<compile_context>
chip_gen: v7x
topology: tpu7x:2x2x1
jax: 0.10.0
libtpu: 0.0.40
codegen_flags: <defaults>
</compile_context>

<pallas_src>
import functools
import math

import jax
import jax.numpy as jnp
from jax import lax
from jax.experimental import pallas as pl
from jax.experimental.pallas import tpu as pltpu

EPS_BN = 1e-5
NUM_SEGMENTS = 16
AUX_W = 128          # lane-dense width for the merged score/magnitude output
MAX_ROWS_PER_STEP = 512


# ------------------------------ Pallas kernel ------------------------------

def rtfm_kernel(x_ref, w0_ref, wsh_ref, gtpw_ref, nww_ref, c5w_ref,
                f1w_ref, f2w_ref, small_ref, feat_ref, aux_ref,
                cat_ref, stk_ref, *, seg_len):
    R, F = x_ref.shape
    T = seg_len
    lg = T.bit_length() - 1                      # T is a power of two (asserted)
    C3 = wsh_ref.shape[2]
    Ci = nww_ref.shape[0]
    C1 = nww_ref.shape[1]
    d4 = 2 * C1 + C3
    H1 = f1w_ref.shape[1]
    H2 = f2w_ref.shape[1]

    x = x_ref[...]                               # (R, F) f32
    xb = x.astype(jnp.bfloat16)

    row = lax.broadcasted_iota(jnp.int32, (R, 1), 0)
    seg_r = row >> lg

    def shift_mask(off):
        # valid iff row r and row r+off are in the same T-row sample and in bounds
        src = row + off
        ok = jnp.logical_and((src >> lg) == seg_r,
                             jnp.logical_and(src >= 0, src < R))
        return ok.astype(jnp.float32)            # (R, 1)

    m1, p1 = shift_mask(-1), shift_mask(1)
    m2, p2 = shift_mask(-2), shift_mask(2)
    m4, p4 = shift_mask(-4), shift_mask(4)

    def shifted(v, off, mask):
        # result[r] = v[r + off] inside each sample, zero outside (f32)
        rolled = jnp.roll(v, (-off) % R, axis=0)
        return rolled * mask

    # ---- conv front end: dense off-0 matmul + six narrow shifted-tap matmuls ----
    h0 = jnp.dot(xb, w0_ref[...], preferred_element_type=jnp.float32)   # (R, F)

    def tap(off, mask, widx):
        op = shifted(x, off, mask).astype(jnp.bfloat16)
        return jnp.dot(op, wsh_ref[widx], preferred_element_type=jnp.float32)

    h1 = tap(-1, m1, 0) + tap(1, p1, 1)          # conv_1, dil 1   (R, C3)
    h2 = tap(-2, m2, 2) + tap(2, p2, 3)          # conv_2, dil 2   (R, C3)
    h3 = tap(-4, m4, 4) + tap(4, p4, 5)          # conv_3, dil 4   (R, C3)

    def branch(lo, hi, hx):
        # conv bias + ReLU + eval-mode BN on one branch slice
        pre = h0[:, lo:hi] + hx[:, 0:hi - lo] + small_ref[0:1, lo:hi]
        act = jnp.maximum(pre, 0.0)
        return act * small_ref[1:2, lo:hi] + small_ref[2:3, lo:hi]

    b1 = branch(0, C1, h1)
    b2 = branch(C1, 2 * C1, h2)
    b3 = branch(2 * C1, d4, h3)
    o4 = jnp.maximum(h0[:, d4:F], 0.0)           # conv_4: ReLU only (no bias / BN)

    # ---- NONLocalBlock1D on conv_4 output, block-diagonal per sample ----
    o4b = o4.astype(jnp.bfloat16)
    gtp = jnp.dot(o4b, gtpw_ref[...], preferred_element_type=jnp.float32) \
        + small_ref[3:4, 0:3 * Ci]               # (R, 3Ci) = [g | theta | phi]
    g_x = gtp[:, 0:Ci]
    th_x = gtp[:, Ci:2 * Ci]
    ph_x = gtp[:, 2 * Ci:3 * Ci]

    col = lax.broadcasted_iota(jnp.int32, (1, R), 1)
    same = seg_r == (col >> lg)                  # (R, R) block-diagonal mask

    f = lax.dot_general(th_x.astype(jnp.bfloat16), ph_x.astype(jnp.bfloat16),
                        (((1,), (1,)), ((), ())),
                        preferred_element_type=jnp.float32)        # (R, R)
    f = jnp.where(same, f * (1.0 / T), 0.0)      # per-sample /N, block-diag
    y = jnp.dot(f.astype(jnp.bfloat16), g_x.astype(jnp.bfloat16),
                preferred_element_type=jnp.float32)                # (R, Ci)
    w_y = jnp.dot(y.astype(jnp.bfloat16), nww_ref[...],
                  preferred_element_type=jnp.float32) + small_ref[4:5, 0:C1]
    z = w_y + o4                                 # (R, C1) non-local residual

    # ---- assemble out_cat = [out1 | out2 | out3 | z] via lane-slice stores ----
    cat_ref[:, 0:C1] = b1
    cat_ref[:, C1:2 * C1] = b2
    cat_ref[:, 2 * C1:d4] = b3
    cat_ref[:, d4:F] = z
    oc = cat_ref[...]                            # (R, F) f32

    # ---- conv_5 (k=3, no bias): stacked-K single matmul, ReLU, eval-BN, residual ----
    stk_ref[:, 0:F] = shifted(oc, -1, m1).astype(jnp.bfloat16)
    stk_ref[:, F:2 * F] = oc.astype(jnp.bfloat16)
    stk_ref[:, 2 * F:3 * F] = shifted(oc, 1, p1).astype(jnp.bfloat16)
    o5 = jnp.dot(stk_ref[...], c5w_ref[...], preferred_element_type=jnp.float32)
    o5 = jnp.maximum(o5, 0.0) * small_ref[5:6, 0:F] + small_ref[6:7, 0:F]
    features = o5 + x                            # (R, F)

    # ---- FC head: relu(fc1) -> relu(fc2) -> sigmoid(fc3) ----
    s1 = jnp.maximum(
        jnp.dot(features.astype(jnp.bfloat16), f1w_ref[...],
                preferred_element_type=jnp.float32) + small_ref[7:8, 0:H1], 0.0)
    s2 = jnp.maximum(
        jnp.dot(s1.astype(jnp.bfloat16), f2w_ref[...],
                preferred_element_type=jnp.float32) + small_ref[8:9, 0:H2], 0.0)
    logit = jnp.sum(s2 * small_ref[9:10, 0:H2], axis=1, keepdims=True) \
        + small_ref[10:11, 0:1]
    score = jax.nn.sigmoid(logit)                # (R, 1), f32

    # ---- feature magnitudes: ||features||_2 over the feature axis (f32) ----
    mag = jnp.sqrt(jnp.sum(features * features, axis=1, keepdims=True))

    feat_ref[...] = features
    lane = lax.broadcasted_iota(jnp.int32, (R, aux_ref.shape[1]), 1)
    aux_ref[...] = jnp.where(lane == 0, score, jnp.where(lane == 1, mag, 0.0))


# ------------------------------ kernel wrapper ------------------------------

def aggregate_and_score(x, packed):
    """x: (B, T, F) float32.  Returns features (B,T,F), scores (B,T,1), mags (B,T,1)."""
    B, T, F = x.shape
    assert T & (T - 1) == 0, "segment length must be a power of two"
    w0, wsh, gtpw, nww, c5w, f1w, f2w, small = packed
    weights = (w0, wsh, gtpw, nww, c5w, f1w, f2w, small)

    # bounded rows-per-step; keep >=2 grid steps so megacore chips split the batch
    # TODO(synk): pad odd batches so the step count never drops to 1 on v7x.
    sps = max(1, min(B, max(1, MAX_ROWS_PER_STEP // T)))
    if B >= 2:
        sps = min(sps, B // 2)
    while B % sps != 0:
        sps -= 1
    n_steps = B // sps
    R_step = sps * T
    R_total = B * T
    x_flat = x.reshape(R_total, F)

    weight_bytes = sum(int(w.size) * w.dtype.itemsize for w in weights)
    step_bytes = R_step * F * 4 * 8 + R_step * 3 * F * 2 + R_step * R_step * 4
    vmem_limit = int(min(127 * 2**20, 2 * weight_bytes + 2 * step_bytes + (8 << 20)))

    C1 = int(nww.shape[1]); Ci = int(nww.shape[0]); C3 = int(wsh.shape[2])
    H1 = int(f1w.shape[1]); H2 = int(f2w.shape[1])
    mm = (F * F + 6 * F * C3 + C1 * 3 * Ci + 2 * R_step * Ci + Ci * C1
          + 3 * F * F + F * H1 + H1 * H2)
    flops = int(2 * R_total * mm)
    bytes_accessed = int(R_total * F * 4 + weight_bytes
                         + R_total * F * 4 + R_total * AUX_W * 4)
    cost = pl.CostEstimate(flops=flops, transcendentals=int(R_total),
                           bytes_accessed=bytes_accessed)

    def const_spec(a, buffered):
        nd = a.ndim
        idx = lambda i, nd=nd: (0,) * nd
        if buffered:
            # constant index_map across the grid -> single-buffer the weight
            return pl.BlockSpec(a.shape, idx, pipeline_mode=pl.Buffered(1))
        return pl.BlockSpec(a.shape, idx)

    def build(use_buffered):
        in_specs = [pl.BlockSpec((R_step, F), lambda i: (i, 0))]
        in_specs += [const_spec(w, use_buffered) for w in weights]
        out_specs = [pl.BlockSpec((R_step, F), lambda i: (i, 0)),
                     pl.BlockSpec((R_step, AUX_W), lambda i: (i, 0))]
        out_shape = (jax.ShapeDtypeStruct((R_total, F), jnp.float32),
                     jax.ShapeDtypeStruct((R_total, AUX_W), jnp.float32))
        return pl.pallas_call(
            functools.partial(rtfm_kernel, seg_len=T),
            out_shape=out_shape,
            grid_spec=pltpu.PrefetchScalarGridSpec(
                num_scalar_prefetch=0,
                grid=(n_steps,),
                in_specs=in_specs,
                out_specs=out_specs,
                scratch_shapes=[pltpu.VMEM((R_step, F), jnp.float32),
                                pltpu.VMEM((R_step, 3 * F), jnp.bfloat16)]),
            compiler_params=pltpu.CompilerParams(
                dimension_semantics=("parallel",),
                vmem_limit_bytes=vmem_limit),
            cost_estimate=cost,
        )

    args = (x_flat,) + weights
    try:
        feat_flat, aux = build(True)(*args)
        jax.block_until_ready((feat_flat, aux))
    except Exception:
        # pl.Buffered(1) not supported on this jax build -> default pipelining
        feat_flat, aux = build(False)(*args)

    features = feat_flat.reshape(B, T, F)
    scores = aux[:, 0].reshape(B, T, 1)
    mags = aux[:, 1].reshape(B, T, 1)
    return features, scores, mags


# ------------------------------ parameter init ------------------------------

def init_params(key, n_features):
    F = n_features
    C1 = F // 4
    sob = F % 4
    C3 = C1 + sob
    Ci = C1 // 2 if C1 // 2 > 0 else 1

    keys = iter(jax.random.split(key, 12))

    def xav(shape, fan_in, fan_out):
        a = math.sqrt(6.0 / (fan_in + fan_out))
        return jax.random.uniform(next(keys), shape, jnp.float32, -a, a)

    def bn_affine(C, gamma):
        # eval-mode BN with running_mean=0, running_var=1 (trained running stats
        # can be folded into these same scale/shift pairs)
        scale = gamma / math.sqrt(1.0 + EPS_BN)
        return (jnp.full((1, C), scale, jnp.float32),
                jnp.zeros((1, C), jnp.float32))

    p = {}
    # conv_1 / conv_2 / conv_3 : torch weight (Cout, F, 3); stored as (3, F, Cout)
    p["c1w"] = xav((3, F, C1), F * 3, C1 * 3)
    p["c1b"] = jnp.zeros((1, C1), jnp.float32)
    p["c1s"], p["c1h"] = bn_affine(C1, 1.0)
    p["c2w"] = xav((3, F, C1), F * 3, C1 * 3)
    p["c2b"] = jnp.zeros((1, C1), jnp.float32)
    p["c2s"], p["c2h"] = bn_affine(C1, 1.0)
    p["c3w"] = xav((3, F, C3), F * 3, C3 * 3)
    p["c3b"] = jnp.zeros((1, C3), jnp.float32)
    p["c3s"], p["c3h"] = bn_affine(C3, 1.0)
    # conv_4 : 1x1, no bias
    p["c4w"] = xav((F, C1), F, C1)
    # non-local block (in=C1, inter=Ci)
    p["gw"] = xav((C1, Ci), C1, Ci)
    p["gb"] = jnp.zeros((1, Ci), jnp.float32)
    p["tw"] = xav((C1, Ci), C1, Ci)
    p["tb"] = jnp.zeros((1, Ci), jnp.float32)
    p["pw"] = xav((C1, Ci), C1, Ci)
    p["pb"] = jnp.zeros((1, Ci), jnp.float32)
    p["nw"] = xav((Ci, C1), Ci, C1)
    p["nb"] = jnp.zeros((1, C1), jnp.float32)
    p["ns"], p["nh"] = bn_affine(C1, 0.0)      # W[1] BN: weight=0, bias=0
    # conv_5 : k=3, no bias; stored as (3, F_in, F_out)
    p["c5w"] = xav((3, F, F), F * 3, F * 3)
    p["c5s"], p["c5h"] = bn_affine(F, 1.0)
    # FC head
    p["f1w"] = xav((F, 512), F, 512)
    p["f1b"] = jnp.zeros((1, 512), jnp.float32)
    p["f2w"] = xav((512, 128), 512, 128)
    p["f2b"] = jnp.zeros((1, 128), jnp.float32)
    p["f3w"] = xav((1, 128), 128, 1)           # fc3 weight stored transposed (1, 128)
    p["f3b"] = jnp.zeros((1, 1), jnp.float32)
    return p


def pack_params(p):
    """Fuse / de-zero / pack the model parameters into 8 kernel operands (bf16 weights)."""
    F = p["c4w"].shape[0]
    C1 = p["c1w"].shape[2]
    C3 = p["c3w"].shape[2]
    Ci = p["gw"].shape[1]
    d4 = 2 * C1 + C3
    bf = jnp.bfloat16

    # off-0 fused weight for the four branches, dense (F, F): lanes [c1|c2|c3|c4]
    w0 = jnp.zeros((F, F), jnp.float32)
    w0 = w0.at[:, 0:C1].set(p["c1w"][1])
    w0 = w0.at[:, C1:2 * C1].set(p["c2w"][1])
    w0 = w0.at[:, 2 * C1:d4].set(p["c3w"][1])
    w0 = w0.at[:, d4:F].set(p["c4w"])

    # narrow shifted taps packed as (6, F, C3): (c1-,c1+,c2-,c2+,c3-,c3+)
    wsh = jnp.zeros((6, F, C3), jnp.float32)
    wsh = wsh.at[0, :, 0:C1].set(p["c1w"][0])
    wsh = wsh.at[1, :, 0:C1].set(p["c1w"][2])
    wsh = wsh.at[2, :, 0:C1].set(p["c2w"][0])
    wsh = wsh.at[3, :, 0:C1].set(p["c2w"][2])
    wsh = wsh.at[4, :, 0:C3].set(p["c3w"][0])
    wsh = wsh.at[5, :, 0:C3].set(p["c3w"][2])

    # non-local g/theta/phi, dense (C1, 3Ci)
    gtpw = jnp.concatenate([p["gw"], p["tw"], p["pw"]], axis=1)

    # non-local W conv with its BN gamma folded in, dense (Ci, C1)
    nww = p["nw"] * p["ns"]
    wy_shift = p["nb"] * p["ns"] + p["nh"]                 # (1, C1)

    # conv_5 stacked over taps (3F, F): rows [tap -1 ; tap 0 ; tap +1]
    c5w = jnp.concatenate([p["c5w"][0], p["c5w"][1], p["c5w"][2]], axis=0)

    SM_W = max(512, F, 128, 3 * Ci, d4)

    def row(v):
        v = jnp.reshape(v, (1, -1)).astype(jnp.float32)
        return jnp.pad(v, ((0, 0), (0, SM_W - v.shape[1])))

    bias_d = jnp.concatenate([p["c1b"], p["c2b"], p["c3b"]], axis=1)
    scale_d = jnp.concatenate([p["c1s"], p["c2s"], p["c3s"]], axis=1)
    shift_d = jnp.concatenate([p["c1h"], p["c2h"], p["c3h"]], axis=1)
    gtp_bias = jnp.concatenate([p["gb"], p["tb"], p["pb"]], axis=1)

    small = jnp.concatenate([
        row(bias_d),         # 0: conv_1/2/3 bias (d4 lanes)
        row(scale_d),        # 1: conv_1/2/3 eval-BN scale
        row(shift_d),        # 2: conv_1/2/3 eval-BN shift
        row(gtp_bias),       # 3: g/theta/phi bias
        row(wy_shift),       # 4: non-local W bias*gamma + beta
        row(p["c5s"]),       # 5: conv_5 BN scale
        row(p["c5h"]),       # 6: conv_5 BN shift
        row(p["f1b"]),       # 7
        row(p["f2b"]),       # 8
        row(p["f3w"]),       # 9
        row(p["f3b"]),       # 10
    ], axis=0)

    return (w0.astype(bf), wsh.astype(bf), gtpw.astype(bf), nww.astype(bf),
            c5w.astype(bf), p["f1w"].astype(bf), p["f2w"].astype(bf), small)


# ------------------------------ full Model.forward ------------------------------

def model_forward(inputs, packed, batch_size, ten_crop="False"):
    k_abn = NUM_SEGMENTS // 10
    k_nor = NUM_SEGMENTS // 10
    bs, ncrops, t, f = inputs.shape

    out = inputs.reshape(-1, t, f)
    features, scores3, mags = aggregate_and_score(out, packed)

    if ten_crop == "True":
        scores = scores3.reshape(bs, ncrops, -1).mean(axis=1)
    else:
        scores = scores3.reshape(bs, ncrops, -1)
        if ncrops == 1:
            scores = scores[:, 0, :]
    scores = scores[:, :, None]                                   # (bs, t, 1)

    if ten_crop == "False":
        normal_features = features[0:batch_size]
        abnormal_features = features[batch_size:]
    else:
        normal_features = features[0:batch_size * 10]
        abnormal_features = features[batch_size * 10:]
    normal_scores = scores[0:batch_size]
    abnormal_scores = scores[batch_size:]

    feat_magnitudes = mags[..., 0]                                # (bs*ncrops, t)
    if ten_crop == "True":
        feat_magnitudes = feat_magnitudes.reshape(bs, ncrops, -1).mean(axis=1)
    else:
        feat_magnitudes = feat_magnitudes.reshape(bs, ncrops, -1)
        if ncrops == 1:
            feat_magnitudes = feat_magnitudes[:, 0, :]

    nfea_magnitudes = feat_magnitudes[0:batch_size]
    afea_magnitudes = feat_magnitudes[batch_size:]
    n_size = nfea_magnitudes.shape[0]
    if n_size == 1:
        afea_magnitudes = nfea_magnitudes
        abnormal_scores = normal_scores
        abnormal_features = normal_features

    # select_idx = Dropout(ones) -> ones in eval mode
    idx_abn = lax.top_k(afea_magnitudes, k_abn)[1]                # (n, k)
    abn_r = abnormal_features.reshape(n_size, ncrops, t, f).transpose(1, 0, 2, 3)
    sel_abn = [jnp.take_along_axis(abn_r[i], idx_abn[:, :, None], axis=1)
               for i in range(ncrops)]
    feat_select_abn = jnp.concatenate(sel_abn, axis=0)
    score_abnormal = jnp.mean(
        jnp.take_along_axis(abnormal_scores, idx_abn[:, :, None], axis=1), axis=1)

    idx_normal = lax.top_k(nfea_magnitudes, k_nor)[1]
    nor_r = normal_features.reshape(n_size, ncrops, t, f).transpose(1, 0, 2, 3)
    sel_nor = [jnp.take_along_axis(nor_r[i], idx_normal[:, :, None], axis=1)
               for i in range(ncrops)]
    feat_select_normal = jnp.concatenate(sel_nor, axis=0)
    score_normal = jnp.mean(
        jnp.take_along_axis(normal_scores, idx_normal[:, :, None], axis=1), axis=1)

    return (score_abnormal, score_normal, feat_select_abn, feat_select_normal,
            feat_select_abn, feat_select_abn, scores, feat_select_abn,
            feat_select_abn, feat_magnitudes)


# ------------------------------------ main ------------------------------------

if __name__ == "__main__":
    key = jax.random.PRNGKey(0)
    kx, kp = jax.random.split(key)

    batch_size = 2          # model's self.batch_size (normal videos)
    bs = 2 * batch_size     # normal + abnormal stacked on the batch axis
    ncrops = 1
    T = NUM_SEGMENTS        # 16
    F = 32                  # n_features (toy; real model uses 2048)

    inputs = jax.random.normal(kx, (bs, ncrops, T, F), dtype=jnp.float32)
    params = init_params(kp, F)
    packed = pack_params(params)

    outs = model_forward(inputs, packed, batch_size, ten_crop="False")
    outs = jax.block_until_ready(outs)

    # light sanity checks on output shapes
    assert outs[0].shape == (batch_size, 1)          # score_abnormal
    assert outs[1].shape == (batch_size, 1)          # score_normal
    assert outs[2].shape == (batch_size, 1, F)       # feat_select_abn
    assert outs[6].shape == (bs, T, 1)               # scores
    assert outs[9].shape == (bs, T)                  # feat_magnitudes
    print("KERNEL_OK")
</pallas_src>

<mosaic_0001>
module attributes {stable_mosaic.version = 11 : i64} {
  func.func @rtfm_kernel(%arg0: i32, %arg1: memref<32x32xf32, #tpu.memory_space<vmem>>, %arg2: memref<32x32xbf16, #tpu.memory_space<vmem>>, %arg3: memref<6x32x8xbf16, #tpu.memory_space<vmem>>, %arg4: memref<8x12xbf16, #tpu.memory_space<vmem>>, %arg5: memref<4x8xbf16, #tpu.memory_space<vmem>>, %arg6: memref<96x32xbf16, #tpu.memory_space<vmem>>, %arg7: memref<32x512xbf16, #tpu.memory_space<vmem>>, %arg8: memref<512x128xbf16, #tpu.memory_space<vmem>>, %arg9: memref<11x512xf32, #tpu.memory_space<vmem>>, %arg10: memref<32x32xf32, #tpu.memory_space<vmem>>, %arg11: memref<32x128xf32, #tpu.memory_space<vmem>>, %arg12: memref<32x32xf32, #tpu.memory_space<vmem>>, %arg13: memref<32x96xbf16, #tpu.memory_space<vmem>>) attributes {dimension_semantics = [#tpu.dimension_semantics<parallel>], iteration_bounds = array<i64: 2>, scalar_prefetch = 0 : i64, scratch_operands = 2 : i64, tpu.core_type = #tpu.core_type<tc>, window_params = [{transform_indices = @transform_0, window_bounds = array<i64: 32, 32>}, {pipeline_mode = #tpu.pipeline_mode<synchronous>, transform_indices = @transform_1, window_bounds = array<i64: 32, 32>}, {pipeline_mode = #tpu.pipeline_mode<synchronous>, transform_indices = @transform_2, window_bounds = array<i64: 6, 32, 8>}, {pipeline_mode = #tpu.pipeline_mode<synchronous>, transform_indices = @transform_3, window_bounds = array<i64: 8, 12>}, {pipeline_mode = #tpu.pipeline_mode<synchronous>, transform_indices = @transform_4, window_bounds = array<i64: 4, 8>}, {pipeline_mode = #tpu.pipeline_mode<synchronous>, transform_indices = @transform_5, window_bounds = array<i64: 96, 32>}, {pipeline_mode = #tpu.pipeline_mode<synchronous>, transform_indices = @transform_6, window_bounds = array<i64: 32, 512>}, {pipeline_mode = #tpu.pipeline_mode<synchronous>, transform_indices = @transform_7, window_bounds = array<i64: 512, 128>}, {pipeline_mode = #tpu.pipeline_mode<synchronous>, transform_indices = @transform_8, window_bounds = array<i64: 11, 512>}, {transform_indices = @transform_9, window_bounds = array<i64: 32, 32>}, {transform_indices = @transform_10, window_bounds = array<i64: 32, 128>}]} {
    %c0 = arith.constant 0 : index
    %c0_0 = arith.constant 0 : index
    %0 = vector.load %arg1[%c0, %c0_0] : memref<32x32xf32, #tpu.memory_space<vmem>>, vector<32x32xf32>
    %1 = arith.truncf %0 : vector<32x32xf32> to vector<32x32xbf16>
    %2 = tpu.iota {dimensions = array<i32: 0>} : vector<32x1xi32>
    %c4_i32 = arith.constant 4 : i32
    %3 = vector.broadcast %c4_i32 : i32 to vector<32x1xi32>
    %4 = arith.shrsi %2, %3 : vector<32x1xi32>
    %c-1_i32 = arith.constant -1 : i32
    %5 = vector.broadcast %c-1_i32 : i32 to vector<32x1xi32>
    %6 = arith.addi %2, %5 : vector<32x1xi32>
    %c4_i32_1 = arith.constant 4 : i32
    %7 = vector.broadcast %c4_i32_1 : i32 to vector<32x1xi32>
    %8 = arith.shrsi %6, %7 : vector<32x1xi32>
    %9 = arith.cmpi eq, %8, %4 : vector<32x1xi32>
    %c0_i32 = arith.constant 0 : i32
    %10 = vector.broadcast %c0_i32 : i32 to vector<32x1xi32>
    %11 = arith.cmpi sge, %6, %10 : vector<32x1xi32>
    %c32_i32 = arith.constant 32 : i32
    %12 = vector.broadcast %c32_i32 : i32 to vector<32x1xi32>
    %13 = arith.cmpi slt, %6, %12 : vector<32x1xi32>
    %14 = arith.andi %11, %13 : vector<32x1xi1>
    %15 = arith.andi %9, %14 : vector<32x1xi1>
    %16 = arith.extui %15 : vector<32x1xi1> to vector<32x1xi32>
    %17 = arith.sitofp %16 : vector<32x1xi32> to vector<32x1xf32>
    %c1_i32 = arith.constant 1 : i32
    %18 = vector.broadcast %c1_i32 : i32 to vector<32x1xi32>
    %19 = arith.addi %2, %18 : vector<32x1xi32>
    %c4_i32_2 = arith.constant 4 : i32
    %20 = vector.broadcast %c4_i32_2 : i32 to vector<32x1xi32>
    %21 = arith.shrsi %19, %20 : vector<32x1xi32>
    %22 = arith.cmpi eq, %21, %4 : vector<32x1xi32>
    %c0_i32_3 = arith.constant 0 : i32
    %23 = vector.broadcast %c0_i32_3 : i32 to vector<32x1xi32>
    %24 = arith.cmpi sge, %19, %23 : vector<32x1xi32>
    %c32_i32_4 = arith.constant 32 : i32
    %25 = vector.broadcast %c32_i32_4 : i32 to vector<32x1xi32>
    %26 = arith.cmpi slt, %19, %25 : vector<32x1xi32>
    %27 = arith.andi %24, %26 : vector<32x1xi1>
    %28 = arith.andi %22, %27 : vector<32x1xi1>
    %29 = arith.extui %28 : vector<32x1xi1> to vector<32x1xi32>
    %30 = arith.sitofp %29 : vector<32x1xi32> to vector<32x1xf32>
    %c-2_i32 = arith.constant -2 : i32
    %31 = vector.broadcast %c-2_i32 : i32 to vector<32x1xi32>
    %32 = arith.addi %2, %31 : vector<32x1xi32>
    %c4_i32_5 = arith.constant 4 : i32
    %33 = vector.broadcast %c4_i32_5 : i32 to vector<32x1xi32>
    %34 = arith.shrsi %32, %33 : vector<32x1xi32>
    %35 = arith.cmpi eq, %34, %4 : vector<32x1xi32>
    %c0_i32_6 = arith.constant 0 : i32
    %36 = vector.broadcast %c0_i32_6 : i32 to vector<32x1xi32>
    %37 = arith.cmpi sge, %32, %36 : vector<32x1xi32>
    %c32_i32_7 = arith.constant 32 : i32
    %38 = vector.broadcast %c32_i32_7 : i32 to vector<32x1xi32>
    %39 = arith.cmpi slt, %32, %38 : vector<32x1xi32>
    %40 = arith.andi %37, %39 : vector<32x1xi1>
    %41 = arith.andi %35, %40 : vector<32x1xi1>
    %42 = arith.extui %41 : vector<32x1xi1> to vector<32x1xi32>
    %43 = arith.sitofp %42 : vector<32x1xi32> to vector<32x1xf32>
    %c2_i32 = arith.constant 2 : i32
    %44 = vector.broadcast %c2_i32 : i32 to vector<32x1xi32>
    %45 = arith.addi %2, %44 : vector<32x1xi32>
    %c4_i32_8 = arith.constant 4 : i32
    %46 = vector.broadcast %c4_i32_8 : i32 to vector<32x1xi32>
    %47 = arith.shrsi %45, %46 : vector<32x1xi32>
    %48 = arith.cmpi eq, %47, %4 : vector<32x1xi32>
    %c0_i32_9 = arith.constant 0 : i32
    %49 = vector.broadcast %c0_i32_9 : i32 to vector<32x1xi32>
    %50 = arith.cmpi sge, %45, %49 : vector<32x1xi32>
    %c32_i32_10 = arith.constant 32 : i32
    %51 = vector.broadcast %c32_i32_10 : i32 to vector<32x1xi32>
    %52 = arith.cmpi slt, %45, %51 : vector<32x1xi32>
    %53 = arith.andi %50, %52 : vector<32x1xi1>
    %54 = arith.andi %48, %53 : vector<32x1xi1>
    %55 = arith.extui %54 : vector<32x1xi1> to vector<32x1xi32>
    %56 = arith.sitofp %55 : vector<32x1xi32> to vector<32x1xf32>
    %c-4_i32 = arith.constant -4 : i32
    %57 = vector.broadcast %c-4_i32 : i32 to vector<32x1xi32>
    %58 = arith.addi %2, %57 : vector<32x1xi32>
    %c4_i32_11 = arith.constant 4 : i32
    %59 = vector.broadcast %c4_i32_11 : i32 to vector<32x1xi32>
    %60 = arith.shrsi %58, %59 : vector<32x1xi32>
    %61 = arith.cmpi eq, %60, %4 : vector<32x1xi32>
    %c0_i32_12 = arith.constant 0 : i32
    %62 = vector.broadcast %c0_i32_12 : i32 to vector<32x1xi32>
    %63 = arith.cmpi sge, %58, %62 : vector<32x1xi32>
    %c32_i32_13 = arith.constant 32 : i32
    %64 = vector.broadcast %c32_i32_13 : i32 to vector<32x1xi32>
    %65 = arith.cmpi slt, %58, %64 : vector<32x1xi32>
    %66 = arith.andi %63, %65 : vector<32x1xi1>
    %67 = arith.andi %61, %66 : vector<32x1xi1>
    %68 = arith.extui %67 : vector<32x1xi1> to vector<32x1xi32>
    %69 = arith.sitofp %68 : vector<32x1xi32> to vector<32x1xf32>
    %c4_i32_14 = arith.constant 4 : i32
    %70 = vector.broadcast %c4_i32_14 : i32 to vector<32x1xi32>
    %71 = arith.addi %2, %70 : vector<32x1xi32>
    %c4_i32_15 = arith.constant 4 : i32
    %72 = vector.broadcast %c4_i32_15 : i32 to vector<32x1xi32>
    %73 = arith.shrsi %71, %72 : vector<32x1xi32>
    %74 = arith.cmpi eq, %73, %4 : vector<32x1xi32>
    %c0_i32_16 = arith.constant 0 : i32
    %75 = vector.broadcast %c0_i32_16 : i32 to vector<32x1xi32>
    %76 = arith.cmpi sge, %71, %75 : vector<32x1xi32>
    %c32_i32_17 = arith.constant 32 : i32
    %77 = vector.broadcast %c32_i32_17 : i32 to vector<32x1xi32>
    %78 = arith.cmpi slt, %71, %77 : vector<32x1xi32>
    %79 = arith.andi %76, %78 : vector<32x1xi1>
    %80 = arith.andi %74, %79 : vector<32x1xi1>
    %81 = arith.extui %80 : vector<32x1xi1> to vector<32x1xi32>
    %82 = arith.sitofp %81 : vector<32x1xi32> to vector<32x1xf32>
    %c0_18 = arith.constant 0 : index
    %c0_19 = arith.constant 0 : index
    %83 = vector.load %arg2[%c0_18, %c0_19] : memref<32x32xbf16, #tpu.memory_space<vmem>>, vector<32x32xbf16>
    %cst = arith.constant dense<0.000000e+00> : vector<32x32xf32>
    %84 = tpu.matmul %1, %83, %cst {dimension_numbers = #tpu.dot_dimension_numbers<[1], [0], [0], [1], [0, 0, 1, 1], [], []>} : vector<32x32xbf16>, vector<32x32xbf16>, vector<32x32xf32> -> vector<32x32xf32>
    %85 = vector.extract_strided_slice %0 {offsets = [31, 0], sizes = [1, 32], strides = [1, 1]} : vector<32x32xf32> to vector<1x32xf32>
    %86 = vector.extract_strided_slice %0 {offsets = [0, 0], sizes = [31, 32], strides = [1, 1]} : vector<32x32xf32> to vector<31x32xf32>
    %87 = tpu.concatenate %85, %86 in 0 : vector<1x32xf32>, vector<31x32xf32> -> vector<32x32xf32>
    %88 = vector.broadcast %17 : vector<32x1xf32> to vector<32x32xf32>
    %89 = arith.mulf %87, %88 : vector<32x32xf32>
    %90 = arith.truncf %89 : vector<32x32xf32> to vector<32x32xbf16>
    %c0_20 = arith.constant 0 : index
    %c0_21 = arith.constant 0 : index
    %c0_22 = arith.constant 0 : index
    %91 = vector.load %arg3[%c0_20, %c0_21, %c0_22] : memref<6x32x8xbf16, #tpu.memory_space<vmem>>, vector<1x32x8xbf16>
    %92 = vector.shape_cast %91 : vector<1x32x8xbf16> to vector<32x8xbf16>
    %cst_23 = arith.constant dense<0.000000e+00> : vector<32x8xf32>
    %93 = tpu.matmul %90, %92, %cst_23 {dimension_numbers = #tpu.dot_dimension_numbers<[1], [0], [0], [1], [0, 0, 1, 1], [], []>} : vector<32x32xbf16>, vector<32x8xbf16>, vector<32x8xf32> -> vector<32x8xf32>
    %94 = vector.extract_strided_slice %0 {offsets = [1, 0], sizes = [31, 32], strides = [1, 1]} : vector<32x32xf32> to vector<31x32xf32>
    %95 = vector.extract_strided_slice %0 {offsets = [0, 0], sizes = [1, 32], strides = [1, 1]} : vector<32x32xf32> to vector<1x32xf32>
    %96 = tpu.concatenate %94, %95 in 0 : vector<31x32xf32>, vector<1x32xf32> -> vector<32x32xf32>
    %97 = vector.broadcast %30 : vector<32x1xf32> to vector<32x32xf32>
    %98 = arith.mulf %96, %97 : vector<32x32xf32>
    %99 = arith.truncf %98 : vector<32x32xf32> to vector<32x32xbf16>
    %c1 = arith.constant 1 : index
    %c0_24 = arith.constant 0 : index
    %c0_25 = arith.constant 0 : index
    %100 = vector.load %arg3[%c1, %c0_24, %c0_25] : memref<6x32x8xbf16, #tpu.memory_space<vmem>>, vector<1x32x8xbf16>
    %101 = vector.shape_cast %100 : vector<1x32x8xbf16> to vector<32x8xbf16>
    %cst_26 = arith.constant dense<0.000000e+00> : vector<32x8xf32>
    %102 = tpu.matmul %99, %101, %cst_26 {dimension_numbers = #tpu.dot_dimension_numbers<[1], [0], [0], [1], [0, 0, 1, 1], [], []>} : vector<32x32xbf16>, vector<32x8xbf16>, vector<32x8xf32> -> vector<32x8xf32>
    %103 = arith.addf %93, %102 : vector<32x8xf32>
    %104 = vector.extract_strided_slice %0 {offsets = [30, 0], sizes = [2, 32], strides = [1, 1]} : vector<32x32xf32> to vector<2x32xf32>
    %105 = vector.extract_strided_slice %0 {offsets = [0, 0], sizes = [30, 32], strides = [1, 1]} : vector<32x32xf32> to vector<30x32xf32>
    %106 = tpu.concatenate %104, %105 in 0 : vector<2x32xf32>, vector<30x32xf32> -> vector<32x32xf32>
    %107 = vector.broadcast %43 : vector<32x1xf32> to vector<32x32xf32>
    %108 = arith.mulf %106, %107 : vector<32x32xf32>
    %109 = arith.truncf %108 : vector<32x32xf32> to vector<32x32xbf16>
    %c2 = arith.constant 2 : index
    %c0_27 = arith.constant 0 : index
    %c0_28 = arith.constant 0 : index
    %110 = vector.load %arg3[%c2, %c0_27, %c0_28] : memref<6x32x8xbf16, #tpu.memory_space<vmem>>, vector<1x32x8xbf16>
    %111 = vector.shape_cast %110 : vector<1x32x8xbf16> to vector<32x8xbf16>
    %cst_29 = arith.constant dense<0.000000e+00> : vector<32x8xf32>
    %112 = tpu.matmul %109, %111, %cst_29 {dimension_numbers = #tpu.dot_dimension_numbers<[1], [0], [0], [1], [0, 0, 1, 1], [], []>} : vector<32x32xbf16>, vector<32x8xbf16>, vector<32x8xf32> -> vector<32x8xf32>
    %113 = vector.extract_strided_slice %0 {offsets = [2, 0], sizes = [30, 32], strides = [1, 1]} : vector<32x32xf32> to vector<30x32xf32>
    %114 = vector.extract_strided_slice %0 {offsets = [0, 0], sizes = [2, 32], strides = [1, 1]} : vector<32x32xf32> to vector<2x32xf32>
    %115 = tpu.concatenate %113, %114 in 0 : vector<30x32xf32>, vector<2x32xf32> -> vector<32x32xf32>
    %116 = vector.broadcast %56 : vector<32x1xf32> to vector<32x32xf32>
    %117 = arith.mulf %115, %116 : vector<32x32xf32>
    %118 = arith.truncf %117 : vector<32x32xf32> to vector<32x32xbf16>
    %c3 = arith.constant 3 : index
    %c0_30 = arith.constant 0 : index
    %c0_31 = arith.constant 0 : index
    %119 = vector.load %arg3[%c3, %c0_30, %c0_31] : memref<6x32x8xbf16, #tpu.memory_space<vmem>>, vector<1x32x8xbf16>
    %120 = vector.shape_cast %119 : vector<1x32x8xbf16> to vector<32x8xbf16>
    %cst_32 = arith.constant dense<0.000000e+00> : vector<32x8xf32>
    %121 = tpu.matmul %118, %120, %cst_32 {dimension_numbers = #tpu.dot_dimension_numbers<[1], [0], [0], [1], [0, 0, 1, 1], [], []>} : vector<32x32xbf16>, vector<32x8xbf16>, vector<32x8xf32> -> vector<32x8xf32>
    %122 = arith.addf %112, %121 : vector<32x8xf32>
    %123 = vector.extract_strided_slice %0 {offsets = [28, 0], sizes = [4, 32], strides = [1, 1]} : vector<32x32xf32> to vector<4x32xf32>
    %124 = vector.extract_strided_slice %0 {offsets = [0, 0], sizes = [28, 32], strides = [1, 1]} : vector<32x32xf32> to vector<28x32xf32>
    %125 = tpu.concatenate %123, %124 in 0 : vector<4x32xf32>, vector<28x32xf32> -> vector<32x32xf32>
    %126 = vector.broadcast %69 : vector<32x1xf32> to vector<32x32xf32>
    %127 = arith.mulf %125, %126 : vector<32x32xf32>
    %128 = arith.truncf %127 : vector<32x32xf32> to vector<32x32xbf16>
    %c4 = arith.constant 4 : index
    %c0_33 = arith.constant 0 : index
    %c0_34 = arith.constant 0 : index
    %129 = vector.load %arg3[%c4, %c0_33, %c0_34] : memref<6x32x8xbf16, #tpu.memory_space<vmem>>, vector<1x32x8xbf16>
    %130 = vector.shape_cast %129 : vector<1x32x8xbf16> to vector<32x8xbf16>
    %cst_35 = arith.constant dense<0.000000e+00> : vector<32x8xf32>
    %131 = tpu.matmul %128, %130, %cst_35 {dimension_numbers = #tpu.dot_dimension_numbers<[1], [0], [0], [1], [0, 0, 1, 1], [], []>} : vector<32x32xbf16>, vector<32x8xbf16>, vector<32x8xf32> -> vector<32x8xf32>
    %132 = vector.extract_strided_slice %0 {offsets = [4, 0], sizes = [28, 32], strides = [1, 1]} : vector<32x32xf32> to vector<28x32xf32>
    %133 = vector.extract_strided_slice %0 {offsets = [0, 0], sizes = [4, 32], strides = [1, 1]} : vector<32x32xf32> to vector<4x32xf32>
    %134 = tpu.concatenate %132, %133 in 0 : vector<28x32xf32>, vector<4x32xf32> -> vector<32x32xf32>
    %135 = vector.broadcast %82 : vector<32x1xf32> to vector<32x32xf32>
    %136 = arith.mulf %134, %135 : vector<32x32xf32>
    %137 = arith.truncf %136 : vector<32x32xf32> to vector<32x32xbf16>
    %c5 = arith.constant 5 : index
    %c0_36 = arith.constant 0 : index
    %c0_37 = arith.constant 0 : index
    %138 = vector.load %arg3[%c5, %c0_36, %c0_37] : memref<6x32x8xbf16, #tpu.memory_space<vmem>>, vector<1x32x8xbf16>
    %139 = vector.shape_cast %138 : vector<1x32x8xbf16> to vector<32x8xbf16>
    %cst_38 = arith.constant dense<0.000000e+00> : vector<32x8xf32>
    %140 = tpu.matmul %137, %139, %cst_38 {dimension_numbers = #tpu.dot_dimension_numbers<[1], [0], [0], [1], [0, 0, 1, 1], [], []>} : vector<32x32xbf16>, vector<32x8xbf16>, vector<32x8xf32> -> vector<32x8xf32>
    %141 = arith.addf %131, %140 : vector<32x8xf32>
    %142 = vector.extract_strided_slice %84 {offsets = [0, 0], sizes = [32, 8], strides = [1, 1]} : vector<32x32xf32> to vector<32x8xf32>
    %143 = arith.addf %142, %103 : vector<32x8xf32>
    %c0_39 = arith.constant 0 : index
    %c0_40 = arith.constant 0 : index
    %144 = vector.load %arg9[%c0_39, %c0_40] : memref<11x512xf32, #tpu.memory_space<vmem>>, vector<1x8xf32>
    %145 = vector.broadcast %144 : vector<1x8xf32> to vector<32x8xf32>
    %146 = arith.addf %143, %145 : vector<32x8xf32>
    %cst_41 = arith.constant 0.000000e+00 : f32
    %147 = vector.broadcast %cst_41 : f32 to vector<32x8xf32>
    %148 = arith.maximumf %146, %147 : vector<32x8xf32>
    %c1_42 = arith.constant 1 : index
    %c0_43 = arith.constant 0 : index
    %149 = vector.load %arg9[%c1_42, %c0_43] : memref<11x512xf32, #tpu.memory_space<vmem>>, vector<1x8xf32>
    %150 = vector.broadcast %149 : vector<1x8xf32> to vector<32x8xf32>
    %151 = arith.mulf %148, %150 : vector<32x8xf32>
    %c2_44 = arith.constant 2 : index
    %c0_45 = arith.constant 0 : index
    %152 = vector.load %arg9[%c2_44, %c0_45] : memref<11x512xf32, #tpu.memory_space<vmem>>, vector<1x8xf32>
    %153 = vector.broadcast %152 : vector<1x8xf32> to vector<32x8xf32>
    %154 = arith.addf %151, %153 : vector<32x8xf32>
    %155 = vector.extract_strided_slice %84 {offsets = [0, 8], sizes = [32, 8], strides = [1, 1]} : vector<32x32xf32> to vector<32x8xf32>
    %156 = arith.addf %155, %122 : vector<32x8xf32>
    %c0_46 = arith.constant 0 : index
    %c8 = arith.constant 8 : index
    %157 = vector.load %arg9[%c0_46, %c8] : memref<11x512xf32, #tpu.memory_space<vmem>>, vector<1x8xf32>
    %158 = vector.broadcast %157 : vector<1x8xf32> to vector<32x8xf32>
    %159 = arith.addf %156, %158 : vector<32x8xf32>
    %cst_47 = arith.constant 0.000000e+00 : f32
    %160 = vector.broadcast %cst_47 : f32 to vector<32x8xf32>
    %161 = arith.maximumf %159, %160 : vector<32x8xf32>
    %c1_48 = arith.constant 1 : index
    %c8_49 = arith.constant 8 : index
    %162 = vector.load %arg9[%c1_48, %c8_49] : memref<11x512xf32, #tpu.memory_space<vmem>>, vector<1x8xf32>
    %163 = vector.broadcast %162 : vector<1x8xf32> to vector<32x8xf32>
    %164 = arith.mulf %161, %163 : vector<32x8xf32>
    %c2_50 = arith.constant 2 : index
    %c8_51 = arith.constant 8 : index
    %165 = vector.load %arg9[%c2_50, %c8_51] : memref<11x512xf32, #tpu.memory_space<vmem>>, vector<1x8xf32>
    %166 = vector.broadcast %165 : vector<1x8xf32> to vector<32x8xf32>
    %167 = arith.addf %164, %166 : vector<32x8xf32>
    %168 = vector.extract_strided_slice %84 {offsets = [0, 16], sizes = [32, 8], strides = [1, 1]} : vector<32x32xf32> to vector<32x8xf32>
    %169 = arith.addf %168, %141 : vector<32x8xf32>
    %c0_52 = arith.constant 0 : index
    %c16 = arith.constant 16 : index
    %170 = vector.load %arg9[%c0_52, %c16] : memref<11x512xf32, #tpu.memory_space<vmem>>, vector<1x8xf32>
    %171 = vector.broadcast %170 : vector<1x8xf32> to vector<32x8xf32>
    %172 = arith.addf %169, %171 : vector<32x8xf32>
    %cst_53 = arith.constant 0.000000e+00 : f32
    %173 = vector.broadcast %cst_53 : f32 to vector<32x8xf32>
    %174 = arith.maximumf %172, %173 : vector<32x8xf32>
    %c1_54 = arith.constant 1 : index
    %c16_55 = arith.constant 16 : index
    %175 = vector.load %arg9[%c1_54, %c16_55] : memref<11x512xf32, #tpu.memory_space<vmem>>, vector<1x8xf32>
    %176 = vector.broadcast %175 : vector<1x8xf32> to vector<32x8xf32>
    %177 = arith.mulf %174, %176 : vector<32x8xf32>
    %c2_56 = arith.constant 2 : index
    %c16_57 = arith.constant 16 : index
    %178 = vector.load %arg9[%c2_56, %c16_57] : memref<11x512xf32, #tpu.memory_space<vmem>>, vector<1x8xf32>
    %179 = vector.broadcast %178 : vector<1x8xf32> to vector<32x8xf32>
    %180 = arith.addf %177, %179 : vector<32x8xf32>
    %181 = vector.extract_strided_slice %84 {offsets = [0, 24], sizes = [32, 8], strides = [1, 1]} : vector<32x32xf32> to vector<32x8xf32>
    %cst_58 = arith.constant 0.000000e+00 : f32
    %182 = vector.broadcast %cst_58 : f32 to vector<32x8xf32>
    %183 = arith.maximumf %181, %182 : vector<32x8xf32>
    %184 = arith.truncf %183 : vector<32x8xf32> to vector<32x8xbf16>
    %c0_59 = arith.constant 0 : index
    %c0_60 = arith.constant 0 : index
    %185 = vector.load %arg4[%c0_59, %c0_60] : memref<8x12xbf16, #tpu.memory_space<vmem>>, vector<8x12xbf16>
    %cst_61 = arith.constant dense<0.000000e+00> : vector<32x12xf32>
    %186 = tpu.matmul %184, %185, %cst_61 {dimension_numbers = #tpu.dot_dimension_numbers<[1], [0], [0], [1], [0, 0, 1, 1], [], []>} : vector<32x8xbf16>, vector<8x12xbf16>, vector<32x12xf32> -> vector<32x12xf32>
    %c3_62 = arith.constant 3 : index
    %c0_63 = arith.constant 0 : index
    %187 = vector.load %arg9[%c3_62, %c0_63] : memref<11x512xf32, #tpu.memory_space<vmem>>, vector<1x12xf32>
    %188 = vector.broadcast %187 : vector<1x12xf32> to vector<32x12xf32>
    %189 = arith.addf %186, %188 : vector<32x12xf32>
    %190 = vector.extract_strided_slice %189 {offsets = [0, 0], sizes = [32, 4], strides = [1, 1]} : vector<32x12xf32> to vector<32x4xf32>
    %191 = vector.extract_strided_slice %189 {offsets = [0, 4], sizes = [32, 4], strides = [1, 1]} : vector<32x12xf32> to vector<32x4xf32>
    %192 = vector.extract_strided_slice %189 {offsets = [0, 8], sizes = [32, 4], strides = [1, 1]} : vector<32x12xf32> to vector<32x4xf32>
    %193 = tpu.iota {dimensions = array<i32: 1>} : vector<1x32xi32>
    %c4_i32_64 = arith.constant 4 : i32
    %194 = vector.broadcast %c4_i32_64 : i32 to vector<1x32xi32>
    %195 = arith.shrsi %193, %194 : vector<1x32xi32>
    %196 = vector.broadcast %4 : vector<32x1xi32> to vector<32x32xi32>
    %197 = vector.broadcast %195 : vector<1x32xi32> to vector<32x32xi32>
    %198 = arith.cmpi eq, %196, %197 : vector<32x32xi32>
    %199 = arith.truncf %191 : vector<32x4xf32> to vector<32x4xbf16>
    %200 = arith.truncf %192 : vector<32x4xf32> to vector<32x4xbf16>
    %cst_65 = arith.constant dense<0.000000e+00> : vector<32x32xf32>
    %201 = tpu.matmul %199, %200, %cst_65 {dimension_numbers = #tpu.dot_dimension_numbers<[1], [1], [0], [0], [0, 0, 1, 0], [], []>} : vector<32x4xbf16>, vector<32x4xbf16>, vector<32x32xf32> -> vector<32x32xf32>
    %cst_66 = arith.constant 6.250000e-02 : f32
    %202 = vector.broadcast %cst_66 : f32 to vector<32x32xf32>
    %203 = arith.mulf %201, %202 : vector<32x32xf32>
    %cst_67 = arith.constant 0.000000e+00 : f32
    %204 = vector.broadcast %cst_67 : f32 to vector<32x32xf32>
    %205 = arith.select %198, %203, %204 : vector<32x32xi1>, vector<32x32xf32>
    %206 = arith.truncf %205 : vector<32x32xf32> to vector<32x32xbf16>
    %207 = arith.truncf %190 : vector<32x4xf32> to vector<32x4xbf16>
    %cst_68 = arith.constant dense<0.000000e+00> : vector<32x4xf32>
    %208 = tpu.matmul %206, %207, %cst_68 {dimension_numbers = #tpu.dot_dimension_numbers<[1], [0], [0], [1], [0, 0, 1, 1], [], []>} : vector<32x32xbf16>, vector<32x4xbf16>, vector<32x4xf32> -> vector<32x4xf32>
    %209 = arith.truncf %208 : vector<32x4xf32> to vector<32x4xbf16>
    %c0_69 = arith.constant 0 : index
    %c0_70 = arith.constant 0 : index
    %210 = vector.load %arg5[%c0_69, %c0_70] : memref<4x8xbf16, #tpu.memory_space<vmem>>, vector<4x8xbf16>
    %cst_71 = arith.constant dense<0.000000e+00> : vector<32x8xf32>
    %211 = tpu.matmul %209, %210, %cst_71 {dimension_numbers = #tpu.dot_dimension_numbers<[1], [0], [0], [1], [0, 0, 1, 1], [], []>} : vector<32x4xbf16>, vector<4x8xbf16>, vector<32x8xf32> -> vector<32x8xf32>
    %c4_72 = arith.constant 4 : index
    %c0_73 = arith.constant 0 : index
    %212 = vector.load %arg9[%c4_72, %c0_73] : memref<11x512xf32, #tpu.memory_space<vmem>>, vector<1x8xf32>
    %213 = vector.broadcast %212 : vector<1x8xf32> to vector<32x8xf32>
    %214 = arith.addf %211, %213 : vector<32x8xf32>
    %215 = arith.addf %214, %183 : vector<32x8xf32>
    %c0_74 = arith.constant 0 : index
    %c0_75 = arith.constant 0 : index
    %216 = vector.load %arg12[%c0_74, %c0_75] : memref<32x32xf32, #tpu.memory_space<vmem>>, vector<32x8xf32>
    tpu.vector_store %arg12[%c0_74, %c0_75], %154 {strides = array<i32>} : memref<32x32xf32, #tpu.memory_space<vmem>>, vector<32x8xf32>,
    %c0_76 = arith.constant 0 : index
    %c8_77 = arith.constant 8 : index
    %217 = vector.load %arg12[%c0_76, %c8_77] : memref<32x32xf32, #tpu.memory_space<vmem>>, vector<32x8xf32>
    tpu.vector_store %arg12[%c0_76, %c8_77], %167 {strides = array<i32>} : memref<32x32xf32, #tpu.memory_space<vmem>>, vector<32x8xf32>,
    %c0_78 = arith.constant 0 : index
    %c16_79 = arith.constant 16 : index
    %218 = vector.load %arg12[%c0_78, %c16_79] : memref<32x32xf32, #tpu.memory_space<vmem>>, vector<32x8xf32>
    tpu.vector_store %arg12[%c0_78, %c16_79], %180 {strides = array<i32>} : memref<32x32xf32, #tpu.memory_space<vmem>>, vector<32x8xf32>,
    %c0_80 = arith.constant 0 : index
    %c24 = arith.constant 24 : index
    %219 = vector.load %arg12[%c0_80, %c24] : memref<32x32xf32, #tpu.memory_space<vmem>>, vector<32x8xf32>
    tpu.vector_store %arg12[%c0_80, %c24], %215 {strides = array<i32>} : memref<32x32xf32, #tpu.memory_space<vmem>>, vector<32x8xf32>,
    %c0_81 = arith.constant 0 : index
    %c0_82 = arith.constant 0 : index
    %220 = vector.load %arg12[%c0_81, %c0_82] : memref<32x32xf32, #tpu.memory_space<vmem>>, vector<32x32xf32>
    %221 = vector.extract_strided_slice %220 {offsets = [31, 0], sizes = [1, 32], strides = [1, 1]} : vector<32x32xf32> to vector<1x32xf32>
    %222 = vector.extract_strided_slice %220 {offsets = [0, 0], sizes = [31, 32], strides = [1, 1]} : vector<32x32xf32> to vector<31x32xf32>
    %223 = tpu.concatenate %221, %222 in 0 : vector<1x32xf32>, vector<31x32xf32> -> vector<32x32xf32>
    %224 = vector.broadcast %17 : vector<32x1xf32> to vector<32x32xf32>
    %225 = arith.mulf %223, %224 : vector<32x32xf32>
    %226 = arith.truncf %225 : vector<32x32xf32> to vector<32x32xbf16>
    %c0_83 = arith.constant 0 : index
    %c0_84 = arith.constant 0 : index
    %227 = vector.load %arg13[%c0_83, %c0_84] : memref<32x96xbf16, #tpu.memory_space<vmem>>, vector<32x32xbf16>
    tpu.vector_store %arg13[%c0_83, %c0_84], %226 {strides = array<i32>} : memref<32x96xbf16, #tpu.memory_space<vmem>>, vector<32x32xbf16>,
    %228 = arith.truncf %220 : vector<32x32xf32> to vector<32x32xbf16>
    %c0_85 = arith.constant 0 : index
    %c32 = arith.constant 32 : index
    %229 = vector.load %arg13[%c0_85, %c32] : memref<32x96xbf16, #tpu.memory_space<vmem>>, vector<32x32xbf16>
    tpu.vector_store %arg13[%c0_85, %c32], %228 {strides = array<i32>} : memref<32x96xbf16, #tpu.memory_space<vmem>>, vector<32x32xbf16>,
    %230 = vector.extract_strided_slice %220 {offsets = [1, 0], sizes = [31, 32], strides = [1, 1]} : vector<32x32xf32> to vector<31x32xf32>
    %231 = vector.extract_strided_slice %220 {offsets = [0, 0], sizes = [1, 32], strides = [1, 1]} : vector<32x32xf32> to vector<1x32xf32>
    %232 = tpu.concatenate %230, %231 in 0 : vector<31x32xf32>, vector<1x32xf32> -> vector<32x32xf32>
    %233 = vector.broadcast %30 : vector<32x1xf32> to vector<32x32xf32>
    %234 = arith.mulf %232, %233 : vector<32x32xf32>
    %235 = arith.truncf %234 : vector<32x32xf32> to vector<32x32xbf16>
    %c0_86 = arith.constant 0 : index
    %c64 = arith.constant 64 : index
    %236 = vector.load %arg13[%c0_86, %c64] : memref<32x96xbf16, #tpu.memory_space<vmem>>, vector<32x32xbf16>
    tpu.vector_store %arg13[%c0_86, %c64], %235 {strides = array<i32>} : memref<32x96xbf16, #tpu.memory_space<vmem>>, vector<32x32xbf16>,
    %c0_87 = arith.constant 0 : index
    %c0_88 = arith.constant 0 : index
    %237 = vector.load %arg13[%c0_87, %c0_88] : memref<32x96xbf16, #tpu.memory_space<vmem>>, vector<32x96xbf16>
    %c0_89 = arith.constant 0 : index
    %c0_90 = arith.constant 0 : index
    %238 = vector.load %arg6[%c0_89, %c0_90] : memref<96x32xbf16, #tpu.memory_space<vmem>>, vector<96x32xbf16>
    %cst_91 = arith.constant dense<0.000000e+00> : vector<32x32xf32>
    %239 = tpu.matmul %237, %238, %cst_91 {dimension_numbers = #tpu.dot_dimension_numbers<[1], [0], [0], [1], [0, 0, 1, 1], [], []>} : vector<32x96xbf16>, vector<96x32xbf16>, vector<32x32xf32> -> vector<32x32xf32>
    %cst_92 = arith.constant 0.000000e+00 : f32
    %240 = vector.broadcast %cst_92 : f32 to vector<32x32xf32>
    %241 = arith.maximumf %239, %240 : vector<32x32xf32>
    %c5_93 = arith.constant 5 : index
    %c0_94 = arith.constant 0 : index
    %242 = vector.load %arg9[%c5_93, %c0_94] : memref<11x512xf32, #tpu.memory_space<vmem>>, vector<1x32xf32>
    %243 = vector.broadcast %242 : vector<1x32xf32> to vector<32x32xf32>
    %244 = arith.mulf %241, %243 : vector<32x32xf32>
    %c6 = arith.constant 6 : index
    %c0_95 = arith.constant 0 : index
    %245 = vector.load %arg9[%c6, %c0_95] : memref<11x512xf32, #tpu.memory_space<vmem>>, vector<1x32xf32>
    %246 = vector.broadcast %245 : vector<1x32xf32> to vector<32x32xf32>
    %247 = arith.addf %244, %246 : vector<32x32xf32>
    %248 = arith.addf %247, %0 : vector<32x32xf32>
    %249 = arith.truncf %248 : vector<32x32xf32> to vector<32x32xbf16>
    %c0_96 = arith.constant 0 : index
    %c0_97 = arith.constant 0 : index
    %250 = vector.load %arg7[%c0_96, %c0_97] : memref<32x512xbf16, #tpu.memory_space<vmem>>, vector<32x512xbf16>
    %cst_98 = arith.constant dense<0.000000e+00> : vector<32x512xf32>
    %251 = tpu.matmul %249, %250, %cst_98 {dimension_numbers = #tpu.dot_dimension_numbers<[1], [0], [0], [1], [0, 0, 1, 1], [], []>} : vector<32x32xbf16>, vector<32x512xbf16>, vector<32x512xf32> -> vector<32x512xf32>
    %c7 = arith.constant 7 : index
    %c0_99 = arith.constant 0 : index
    %252 = vector.load %arg9[%c7, %c0_99] : memref<11x512xf32, #tpu.memory_space<vmem>>, vector<1x512xf32>
    %253 = vector.broadcast %252 : vector<1x512xf32> to vector<32x512xf32>
    %254 = arith.addf %251, %253 : vector<32x512xf32>
    %cst_100 = arith.constant 0.000000e+00 : f32
    %255 = vector.broadcast %cst_100 : f32 to vector<32x512xf32>
    %256 = arith.maximumf %254, %255 : vector<32x512xf32>
    %257 = arith.truncf %256 : vector<32x512xf32> to vector<32x512xbf16>
    %c0_101 = arith.constant 0 : index
    %c0_102 = arith.constant 0 : index
    %258 = vector.load %arg8[%c0_101, %c0_102] : memref<512x128xbf16, #tpu.memory_space<vmem>>, vector<512x128xbf16>
    %cst_103 = arith.constant dense<0.000000e+00> : vector<32x128xf32>
    %259 = tpu.matmul %257, %258, %cst_103 {dimension_numbers = #tpu.dot_dimension_numbers<[1], [0], [0], [1], [0, 0, 1, 1], [], []>} : vector<32x512xbf16>, vector<512x128xbf16>, vector<32x128xf32> -> vector<32x128xf32>
    %c8_104 = arith.constant 8 : index
    %c0_105 = arith.constant 0 : index
    %260 = vector.load %arg9[%c8_104, %c0_105] : memref<11x512xf32, #tpu.memory_space<vmem>>, vector<1x128xf32>
    %261 = vector.broadcast %260 : vector<1x128xf32> to vector<32x128xf32>
    %262 = arith.addf %259, %261 : vector<32x128xf32>
    %cst_106 = arith.constant 0.000000e+00 : f32
    %263 = vector.broadcast %cst_106 : f32 to vector<32x128xf32>
    %264 = arith.maximumf %262, %263 : vector<32x128xf32>
    %c9 = arith.constant 9 : index
    %c0_107 = arith.constant 0 : index
    %265 = vector.load %arg9[%c9, %c0_107] : memref<11x512xf32, #tpu.memory_space<vmem>>, vector<1x128xf32>
    %266 = vector.broadcast %265 : vector<1x128xf32> to vector<32x128xf32>
    %267 = arith.mulf %264, %266 : vector<32x128xf32>
    %cst_108 = arith.constant dense<0.000000e+00> : vector<32xf32>
    %268 = vector.multi_reduction <add>, %267, %cst_108 [1] : vector<32x128xf32> to vector<32xf32>
    %269 = vector.shape_cast %268 : vector<32xf32> to vector<32x1xf32>
    %c10 = arith.constant 10 : index
    %c0_109 = arith.constant 0 : index
    %270 = vector.load %arg9[%c10, %c0_109] : memref<11x512xf32, #tpu.memory_space<vmem>>, vector<1x1xf32>
    %271 = vector.broadcast %270 : vector<1x1xf32> to vector<32x1xf32>
    %272 = arith.addf %269, %271 : vector<32x1xf32>
    %273 = arith.negf %272 : vector<32x1xf32>
    %274 = math.exp %273 : vector<32x1xf32>
    %cst_110 = arith.constant 1.000000e+00 : f32
    %275 = vector.broadcast %cst_110 : f32 to vector<32x1xf32>
    %276 = arith.addf %275, %274 : vector<32x1xf32>
    %277 = arith.divf %275, %276 : vector<32x1xf32>
    %278 = arith.mulf %248, %248 : vector<32x32xf32>
    %cst_111 = arith.constant dense<0.000000e+00> : vector<32xf32>
    %279 = vector.multi_reduction <add>, %278, %cst_111 [1] : vector<32x32xf32> to vector<32xf32>
    %280 = vector.shape_cast %279 : vector<32xf32> to vector<32x1xf32>
    %281 = math.sqrt %280 : vector<32x1xf32>
    %c0_112 = arith.constant 0 : index
    %c0_113 = arith.constant 0 : index
    %282 = vector.load %arg10[%c0_112, %c0_113] : memref<32x32xf32, #tpu.memory_space<vmem>>, vector<32x32xf32>
    tpu.vector_store %arg10[%c0_112, %c0_113], %248 {strides = array<i32>} : memref<32x32xf32, #tpu.memory_space<vmem>>, vector<32x32xf32>,
    %283 = tpu.iota {dimensions = array<i32: 1>} : vector<32x128xi32>
    %c0_i32_114 = arith.constant 0 : i32
    %284 = vector.broadcast %c0_i32_114 : i32 to vector<32x128xi32>
    %285 = arith.cmpi eq, %283, %284 : vector<32x128xi32>
    %c1_i32_115 = arith.constant 1 : i32
    %286 = vector.broadcast %c1_i32_115 : i32 to vector<32x128xi32>
    %287 = arith.cmpi eq, %283, %286 : vector<32x128xi32>
    %cst_116 = arith.constant 0.000000e+00 : f32
    %288 = vector.shape_cast %281 : vector<32x1xf32> to vector<32x1xf32>
    %289 = vector.broadcast %288 : vector<32x1xf32> to vector<32x128xf32>
    %290 = vector.broadcast %cst_116 : f32 to vector<32x128xf32>
    %291 = arith.select %287, %289, %290 : vector<32x128xi1>, vector<32x128xf32>
    %292 = vector.shape_cast %277 : vector<32x1xf32> to vector<32x1xf32>
    %293 = vector.broadcast %292 : vector<32x1xf32> to vector<32x128xf32>
    %294 = arith.select %285, %293, %291 : vector<32x128xi1>, vector<32x128xf32>
    %c0_117 = arith.constant 0 : index
    %c0_118 = arith.constant 0 : index
    %295 = vector.load %arg11[%c0_117, %c0_118] : memref<32x128xf32, #tpu.memory_space<vmem>>, vector<32x128xf32>
    tpu.vector_store %arg11[%c0_117, %c0_118], %294 {strides = array<i32>} : memref<32x128xf32, #tpu.memory_space<vmem>>, vector<32x128xf32>,
    return
  }
  func.func @transform_0(%arg0: i32) -> (i32, i32) {
    %c0_i32 = arith.constant 0 : i32
    %c0_i32_0 = arith.constant 0 : i32
    return %arg0, %c0_i32 : i32, i32
  }
  func.func @transform_1(%arg0: i32) -> (i32, i32) {
    %c0_i32 = arith.constant 0 : i32
    %c0_i32_0 = arith.constant 0 : i32
    %c0_i32_1 = arith.constant 0 : i32
    return %c0_i32, %c0_i32_0 : i32, i32
  }
  func.func @transform_2(%arg0: i32) -> (i32, i32, i32) {
    %c0_i32 = arith.constant 0 : i32
    %c0_i32_0 = arith.constant 0 : i32
    %c0_i32_1 = arith.constant 0 : i32
    %c0_i32_2 = arith.constant 0 : i32
    return %c0_i32, %c0_i32_0, %c0_i32_1 : i32, i32, i32
  }
  func.func @transform_3(%arg0: i32) -> (i32, i32) {
    %c0_i32 = arith.constant 0 : i32
    %c0_i32_0 = arith.constant 0 : i32
    %c0_i32_1 = arith.constant 0 : i32
    return %c0_i32, %c0_i32_0 : i32, i32
  }
  func.func @transform_4(%arg0: i32) -> (i32, i32) {
    %c0_i32 = arith.constant 0 : i32
    %c0_i32_0 = arith.constant 0 : i32
    %c0_i32_1 = arith.constant 0 : i32
    return %c0_i32, %c0_i32_0 : i32, i32
  }
  func.func @transform_5(%arg0: i32) -> (i32, i32) {
    %c0_i32 = arith.constant 0 : i32
    %c0_i32_0 = arith.constant 0 : i32
    %c0_i32_1 = arith.constant 0 : i32
    return %c0_i32, %c0_i32_0 : i32, i32
  }
  func.func @transform_6(%arg0: i32) -> (i32, i32) {
    %c0_i32 = arith.constant 0 : i32
    %c0_i32_0 = arith.constant 0 : i32
    %c0_i32_1 = arith.constant 0 : i32
    return %c0_i32, %c0_i32_0 : i32, i32
  }
  func.func @transform_7(%arg0: i32) -> (i32, i32) {
    %c0_i32 = arith.constant 0 : i32
    %c0_i32_0 = arith.constant 0 : i32
    %c0_i32_1 = arith.constant 0 : i32
    return %c0_i32, %c0_i32_0 : i32, i32
  }
  func.func @transform_8(%arg0: i32) -> (i32, i32) {
    %c0_i32 = arith.constant 0 : i32
    %c0_i32_0 = arith.constant 0 : i32
    %c0_i32_1 = arith.constant 0 : i32
    return %c0_i32, %c0_i32_0 : i32, i32
  }
  func.func @transform_9(%arg0: i32) -> (i32, i32) {
    %c0_i32 = arith.constant 0 : i32
    %c0_i32_0 = arith.constant 0 : i32
    return %arg0, %c0_i32 : i32, i32
  }
  func.func @transform_10(%arg0: i32) -> (i32, i32) {
    %c0_i32 = arith.constant 0 : i32
    %c0_i32_0 = arith.constant 0 : i32
    return %arg0, %c0_i32 : i32, i32
  }
}

module attributes {stable_mosaic.version = 11 : i64} {
  func.func @rtfm_kernel(%arg0: i32, %arg1: memref<32x32xf32, #tpu.memory_space<vmem>>, %arg2: memref<32x32xbf16, #tpu.memory_space<vmem>>, %arg3: memref<6x32x8xbf16, #tpu.memory_space<vmem>>, %arg4: memref<8x12xbf16, #tpu.memory_space<vmem>>, %arg5: memref<4x8xbf16, #tpu.memory_space<vmem>>, %arg6: memref<96x32xbf16, #tpu.memory_space<vmem>>, %arg7: memref<32x512xbf16, #tpu.memory_space<vmem>>, %arg8: memref<512x128xbf16, #tpu.memory_space<vmem>>, %arg9: memref<11x512xf32, #tpu.memory_space<vmem>>, %arg10: memref<32x32xf32, #tpu.memory_space<vmem>>, %arg11: memref<32x128xf32, #tpu.memory_space<vmem>>, %arg12: memref<32x32xf32, #tpu.memory_space<vmem>>, %arg13: memref<32x96xbf16, #tpu.memory_space<vmem>>) attributes {dimension_semantics = [#tpu.dimension_semantics<parallel>], iteration_bounds = array<i64: 2>, scalar_prefetch = 0 : i64, scratch_operands = 2 : i64, tpu.core_type = #tpu.core_type<tc>, window_params = [{transform_indices = @transform_0, window_bounds = array<i64: 32, 32>}, {pipeline_mode = #tpu.pipeline_mode<synchronous>, transform_indices = @transform_1, window_bounds = array<i64: 32, 32>}, {pipeline_mode = #tpu.pipeline_mode<synchronous>, transform_indices = @transform_2, window_bounds = array<i64: 6, 32, 8>}, {pipeline_mode = #tpu.pipeline_mode<synchronous>, transform_indices = @transform_3, window_bounds = array<i64: 8, 12>}, {pipeline_mode = #tpu.pipeline_mode<synchronous>, transform_indices = @transform_4, window_bounds = array<i64: 4, 8>}, {pipeline_mode = #tpu.pipeline_mode<synchronous>, transform_indices = @transform_5, window_bounds = array<i64: 96, 32>}, {pipeline_mode = #tpu.pipeline_mode<synchronous>, transform_indices = @transform_6, window_bounds = array<i64: 32, 512>}, {pipeline_mode = #tpu.pipeline_mode<synchronous>, transform_indices = @transform_7, window_bounds = array<i64: 512, 128>}, {pipeline_mode = #tpu.pipeline_mode<synchronous>, transform_indices = @transform_8, window_bounds = array<i64: 11, 512>}, {transform_indices = @transform_9, window_bounds = array<i64: 32, 32>}, {transform_indices = @transform_10, window_bounds = array<i64: 32, 128>}]} {
    %c0 = arith.constant 0 : index
    %c0_0 = arith.constant 0 : index
    %0 = vector.load %arg1[%c0, %c0_0] : memref<32x32xf32, #tpu.memory_space<vmem>>, vector<32x32xf32>
    %1 = arith.truncf %0 : vector<32x32xf32> to vector<32x32xbf16>
    %2 = tpu.iota {dimensions = array<i32: 0>} : vector<32x1xi32>
    %c4_i32 = arith.constant 4 : i32
    %3 = vector.broadcast %c4_i32 : i32 to vector<32x1xi32>
    %4 = arith.shrsi %2, %3 : vector<32x1xi32>
    %c-1_i32 = arith.constant -1 : i32
    %5 = vector.broadcast %c-1_i32 : i32 to vector<32x1xi32>
    %6 = arith.addi %2, %5 : vector<32x1xi32>
    %c4_i32_1 = arith.constant 4 : i32
    %7 = vector.broadcast %c4_i32_1 : i32 to vector<32x1xi32>
    %8 = arith.shrsi %6, %7 : vector<32x1xi32>
    %9 = arith.cmpi eq, %8, %4 : vector<32x1xi32>
    %c0_i32 = arith.constant 0 : i32
    %10 = vector.broadcast %c0_i32 : i32 to vector<32x1xi32>
    %11 = arith.cmpi sge, %6, %10 : vector<32x1xi32>
    %c32_i32 = arith.constant 32 : i32
    %12 = vector.broadcast %c32_i32 : i32 to vector<32x1xi32>
    %13 = arith.cmpi slt, %6, %12 : vector<32x1xi32>
    %14 = arith.andi %11, %13 : vector<32x1xi1>
    %15 = arith.andi %9, %14 : vector<32x1xi1>
    %16 = arith.extui %15 : vector<32x1xi1> to vector<32x1xi32>
    %17 = arith.sitofp %16 : vector<32x1xi32> to vector<32x1xf32>
    %c1_i32 = arith.constant 1 : i32
    %18 = vector.broadcast %c1_i32 : i32 to vector<32x1xi32>
    %19 = arith.addi %2, %18 : vector<32x1xi32>
    %c4_i32_2 = arith.constant 4 : i32
    %20 = vector.broadcast %c4_i32_2 : i32 to vector<32x1xi32>
    %21 = arith.shrsi %19, %20 : vector<32x1xi32>
    %22 = arith.cmpi eq, %21, %4 : vector<32x1xi32>
    %c0_i32_3 = arith.constant 0 : i32
    %23 = vector.broadcast %c0_i32_3 : i32 to vector<32x1xi32>
    %24 = arith.cmpi sge, %19, %23 : vector<32x1xi32>
    %c32_i32_4 = arith.constant 32 : i32
    %25 = vector.broadcast %c32_i32_4 : i32 to vector<32x1xi32>
    %26 = arith.cmpi slt, %19, %25 : vector<32x1xi32>
    %27 = arith.andi %24, %26 : vector<32x1xi1>
    %28 = arith.andi %22, %27 : vector<32x1xi1>
    %29 = arith.extui %28 : vector<32x1xi1> to vector<32x1xi32>
    %30 = arith.sitofp %29 : vector<32x1xi32> to vector<32x1xf32>
    %c-2_i32 = arith.constant -2 : i32
    %31 = vector.broadcast %c-2_i32 : i32 to vector<32x1xi32>
    %32 = arith.addi %2, %31 : vector<32x1xi32>
    %c4_i32_5 = arith.constant 4 : i32
    %33 = vector.broadcast %c4_i32_5 : i32 to vector<32x1xi32>
    %34 = arith.shrsi %32, %33 : vector<32x1xi32>
    %35 = arith.cmpi eq, %34, %4 : vector<32x1xi32>
    %c0_i32_6 = arith.constant 0 : i32
    %36 = vector.broadcast %c0_i32_6 : i32 to vector<32x1xi32>
    %37 = arith.cmpi sge, %32, %36 : vector<32x1xi32>
    %c32_i32_7 = arith.constant 32 : i32
    %38 = vector.broadcast %c32_i32_7 : i32 to vector<32x1xi32>
    %39 = arith.cmpi slt, %32, %38 : vector<32x1xi32>
    %40 = arith.andi %37, %39 : vector<32x1xi1>
    %41 = arith.andi %35, %40 : vector<32x1xi1>
    %42 = arith.extui %41 : vector<32x1xi1> to vector<32x1xi32>
    %43 = arith.sitofp %42 : vector<32x1xi32> to vector<32x1xf32>
    %c2_i32 = arith.constant 2 : i32
    %44 = vector.broadcast %c2_i32 : i32 to vector<32x1xi32>
    %45 = arith.addi %2, %44 : vector<32x1xi32>
    %c4_i32_8 = arith.constant 4 : i32
    %46 = vector.broadcast %c4_i32_8 : i32 to vector<32x1xi32>
    %47 = arith.shrsi %45, %46 : vector<32x1xi32>
    %48 = arith.cmpi eq, %47, %4 : vector<32x1xi32>
    %c0_i32_9 = arith.constant 0 : i32
    %49 = vector.broadcast %c0_i32_9 : i32 to vector<32x1xi32>
    %50 = arith.cmpi sge, %45, %49 : vector<32x1xi32>
    %c32_i32_10 = arith.constant 32 : i32
    %51 = vector.broadcast %c32_i32_10 : i32 to vector<32x1xi32>
    %52 = arith.cmpi slt, %45, %51 : vector<32x1xi32>
    %53 = arith.andi %50, %52 : vector<32x1xi1>
    %54 = arith.andi %48, %53 : vector<32x1xi1>
    %55 = arith.extui %54 : vector<32x1xi1> to vector<32x1xi32>
    %56 = arith.sitofp %55 : vector<32x1xi32> to vector<32x1xf32>
    %c-4_i32 = arith.constant -4 : i32
    %57 = vector.broadcast %c-4_i32 : i32 to vector<32x1xi32>
    %58 = arith.addi %2, %57 : vector<32x1xi32>
    %c4_i32_11 = arith.constant 4 : i32
    %59 = vector.broadcast %c4_i32_11 : i32 to vector<32x1xi32>
    %60 = arith.shrsi %58, %59 : vector<32x1xi32>
    %61 = arith.cmpi eq, %60, %4 : vector<32x1xi32>
    %c0_i32_12 = arith.constant 0 : i32
    %62 = vector.broadcast %c0_i32_12 : i32 to vector<32x1xi32>
    %63 = arith.cmpi sge, %58, %62 : vector<32x1xi32>
    %c32_i32_13 = arith.constant 32 : i32
    %64 = vector.broadcast %c32_i32_13 : i32 to vector<32x1xi32>
    %65 = arith.cmpi slt, %58, %64 : vector<32x1xi32>
    %66 = arith.andi %63, %65 : vector<32x1xi1>
    %67 = arith.andi %61, %66 : vector<32x1xi1>
    %68 = arith.extui %67 : vector<32x1xi1> to vector<32x1xi32>
    %69 = arith.sitofp %68 : vector<32x1xi32> to vector<32x1xf32>
    %c4_i32_14 = arith.constant 4 : i32
    %70 = vector.broadcast %c4_i32_14 : i32 to vector<32x1xi32>
    %71 = arith.addi %2, %70 : vector<32x1xi32>
    %c4_i32_15 = arith.constant 4 : i32
    %72 = vector.broadcast %c4_i32_15 : i32 to vector<32x1xi32>
    %73 = arith.shrsi %71, %72 : vector<32x1xi32>
    %74 = arith.cmpi eq, %73, %4 : vector<32x1xi32>
    %c0_i32_16 = arith.constant 0 : i32
    %75 = vector.broadcast %c0_i32_16 : i32 to vector<32x1xi32>
    %76 = arith.cmpi sge, %71, %75 : vector<32x1xi32>
    %c32_i32_17 = arith.constant 32 : i32
    %77 = vector.broadcast %c32_i32_17 : i32 to vector<32x1xi32>
    %78 = arith.cmpi slt, %71, %77 : vector<32x1xi32>
    %79 = arith.andi %76, %78 : vector<32x1xi1>
    %80 = arith.andi %74, %79 : vector<32x1xi1>
    %81 = arith.extui %80 : vector<32x1xi1> to vector<32x1xi32>
    %82 = arith.sitofp %81 : vector<32x1xi32> to vector<32x1xf32>
    %c0_18 = arith.constant 0 : index
    %c0_19 = arith.constant 0 : index
    %83 = vector.load %arg2[%c0_18, %c0_19] : memref<32x32xbf16, #tpu.memory_space<vmem>>, vector<32x32xbf16>
    %cst = arith.constant dense<0.000000e+00> : vector<32x32xf32>
    %84 = tpu.matmul %1, %83, %cst {dimension_numbers = #tpu.dot_dimension_numbers<[1], [0], [0], [1], [0, 0, 1, 1], [], []>} : vector<32x32xbf16>, vector<32x32xbf16>, vector<32x32xf32> -> vector<32x32xf32>
    %85 = vector.extract_strided_slice %0 {offsets = [31, 0], sizes = [1, 32], strides = [1, 1]} : vector<32x32xf32> to vector<1x32xf32>
    %86 = vector.extract_strided_slice %0 {offsets = [0, 0], sizes = [31, 32], strides = [1, 1]} : vector<32x32xf32> to vector<31x32xf32>
    %87 = tpu.concatenate %85, %86 in 0 : vector<1x32xf32>, vector<31x32xf32> -> vector<32x32xf32>
    %88 = vector.broadcast %17 : vector<32x1xf32> to vector<32x32xf32>
    %89 = arith.mulf %87, %88 : vector<32x32xf32>
    %90 = arith.truncf %89 : vector<32x32xf32> to vector<32x32xbf16>
    %c0_20 = arith.constant 0 : index
    %c0_21 = arith.constant 0 : index
    %c0_22 = arith.constant 0 : index
    %91 = vector.load %arg3[%c0_20, %c0_21, %c0_22] : memref<6x32x8xbf16, #tpu.memory_space<vmem>>, vector<1x32x8xbf16>
    %92 = vector.shape_cast %91 : vector<1x32x8xbf16> to vector<32x8xbf16>
    %cst_23 = arith.constant dense<0.000000e+00> : vector<32x8xf32>
    %93 = tpu.matmul %90, %92, %cst_23 {dimension_numbers = #tpu.dot_dimension_numbers<[1], [0], [0], [1], [0, 0, 1, 1], [], []>} : vector<32x32xbf16>, vector<32x8xbf16>, vector<32x8xf32> -> vector<32x8xf32>
    %94 = vector.extract_strided_slice %0 {offsets = [1, 0], sizes = [31, 32], strides = [1, 1]} : vector<32x32xf32> to vector<31x32xf32>
    %95 = vector.extract_strided_slice %0 {offsets = [0, 0], sizes = [1, 32], strides = [1, 1]} : vector<32x32xf32> to vector<1x32xf32>
    %96 = tpu.concatenate %94, %95 in 0 : vector<31x32xf32>, vector<1x32xf32> -> vector<32x32xf32>
    %97 = vector.broadcast %30 : vector<32x1xf32> to vector<32x32xf32>
    %98 = arith.mulf %96, %97 : vector<32x32xf32>
    %99 = arith.truncf %98 : vector<32x32xf32> to vector<32x32xbf16>
    %c1 = arith.constant 1 : index
    %c0_24 = arith.constant 0 : index
    %c0_25 = arith.constant 0 : index
    %100 = vector.load %arg3[%c1, %c0_24, %c0_25] : memref<6x32x8xbf16, #tpu.memory_space<vmem>>, vector<1x32x8xbf16>
    %101 = vector.shape_cast %100 : vector<1x32x8xbf16> to vector<32x8xbf16>
    %cst_26 = arith.constant dense<0.000000e+00> : vector<32x8xf32>
    %102 = tpu.matmul %99, %101, %cst_26 {dimension_numbers = #tpu.dot_dimension_numbers<[1], [0], [0], [1], [0, 0, 1, 1], [], []>} : vector<32x32xbf16>, vector<32x8xbf16>, vector<32x8xf32> -> vector<32x8xf32>
    %103 = arith.addf %93, %102 : vector<32x8xf32>
    %104 = vector.extract_strided_slice %0 {offsets = [30, 0], sizes = [2, 32], strides = [1, 1]} : vector<32x32xf32> to vector<2x32xf32>
    %105 = vector.extract_strided_slice %0 {offsets = [0, 0], sizes = [30, 32], strides = [1, 1]} : vector<32x32xf32> to vector<30x32xf32>
    %106 = tpu.concatenate %104, %105 in 0 : vector<2x32xf32>, vector<30x32xf32> -> vector<32x32xf32>
    %107 = vector.broadcast %43 : vector<32x1xf32> to vector<32x32xf32>
    %108 = arith.mulf %106, %107 : vector<32x32xf32>
    %109 = arith.truncf %108 : vector<32x32xf32> to vector<32x32xbf16>
    %c2 = arith.constant 2 : index
    %c0_27 = arith.constant 0 : index
    %c0_28 = arith.constant 0 : index
    %110 = vector.load %arg3[%c2, %c0_27, %c0_28] : memref<6x32x8xbf16, #tpu.memory_space<vmem>>, vector<1x32x8xbf16>
    %111 = vector.shape_cast %110 : vector<1x32x8xbf16> to vector<32x8xbf16>
    %cst_29 = arith.constant dense<0.000000e+00> : vector<32x8xf32>
    %112 = tpu.matmul %109, %111, %cst_29 {dimension_numbers = #tpu.dot_dimension_numbers<[1], [0], [0], [1], [0, 0, 1, 1], [], []>} : vector<32x32xbf16>, vector<32x8xbf16>, vector<32x8xf32> -> vector<32x8xf32>
    %113 = vector.extract_strided_slice %0 {offsets = [2, 0], sizes = [30, 32], strides = [1, 1]} : vector<32x32xf32> to vector<30x32xf32>
    %114 = vector.extract_strided_slice %0 {offsets = [0, 0], sizes = [2, 32], strides = [1, 1]} : vector<32x32xf32> to vector<2x32xf32>
    %115 = tpu.concatenate %113, %114 in 0 : vector<30x32xf32>, vector<2x32xf32> -> vector<32x32xf32>
    %116 = vector.broadcast %56 : vector<32x1xf32> to vector<32x32xf32>
    %117 = arith.mulf %115, %116 : vector<32x32xf32>
    %118 = arith.truncf %117 : vector<32x32xf32> to vector<32x32xbf16>
    %c3 = arith.constant 3 : index
    %c0_30 = arith.constant 0 : index
    %c0_31 = arith.constant 0 : index
    %119 = vector.load %arg3[%c3, %c0_30, %c0_31] : memref<6x32x8xbf16, #tpu.memory_space<vmem>>, vector<1x32x8xbf16>
    %120 = vector.shape_cast %119 : vector<1x32x8xbf16> to vector<32x8xbf16>
    %cst_32 = arith.constant dense<0.000000e+00> : vector<32x8xf32>
    %121 = tpu.matmul %118, %120, %cst_32 {dimension_numbers = #tpu.dot_dimension_numbers<[1], [0], [0], [1], [0, 0, 1, 1], [], []>} : vector<32x32xbf16>, vector<32x8xbf16>, vector<32x8xf32> -> vector<32x8xf32>
    %122 = arith.addf %112, %121 : vector<32x8xf32>
    %123 = vector.extract_strided_slice %0 {offsets = [28, 0], sizes = [4, 32], strides = [1, 1]} : vector<32x32xf32> to vector<4x32xf32>
    %124 = vector.extract_strided_slice %0 {offsets = [0, 0], sizes = [28, 32], strides = [1, 1]} : vector<32x32xf32> to vector<28x32xf32>
    %125 = tpu.concatenate %123, %124 in 0 : vector<4x32xf32>, vector<28x32xf32> -> vector<32x32xf32>
    %126 = vector.broadcast %69 : vector<32x1xf32> to vector<32x32xf32>
    %127 = arith.mulf %125, %126 : vector<32x32xf32>
    %128 = arith.truncf %127 : vector<32x32xf32> to vector<32x32xbf16>
    %c4 = arith.constant 4 : index
    %c0_33 = arith.constant 0 : index
    %c0_34 = arith.constant 0 : index
    %129 = vector.load %arg3[%c4, %c0_33, %c0_34] : memref<6x32x8xbf16, #tpu.memory_space<vmem>>, vector<1x32x8xbf16>
    %130 = vector.shape_cast %129 : vector<1x32x8xbf16> to vector<32x8xbf16>
    %cst_35 = arith.constant dense<0.000000e+00> : vector<32x8xf32>
    %131 = tpu.matmul %128, %130, %cst_35 {dimension_numbers = #tpu.dot_dimension_numbers<[1], [0], [0], [1], [0, 0, 1, 1], [], []>} : vector<32x32xbf16>, vector<32x8xbf16>, vector<32x8xf32> -> vector<32x8xf32>
    %132 = vector.extract_strided_slice %0 {offsets = [4, 0], sizes = [28, 32], strides = [1, 1]} : vector<32x32xf32> to vector<28x32xf32>
    %133 = vector.extract_strided_slice %0 {offsets = [0, 0], sizes = [4, 32], strides = [1, 1]} : vector<32x32xf32> to vector<4x32xf32>
    %134 = tpu.concatenate %132, %133 in 0 : vector<28x32xf32>, vector<4x32xf32> -> vector<32x32xf32>
    %135 = vector.broadcast %82 : vector<32x1xf32> to vector<32x32xf32>
    %136 = arith.mulf %134, %135 : vector<32x32xf32>
    %137 = arith.truncf %136 : vector<32x32xf32> to vector<32x32xbf16>
    %c5 = arith.constant 5 : index
    %c0_36 = arith.constant 0 : index
    %c0_37 = arith.constant 0 : index
    %138 = vector.load %arg3[%c5, %c0_36, %c0_37] : memref<6x32x8xbf16, #tpu.memory_space<vmem>>, vector<1x32x8xbf16>
    %139 = vector.shape_cast %138 : vector<1x32x8xbf16> to vector<32x8xbf16>
    %cst_38 = arith.constant dense<0.000000e+00> : vector<32x8xf32>
    %140 = tpu.matmul %137, %139, %cst_38 {dimension_numbers = #tpu.dot_dimension_numbers<[1], [0], [0], [1], [0, 0, 1, 1], [], []>} : vector<32x32xbf16>, vector<32x8xbf16>, vector<32x8xf32> -> vector<32x8xf32>
    %141 = arith.addf %131, %140 : vector<32x8xf32>
    %142 = vector.extract_strided_slice %84 {offsets = [0, 0], sizes = [32, 8], strides = [1, 1]} : vector<32x32xf32> to vector<32x8xf32>
    %143 = arith.addf %142, %103 : vector<32x8xf32>
    %c0_39 = arith.constant 0 : index
    %c0_40 = arith.constant 0 : index
    %144 = vector.load %arg9[%c0_39, %c0_40] : memref<11x512xf32, #tpu.memory_space<vmem>>, vector<1x8xf32>
    %145 = vector.broadcast %144 : vector<1x8xf32> to vector<32x8xf32>
    %146 = arith.addf %143, %145 : vector<32x8xf32>
    %cst_41 = arith.constant 0.000000e+00 : f32
    %147 = vector.broadcast %cst_41 : f32 to vector<32x8xf32>
    %148 = arith.maximumf %146, %147 : vector<32x8xf32>
    %c1_42 = arith.constant 1 : index
    %c0_43 = arith.constant 0 : index
    %149 = vector.load %arg9[%c1_42, %c0_43] : memref<11x512xf32, #tpu.memory_space<vmem>>, vector<1x8xf32>
    %150 = vector.broadcast %149 : vector<1x8xf32> to vector<32x8xf32>
    %151 = arith.mulf %148, %150 : vector<32x8xf32>
    %c2_44 = arith.constant 2 : index
    %c0_45 = arith.constant 0 : index
    %152 = vector.load %arg9[%c2_44, %c0_45] : memref<11x512xf32, #tpu.memory_space<vmem>>, vector<1x8xf32>
    %153 = vector.broadcast %152 : vector<1x8xf32> to vector<32x8xf32>
    %154 = arith.addf %151, %153 : vector<32x8xf32>
    %155 = vector.extract_strided_slice %84 {offsets = [0, 8], sizes = [32, 8], strides = [1, 1]} : vector<32x32xf32> to vector<32x8xf32>
    %156 = arith.addf %155, %122 : vector<32x8xf32>
    %c0_46 = arith.constant 0 : index
    %c8 = arith.constant 8 : index
    %157 = vector.load %arg9[%c0_46, %c8] : memref<11x512xf32, #tpu.memory_space<vmem>>, vector<1x8xf32>
    %158 = vector.broadcast %157 : vector<1x8xf32> to vector<32x8xf32>
    %159 = arith.addf %156, %158 : vector<32x8xf32>
    %cst_47 = arith.constant 0.000000e+00 : f32
    %160 = vector.broadcast %cst_47 : f32 to vector<32x8xf32>
    %161 = arith.maximumf %159, %160 : vector<32x8xf32>
    %c1_48 = arith.constant 1 : index
    %c8_49 = arith.constant 8 : index
    %162 = vector.load %arg9[%c1_48, %c8_49] : memref<11x512xf32, #tpu.memory_space<vmem>>, vector<1x8xf32>
    %163 = vector.broadcast %162 : vector<1x8xf32> to vector<32x8xf32>
    %164 = arith.mulf %161, %163 : vector<32x8xf32>
    %c2_50 = arith.constant 2 : index
    %c8_51 = arith.constant 8 : index
    %165 = vector.load %arg9[%c2_50, %c8_51] : memref<11x512xf32, #tpu.memory_space<vmem>>, vector<1x8xf32>
    %166 = vector.broadcast %165 : vector<1x8xf32> to vector<32x8xf32>
    %167 = arith.addf %164, %166 : vector<32x8xf32>
    %168 = vector.extract_strided_slice %84 {offsets = [0, 16], sizes = [32, 8], strides = [1, 1]} : vector<32x32xf32> to vector<32x8xf32>
    %169 = arith.addf %168, %141 : vector<32x8xf32>
    %c0_52 = arith.constant 0 : index
    %c16 = arith.constant 16 : index
    %170 = vector.load %arg9[%c0_52, %c16] : memref<11x512xf32, #tpu.memory_space<vmem>>, vector<1x8xf32>
    %171 = vector.broadcast %170 : vector<1x8xf32> to vector<32x8xf32>
    %172 = arith.addf %169, %171 : vector<32x8xf32>
    %cst_53 = arith.constant 0.000000e+00 : f32
    %173 = vector.broadcast %cst_53 : f32 to vector<32x8xf32>
    %174 = arith.maximumf %172, %173 : vector<32x8xf32>
    %c1_54 = arith.constant 1 : index
    %c16_55 = arith.constant 16 : index
    %175 = vector.load %arg9[%c1_54, %c16_55] : memref<11x512xf32, #tpu.memory_space<vmem>>, vector<1x8xf32>
    %176 = vector.broadcast %175 : vector<1x8xf32> to vector<32x8xf32>
    %177 = arith.mulf %174, %176 : vector<32x8xf32>
    %c2_56 = arith.constant 2 : index
    %c16_57 = arith.constant 16 : index
    %178 = vector.load %arg9[%c2_56, %c16_57] : memref<11x512xf32, #tpu.memory_space<vmem>>, vector<1x8xf32>
    %179 = vector.broadcast %178 : vector<1x8xf32> to vector<32x8xf32>
    %180 = arith.addf %177, %179 : vector<32x8xf32>
    %181 = vector.extract_strided_slice %84 {offsets = [0, 24], sizes = [32, 8], strides = [1, 1]} : vector<32x32xf32> to vector<32x8xf32>
    %cst_58 = arith.constant 0.000000e+00 : f32
    %182 = vector.broadcast %cst_58 : f32 to vector<32x8xf32>
    %183 = arith.maximumf %181, %182 : vector<32x8xf32>
    %184 = arith.truncf %183 : vector<32x8xf32> to vector<32x8xbf16>
    %c0_59 = arith.constant 0 : index
    %c0_60 = arith.constant 0 : index
    %185 = vector.load %arg4[%c0_59, %c0_60] : memref<8x12xbf16, #tpu.memory_space<vmem>>, vector<8x12xbf16>
    %cst_61 = arith.constant dense<0.000000e+00> : vector<32x12xf32>
    %186 = tpu.matmul %184, %185, %cst_61 {dimension_numbers = #tpu.dot_dimension_numbers<[1], [0], [0], [1], [0, 0, 1, 1], [], []>} : vector<32x8xbf16>, vector<8x12xbf16>, vector<32x12xf32> -> vector<32x12xf32>
    %c3_62 = arith.constant 3 : index
    %c0_63 = arith.constant 0 : index
    %187 = vector.load %arg9[%c3_62, %c0_63] : memref<11x512xf32, #tpu.memory_space<vmem>>, vector<1x12xf32>
    %188 = vector.broadcast %187 : vector<1x12xf32> to vector<32x12xf32>
    %189 = arith.addf %186, %188 : vector<32x12xf32>
    %190 = vector.extract_strided_slice %189 {offsets = [0, 0], sizes = [32, 4], strides = [1, 1]} : vector<32x12xf32> to vector<32x4xf32>
    %191 = vector.extract_strided_slice %189 {offsets = [0, 4], sizes = [32, 4], strides = [1, 1]} : vector<32x12xf32> to vector<32x4xf32>
    %192 = vector.extract_strided_slice %189 {offsets = [0, 8], sizes = [32, 4], strides = [1, 1]} : vector<32x12xf32> to vector<32x4xf32>
    %193 = tpu.iota {dimensions = array<i32: 1>} : vector<1x32xi32>
    %c4_i32_64 = arith.constant 4 : i32
    %194 = vector.broadcast %c4_i32_64 : i32 to vector<1x32xi32>
    %195 = arith.shrsi %193, %194 : vector<1x32xi32>
    %196 = vector.broadcast %4 : vector<32x1xi32> to vector<32x32xi32>
    %197 = vector.broadcast %195 : vector<1x32xi32> to vector<32x32xi32>
    %198 = arith.cmpi eq, %196, %197 : vector<32x32xi32>
    %199 = arith.truncf %191 : vector<32x4xf32> to vector<32x4xbf16>
    %200 = arith.truncf %192 : vector<32x4xf32> to vector<32x4xbf16>
    %cst_65 = arith.constant dense<0.000000e+00> : vector<32x32xf32>
    %201 = tpu.matmul %199, %200, %cst_65 {dimension_numbers = #tpu.dot_dimension_numbers<[1], [1], [0], [0], [0, 0, 1, 0], [], []>} : vector<32x4xbf16>, vector<32x4xbf16>, vector<32x32xf32> -> vector<32x32xf32>
    %cst_66 = arith.constant 6.250000e-02 : f32
    %202 = vector.broadcast %cst_66 : f32 to vector<32x32xf32>
    %203 = arith.mulf %201, %202 : vector<32x32xf32>
    %cst_67 = arith.constant 0.000000e+00 : f32
    %204 = vector.broadcast %cst_67 : f32 to vector<32x32xf32>
    %205 = arith.select %198, %203, %204 : vector<32x32xi1>, vector<32x32xf32>
    %206 = arith.truncf %205 : vector<32x32xf32> to vector<32x32xbf16>
    %207 = arith.truncf %190 : vector<32x4xf32> to vector<32x4xbf16>
    %cst_68 = arith.constant dense<0.000000e+00> : vector<32x4xf32>
    %208 = tpu.matmul %206, %207, %cst_68 {dimension_numbers = #tpu.dot_dimension_numbers<[1], [0], [0], [1], [0, 0, 1, 1], [], []>} : vector<32x32xbf16>, vector<32x4xbf16>, vector<32x4xf32> -> vector<32x4xf32>
    %209 = arith.truncf %208 : vector<32x4xf32> to vector<32x4xbf16>
    %c0_69 = arith.constant 0 : index
    %c0_70 = arith.constant 0 : index
    %210 = vector.load %arg5[%c0_69, %c0_70] : memref<4x8xbf16, #tpu.memory_space<vmem>>, vector<4x8xbf16>
    %cst_71 = arith.constant dense<0.000000e+00> : vector<32x8xf32>
    %211 = tpu.matmul %209, %210, %cst_71 {dimension_numbers = #tpu.dot_dimension_numbers<[1], [0], [0], [1], [0, 0, 1, 1], [], []>} : vector<32x4xbf16>, vector<4x8xbf16>, vector<32x8xf32> -> vector<32x8xf32>
    %c4_72 = arith.constant 4 : index
    %c0_73 = arith.constant 0 : index
    %212 = vector.load %arg9[%c4_72, %c0_73] : memref<11x512xf32, #tpu.memory_space<vmem>>, vector<1x8xf32>
    %213 = vector.broadcast %212 : vector<1x8xf32> to vector<32x8xf32>
    %214 = arith.addf %211, %213 : vector<32x8xf32>
    %215 = arith.addf %214, %183 : vector<32x8xf32>
    %c0_74 = arith.constant 0 : index
    %c0_75 = arith.constant 0 : index
    %216 = vector.load %arg12[%c0_74, %c0_75] : memref<32x32xf32, #tpu.memory_space<vmem>>, vector<32x8xf32>
    tpu.vector_store %arg12[%c0_74, %c0_75], %154 {strides = array<i32>} : memref<32x32xf32, #tpu.memory_space<vmem>>, vector<32x8xf32>,
    %c0_76 = arith.constant 0 : index
    %c8_77 = arith.constant 8 : index
    %217 = vector.load %arg12[%c0_76, %c8_77] : memref<32x32xf32, #tpu.memory_space<vmem>>, vector<32x8xf32>
    tpu.vector_store %arg12[%c0_76, %c8_77], %167 {strides = array<i32>} : memref<32x32xf32, #tpu.memory_space<vmem>>, vector<32x8xf32>,
    %c0_78 = arith.constant 0 : index
    %c16_79 = arith.constant 16 : index
    %218 = vector.load %arg12[%c0_78, %c16_79] : memref<32x32xf32, #tpu.memory_space<vmem>>, vector<32x8xf32>
    tpu.vector_store %arg12[%c0_78, %c16_79], %180 {strides = array<i32>} : memref<32x32xf32, #tpu.memory_space<vmem>>, vector<32x8xf32>,
    %c0_80 = arith.constant 0 : index
    %c24 = arith.constant 24 : index
    %219 = vector.load %arg12[%c0_80, %c24] : memref<32x32xf32, #tpu.memory_space<vmem>>, vector<32x8xf32>
    tpu.vector_store %arg12[%c0_80, %c24], %215 {strides = array<i32>} : memref<32x32xf32, #tpu.memory_space<vmem>>, vector<32x8xf32>,
    %c0_81 = arith.constant 0 : index
    %c0_82 = arith.constant 0 : index
    %220 = vector.load %arg12[%c0_81, %c0_82] : memref<32x32xf32, #tpu.memory_space<vmem>>, vector<32x32xf32>
    %221 = vector.extract_strided_slice %220 {offsets = [31, 0], sizes = [1, 32], strides = [1, 1]} : vector<32x32xf32> to vector<1x32xf32>
    %222 = vector.extract_strided_slice %220 {offsets = [0, 0], sizes = [31, 32], strides = [1, 1]} : vector<32x32xf32> to vector<31x32xf32>
    %223 = tpu.concatenate %221, %222 in 0 : vector<1x32xf32>, vector<31x32xf32> -> vector<32x32xf32>
    %224 = vector.broadcast %17 : vector<32x1xf32> to vector<32x32xf32>
    %225 = arith.mulf %223, %224 : vector<32x32xf32>
    %226 = arith.truncf %225 : vector<32x32xf32> to vector<32x32xbf16>
    %c0_83 = arith.constant 0 : index
    %c0_84 = arith.constant 0 : index
    %227 = vector.load %arg13[%c0_83, %c0_84] : memref<32x96xbf16, #tpu.memory_space<vmem>>, vector<32x32xbf16>
    tpu.vector_store %arg13[%c0_83, %c0_84], %226 {strides = array<i32>} : memref<32x96xbf16, #tpu.memory_space<vmem>>, vector<32x32xbf16>,
    %228 = arith.truncf %220 : vector<32x32xf32> to vector<32x32xbf16>
    %c0_85 = arith.constant 0 : index
    %c32 = arith.constant 32 : index
    %229 = vector.load %arg13[%c0_85, %c32] : memref<32x96xbf16, #tpu.memory_space<vmem>>, vector<32x32xbf16>
    tpu.vector_store %arg13[%c0_85, %c32], %228 {strides = array<i32>} : memref<32x96xbf16, #tpu.memory_space<vmem>>, vector<32x32xbf16>,
    %230 = vector.extract_strided_slice %220 {offsets = [1, 0], sizes = [31, 32], strides = [1, 1]} : vector<32x32xf32> to vector<31x32xf32>
    %231 = vector.extract_strided_slice %220 {offsets = [0, 0], sizes = [1, 32], strides = [1, 1]} : vector<32x32xf32> to vector<1x32xf32>
    %232 = tpu.concatenate %230, %231 in 0 : vector<31x32xf32>, vector<1x32xf32> -> vector<32x32xf32>
    %233 = vector.broadcast %30 : vector<32x1xf32> to vector<32x32xf32>
    %234 = arith.mulf %232, %233 : vector<32x32xf32>
    %235 = arith.truncf %234 : vector<32x32xf32> to vector<32x32xbf16>
    %c0_86 = arith.constant 0 : index
    %c64 = arith.constant 64 : index
    %236 = vector.load %arg13[%c0_86, %c64] : memref<32x96xbf16, #tpu.memory_space<vmem>>, vector<32x32xbf16>
    tpu.vector_store %arg13[%c0_86, %c64], %235 {strides = array<i32>} : memref<32x96xbf16, #tpu.memory_space<vmem>>, vector<32x32xbf16>,
    %c0_87 = arith.constant 0 : index
    %c0_88 = arith.constant 0 : index
    %237 = vector.load %arg13[%c0_87, %c0_88] : memref<32x96xbf16, #tpu.memory_space<vmem>>, vector<32x96xbf16>
    %c0_89 = arith.constant 0 : index
    %c0_90 = arith.constant 0 : index
    %238 = vector.load %arg6[%c0_89, %c0_90] : memref<96x32xbf16, #tpu.memory_space<vmem>>, vector<96x32xbf16>
    %cst_91 = arith.constant dense<0.000000e+00> : vector<32x32xf32>
    %239 = tpu.matmul %237, %238, %cst_91 {dimension_numbers = #tpu.dot_dimension_numbers<[1], [0], [0], [1], [0, 0, 1, 1], [], []>} : vector<32x96xbf16>, vector<96x32xbf16>, vector<32x32xf32> -> vector<32x32xf32>
    %cst_92 = arith.constant 0.000000e+00 : f32
    %240 = vector.broadcast %cst_92 : f32 to vector<32x32xf32>
    %241 = arith.maximumf %239, %240 : vector<32x32xf32>
    %c5_93 = arith.constant 5 : index
    %c0_94 = arith.constant 0 : index
    %242 = vector.load %arg9[%c5_93, %c0_94] : memref<11x512xf32, #tpu.memory_space<vmem>>, vector<1x32xf32>
    %243 = vector.broadcast %242 : vector<1x32xf32> to vector<32x32xf32>
    %244 = arith.mulf %241, %243 : vector<32x32xf32>
    %c6 = arith.constant 6 : index
    %c0_95 = arith.constant 0 : index
    %245 = vector.load %arg9[%c6, %c0_95] : memref<11x512xf32, #tpu.memory_space<vmem>>, vector<1x32xf32>
    %246 = vector.broadcast %245 : vector<1x32xf32> to vector<32x32xf32>
    %247 = arith.addf %244, %246 : vector<32x32xf32>
    %248 = arith.addf %247, %0 : vector<32x32xf32>
    %249 = arith.truncf %248 : vector<32x32xf32> to vector<32x32xbf16>
    %c0_96 = arith.constant 0 : index
    %c0_97 = arith.constant 0 : index
    %250 = vector.load %arg7[%c0_96, %c0_97] : memref<32x512xbf16, #tpu.memory_space<vmem>>, vector<32x512xbf16>
    %cst_98 = arith.constant dense<0.000000e+00> : vector<32x512xf32>
    %251 = tpu.matmul %249, %250, %cst_98 {dimension_numbers = #tpu.dot_dimension_numbers<[1], [0], [0], [1], [0, 0, 1, 1], [], []>} : vector<32x32xbf16>, vector<32x512xbf16>, vector<32x512xf32> -> vector<32x512xf32>
    %c7 = arith.constant 7 : index
    %c0_99 = arith.constant 0 : index
    %252 = vector.load %arg9[%c7, %c0_99] : memref<11x512xf32, #tpu.memory_space<vmem>>, vector<1x512xf32>
    %253 = vector.broadcast %252 : vector<1x512xf32> to vector<32x512xf32>
    %254 = arith.addf %251, %253 : vector<32x512xf32>
    %cst_100 = arith.constant 0.000000e+00 : f32
    %255 = vector.broadcast %cst_100 : f32 to vector<32x512xf32>
    %256 = arith.maximumf %254, %255 : vector<32x512xf32>
    %257 = arith.truncf %256 : vector<32x512xf32> to vector<32x512xbf16>
    %c0_101 = arith.constant 0 : index
    %c0_102 = arith.constant 0 : index
    %258 = vector.load %arg8[%c0_101, %c0_102] : memref<512x128xbf16, #tpu.memory_space<vmem>>, vector<512x128xbf16>
    %cst_103 = arith.constant dense<0.000000e+00> : vector<32x128xf32>
    %259 = tpu.matmul %257, %258, %cst_103 {dimension_numbers = #tpu.dot_dimension_numbers<[1], [0], [0], [1], [0, 0, 1, 1], [], []>} : vector<32x512xbf16>, vector<512x128xbf16>, vector<32x128xf32> -> vector<32x128xf32>
    %c8_104 = arith.constant 8 : index
    %c0_105 = arith.constant 0 : index
    %260 = vector.load %arg9[%c8_104, %c0_105] : memref<11x512xf32, #tpu.memory_space<vmem>>, vector<1x128xf32>
    %261 = vector.broadcast %260 : vector<1x128xf32> to vector<32x128xf32>
    %262 = arith.addf %259, %261 : vector<32x128xf32>
    %cst_106 = arith.constant 0.000000e+00 : f32
    %263 = vector.broadcast %cst_106 : f32 to vector<32x128xf32>
    %264 = arith.maximumf %262, %263 : vector<32x128xf32>
    %c9 = arith.constant 9 : index
    %c0_107 = arith.constant 0 : index
    %265 = vector.load %arg9[%c9, %c0_107] : memref<11x512xf32, #tpu.memory_space<vmem>>, vector<1x128xf32>
    %266 = vector.broadcast %265 : vector<1x128xf32> to vector<32x128xf32>
    %267 = arith.mulf %264, %266 : vector<32x128xf32>
    %cst_108 = arith.constant dense<0.000000e+00> : vector<32xf32>
    %268 = vector.multi_reduction <add>, %267, %cst_108 [1] : vector<32x128xf32> to vector<32xf32>
    %269 = vector.shape_cast %268 : vector<32xf32> to vector<32x1xf32>
    %c10 = arith.constant 10 : index
    %c0_109 = arith.constant 0 : index
    %270 = vector.load %arg9[%c10, %c0_109] : memref<11x512xf32, #tpu.memory_space<vmem>>, vector<1x1xf32>
    %271 = vector.broadcast %270 : vector<1x1xf32> to vector<32x1xf32>
    %272 = arith.addf %269, %271 : vector<32x1xf32>
    %273 = arith.negf %272 : vector<32x1xf32>
    %274 = math.exp %273 : vector<32x1xf32>
    %cst_110 = arith.constant 1.000000e+00 : f32
    %275 = vector.broadcast %cst_110 : f32 to vector<32x1xf32>
    %276 = arith.addf %275, %274 : vector<32x1xf32>
    %277 = arith.divf %275, %276 : vector<32x1xf32>
    %278 = arith.mulf %248, %248 : vector<32x32xf32>
    %cst_111 = arith.constant dense<0.000000e+00> : vector<32xf32>
    %279 = vector.multi_reduction <add>, %278, %cst_111 [1] : vector<32x32xf32> to vector<32xf32>
    %280 = vector.shape_cast %279 : vector<32xf32> to vector<32x1xf32>
    %281 = math.sqrt %280 : vector<32x1xf32>
    %c0_112 = arith.constant 0 : index
    %c0_113 = arith.constant 0 : index
    %282 = vector.load %arg10[%c0_112, %c0_113] : memref<32x32xf32, #tpu.memory_space<vmem>>, vector<32x32xf32>
    tpu.vector_store %arg10[%c0_112, %c0_113], %248 {strides = array<i32>} : memref<32x32xf32, #tpu.memory_space<vmem>>, vector<32x32xf32>,
    %283 = tpu.iota {dimensions = array<i32: 1>} : vector<32x128xi32>
    %c0_i32_114 = arith.constant 0 : i32
    %284 = vector.broadcast %c0_i32_114 : i32 to vector<32x128xi32>
    %285 = arith.cmpi eq, %283, %284 : vector<32x128xi32>
    %c1_i32_115 = arith.constant 1 : i32
    %286 = vector.broadcast %c1_i32_115 : i32 to vector<32x128xi32>
    %287 = arith.cmpi eq, %283, %286 : vector<32x128xi32>
    %cst_116 = arith.constant 0.000000e+00 : f32
    %288 = vector.shape_cast %281 : vector<32x1xf32> to vector<32x1xf32>
    %289 = vector.broadcast %288 : vector<32x1xf32> to vector<32x128xf32>
    %290 = vector.broadcast %cst_116 : f32 to vector<32x128xf32>
    %291 = arith.select %287, %289, %290 : vector<32x128xi1>, vector<32x128xf32>
    %292 = vector.shape_cast %277 : vector<32x1xf32> to vector<32x1xf32>
    %293 = vector.broadcast %292 : vector<32x1xf32> to vector<32x128xf32>
    %294 = arith.select %285, %293, %291 : vector<32x128xi1>, vector<32x128xf32>
    %c0_117 = arith.constant 0 : index
    %c0_118 = arith.constant 0 : index
    %295 = vector.load %arg11[%c0_117, %c0_118] : memref<32x128xf32, #tpu.memory_space<vmem>>, vector<32x128xf32>
    tpu.vector_store %arg11[%c0_117, %c0_118], %294 {strides = array<i32>} : memref<32x128xf32, #tpu.memory_space<vmem>>, vector<32x128xf32>,
    return
  }
  func.func @transform_0(%arg0: i32) -> (i32, i32) {
    %c0_i32 = arith.constant 0 : i32
    %c0_i32_0 = arith.constant 0 : i32
    return %arg0, %c0_i32 : i32, i32
  }
  func.func @transform_1(%arg0: i32) -> (i32, i32) {
    %c0_i32 = arith.constant 0 : i32
    %c0_i32_0 = arith.constant 0 : i32
    %c0_i32_1 = arith.constant 0 : i32
    return %c0_i32, %c0_i32_0 : i32, i32
  }
  func.func @transform_2(%arg0: i32) -> (i32, i32, i32) {
    %c0_i32 = arith.constant 0 : i32
    %c0_i32_0 = arith.constant 0 : i32
    %c0_i32_1 = arith.constant 0 : i32
    %c0_i32_2 = arith.constant 0 : i32
    return %c0_i32, %c0_i32_0, %c0_i32_1 : i32, i32, i32
  }
  func.func @transform_3(%arg0: i32) -> (i32, i32) {
    %c0_i32 = arith.constant 0 : i32
    %c0_i32_0 = arith.constant 0 : i32
    %c0_i32_1 = arith.constant 0 : i32
    return %c0_i32, %c0_i32_0 : i32, i32
  }
  func.func @transform_4(%arg0: i32) -> (i32, i32) {
    %c0_i32 = arith.constant 0 : i32
    %c0_i32_0 = arith.constant 0 : i32
    %c0_i32_1 = arith.constant 0 : i32
    return %c0_i32, %c0_i32_0 : i32, i32
  }
  func.func @transform_5(%arg0: i32) -> (i32, i32) {
    %c0_i32 = arith.constant 0 : i32
    %c0_i32_0 = arith.constant 0 : i32
    %c0_i32_1 = arith.constant 0 : i32
    return %c0_i32, %c0_i32_0 : i32, i32
  }
  func.func @transform_6(%arg0: i32) -> (i32, i32) {
    %c0_i32 = arith.constant 0 : i32
    %c0_i32_0 = arith.constant 0 : i32
    %c0_i32_1 = arith.constant 0 : i32
    return %c0_i32, %c0_i32_0 : i32, i32
  }
  func.func @transform_7(%arg0: i32) -> (i32, i32) {
    %c0_i32 = arith.constant 0 : i32
    %c0_i32_0 = arith.constant 0 : i32
    %c0_i32_1 = arith.constant 0 : i32
    return %c0_i32, %c0_i32_0 : i32, i32
  }
  func.func @transform_8(%arg0: i32) -> (i32, i32) {
    %c0_i32 = arith.constant 0 : i32
    %c0_i32_0 = arith.constant 0 : i32
    %c0_i32_1 = arith.constant 0 : i32
    return %c0_i32, %c0_i32_0 : i32, i32
  }
  func.func @transform_9(%arg0: i32) -> (i32, i32) {
    %c0_i32 = arith.constant 0 : i32
    %c0_i32_0 = arith.constant 0 : i32
    return %arg0, %c0_i32 : i32, i32
  }
  func.func @transform_10(%arg0: i32) -> (i32, i32) {
    %c0_i32 = arith.constant 0 : i32
    %c0_i32_0 = arith.constant 0 : i32
    return %arg0, %c0_i32 : i32, i32
  }
}

</mosaic_0001>

<llo_original>
// kernel: tpu_custom_call.1
$region0: #{tpu_custom_call.1}
  #allocation0 [shape = 'u32[]', space=smem, size = 0x4, offset = 0x4, fixed_abs, tag = 'smem constant byte address 0x4 - core index']
  #allocation1 [shape = 'u32[144,128]{1,0:T(1,128)}', space=vmem, size = 0x12000, scoped, tag = 'internal scratch']
  #allocation2 [shape = 'f32[32,32]{1,0:T(8,128)}', space=vmem, size = 0x4000, scoped, tag = 'scratch operand']
  #allocation3 [shape = 'bf16[32,96]{1,0:T(16,128)(2,1)}', space=vmem, size = 0x2000, scoped, tag = 'scratch operand']
  %s0 = inlined_call_operand.vmem [shape: f32[64,32], index: 0, kind: input, shape index: {}]
  %s1 = inlined_call_operand.vmem [shape: bf16[32,32], index: 1, kind: input, shape index: {}]
  %s2 = inlined_call_operand.vmem [shape: bf16[6,32,8], index: 2, kind: input, shape index: {}]
  %s3 = inlined_call_operand.vmem [shape: bf16[8,12], index: 3, kind: input, shape index: {}]
  %s4 = inlined_call_operand.vmem [shape: bf16[4,8], index: 4, kind: input, shape index: {}]
  %s5 = inlined_call_operand.vmem [shape: bf16[96,32], index: 5, kind: input, shape index: {}]
  %s6 = inlined_call_operand.hbm [shape: bf16[32,512], index: 6, kind: input, shape index: {}]
  %s7 = inlined_call_operand.vmem [shape: bf16[512,128], index: 7, kind: input, shape index: {}]
  %s8 = inlined_call_operand.hbm [shape: f32[11,512], index: 8, kind: input, shape index: {}]
  %s9 = inlined_call_operand.vmem [shape: f32[64,32], index: 9, kind: output, shape index: {0}]
  %s10 = inlined_call_operand.hbm [shape: f32[64,128], index: 10, kind: output, shape index: {1}]
  %11 = xla_tuple %s9, %s10
  %s12 = sld [smem:[#allocation0]]
  $region85: #{tpu_custom_call.1} parent=0
    _
  %s14 = ssub.s32 1, %s12
  %s15 = scalar_select 0, %s14, %s12
  $region1: #{tpu_custom_call.1} parent=0
    #allocation4 [shape = 'u8[32768]{0}', space=vmem, size = 0x8000, scoped, tag = 'input window, operand 6, single buffered']
    #allocation5 [shape = 's32[2]{0}', space=sflag, size = 0x8, scoped, tag = 'scoped memory for tpu_custom_call.1']
    #allocation6 [shape = 's32[2]{0}', space=sflag, size = 0x8, scoped, tag = 'scoped memory for tpu_custom_call.1']
    #allocation7 [shape = 'u8[32768]{0}', space=vmem, size = 0x8000, scoped, tag = 'input window, operand 8, single buffered']
    #allocation8 [shape = 's32[1]{0}', space=sflag, size = 0x4, scoped, tag = 'scoped memory for tpu_custom_call.1']
    #allocation9 [shape = 'u8[32768]{0}', space=vmem, size = 0x8000, scoped, tag = 'output window, operand 1']
    %16 = vsyncpa [#allocation5], 0
    %17 = vsyncpa [#allocation8], 0
    %18 = vsyncpa [#allocation6], 0
    %s19 = scalar_lea.sflag [#allocation6], 1
    %20 = vsyncpa %s19, 0
    loop: start=0, step=1, limit=4
    $region2: #{tpu_custom_call.1} parent=1 // loop_pre_header
      _
    $region3: #{tpu_custom_call.1} parent=1 // loop_header
      %s22 = sphi 0, %s26
      %p23 = scmp.ge.s32.totalorder %s22, 4
      %s32 = sphi 0, %s34
      %s35 = sphi 0, %s32
      %s36 = sphi 0, %s35
      %s52 = sphi 0, %s36
      %s56 = sphi 0, %s56
      %s58 = sphi 0, %s56
      %s59 = sphi 0, %s58
      %s73 = sphi 0, %s59
      %s77 = sphi 0, %s77
      %s79 = sphi 0, %s77
      %s80 = sphi 0, %s79
      %s94 = sphi 0, %s80
      %s98 = sphi 0, %s98
      %s100 = sphi 0, %s98
      %s101 = sphi 0, %s100
      %s115 = sphi 0, %s101
      %s119 = sphi 0, %s119
      %s121 = sphi 0, %s119
      %s122 = sphi 0, %s121
      %s136 = sphi 0, %s122
      %s140 = sphi 0, %s140
      %s142 = sphi 0, %s140
      %s143 = sphi 0, %s142
      %s157 = sphi 0, %s143
      %s161 = sphi 0, %s161
      %s163 = sphi 0, %s161
      %s164 = sphi 0, %s163
      %s178 = sphi 0, %s164
      %s182 = sphi 0, %s182
      %s184 = sphi 0, %s182
      %s185 = sphi 0, %s184
      %s199 = sphi 0, %s185
      %s203 = sphi 0, %s203
      %s205 = sphi 0, %s203
      %s206 = sphi 0, %s205
      %s220 = sphi 0, %s206
      %s226 = sphi 0, %s228
      %s229 = sphi 0, %s226
      %s230 = sphi 0, %s229
      %s246 = sphi 0, %s230
      %s252 = sphi 0, %s254
      %s255 = sphi 0, %s252
      %s256 = sphi 0, %s255
      %s272 = sphi 0, %s256
    $region4: #{tpu_custom_call.1} parent=1 // loop_header_branch
      %25 = sbr.rel (%p23) target = $region8
    $region5: #{tpu_custom_call.1} parent=1 // loop_body
      %s27 = ssub.s32 %s22, 1
      %s28 = ssub.s32 %s22, 2
      %s29 = sadd.s32 %s22, 1
      %s30 = ssub.s32 %s22, %s29
      %p31 = scmp.eq.s32.totalorder %s30, 0
      %s33 = sadd.s32 %s32, 1
      %s34 = scalar_select %p31, %s32, %s33
      %p37 = pneg %p31
      %p38 = scmp.eq.s32.totalorder %s22, 1
      %p39 = por %p37, %p38
      %p40 = scmp.ne.s32.totalorder %s32, %s35
      %p41 = scmp.eq.s32.totalorder %s22, 0
      %p42 = por %p40, %p41
      %p43 = scmp.ne.s32.totalorder %s32, %s35
      %p44 = scmp.eq.s32.totalorder %s27, 1
      %p45 = por %p43, %p44
      %p46 = scmp.ne.s32.totalorder %s35, %s36
      %p47 = scmp.eq.s32.totalorder %s27, 0
      %p48 = por %p46, %p47
      %p49 = scmp.ne.s32.totalorder %s35, %s36
      %p50 = scmp.eq.s32.totalorder %s28, 1
      %p51 = por %p49, %p50
      %p53 = scmp.ne.s32.totalorder %s36, %s52
      %p54 = scmp.eq.s32.totalorder %s28, 0
      %p55 = por %p53, %p54
      %s57 = sadd.s32 %s56, 1
      %p60 = scmp.eq.s32.totalorder %s22, 1
      %p61 = scmp.ne.s32.totalorder %s56, %s58
      %p62 = scmp.eq.s32.totalorder %s22, 0
      %p63 = por %p61, %p62
      %p64 = scmp.ne.s32.totalorder %s56, %s58
      %p65 = scmp.eq.s32.totalorder %s27, 1
      %p66 = por %p64, %p65
      %p67 = scmp.ne.s32.totalorder %s58, %s59
      %p68 = scmp.eq.s32.totalorder %s27, 0
      %p69 = por %p67, %p68
      %p70 = scmp.ne.s32.totalorder %s58, %s59
      %p71 = scmp.eq.s32.totalorder %s28, 1
      %p72 = por %p70, %p71
      %p74 = scmp.ne.s32.totalorder %s59, %s73
      %p75 = scmp.eq.s32.totalorder %s28, 0
      %p76 = por %p74, %p75
      %s78 = sadd.s32 %s77, 1
      %p81 = scmp.eq.s32.totalorder %s22, 1
      %p82 = scmp.ne.s32.totalorder %s77, %s79
      %p83 = scmp.eq.s32.totalorder %s22, 0
      %p84 = por %p82, %p83
      %p85 = scmp.ne.s32.totalorder %s77, %s79
      %p86 = scmp.eq.s32.totalorder %s27, 1
      %p87 = por %p85, %p86
      %p88 = scmp.ne.s32.totalorder %s79, %s80
      %p89 = scmp.eq.s32.totalorder %s27, 0
      %p90 = por %p88, %p89
      %p91 = scmp.ne.s32.totalorder %s79, %s80
      %p92 = scmp.eq.s32.totalorder %s28, 1
      %p93 = por %p91, %p92
      %p95 = scmp.ne.s32.totalorder %s80, %s94
      %p96 = scmp.eq.s32.totalorder %s28, 0
      %p97 = por %p95, %p96
      %s99 = sadd.s32 %s98, 1
      %p102 = scmp.eq.s32.totalorder %s22, 1
      %p103 = scmp.ne.s32.totalorder %s98, %s100
      %p104 = scmp.eq.s32.totalorder %s22, 0
      %p105 = por %p103, %p104
      %p106 = scmp.ne.s32.totalorder %s98, %s100
      %p107 = scmp.eq.s32.totalorder %s27, 1
      %p108 = por %p106, %p107
      %p109 = scmp.ne.s32.totalorder %s100, %s101
      %p110 = scmp.eq.s32.totalorder %s27, 0
      %p111 = por %p109, %p110
      %p112 = scmp.ne.s32.totalorder %s100, %s101
      %p113 = scmp.eq.s32.totalorder %s28, 1
      %p114 = por %p112, %p113
      %p116 = scmp.ne.s32.totalorder %s101, %s115
      %p117 = scmp.eq.s32.totalorder %s28, 0
      %p118 = por %p116, %p117
      %s120 = sadd.s32 %s119, 1
      %p123 = scmp.eq.s32.totalorder %s22, 1
      %p124 = scmp.ne.s32.totalorder %s119, %s121
      %p125 = scmp.eq.s32.totalorder %s22, 0
      %p126 = por %p124, %p125
      %p127 = scmp.ne.s32.totalorder %s119, %s121
      %p128 = scmp.eq.s32.totalorder %s27, 1
      %p129 = por %p127, %p128
      %p130 = scmp.ne.s32.totalorder %s121, %s122
      %p131 = scmp.eq.s32.totalorder %s27, 0
      %p132 = por %p130, %p131
      %p133 = scmp.ne.s32.totalorder %s121, %s122
      %p134 = scmp.eq.s32.totalorder %s28, 1
      %p135 = por %p133, %p134
      %p137 = scmp.ne.s32.totalorder %s122, %s136
      %p138 = scmp.eq.s32.totalorder %s28, 0
      %p139 = por %p137, %p138
      %s141 = sadd.s32 %s140, 1
      %p144 = scmp.eq.s32.totalorder %s22, 1
      %p145 = scmp.ne.s32.totalorder %s140, %s142
      %p146 = scmp.eq.s32.totalorder %s22, 0
      %p147 = por %p145, %p146
      %p148 = scmp.ne.s32.totalorder %s140, %s142
      %p149 = scmp.eq.s32.totalorder %s27, 1
      %p150 = por %p148, %p149
      %p151 = scmp.ne.s32.totalorder %s142, %s143
      %p152 = scmp.eq.s32.totalorder %s27, 0
      %p153 = por %p151, %p152
      %p154 = scmp.ne.s32.totalorder %s142, %s143
      %p155 = scmp.eq.s32.totalorder %s28, 1
      %p156 = por %p154, %p155
      %p158 = scmp.ne.s32.totalorder %s143, %s157
      %p159 = scmp.eq.s32.totalorder %s28, 0
      %p160 = por %p158, %p159
      %s162 = sadd.s32 %s161, 1
      %p165 = scmp.eq.s32.totalorder %s22, 1
      %p166 = scmp.ne.s32.totalorder %s161, %s163
      %p167 = scmp.eq.s32.totalorder %s22, 0
      %p168 = por %p166, %p167
      %p169 = scmp.ne.s32.totalorder %s161, %s163
      %p170 = scmp.eq.s32.totalorder %s27, 1
      %p171 = por %p169, %p170
      %p172 = scmp.ne.s32.totalorder %s163, %s164
      %p173 = scmp.eq.s32.totalorder %s27, 0
      %p174 = por %p172, %p173
      %p175 = scmp.ne.s32.totalorder %s163, %s164
      %p176 = scmp.eq.s32.totalorder %s28, 1
      %p177 = por %p175, %p176
      %p179 = scmp.ne.s32.totalorder %s164, %s178
      %p180 = scmp.eq.s32.totalorder %s28, 0
      %p181 = por %p179, %p180
      %s183 = sadd.s32 %s182, 1
      %p186 = scmp.eq.s32.totalorder %s22, 1
      %p187 = scmp.ne.s32.totalorder %s182, %s184
      %p188 = scmp.eq.s32.totalorder %s22, 0
      %p189 = por %p187, %p188
      %p190 = scmp.ne.s32.totalorder %s182, %s184
      %p191 = scmp.eq.s32.totalorder %s27, 1
      %p192 = por %p190, %p191
      %p193 = scmp.ne.s32.totalorder %s184, %s185
      %p194 = scmp.eq.s32.totalorder %s27, 0
      %p195 = por %p193, %p194
      %p196 = scmp.ne.s32.totalorder %s184, %s185
      %p197 = scmp.eq.s32.totalorder %s28, 1
      %p198 = por %p196, %p197
      %p200 = scmp.ne.s32.totalorder %s185, %s199
      %p201 = scmp.eq.s32.totalorder %s28, 0
      %p202 = por %p200, %p201
      %s204 = sadd.s32 %s203, 1
      %p207 = scmp.eq.s32.totalorder %s22, 1
      %p208 = scmp.ne.s32.totalorder %s203, %s205
      %p209 = scmp.eq.s32.totalorder %s22, 0
      %p210 = por %p208, %p209
      %p211 = scmp.ne.s32.totalorder %s203, %s205
      %p212 = scmp.eq.s32.totalorder %s27, 1
      %p213 = por %p211, %p212
      %p214 = scmp.ne.s32.totalorder %s205, %s206
      %p215 = scmp.eq.s32.totalorder %s27, 0
      %p216 = por %p214, %p215
      %p217 = scmp.ne.s32.totalorder %s205, %s206
      %p218 = scmp.eq.s32.totalorder %s28, 1
      %p219 = por %p217, %p218
      %p221 = scmp.ne.s32.totalorder %s206, %s220
      %p222 = scmp.eq.s32.totalorder %s28, 0
      %p223 = por %p221, %p222
      %s224 = ssub.s32 %s22, %s29
      %p225 = scmp.eq.s32.totalorder %s224, 0
      %s227 = sadd.s32 %s226, 1
      %s228 = scalar_select %p225, %s226, %s227
      %p231 = pneg %p225
      %p232 = scmp.eq.s32.totalorder %s22, 1
      %p233 = por %p231, %p232
      %p234 = scmp.ne.s32.totalorder %s226, %s229
      %p235 = scmp.eq.s32.totalorder %s22, 0
      %p236 = por %p234, %p235
      %p237 = scmp.ne.s32.totalorder %s226, %s229
      %p238 = scmp.eq.s32.totalorder %s27, 1
      %p239 = por %p237, %p238
      %p240 = scmp.ne.s32.totalorder %s229, %s230
      %p241 = scmp.eq.s32.totalorder %s27, 0
      %p242 = por %p240, %p241
      %p243 = scmp.ne.s32.totalorder %s229, %s230
      %p244 = scmp.eq.s32.totalorder %s28, 1
      %p245 = por %p243, %p244
      %p247 = scmp.ne.s32.totalorder %s230, %s246
      %p248 = scmp.eq.s32.totalorder %s28, 0
      %p249 = por %p247, %p248
      %s250 = ssub.s32 %s22, %s29
      %p251 = scmp.eq.s32.totalorder %s250, 0
      %s253 = sadd.s32 %s252, 1
      %s254 = scalar_select %p251, %s252, %s253
      %p257 = pneg %p251
      %p258 = scmp.eq.s32.totalorder %s22, 1
      %p259 = por %p257, %p258
      %p260 = scmp.ne.s32.totalorder %s252, %s255
      %p261 = scmp.eq.s32.totalorder %s22, 0
      %p262 = por %p260, %p261
      %p263 = scmp.ne.s32.totalorder %s252, %s255
      %p264 = scmp.eq.s32.totalorder %s27, 1
      %p265 = por %p263, %p264
      %p266 = scmp.ne.s32.totalorder %s255, %s256
      %p267 = scmp.eq.s32.totalorder %s27, 0
      %p268 = por %p266, %p267
      %p269 = scmp.ne.s32.totalorder %s255, %s256
      %p270 = scmp.eq.s32.totalorder %s28, 1
      %p271 = por %p269, %p270
      %p273 = scmp.ne.s32.totalorder %s256, %s272
      %p274 = scmp.eq.s32.totalorder %s28, 0
      %p275 = por %p273, %p274
      %p276 = scmp.le.s32.totalorder 1, %s22
      %p277 = scmp.lt.s32.totalorder %s22, 3
      %p278 = pnand %p276, %p277
      %p279 = pneg %p278
      // Predicated region
      $region9: #{tpu_custom_call.1} parent=5 // pred_check
        _
      $region10: #{tpu_custom_call.1} parent=5 // pred_check_branch
        %281 = sbr.rel (%p278) target = $region12
      $region11: #{tpu_custom_call.1} parent=5 // pred_region
        %s282 = ssub.s32 %s22, 1
        // Predicated region
        $region13: #{tpu_custom_call.1} parent=11 // pred_check
          %p283 = pneg %p69
        $region14: #{tpu_custom_call.1} parent=11 // pred_check_branch
          %285 = sbr.rel (%p283) target = $region16
        $region15: #{tpu_custom_call.1} parent=11 // pred_region
          _
        $region16: #{tpu_custom_call.1} parent=11 // pred_fallthru
          _
        // Predicated region
        $region17: #{tpu_custom_call.1} parent=11 // pred_check
          %p286 = pneg %p90
        $region18: #{tpu_custom_call.1} parent=11 // pred_check_branch
          %288 = sbr.rel (%p286) target = $region20
        $region19: #{tpu_custom_call.1} parent=11 // pred_region
          _
        $region20: #{tpu_custom_call.1} parent=11 // pred_fallthru
          _
        // Predicated region
        $region21: #{tpu_custom_call.1} parent=11 // pred_check
          %p289 = pneg %p111
        $region22: #{tpu_custom_call.1} parent=11 // pred_check_branch
          %291 = sbr.rel (%p289) target = $region24
        $region23: #{tpu_custom_call.1} parent=11 // pred_region
          _
        $region24: #{tpu_custom_call.1} parent=11 // pred_fallthru
          _
        // Predicated region
        $region25: #{tpu_custom_call.1} parent=11 // pred_check
          %p292 = pneg %p132
        $region26: #{tpu_custom_call.1} parent=11 // pred_check_branch
          %294 = sbr.rel (%p292) target = $region28
        $region27: #{tpu_custom_call.1} parent=11 // pred_region
          _
        $region28: #{tpu_custom_call.1} parent=11 // pred_fallthru
          _
        // Predicated region
        $region29: #{tpu_custom_call.1} parent=11 // pred_check
          %p295 = pneg %p153
        $region30: #{tpu_custom_call.1} parent=11 // pred_check_branch
          %297 = sbr.rel (%p295) target = $region32
        $region31: #{tpu_custom_call.1} parent=11 // pred_region
          _
        $region32: #{tpu_custom_call.1} parent=11 // pred_fallthru
          _
        // Predicated region
        $region33: #{tpu_custom_call.1} parent=11 // pred_check
          %p298 = pneg %p174
        $region34: #{tpu_custom_call.1} parent=11 // pred_check_branch
          %300 = sbr.rel (%p298) target = $region36
        $region35: #{tpu_custom_call.1} parent=11 // pred_region
          %s302 = ssub.s32 1024, 1024
          %303 = vsyncadd [#allocation5], %s302
          %s304 = sshll.u32 [#allocation4], 4
          %s305 = int_to_ptr.vmem [resolvable:$true] %s304
          %310 = dma.hbm_to_vmem [thread:$0]  %s6, 1024, %s305, [#allocation5], 256, 256, 16
        $region36: #{tpu_custom_call.1} parent=11 // pred_fallthru
          _
        // Predicated region
        $region37: #{tpu_custom_call.1} parent=11 // pred_check
          %p311 = pneg %p195
        $region38: #{tpu_custom_call.1} parent=11 // pred_check_branch
          %313 = sbr.rel (%p311) target = $region40
        $region39: #{tpu_custom_call.1} parent=11 // pred_region
          _
        $region40: #{tpu_custom_call.1} parent=11 // pred_fallthru
          _
        // Predicated region
        $region41: #{tpu_custom_call.1} parent=11 // pred_check
          %p314 = pneg %p216
        $region42: #{tpu_custom_call.1} parent=11 // pred_check_branch
          %316 = sbr.rel (%p314) target = $region44
        $region43: #{tpu_custom_call.1} parent=11 // pred_region
          %s318 = ssub.s32 1024, 1024
          %319 = vsyncadd [#allocation8], %s318
          %s320 = sshll.u32 [#allocation7], 4
          %s321 = int_to_ptr.vmem [resolvable:$true] %s320
          %326 = dma.hbm_to_vmem [thread:$0]  %s8, 1024, %s321, [#allocation8], 512, 512, 32
        $region44: #{tpu_custom_call.1} parent=11 // pred_fallthru
          _
      $region12: #{tpu_custom_call.1} parent=5 // pred_fallthru
        _
      %p327 = scmp.lt.s32.totalorder %s22, 2
      // Predicated region
      $region45: #{tpu_custom_call.1} parent=5 // pred_check
        %p328 = pneg %p327
      $region46: #{tpu_custom_call.1} parent=5 // pred_check_branch
        %330 = sbr.rel (%p328) target = $region48
      $region47: #{tpu_custom_call.1} parent=5 // pred_region
        // Predicated region
        $region49: #{tpu_custom_call.1} parent=47 // pred_check
          %p331 = pneg %p42
        $region50: #{tpu_custom_call.1} parent=47 // pred_check_branch
          %333 = sbr.rel (%p331) target = $region52
        $region51: #{tpu_custom_call.1} parent=47 // pred_region
          %s334 = smul.u32 4, %s22
          %p335 = scmp.lt.s32.totalorder %s334, 7
          %s336 = scalar_select %p335, %s334, 7
          %s337 = smul.addr %s336, 8
          %s338 = scalar_lea.vmem %s0, %s337
          %s339 = smul.u32 4, %s22
        $region52: #{tpu_custom_call.1} parent=47 // pred_fallthru
          _
      $region48: #{tpu_custom_call.1} parent=5 // pred_fallthru
        _
      %p340 = scmp.le.s32.totalorder 1, %s22
      %p341 = scmp.lt.s32.totalorder %s22, 3
      %p342 = pnand %p340, %p341
      %p343 = pneg %p342
      // Predicated region
      $region53: #{tpu_custom_call.1} parent=5 // pred_check
        _
      $region54: #{tpu_custom_call.1} parent=5 // pred_check_branch
        %345 = sbr.rel (%p342) target = $region56
      $region55: #{tpu_custom_call.1} parent=5 // pred_region
        %s346 = ssub.s32 %s22, 1
        // Predicated region
        $region57: #{tpu_custom_call.1} parent=55 // pred_check
          %p347 = pneg %p174
        $region58: #{tpu_custom_call.1} parent=55 // pred_check_branch
          %349 = sbr.rel (%p347) target = $region60
        $region59: #{tpu_custom_call.1} parent=55 // pred_region
          %350 = dma.done [#allocation5], 1024
        $region60: #{tpu_custom_call.1} parent=55 // pred_fallthru
          _
        // Predicated region
        $region61: #{tpu_custom_call.1} parent=55 // pred_check
          %p351 = pneg %p216
        $region62: #{tpu_custom_call.1} parent=55 // pred_check_branch
          %353 = sbr.rel (%p351) target = $region64
        $region63: #{tpu_custom_call.1} parent=55 // pred_region
          %354 = dma.done [#allocation8], 1024
        $region64: #{tpu_custom_call.1} parent=55 // pred_fallthru
          _
        %s355 = smul.u32 4, %s27
        %p356 = scmp.lt.s32.totalorder %s355, 7
        %s357 = scalar_select %p356, %s355, 7
        %s358 = smul.addr %s357, 8
        %s359 = scalar_lea.vmem %s0, %s358
        %p360 = pneg %p48
        %p361 = pneg %p45
        %p362 = pneg %p69
        %p363 = pneg %p66
        %p364 = pneg %p90
        %p365 = pneg %p87
        %p366 = pneg %p111
        %p367 = pneg %p108
        %p368 = pneg %p132
        %p369 = pneg %p129
        %p370 = pneg %p153
        %p371 = pneg %p150
        %p372 = pneg %p174
        %p373 = pneg %p171
        %p374 = pneg %p195
        %p375 = pneg %p192
        %p376 = pneg %p216
        %p377 = pneg %p213
        %p378 = pneg %p242
        %p379 = pneg %p239
        %s380 = smul.u32 4, %s27
        %p381 = scmp.lt.s32.totalorder %s380, 7
        %s382 = scalar_select %p381, %s380, 7
        %s383 = smul.addr %s382, 8
        %s384 = scalar_lea.vmem %s9, %s383
        %p385 = pneg %p268
        %p386 = pneg %p265
        %s387 = sand.u32 %s255, 1
        %s388 = scalar_lea.sflag [#allocation6], %s387
        %s389 = sand.u32 %s255, 1
        %s390 = smul.addr %s389, 32
        %s391 = scalar_lea.vmem [#allocation9], %s390
        %s392 = smul.u32 4, %s27
        %p393 = scmp.lt.s32.totalorder %s392, 7
        %s394 = scalar_select %p393, %s392, 7
        %s395 = smul.addr %s394, 8
        %s396 = scalar_lea.vmem %s0, %s395
        %s397 = smul.u32 4, %s27
        %s398 = smul.u32 4, %s27
        %p399 = scmp.lt.s32.totalorder %s398, 7
        %s400 = scalar_select %p399, %s398, 7
        %s401 = smul.addr %s400, 8
        %s402 = scalar_lea.vmem %s9, %s401
        %s403 = smul.u32 4, %s27
        %s404 = smul.u32 4, %s27
        %v406 = vld [vmem:[%s396] sm:$0xff]
        %v407 = vld [vmem:[%s396 + $0x8] sm:$0xff]
        %v408 = vld [vmem:[%s396 + $0x10] sm:$0xff]
        %v409 = vld [vmem:[%s396 + $0x18] sm:$0xff]
        %v410 = vpack.c.bf16 %v407, %v406
        %v411 = vpack.c.bf16 %v409, %v408
        %v412 = vlaneseq
        %v413 = vshrl.u32 %v412, 7
        %v414 = vadd.s32 %v413, 8
        %v415 = vadd.s32 %v413, 16
        %v416 = vadd.s32 %v413, 24
        %v417 = vshra.s32 %v413, 4
        %v418 = vshra.s32 %v414, 4
        %v419 = vshra.s32 %v415, 4
        %v420 = vshra.s32 %v416, 4
        %v421 = vadd.s32 %v413, 4294967295
        %v422 = vadd.s32 %v414, 4294967295
        %v423 = vadd.s32 %v415, 4294967295
        %v424 = vadd.s32 %v416, 4294967295
        %v425 = vshra.s32 %v421, 4
        %v426 = vshra.s32 %v422, 4
        %v427 = vshra.s32 %v423, 4
        %v428 = vshra.s32 %v424, 4
        %vm429 = vcmp.eq.s32.totalorder %v425, %v417
        %vm430 = vcmp.eq.s32.totalorder %v426, %v418
        %vm431 = vcmp.eq.s32.totalorder %v427, %v419
        %vm432 = vcmp.eq.s32.totalorder %v428, %v420
        %vm433 = vcmp.ge.s32.totalorder %v421, 0
        %vm434 = vcmp.ge.s32.totalorder %v422, 0
        %vm435 = vcmp.ge.s32.totalorder %v423, 0
        %vm436 = vcmp.ge.s32.totalorder %v424, 0
        %vm437 = vcmp.lt.s32.totalorder %v421, 32
        %vm438 = vcmp.lt.s32.totalorder %v422, 32
        %vm439 = vcmp.lt.s32.totalorder %v423, 32
        %vm440 = vcmp.lt.s32.totalorder %v424, 32
        %vm441 = vmand %vm433, %vm437
        %vm442 = vmand %vm434, %vm438
        %vm443 = vmand %vm435, %vm439
        %vm444 = vmand %vm436, %vm440
        %vm445 = vmand %vm429, %vm441
        %vm446 = vmand %vm430, %vm442
        %vm447 = vmand %vm431, %vm443
        %vm448 = vmand %vm432, %vm444
        %v449 = vsel %vm445, 1, 0
        %v450 = vsel %vm446, 1, 0
        %v451 = vsel %vm447, 1, 0
        %v452 = vsel %vm448, 1, 0
        %v453 = vcvt.s32.f32 %v449
        %v454 = vcvt.s32.f32 %v450
        %v455 = vcvt.s32.f32 %v451
        %v456 = vcvt.s32.f32 %v452
        %v457 = vadd.s32 %v413, 1
        %v458 = vadd.s32 %v414, 1
        %v459 = vadd.s32 %v415, 1
        %v460 = vadd.s32 %v416, 1
        %v461 = vshra.s32 %v457, 4
        %v462 = vshra.s32 %v458, 4
        %v463 = vshra.s32 %v459, 4
        %v464 = vshra.s32 %v460, 4
        %vm465 = vcmp.eq.s32.totalorder %v461, %v417
        %vm466 = vcmp.eq.s32.totalorder %v462, %v418
        %vm467 = vcmp.eq.s32.totalorder %v463, %v419
        %vm468 = vcmp.eq.s32.totalorder %v464, %v420
        %vm469 = vcmp.ge.s32.totalorder %v457, 0
        %vm470 = vcmp.ge.s32.totalorder %v458, 0
        %vm471 = vcmp.ge.s32.totalorder %v459, 0
        %vm472 = vcmp.ge.s32.totalorder %v460, 0
        %vm473 = vcmp.lt.s32.totalorder %v457, 32
        %vm474 = vcmp.lt.s32.totalorder %v458, 32
        %vm475 = vcmp.lt.s32.totalorder %v459, 32
        %vm476 = vcmp.lt.s32.totalorder %v460, 32
        %vm477 = vmand %vm469, %vm473
        %vm478 = vmand %vm470, %vm474
        %vm479 = vmand %vm471, %vm475
        %vm480 = vmand %vm472, %vm476
        %vm481 = vmand %vm465, %vm477
        %vm482 = vmand %vm466, %vm478
        %vm483 = vmand %vm467, %vm479
        %vm484 = vmand %vm468, %vm480
        %v485 = vsel %vm481, 1, 0
        %v486 = vsel %vm482, 1, 0
        %v487 = vsel %vm483, 1, 0
        %v488 = vsel %vm484, 1, 0
        %v489 = vcvt.s32.f32 %v485
        %v490 = vcvt.s32.f32 %v486
        %v491 = vcvt.s32.f32 %v487
        %v492 = vcvt.s32.f32 %v488
        %v493 = vadd.s32 %v413, 4294967294
        %v494 = vadd.s32 %v414, 4294967294
        %v495 = vadd.s32 %v415, 4294967294
        %v496 = vadd.s32 %v416, 4294967294
        %v497 = vshra.s32 %v493, 4
        %v498 = vshra.s32 %v494, 4
        %v499 = vshra.s32 %v495, 4
        %v500 = vshra.s32 %v496, 4
        %vm501 = vcmp.eq.s32.totalorder %v497, %v417
        %vm502 = vcmp.eq.s32.totalorder %v498, %v418
        %vm503 = vcmp.eq.s32.totalorder %v499, %v419
        %vm504 = vcmp.eq.s32.totalorder %v500, %v420
        %vm505 = vcmp.ge.s32.totalorder %v493, 0
        %vm506 = vcmp.ge.s32.totalorder %v494, 0
        %vm507 = vcmp.ge.s32.totalorder %v495, 0
        %vm508 = vcmp.ge.s32.totalorder %v496, 0
        %vm509 = vcmp.lt.s32.totalorder %v493, 32
        %vm510 = vcmp.lt.s32.totalorder %v494, 32
        %vm511 = vcmp.lt.s32.totalorder %v495, 32
        %vm512 = vcmp.lt.s32.totalorder %v496, 32
        %vm513 = vmand %vm505, %vm509
        %vm514 = vmand %vm506, %vm510
        %vm515 = vmand %vm507, %vm511
        %vm516 = vmand %vm508, %vm512
        %vm517 = vmand %vm501, %vm513
        %vm518 = vmand %vm502, %vm514
        %vm519 = vmand %vm503, %vm515
        %vm520 = vmand %vm504, %vm516
        %v521 = vsel %vm517, 1, 0
        %v522 = vsel %vm518, 1, 0
        %v523 = vsel %vm519, 1, 0
        %v524 = vsel %vm520, 1, 0
        %v525 = vcvt.s32.f32 %v521
        %v526 = vcvt.s32.f32 %v522
        %v527 = vcvt.s32.f32 %v523
        %v528 = vcvt.s32.f32 %v524
        %v529 = vadd.s32 %v413, 2
        %v530 = vadd.s32 %v414, 2
        %v531 = vadd.s32 %v415, 2
        %v532 = vadd.s32 %v416, 2
        %v533 = vshra.s32 %v529, 4
        %v534 = vshra.s32 %v530, 4
        %v535 = vshra.s32 %v531, 4
        %v536 = vshra.s32 %v532, 4
        %vm537 = vcmp.eq.s32.totalorder %v533, %v417
        %vm538 = vcmp.eq.s32.totalorder %v534, %v418
        %vm539 = vcmp.eq.s32.totalorder %v535, %v419
        %vm540 = vcmp.eq.s32.totalorder %v536, %v420
        %vm541 = vcmp.ge.s32.totalorder %v529, 0
        %vm542 = vcmp.ge.s32.totalorder %v530, 0
        %vm543 = vcmp.ge.s32.totalorder %v531, 0
        %vm544 = vcmp.ge.s32.totalorder %v532, 0
        %vm545 = vcmp.lt.s32.totalorder %v529, 32
        %vm546 = vcmp.lt.s32.totalorder %v530, 32
        %vm547 = vcmp.lt.s32.totalorder %v531, 32
        %vm548 = vcmp.lt.s32.totalorder %v532, 32
        %vm549 = vmand %vm541, %vm545
        %vm550 = vmand %vm542, %vm546
        %vm551 = vmand %vm543, %vm547
        %vm552 = vmand %vm544, %vm548
        %vm553 = vmand %vm537, %vm549
        %vm554 = vmand %vm538, %vm550
        %vm555 = vmand %vm539, %vm551
        %vm556 = vmand %vm540, %vm552
        %v557 = vsel %vm553, 1, 0
        %v558 = vsel %vm554, 1, 0
        %v559 = vsel %vm555, 1, 0
        %v560 = vsel %vm556, 1, 0
        %v561 = vcvt.s32.f32 %v557
        %v562 = vcvt.s32.f32 %v558
        %v563 = vcvt.s32.f32 %v559
        %v564 = vcvt.s32.f32 %v560
        %v565 = vadd.s32 %v413, 4294967292
        %v566 = vadd.s32 %v414, 4294967292
        %v567 = vadd.s32 %v415, 4294967292
        %v568 = vadd.s32 %v416, 4294967292
        %v569 = vshra.s32 %v565, 4
        %v570 = vshra.s32 %v566, 4
        %v571 = vshra.s32 %v567, 4
        %v572 = vshra.s32 %v568, 4
        %vm573 = vcmp.eq.s32.totalorder %v569, %v417
        %vm574 = vcmp.eq.s32.totalorder %v570, %v418
        %vm575 = vcmp.eq.s32.totalorder %v571, %v419
        %vm576 = vcmp.eq.s32.totalorder %v572, %v420
        %vm577 = vcmp.ge.s32.totalorder %v565, 0
        %vm578 = vcmp.ge.s32.totalorder %v566, 0
        %vm579 = vcmp.ge.s32.totalorder %v567, 0
        %vm580 = vcmp.ge.s32.totalorder %v568, 0
        %vm581 = vcmp.lt.s32.totalorder %v565, 32
        %vm582 = vcmp.lt.s32.totalorder %v566, 32
        %vm583 = vcmp.lt.s32.totalorder %v567, 32
        %vm584 = vcmp.lt.s32.totalorder %v568, 32
        %vm585 = vmand %vm577, %vm581
        %vm586 = vmand %vm578, %vm582
        %vm587 = vmand %vm579, %vm583
        %vm588 = vmand %vm580, %vm584
        %vm589 = vmand %vm573, %vm585
        %vm590 = vmand %vm574, %vm586
        %vm591 = vmand %vm575, %vm587
        %vm592 = vmand %vm576, %vm588
        %v593 = vsel %vm589, 1, 0
        %v594 = vsel %vm590, 1, 0
        %v595 = vsel %vm591, 1, 0
        %v596 = vsel %vm592, 1, 0
        %v597 = vcvt.s32.f32 %v593
        %v598 = vcvt.s32.f32 %v594
        %v599 = vcvt.s32.f32 %v595
        %v600 = vcvt.s32.f32 %v596
        %v601 = vadd.s32 %v413, 4
        %v602 = vadd.s32 %v414, 4
        %v603 = vadd.s32 %v415, 4
        %v604 = vadd.s32 %v416, 4
        %v605 = vshra.s32 %v601, 4
        %v606 = vshra.s32 %v602, 4
        %v607 = vshra.s32 %v603, 4
        %v608 = vshra.s32 %v604, 4
        %vm609 = vcmp.eq.s32.totalorder %v605, %v417
        %vm610 = vcmp.eq.s32.totalorder %v606, %v418
        %vm611 = vcmp.eq.s32.totalorder %v607, %v419
        %vm612 = vcmp.eq.s32.totalorder %v608, %v420
        %vm613 = vcmp.ge.s32.totalorder %v601, 0
        %vm614 = vcmp.ge.s32.totalorder %v602, 0
        %vm615 = vcmp.ge.s32.totalorder %v603, 0
        %vm616 = vcmp.ge.s32.totalorder %v604, 0
        %vm617 = vcmp.lt.s32.totalorder %v601, 32
        %vm618 = vcmp.lt.s32.totalorder %v602, 32
        %vm619 = vcmp.lt.s32.totalorder %v603, 32
        %vm620 = vcmp.lt.s32.totalorder %v604, 32
        %vm621 = vmand %vm613, %vm617
        %vm622 = vmand %vm614, %vm618
        %vm623 = vmand %vm615, %vm619
        %vm624 = vmand %vm616, %vm620
        %vm625 = vmand %vm609, %vm621
        %vm626 = vmand %vm610, %vm622
        %vm627 = vmand %vm611, %vm623
        %vm628 = vmand %vm612, %vm624
        %v629 = vsel %vm625, 1, 0
        %v630 = vsel %vm626, 1, 0
        %v631 = vsel %vm627, 1, 0
        %v632 = vsel %vm628, 1, 0
        %v633 = vcvt.s32.f32 %v629
        %v634 = vcvt.s32.f32 %v630
        %v635 = vcvt.s32.f32 %v631
        %v636 = vcvt.s32.f32 %v632
        %v637 = vld [vmem:[%s1] sm:$0xf]
        %v638 = vld [vmem:[%s1 + $0x4] sm:$0xf]
        %v639 = vld [vmem:[%s1 + $0x8] sm:$0xf]
        %v640 = vld [vmem:[%s1 + $0xc] sm:$0xf]
        %v645 = vunpack.c.l.b16 %v637
        %v646 = vunpack.c.l.b16 %v638
        %v647 = vunpack.c.l.b16 %v639
        %v648 = vunpack.c.l.b16 %v640
        %v649 = vpack.c.b16 %v646, %v645
        %v650 = vpack.c.b16 %v648, %v647
        %vm653 = vcmask 261120
        %v655 = vsel %vm653, %v410, 0
        %v658 = vsel %vm653, %v411, 0
        %660 = vmatprep.subr.bf16.mxu0 0
        %661 = vmatpush1.bf16.msra.mxu0 %v649
        %662 = vmatprep.subr.bf16.mxu0 0
        %663 = vmatpush1.bf16.msra.mxu0 %v650
        %664 = vmatprep.subr.bf16.mxu0 0
        %665 = vmatpush1.bf16.msra.mxu0 0
        %666 = vmatprep.subr.bf16.mxu0 0
        %667 = vmatpush1.bf16.msra.mxu0 0
        %668 = vmatprep.subr.bf16.mxu0 0
        %669 = vmatpush1.bf16.msra.mxu0 0
        %670 = vmatprep.subr.bf16.mxu0 0
        %671 = vmatpush1.bf16.msra.mxu0 0
        %672 = vmatprep.subr.bf16.mxu0 0
        %673 = vmatpush1.bf16.msra.mxu0 0
        %674 = vmatprep.subr.bf16.mxu0 0
        %675 = vmatpush1.bf16.msra.mxu0 0
        %676 = vmatprep.subr.bf16.mxu0 0
        %677 = vmatpush1.bf16.msra.mxu0 0
        %678 = vmatprep.subr.bf16.mxu0 0
        %679 = vmatpush1.bf16.msra.mxu0 0
        %680 = vmatprep.subr.bf16.mxu0 0
        %681 = vmatpush1.bf16.msra.mxu0 0
        %682 = vmatprep.subr.bf16.mxu0 0
        %683 = vmatpush1.bf16.msra.mxu0 0
        %684 = vmatprep.subr.bf16.mxu0 0
        %685 = vmatpush1.bf16.msra.mxu0 0
        %686 = vmatprep.subr.bf16.mxu0 0
        %687 = vmatpush1.bf16.msra.mxu0 0
        %688 = vmatprep.subr.bf16.mxu0 0
        %689 = vmatpush1.bf16.msra.mxu0 0
        %690 = vmatprep.subr.bf16.mxu0 0
        %691 = vmatpush1.bf16.msra.mxu0 0
        %692 = vmatprep.mubr.bf16.mxu0 0
        %693 = vmatmul.mubr.bf16.gmra.mrb[0].mxu0 %v655
        %v694 = vpop.f32.mrb[0].mxu0
        %v695 = vadd.f32 0.0, %v694
        %v696 = vpop.f32.mrb[0].mxu0
        %v697 = vpop.f32.mrb[0].mxu0
        %v698 = vadd.f32 0.0, %v697
        %v699 = vpop.f32.mrb[0].mxu0
        %700 = vmatprep.mubr.bf16.mxu0 0
        %701 = vmatmul.mubr.bf16.gmra.mrb[0].mxu0 %v658
        %v702 = vpop.f32.mrb[0].mxu0
        %v703 = vadd.f32 0.0, %v702
        %v704 = vpop.f32.mrb[0].mxu0
        %v705 = vpop.f32.mrb[0].mxu0
        %v706 = vadd.f32 0.0, %v705
        %v707 = vpop.f32.mrb[0].mxu0
        %708 = vdwg.mxu0
        %v710 = vrot.slane %v409, 7
        %vm715 = vcmask 1040384
        %v716 = vrot.slane %v406, 7
        %v717 = vrot.slane %v407, 7
        %v718 = vsel %vm715, %v716, %v717
        %v719 = vrot.slane %v408, 7
        %v720 = vsel %vm715, %v717, %v719
        %v721 = vsel %vm715, %v719, %v710
        %v726 = vsel %vm715, %v710, %v716
        %v727 = vmul.f32 %v726, %v453
        %v728 = vmul.f32 %v718, %v454
        %v729 = vmul.f32 %v720, %v455
        %v730 = vmul.f32 %v721, %v456
        %v731 = vpack.c.bf16 %v728, %v727
        %v732 = vpack.c.bf16 %v730, %v729
        %v733 = vld [vmem:[%s2] sm:$0xf]
        %v734 = vld [vmem:[%s2 + $0x4] sm:$0xf]
        %v735 = vld [vmem:[%s2 + $0x8] sm:$0xf]
        %v736 = vld [vmem:[%s2 + $0xc] sm:$0xf]
        %vm737 = vcmask 1046528
        %v738 = vrot.slane %v406, 1
        %v739 = vrot.slane %v407, 1
        %v740 = vsel %vm737, %v738, %v739
        %v741 = vrot.slane %v408, 1
        %v742 = vsel %vm737, %v739, %v741
        %v743 = vrot.slane %v409, 1
        %v744 = vsel %vm737, %v741, %v743
        %v750 = vsel %vm737, %v743, %v738
        %v751 = vmul.f32 %v740, %v489
        %v752 = vmul.f32 %v742, %v490
        %v753 = vmul.f32 %v744, %v491
        %v754 = vmul.f32 %v750, %v492
        %v755 = vpack.c.bf16 %v752, %v751
        %v756 = vpack.c.bf16 %v754, %v753
        %s757 = scalar_lea.vmem %s2, 16
        %v758 = vld [vmem:[%s757] sm:$0xf]
        %v759 = vld [vmem:[%s757 + $0x4] sm:$0xf]
        %v760 = vld [vmem:[%s757 + $0x8] sm:$0xf]
        %v761 = vld [vmem:[%s757 + $0xc] sm:$0xf]
        %v766 = vunpack.c.l.b16 %v758
        %v767 = vunpack.c.l.b16 %v759
        %v768 = vunpack.c.l.b16 %v760
        %v769 = vunpack.c.l.b16 %v761
        %v770 = vpack.c.b16 %v767, %v766
        %v771 = vpack.c.b16 %v769, %v768
        %v775 = vsel %vm653, %v755, 0
        %v778 = vsel %vm653, %v756, 0
        %780 = vmatprep.subr.bf16.mxu0 0
        %781 = vmatpush1.bf16.msra.mxu0 %v770
        %782 = vmatprep.subr.bf16.mxu0 0
        %783 = vmatpush1.bf16.msra.mxu0 %v771
        %784 = vmatprep.subr.bf16.mxu0 0
        %785 = vmatpush1.bf16.msra.mxu0 0
        %786 = vmatprep.subr.bf16.mxu0 0
        %787 = vmatpush1.bf16.msra.mxu0 0
        %788 = vmatprep.subr.bf16.mxu0 0
        %789 = vmatpush1.bf16.msra.mxu0 0
        %790 = vmatprep.subr.bf16.mxu0 0
        %791 = vmatpush1.bf16.msra.mxu0 0
        %792 = vmatprep.subr.bf16.mxu0 0
        %793 = vmatpush1.bf16.msra.mxu0 0
        %794 = vmatprep.subr.bf16.mxu0 0
        %795 = vmatpush1.bf16.msra.mxu0 0
        %796 = vmatprep.subr.bf16.mxu0 0
        %797 = vmatpush1.bf16.msra.mxu0 0
        %798 = vmatprep.subr.bf16.mxu0 0
        %799 = vmatpush1.bf16.msra.mxu0 0
        %800 = vmatprep.subr.bf16.mxu0 0
        %801 = vmatpush1.bf16.msra.mxu0 0
        %802 = vmatprep.subr.bf16.mxu0 0
        %803 = vmatpush1.bf16.msra.mxu0 0
        %804 = vmatprep.subr.bf16.mxu0 0
        %805 = vmatpush1.bf16.msra.mxu0 0
        %806 = vmatprep.subr.bf16.mxu0 0
        %807 = vmatpush1.bf16.msra.mxu0 0
        %808 = vmatprep.subr.bf16.mxu0 0
        %809 = vmatpush1.bf16.msra.mxu0 0
        %810 = vmatprep.subr.bf16.mxu0 0
        %811 = vmatpush1.bf16.msra.mxu0 0
        %812 = vmatprep.mubr.bf16.mxu0 0
        %813 = vmatmul.mubr.bf16.gmra.mrb[0].mxu0 %v775
        %v814 = vpop.f32.mrb[0].mxu0
        %v815 = vadd.f32 0.0, %v814
        %v816 = vpop.f32.mrb[0].mxu0
        %v817 = vpop.f32.mrb[0].mxu0
        %v818 = vadd.f32 0.0, %v817
        %v819 = vpop.f32.mrb[0].mxu0
        %820 = vmatprep.mubr.bf16.mxu0 0
        %821 = vmatmul.mubr.bf16.gmra.mrb[0].mxu0 %v778
        %v822 = vpop.f32.mrb[0].mxu0
        %v823 = vadd.f32 0.0, %v822
        %v824 = vpop.f32.mrb[0].mxu0
        %v825 = vpop.f32.mrb[0].mxu0
        %v826 = vadd.f32 0.0, %v825
        %v827 = vpop.f32.mrb[0].mxu0
        %828 = vdwg.mxu0
        %v833 = vunpack.c.l.b16 %v733
        %v834 = vunpack.c.l.b16 %v734
        %v835 = vunpack.c.l.b16 %v735
        %v836 = vunpack.c.l.b16 %v736
        %v837 = vpack.c.b16 %v834, %v833
        %v838 = vpack.c.b16 %v836, %v835
        %v842 = vsel %vm653, %v731, 0
        %v845 = vsel %vm653, %v732, 0
        %847 = vmatprep.subr.bf16.mxu0 0
        %848 = vmatpush1.bf16.msra.mxu0 %v837
        %849 = vmatprep.subr.bf16.mxu0 0
        %850 = vmatpush1.bf16.msra.mxu0 %v838
        %851 = vmatprep.subr.bf16.mxu0 0
        %852 = vmatpush1.bf16.msra.mxu0 0
        %853 = vmatprep.subr.bf16.mxu0 0
        %854 = vmatpush1.bf16.msra.mxu0 0
        %855 = vmatprep.subr.bf16.mxu0 0
        %856 = vmatpush1.bf16.msra.mxu0 0
        %857 = vmatprep.subr.bf16.mxu0 0
        %858 = vmatpush1.bf16.msra.mxu0 0
        %859 = vmatprep.subr.bf16.mxu0 0
        %860 = vmatpush1.bf16.msra.mxu0 0
        %861 = vmatprep.subr.bf16.mxu0 0
        %862 = vmatpush1.bf16.msra.mxu0 0
        %863 = vmatprep.subr.bf16.mxu0 0
        %864 = vmatpush1.bf16.msra.mxu0 0
        %865 = vmatprep.subr.bf16.mxu0 0
        %866 = vmatpush1.bf16.msra.mxu0 0
        %867 = vmatprep.subr.bf16.mxu0 0
        %868 = vmatpush1.bf16.msra.mxu0 0
        %869 = vmatprep.subr.bf16.mxu0 0
        %870 = vmatpush1.bf16.msra.mxu0 0
        %871 = vmatprep.subr.bf16.mxu0 0
        %872 = vmatpush1.bf16.msra.mxu0 0
        %873 = vmatprep.subr.bf16.mxu0 0
        %874 = vmatpush1.bf16.msra.mxu0 0
        %875 = vmatprep.subr.bf16.mxu0 0
        %876 = vmatpush1.bf16.msra.mxu0 0
        %877 = vmatprep.subr.bf16.mxu0 0
        %878 = vmatpush1.bf16.msra.mxu0 0
        %879 = vmatprep.mubr.bf16.mxu0 0
        %880 = vmatmul.mubr.bf16.gmra.mrb[0].mxu0 %v842
        %v881 = vpop.f32.mrb[0].mxu0
        %v882 = vadd.f32 %v815, %v881
        %v883 = vpop.f32.mrb[0].mxu0
        %v884 = vpop.f32.mrb[0].mxu0
        %v885 = vadd.f32 %v818, %v884
        %v886 = vpop.f32.mrb[0].mxu0
        %887 = vmatprep.mubr.bf16.mxu0 0
        %888 = vmatmul.mubr.bf16.gmra.mrb[0].mxu0 %v845
        %v889 = vpop.f32.mrb[0].mxu0
        %v890 = vadd.f32 %v823, %v889
        %v891 = vpop.f32.mrb[0].mxu0
        %v892 = vpop.f32.mrb[0].mxu0
        %v893 = vadd.f32 %v826, %v892
        %v894 = vpop.f32.mrb[0].mxu0
        %895 = vdwg.mxu0
        %v896 = vrot.slane %v409, 6
        %vm898 = vcmask 1041408
        %v899 = vrot.slane %v406, 6
        %v900 = vrot.slane %v407, 6
        %v901 = vsel %vm898, %v899, %v900
        %v902 = vrot.slane %v408, 6
        %v903 = vsel %vm898, %v900, %v902
        %v904 = vsel %vm898, %v902, %v896
        %v909 = vsel %vm898, %v896, %v899
        %v910 = vmul.f32 %v909, %v525
        %v911 = vmul.f32 %v901, %v526
        %v912 = vmul.f32 %v903, %v527
        %v913 = vmul.f32 %v904, %v528
        %v914 = vpack.c.bf16 %v911, %v910
        %v915 = vpack.c.bf16 %v913, %v912
        %s916 = scalar_lea.vmem %s2, 32
        %v917 = vld [vmem:[%s916] sm:$0xf]
        %v918 = vld [vmem:[%s916 + $0x4] sm:$0xf]
        %v919 = vld [vmem:[%s916 + $0x8] sm:$0xf]
        %v920 = vld [vmem:[%s916 + $0xc] sm:$0xf]
        %vm921 = vcmask 1045504
        %v922 = vrot.slane %v406, 2
        %v923 = vrot.slane %v407, 2
        %v924 = vsel %vm921, %v922, %v923
        %v925 = vrot.slane %v408, 2
        %v926 = vsel %vm921, %v923, %v925
        %v927 = vrot.slane %v409, 2
        %v928 = vsel %vm921, %v925, %v927
        %v934 = vsel %vm921, %v927, %v922
        %v935 = vmul.f32 %v924, %v561
        %v936 = vmul.f32 %v926, %v562
        %v937 = vmul.f32 %v928, %v563
        %v938 = vmul.f32 %v934, %v564
        %v939 = vpack.c.bf16 %v936, %v935
        %v940 = vpack.c.bf16 %v938, %v937
        %s941 = scalar_lea.vmem %s2, 48
        %v942 = vld [vmem:[%s941] sm:$0xf]
        %v943 = vld [vmem:[%s941 + $0x4] sm:$0xf]
        %v944 = vld [vmem:[%s941 + $0x8] sm:$0xf]
        %v945 = vld [vmem:[%s941 + $0xc] sm:$0xf]
        %v950 = vunpack.c.l.b16 %v942
        %v951 = vunpack.c.l.b16 %v943
        %v952 = vunpack.c.l.b16 %v944
        %v953 = vunpack.c.l.b16 %v945
        %v954 = vpack.c.b16 %v951, %v950
        %v955 = vpack.c.b16 %v953, %v952
        %v959 = vsel %vm653, %v939, 0
        %v962 = vsel %vm653, %v940, 0
        %964 = vmatprep.subr.bf16.mxu0 0
        %965 = vmatpush1.bf16.msra.mxu0 %v954
        %966 = vmatprep.subr.bf16.mxu0 0
        %967 = vmatpush1.bf16.msra.mxu0 %v955
        %968 = vmatprep.subr.bf16.mxu0 0
        %969 = vmatpush1.bf16.msra.mxu0 0
        %970 = vmatprep.subr.bf16.mxu0 0
        %971 = vmatpush1.bf16.msra.mxu0 0
        %972 = vmatprep.subr.bf16.mxu0 0
        %973 = vmatpush1.bf16.msra.mxu0 0
        %974 = vmatprep.subr.bf16.mxu0 0
        %975 = vmatpush1.bf16.msra.mxu0 0
        %976 = vmatprep.subr.bf16.mxu0 0
        %977 = vmatpush1.bf16.msra.mxu0 0
        %978 = vmatprep.subr.bf16.mxu0 0
        %979 = vmatpush1.bf16.msra.mxu0 0
        %980 = vmatprep.subr.bf16.mxu0 0
        %981 = vmatpush1.bf16.msra.mxu0 0
        %982 = vmatprep.subr.bf16.mxu0 0
        %983 = vmatpush1.bf16.msra.mxu0 0
        %984 = vmatprep.subr.bf16.mxu0 0
        %985 = vmatpush1.bf16.msra.mxu0 0
        %986 = vmatprep.subr.bf16.mxu0 0
        %987 = vmatpush1.bf16.msra.mxu0 0
        %988 = vmatprep.subr.bf16.mxu0 0
        %989 = vmatpush1.bf16.msra.mxu0 0
        %990 = vmatprep.subr.bf16.mxu0 0
        %991 = vmatpush1.bf16.msra.mxu0 0
        %992 = vmatprep.subr.bf16.mxu0 0
        %993 = vmatpush1.bf16.msra.mxu0 0
        %994 = vmatprep.subr.bf16.mxu0 0
        %995 = vmatpush1.bf16.msra.mxu0 0
        %996 = vmatprep.mubr.bf16.mxu0 0
        %997 = vmatmul.mubr.bf16.gmra.mrb[0].mxu0 %v959
        %v998 = vpop.f32.mrb[0].mxu0
        %v999 = vadd.f32 0.0, %v998
        %v1000 = vpop.f32.mrb[0].mxu0
        %v1001 = vpop.f32.mrb[0].mxu0
        %v1002 = vadd.f32 0.0, %v1001
        %v1003 = vpop.f32.mrb[0].mxu0
        %1004 = vmatprep.mubr.bf16.mxu0 0
        %1005 = vmatmul.mubr.bf16.gmra.mrb[0].mxu0 %v962
        %v1006 = vpop.f32.mrb[0].mxu0
        %v1007 = vadd.f32 0.0, %v1006
        %v1008 = vpop.f32.mrb[0].mxu0
        %v1009 = vpop.f32.mrb[0].mxu0
        %v1010 = vadd.f32 0.0, %v1009
        %v1011 = vpop.f32.mrb[0].mxu0
        %1012 = vdwg.mxu0
        %v1017 = vunpack.c.l.b16 %v917
        %v1018 = vunpack.c.l.b16 %v918
        %v1019 = vunpack.c.l.b16 %v919
        %v1020 = vunpack.c.l.b16 %v920
        %v1021 = vpack.c.b16 %v1018, %v1017
        %v1022 = vpack.c.b16 %v1020, %v1019
        %v1026 = vsel %vm653, %v914, 0
        %v1029 = vsel %vm653, %v915, 0
        %1031 = vmatprep.subr.bf16.mxu0 0
        %1032 = vmatpush1.bf16.msra.mxu0 %v1021
        %1033 = vmatprep.subr.bf16.mxu0 0
        %1034 = vmatpush1.bf16.msra.mxu0 %v1022
        %1035 = vmatprep.subr.bf16.mxu0 0
        %1036 = vmatpush1.bf16.msra.mxu0 0
        %1037 = vmatprep.subr.bf16.mxu0 0
        %1038 = vmatpush1.bf16.msra.mxu0 0
        %1039 = vmatprep.subr.bf16.mxu0 0
        %1040 = vmatpush1.bf16.msra.mxu0 0
        %1041 = vmatprep.subr.bf16.mxu0 0
        %1042 = vmatpush1.bf16.msra.mxu0 0
        %1043 = vmatprep.subr.bf16.mxu0 0
        %1044 = vmatpush1.bf16.msra.mxu0 0
        %1045 = vmatprep.subr.bf16.mxu0 0
        %1046 = vmatpush1.bf16.msra.mxu0 0
        %1047 = vmatprep.subr.bf16.mxu0 0
        %1048 = vmatpush1.bf16.msra.mxu0 0
        %1049 = vmatprep.subr.bf16.mxu0 0
        %1050 = vmatpush1.bf16.msra.mxu0 0
        %1051 = vmatprep.subr.bf16.mxu0 0
        %1052 = vmatpush1.bf16.msra.mxu0 0
        %1053 = vmatprep.subr.bf16.mxu0 0
        %1054 = vmatpush1.bf16.msra.mxu0 0
        %1055 = vmatprep.subr.bf16.mxu0 0
        %1056 = vmatpush1.bf16.msra.mxu0 0
        %1057 = vmatprep.subr.bf16.mxu0 0
        %1058 = vmatpush1.bf16.msra.mxu0 0
        %1059 = vmatprep.subr.bf16.mxu0 0
        %1060 = vmatpush1.bf16.msra.mxu0 0
        %1061 = vmatprep.subr.bf16.mxu0 0
        %1062 = vmatpush1.bf16.msra.mxu0 0
        %1063 = vmatprep.mubr.bf16.mxu0 0
        %1064 = vmatmul.mubr.bf16.gmra.mrb[0].mxu0 %v1026
        %v1065 = vpop.f32.mrb[0].mxu0
        %v1066 = vadd.f32 %v999, %v1065
        %v1067 = vpop.f32.mrb[0].mxu0
        %v1068 = vpop.f32.mrb[0].mxu0
        %v1069 = vadd.f32 %v1002, %v1068
        %v1070 = vpop.f32.mrb[0].mxu0
        %1071 = vmatprep.mubr.bf16.mxu0 0
        %1072 = vmatmul.mubr.bf16.gmra.mrb[0].mxu0 %v1029
        %v1073 = vpop.f32.mrb[0].mxu0
        %v1074 = vadd.f32 %v1007, %v1073
        %v1075 = vpop.f32.mrb[0].mxu0
        %v1076 = vpop.f32.mrb[0].mxu0
        %v1077 = vadd.f32 %v1010, %v1076
        %v1078 = vpop.f32.mrb[0].mxu0
        %1079 = vdwg.mxu0
        %v1080 = vrot.slane %v409, 4
        %vm1082 = vcmask 1043456
        %v1083 = vrot.slane %v406, 4
        %v1084 = vrot.slane %v407, 4
        %v1085 = vsel %vm1082, %v1083, %v1084
        %v1086 = vrot.slane %v408, 4
        %v1087 = vsel %vm1082, %v1084, %v1086
        %v1088 = vsel %vm1082, %v1086, %v1080
        %v1093 = vsel %vm1082, %v1080, %v1083
        %v1094 = vmul.f32 %v1093, %v597
        %v1095 = vmul.f32 %v1085, %v598
        %v1096 = vmul.f32 %v1087, %v599
        %v1097 = vmul.f32 %v1088, %v600
        %v1098 = vpack.c.bf16 %v1095, %v1094
        %v1099 = vpack.c.bf16 %v1097, %v1096
        %s1100 = scalar_lea.vmem %s2, 64
        %v1101 = vld [vmem:[%s1100] sm:$0xf]
        %v1102 = vld [vmem:[%s1100 + $0x4] sm:$0xf]
        %v1103 = vld [vmem:[%s1100 + $0x8] sm:$0xf]
        %v1104 = vld [vmem:[%s1100 + $0xc] sm:$0xf]
        %v1105 = vmul.f32 %v1085, %v633
        %v1106 = vmul.f32 %v1087, %v634
        %v1107 = vmul.f32 %v1088, %v635
        %v1108 = vmul.f32 %v1093, %v636
        %v1109 = vpack.c.bf16 %v1106, %v1105
        %v1110 = vpack.c.bf16 %v1108, %v1107
        %s1111 = scalar_lea.vmem %s2, 80
        %v1112 = vld [vmem:[%s1111] sm:$0xf]
        %v1113 = vld [vmem:[%s1111 + $0x4] sm:$0xf]
        %v1114 = vld [vmem:[%s1111 + $0x8] sm:$0xf]
        %v1115 = vld [vmem:[%s1111 + $0xc] sm:$0xf]
        %v1120 = vunpack.c.l.b16 %v1112
        %v1121 = vunpack.c.l.b16 %v1113
        %v1122 = vunpack.c.l.b16 %v1114
        %v1123 = vunpack.c.l.b16 %v1115
        %v1124 = vpack.c.b16 %v1121, %v1120
        %v1125 = vpack.c.b16 %v1123, %v1122
        %v1129 = vsel %vm653, %v1109, 0
        %v1132 = vsel %vm653, %v1110, 0
        %1134 = vmatprep.subr.bf16.mxu0 0
        %1135 = vmatpush1.bf16.msra.mxu0 %v1124
        %1136 = vmatprep.subr.bf16.mxu0 0
        %1137 = vmatpush1.bf16.msra.mxu0 %v1125
        %1138 = vmatprep.subr.bf16.mxu0 0
        %1139 = vmatpush1.bf16.msra.mxu0 0
        %1140 = vmatprep.subr.bf16.mxu0 0
        %1141 = vmatpush1.bf16.msra.mxu0 0
        %1142 = vmatprep.subr.bf16.mxu0 0
        %1143 = vmatpush1.bf16.msra.mxu0 0
        %1144 = vmatprep.subr.bf16.mxu0 0
        %1145 = vmatpush1.bf16.msra.mxu0 0
        %1146 = vmatprep.subr.bf16.mxu0 0
        %1147 = vmatpush1.bf16.msra.mxu0 0
        %1148 = vmatprep.subr.bf16.mxu0 0
        %1149 = vmatpush1.bf16.msra.mxu0 0
        %1150 = vmatprep.subr.bf16.mxu0 0
        %1151 = vmatpush1.bf16.msra.mxu0 0
        %1152 = vmatprep.subr.bf16.mxu0 0
        %1153 = vmatpush1.bf16.msra.mxu0 0
        %1154 = vmatprep.subr.bf16.mxu0 0
        %1155 = vmatpush1.bf16.msra.mxu0 0
        %1156 = vmatprep.subr.bf16.mxu0 0
        %1157 = vmatpush1.bf16.msra.mxu0 0
        %1158 = vmatprep.subr.bf16.mxu0 0
        %1159 = vmatpush1.bf16.msra.mxu0 0
        %1160 = vmatprep.subr.bf16.mxu0 0
        %1161 = vmatpush1.bf16.msra.mxu0 0
        %1162 = vmatprep.subr.bf16.mxu0 0
        %1163 = vmatpush1.bf16.msra.mxu0 0
        %1164 = vmatprep.subr.bf16.mxu0 0
        %1165 = vmatpush1.bf16.msra.mxu0 0
        %1166 = vmatprep.mubr.bf16.mxu0 0
        %1167 = vmatmul.mubr.bf16.gmra.mrb[0].mxu0 %v1129
        %v1168 = vpop.f32.mrb[0].mxu0
        %v1169 = vadd.f32 0.0, %v1168
        %v1170 = vpop.f32.mrb[0].mxu0
        %v1171 = vpop.f32.mrb[0].mxu0
        %v1172 = vadd.f32 0.0, %v1171
        %v1173 = vpop.f32.mrb[0].mxu0
        %1174 = vmatprep.mubr.bf16.mxu0 0
        %1175 = vmatmul.mubr.bf16.gmra.mrb[0].mxu0 %v1132
        %v1176 = vpop.f32.mrb[0].mxu0
        %v1177 = vadd.f32 0.0, %v1176
        %v1178 = vpop.f32.mrb[0].mxu0
        %v1179 = vpop.f32.mrb[0].mxu0
        %v1180 = vadd.f32 0.0, %v1179
        %v1181 = vpop.f32.mrb[0].mxu0
        %1182 = vdwg.mxu0
        %v1187 = vunpack.c.l.b16 %v1101
        %v1188 = vunpack.c.l.b16 %v1102
        %v1189 = vunpack.c.l.b16 %v1103
        %v1190 = vunpack.c.l.b16 %v1104
        %v1191 = vpack.c.b16 %v1188, %v1187
        %v1192 = vpack.c.b16 %v1190, %v1189
        %v1196 = vsel %vm653, %v1098, 0
        %v1199 = vsel %vm653, %v1099, 0
        %1201 = vmatprep.subr.bf16.mxu0 0
        %1202 = vmatpush1.bf16.msra.mxu0 %v1191
        %1203 = vmatprep.subr.bf16.mxu0 0
        %1204 = vmatpush1.bf16.msra.mxu0 %v1192
        %1205 = vmatprep.subr.bf16.mxu0 0
        %1206 = vmatpush1.bf16.msra.mxu0 0
        %1207 = vmatprep.subr.bf16.mxu0 0
        %1208 = vmatpush1.bf16.msra.mxu0 0
        %1209 = vmatprep.subr.bf16.mxu0 0
        %1210 = vmatpush1.bf16.msra.mxu0 0
        %1211 = vmatprep.subr.bf16.mxu0 0
        %1212 = vmatpush1.bf16.msra.mxu0 0
        %1213 = vmatprep.subr.bf16.mxu0 0
        %1214 = vmatpush1.bf16.msra.mxu0 0
        %1215 = vmatprep.subr.bf16.mxu0 0
        %1216 = vmatpush1.bf16.msra.mxu0 0
        %1217 = vmatprep.subr.bf16.mxu0 0
        %1218 = vmatpush1.bf16.msra.mxu0 0
        %1219 = vmatprep.subr.bf16.mxu0 0
        %1220 = vmatpush1.bf16.msra.mxu0 0
        %1221 = vmatprep.subr.bf16.mxu0 0
        %1222 = vmatpush1.bf16.msra.mxu0 0
        %1223 = vmatprep.subr.bf16.mxu0 0
        %1224 = vmatpush1.bf16.msra.mxu0 0
        %1225 = vmatprep.subr.bf16.mxu0 0
        %1226 = vmatpush1.bf16.msra.mxu0 0
        %1227 = vmatprep.subr.bf16.mxu0 0
        %1228 = vmatpush1.bf16.msra.mxu0 0
        %1229 = vmatprep.subr.bf16.mxu0 0
        %1230 = vmatpush1.bf16.msra.mxu0 0
        %1231 = vmatprep.subr.bf16.mxu0 0
        %1232 = vmatpush1.bf16.msra.mxu0 0
        %1233 = vmatprep.mubr.bf16.mxu0 0
        %1234 = vmatmul.mubr.bf16.gmra.mrb[0].mxu0 %v1196
        %v1235 = vpop.f32.mrb[0].mxu0
        %v1236 = vadd.f32 %v1169, %v1235
        %v1237 = vpop.f32.mrb[0].mxu0
        %v1238 = vpop.f32.mrb[0].mxu0
        %v1239 = vadd.f32 %v1172, %v1238
        %v1240 = vpop.f32.mrb[0].mxu0
        %1241 = vmatprep.mubr.bf16.mxu0 0
        %1242 = vmatmul.mubr.bf16.gmra.mrb[0].mxu0 %v1199
        %v1243 = vpop.f32.mrb[0].mxu0
        %v1244 = vadd.f32 %v1177, %v1243
        %v1245 = vpop.f32.mrb[0].mxu0
        %v1246 = vpop.f32.mrb[0].mxu0
        %v1247 = vadd.f32 %v1180, %v1246
        %v1248 = vpop.f32.mrb[0].mxu0
        %1249 = vdwg.mxu0
        %v1250 = vadd.f32 %v695, %v882
        %v1251 = vadd.f32 %v698, %v885
        %v1252 = vadd.f32 %v703, %v890
        %v1253 = vadd.f32 %v706, %v893
        %v1254 = vld [vmem:[#allocation7] ss:$0 sm:$0xff]
        %v1255 = vadd.f32 %v1250, %v1254
        %v1256 = vadd.f32 %v1251, %v1254
        %v1257 = vadd.f32 %v1252, %v1254
        %v1258 = vadd.f32 %v1253, %v1254
        %v1259 = vmax.f32 %v1255, 0.0
        %v1260 = vmax.f32 %v1256, 0.0
        %v1261 = vmax.f32 %v1257, 0.0
        %v1262 = vmax.f32 %v1258, 0.0
        %v1263 = vld [vmem:[#allocation7 + $0x1] ss:$0 sm:$0xff]
        %v1264 = vmul.f32 %v1259, %v1263
        %v1265 = vmul.f32 %v1260, %v1263
        %v1266 = vmul.f32 %v1261, %v1263
        %v1267 = vmul.f32 %v1262, %v1263
        %v1268 = vld [vmem:[#allocation7 + $0x2] ss:$0 sm:$0xff]
        %v1269 = vadd.f32 %v1264, %v1268
        %v1270 = vadd.f32 %v1265, %v1268
        %v1271 = vadd.f32 %v1266, %v1268
        %v1272 = vadd.f32 %v1267, %v1268
        %1277 = vrot.lane.b32.xlu0 %v1066, 8
        %v1278 = vpop.permute.xlu0 %1277
        %1279 = vrot.lane.b32.xlu0 %v1069, 8
        %v1280 = vpop.permute.xlu0 %1279
        %1281 = vrot.lane.b32.xlu0 %v1074, 8
        %v1282 = vpop.permute.xlu0 %1281
        %1283 = vrot.lane.b32.xlu0 %v1077, 8
        %v1284 = vpop.permute.xlu0 %1283
        %v1289 = vadd.f32 %v695, %v1278
        %v1290 = vadd.f32 %v698, %v1280
        %v1291 = vadd.f32 %v703, %v1282
        %v1292 = vadd.f32 %v706, %v1284
        %v1293 = vadd.f32 %v1289, %v1254
        %v1294 = vadd.f32 %v1290, %v1254
        %v1295 = vadd.f32 %v1291, %v1254
        %v1296 = vadd.f32 %v1292, %v1254
        %v1297 = vmax.f32 %v1293, 0.0
        %v1298 = vmax.f32 %v1294, 0.0
        %v1299 = vmax.f32 %v1295, 0.0
        %v1300 = vmax.f32 %v1296, 0.0
        %v1301 = vmul.f32 %v1297, %v1263
        %v1302 = vmul.f32 %v1298, %v1263
        %v1303 = vmul.f32 %v1299, %v1263
        %v1304 = vmul.f32 %v1300, %v1263
        %v1305 = vadd.f32 %v1301, %v1268
        %v1306 = vadd.f32 %v1302, %v1268
        %v1307 = vadd.f32 %v1303, %v1268
        %v1308 = vadd.f32 %v1304, %v1268
        %1313 = vrot.lane.b32.xlu0 %v1236, 16
        %v1314 = vpop.permute.xlu0 %1313
        %1315 = vrot.lane.b32.xlu0 %v1239, 16
        %v1316 = vpop.permute.xlu0 %1315
        %1317 = vrot.lane.b32.xlu0 %v1244, 16
        %v1318 = vpop.permute.xlu0 %1317
        %1319 = vrot.lane.b32.xlu0 %v1247, 16
        %v1320 = vpop.permute.xlu0 %1319
        %v1325 = vadd.f32 %v695, %v1314
        %v1326 = vadd.f32 %v698, %v1316
        %v1327 = vadd.f32 %v703, %v1318
        %v1328 = vadd.f32 %v706, %v1320
        %v1329 = vadd.f32 %v1325, %v1254
        %v1330 = vadd.f32 %v1326, %v1254
        %v1331 = vadd.f32 %v1327, %v1254
        %v1332 = vadd.f32 %v1328, %v1254
        %v1333 = vmax.f32 %v1329, 0.0
        %v1334 = vmax.f32 %v1330, 0.0
        %v1335 = vmax.f32 %v1331, 0.0
        %v1336 = vmax.f32 %v1332, 0.0
        %v1337 = vmul.f32 %v1333, %v1263
        %v1338 = vmul.f32 %v1334, %v1263
        %v1339 = vmul.f32 %v1335, %v1263
        %v1340 = vmul.f32 %v1336, %v1263
        %v1341 = vadd.f32 %v1337, %v1268
        %v1342 = vadd.f32 %v1338, %v1268
        %v1343 = vadd.f32 %v1339, %v1268
        %v1344 = vadd.f32 %v1340, %v1268
        %v1345 = vmax.f32 %v695, 0.0
        %v1346 = vmax.f32 %v698, 0.0
        %v1347 = vmax.f32 %v703, 0.0
        %v1348 = vmax.f32 %v706, 0.0
        %v1349 = vpack.c.bf16 %v1346, %v1345
        %v1350 = vpack.c.bf16 %v1348, %v1347
        %v1351 = vld [vmem:[%s3] sm:$0xf]
        %v1352 = vld [vmem:[#allocation7 + $0x3] ss:$0 sm:$0xff]
        %1355 = vrot.lane.b32.xlu0 %v1349, 104
        %v1356 = vpop.permute.xlu0 %1355
        %1357 = vrot.lane.b32.xlu0 %v1350, 104
        %v1358 = vpop.permute.xlu0 %1357
        %vm1359 = vcmask 64512
        %v1361 = vsel %vm1359, %v1356, 0
        %v1364 = vsel %vm1359, %v1358, 0
        %v1367 = vsel %vm1082, %v1351, 0
        %1369 = vmatprep.subr.bf16.mxu0 0
        %1370 = vmatpush1.bf16.msra.mxu0 %v1367
        %1371 = vmatprep.subr.bf16.mxu0 0
        %1372 = vmatpush1.bf16.msra.mxu0 0
        %1373 = vmatprep.subr.bf16.mxu0 0
        %1374 = vmatpush1.bf16.msra.mxu0 0
        %1375 = vmatprep.subr.bf16.mxu0 0
        %1376 = vmatpush1.bf16.msra.mxu0 0
        %1377 = vmatprep.subr.bf16.mxu0 0
        %1378 = vmatpush1.bf16.msra.mxu0 0
        %1379 = vmatprep.subr.bf16.mxu0 0
        %1380 = vmatpush1.bf16.msra.mxu0 0
        %1381 = vmatprep.subr.bf16.mxu0 0
        %1382 = vmatpush1.bf16.msra.mxu0 0
        %1383 = vmatprep.subr.bf16.mxu0 0
        %1384 = vmatpush1.bf16.msra.mxu0 0
        %1385 = vmatprep.subr.bf16.mxu0 0
        %1386 = vmatpush1.bf16.msra.mxu0 0
        %1387 = vmatprep.subr.bf16.mxu0 0
        %1388 = vmatpush1.bf16.msra.mxu0 0
        %1389 = vmatprep.subr.bf16.mxu0 0
        %1390 = vmatpush1.bf16.msra.mxu0 0
        %1391 = vmatprep.subr.bf16.mxu0 0
        %1392 = vmatpush1.bf16.msra.mxu0 0
        %1393 = vmatprep.subr.bf16.mxu0 0
        %1394 = vmatpush1.bf16.msra.mxu0 0
        %1395 = vmatprep.subr.bf16.mxu0 0
        %1396 = vmatpush1.bf16.msra.mxu0 0
        %1397 = vmatprep.subr.bf16.mxu0 0
        %1398 = vmatpush1.bf16.msra.mxu0 0
        %1399 = vmatprep.subr.bf16.mxu0 0
        %1400 = vmatpush1.bf16.msra.mxu0 0
        %1401 = vmatprep.mubr.bf16.mxu0 0
        %1402 = vmatmul.mubr.bf16.gmra.mrb[0].mxu0 %v1361
        %v1403 = vpop.f32.mrb[0].mxu0
        %v1404 = vadd.f32 %v1352, %v1403
        %v1405 = vpop.f32.mrb[0].mxu0
        %v1406 = vpop.f32.mrb[0].mxu0
        %v1407 = vadd.f32 %v1352, %v1406
        %v1408 = vpop.f32.mrb[0].mxu0
        %1409 = vmatprep.mubr.bf16.mxu0 0
        %1410 = vmatmul.mubr.bf16.gmra.mrb[0].mxu0 %v1364
        %v1411 = vpop.f32.mrb[0].mxu0
        %v1412 = vadd.f32 %v1352, %v1411
        %v1413 = vpop.f32.mrb[0].mxu0
        %v1414 = vpop.f32.mrb[0].mxu0
        %v1415 = vadd.f32 %v1352, %v1414
        %v1416 = vpop.f32.mrb[0].mxu0
        %1417 = vdwg.mxu0
        %v1418 = vlaneseq
        %v1419 = vand.u32 %v1418, 127
        %v1420 = vshra.s32 %v1419, 4
        %vm1421 = vcmp.eq.s32.totalorder %v417, %v1420
        %vm1422 = vcmp.eq.s32.totalorder %v418, %v1420
        %vm1423 = vcmp.eq.s32.totalorder %v419, %v1420
        %vm1424 = vcmp.eq.s32.totalorder %v420, %v1420
        %v1425 = vpack.c.bf16 %v1407, %v1404
        %v1426 = vpack.c.bf16 %v1415, %v1412
        %1429 = vrot.lane.b32.xlu0 %v1425, 124
        %v1430 = vpop.permute.xlu0 %1429
        %1431 = vrot.lane.b32.xlu0 %v1426, 124
        %v1432 = vpop.permute.xlu0 %1431
        %1433 = vrot.lane.b32.xlu0 %v1425, 120
        %v1434 = vpop.permute.xlu0 %1433
        %1435 = vrot.lane.b32.xlu0 %v1426, 120
        %v1436 = vpop.permute.xlu0 %1435
        %vm1437 = vcmask 31744
        %v1439 = vsel %vm1437, %v1430, 0
        %v1442 = vsel %vm1437, %v1432, 0
        %v1445 = vsel %vm1437, %v1434, 0
        %v1448 = vsel %vm1437, %v1436, 0
        %1450 = vmatprep.subr.bf16.mxu0 0
        %1451 = vmatpush1.bf16.xpose.msra.mxu0 %v1445
        %1452 = vmatprep.subr.bf16.mxu0 0
        %1453 = vmatpush1.bf16.xpose.msra.mxu0 %v1448
        %1454 = vmatprep.subr.bf16.mxu0 0
        %1455 = vmatpush1.bf16.xpose.msra.mxu0 0
        %1456 = vmatprep.subr.bf16.mxu0 0
        %1457 = vmatpush1.bf16.xpose.msra.mxu0 0
        %1458 = vmatprep.subr.bf16.mxu0 0
        %1459 = vmatpush1.bf16.xpose.msra.mxu0 0
        %1460 = vmatprep.subr.bf16.mxu0 0
        %1461 = vmatpush1.bf16.xpose.msra.mxu0 0
        %1462 = vmatprep.subr.bf16.mxu0 0
        %1463 = vmatpush1.bf16.xpose.msra.mxu0 0
        %1464 = vmatprep.subr.bf16.mxu0 0
        %1465 = vmatpush1.bf16.xpose.msra.mxu0 0
        %1466 = vmatprep.subr.bf16.mxu0 0
        %1467 = vmatpush1.bf16.xpose.msra.mxu0 0
        %1468 = vmatprep.subr.bf16.mxu0 0
        %1469 = vmatpush1.bf16.xpose.msra.mxu0 0
        %1470 = vmatprep.subr.bf16.mxu0 0
        %1471 = vmatpush1.bf16.xpose.msra.mxu0 0
        %1472 = vmatprep.subr.bf16.mxu0 0
        %1473 = vmatpush1.bf16.xpose.msra.mxu0 0
        %1474 = vmatprep.subr.bf16.mxu0 0
        %1475 = vmatpush1.bf16.xpose.msra.mxu0 0
        %1476 = vmatprep.subr.bf16.mxu0 0
        %1477 = vmatpush1.bf16.xpose.msra.mxu0 0
        %1478 = vmatprep.subr.bf16.mxu0 0
        %1479 = vmatpush1.bf16.xpose.msra.mxu0 0
        %1480 = vmatprep.subr.bf16.mxu0 0
        %1481 = vmatpush1.bf16.xpose.msra.mxu0 0
        %1482 = vmatprep.mubr.bf16.mxu0 0
        %1483 = vmatmul.mubr.bf16.gmra.mrb[0].mxu0 %v1439
        %v1484 = vpop.f32.mrb[0].mxu0
        %v1485 = vadd.f32 0.0, %v1484
        %v1486 = vpop.f32.mrb[0].mxu0
        %v1487 = vpop.f32.mrb[0].mxu0
        %v1488 = vadd.f32 0.0, %v1487
        %v1489 = vpop.f32.mrb[0].mxu0
        %1490 = vmatprep.mubr.bf16.mxu0 0
        %1491 = vmatmul.mubr.bf16.gmra.mrb[0].mxu0 %v1442
        %v1492 = vpop.f32.mrb[0].mxu0
        %v1493 = vadd.f32 0.0, %v1492
        %v1494 = vpop.f32.mrb[0].mxu0
        %v1495 = vpop.f32.mrb[0].mxu0
        %v1496 = vadd.f32 0.0, %v1495
        %v1497 = vpop.f32.mrb[0].mxu0
        %1498 = vdwg.mxu0
        %v1499 = vmul.f32 %v1485, 0.0625
        %v1500 = vmul.f32 %v1488, 0.0625
        %v1501 = vmul.f32 %v1493, 0.0625
        %v1502 = vmul.f32 %v1496, 0.0625
        %v1503 = vsel %vm1421, %v1499, 0.0
        %v1504 = vsel %vm1422, %v1500, 0.0
        %v1505 = vsel %vm1423, %v1501, 0.0
        %v1506 = vsel %vm1424, %v1502, 0.0
        %v1507 = vpack.c.bf16 %v1504, %v1503
        %v1508 = vpack.c.bf16 %v1506, %v1505
        %v1510 = vsel %vm653, %v1507, 0
        %v1513 = vsel %vm653, %v1508, 0
        %1515 = vmatprep.subr.bf16.mxu0 0
        %1516 = vmatpush1.bf16.msra.mxu0 %v1425
        %1517 = vmatprep.subr.bf16.mxu0 0
        %1518 = vmatpush1.bf16.msra.mxu0 %v1426
        %1519 = vmatprep.subr.bf16.mxu0 0
        %1520 = vmatpush1.bf16.msra.mxu0 0
        %1521 = vmatprep.subr.bf16.mxu0 0
        %1522 = vmatpush1.bf16.msra.mxu0 0
        %1523 = vmatprep.subr.bf16.mxu0 0
        %1524 = vmatpush1.bf16.msra.mxu0 0
        %1525 = vmatprep.subr.bf16.mxu0 0
        %1526 = vmatpush1.bf16.msra.mxu0 0
        %1527 = vmatprep.subr.bf16.mxu0 0
        %1528 = vmatpush1.bf16.msra.mxu0 0
        %1529 = vmatprep.subr.bf16.mxu0 0
        %1530 = vmatpush1.bf16.msra.mxu0 0
        %1531 = vmatprep.subr.bf16.mxu0 0
        %1532 = vmatpush1.bf16.msra.mxu0 0
        %1533 = vmatprep.subr.bf16.mxu0 0
        %1534 = vmatpush1.bf16.msra.mxu0 0
        %1535 = vmatprep.subr.bf16.mxu0 0
        %1536 = vmatpush1.bf16.msra.mxu0 0
        %1537 = vmatprep.subr.bf16.mxu0 0
        %1538 = vmatpush1.bf16.msra.mxu0 0
        %1539 = vmatprep.subr.bf16.mxu0 0
        %1540 = vmatpush1.bf16.msra.mxu0 0
        %1541 = vmatprep.subr.bf16.mxu0 0
        %1542 = vmatpush1.bf16.msra.mxu0 0
        %1543 = vmatprep.subr.bf16.mxu0 0
        %1544 = vmatpush1.bf16.msra.mxu0 0
        %1545 = vmatprep.subr.bf16.mxu0 0
        %1546 = vmatpush1.bf16.msra.mxu0 0
        %1547 = vmatprep.mubr.bf16.mxu0 0
        %1548 = vmatmul.mubr.bf16.gmra.mrb[0].mxu0 %v1510
        %v1549 = vpop.f32.mrb[0].mxu0
        %v1550 = vadd.f32 0.0, %v1549
        %v1551 = vpop.f32.mrb[0].mxu0
        %v1552 = vpop.f32.mrb[0].mxu0
        %v1553 = vadd.f32 0.0, %v1552
        %v1554 = vpop.f32.mrb[0].mxu0
        %1555 = vmatprep.mubr.bf16.mxu0 0
        %1556 = vmatmul.mubr.bf16.gmra.mrb[0].mxu0 %v1513
        %v1557 = vpop.f32.mrb[0].mxu0
        %v1558 = vadd.f32 0.0, %v1557
        %v1559 = vpop.f32.mrb[0].mxu0
        %v1560 = vpop.f32.mrb[0].mxu0
        %v1561 = vadd.f32 0.0, %v1560
        %v1562 = vpop.f32.mrb[0].mxu0
        %1563 = vdwg.mxu0
        %v1564 = vpack.c.bf16 %v1553, %v1550
        %v1565 = vpack.c.bf16 %v1561, %v1558
        %v1566 = vld [vmem:[%s4] sm:$0x3]
        %v1567 = vld [vmem:[#allocation7 + $0x4] ss:$0 sm:$0xff]
        %v1569 = vsel %vm1437, %v1564, 0
        %v1572 = vsel %vm1437, %v1565, 0
        %v1575 = vsel %vm898, %v1566, 0
        %1577 = vmatprep.subr.bf16.mxu0 0
        %1578 = vmatpush1.bf16.msra.mxu0 %v1575
        %1579 = vmatprep.subr.bf16.mxu0 0
        %1580 = vmatpush1.bf16.msra.mxu0 0
        %1581 = vmatprep.subr.bf16.mxu0 0
        %1582 = vmatpush1.bf16.msra.mxu0 0
        %1583 = vmatprep.subr.bf16.mxu0 0
        %1584 = vmatpush1.bf16.msra.mxu0 0
        %1585 = vmatprep.subr.bf16.mxu0 0
        %1586 = vmatpush1.bf16.msra.mxu0 0
        %1587 = vmatprep.subr.bf16.mxu0 0
        %1588 = vmatpush1.bf16.msra.mxu0 0
        %1589 = vmatprep.subr.bf16.mxu0 0
        %1590 = vmatpush1.bf16.msra.mxu0 0
        %1591 = vmatprep.subr.bf16.mxu0 0
        %1592 = vmatpush1.bf16.msra.mxu0 0
        %1593 = vmatprep.subr.bf16.mxu0 0
        %1594 = vmatpush1.bf16.msra.mxu0 0
        %1595 = vmatprep.subr.bf16.mxu0 0
        %1596 = vmatpush1.bf16.msra.mxu0 0
        %1597 = vmatprep.subr.bf16.mxu0 0
        %1598 = vmatpush1.bf16.msra.mxu0 0
        %1599 = vmatprep.subr.bf16.mxu0 0
        %1600 = vmatpush1.bf16.msra.mxu0 0
        %1601 = vmatprep.subr.bf16.mxu0 0
        %1602 = vmatpush1.bf16.msra.mxu0 0
        %1603 = vmatprep.subr.bf16.mxu0 0
        %1604 = vmatpush1.bf16.msra.mxu0 0
        %1605 = vmatprep.subr.bf16.mxu0 0
        %1606 = vmatpush1.bf16.msra.mxu0 0
        %1607 = vmatprep.subr.bf16.mxu0 0
        %1608 = vmatpush1.bf16.msra.mxu0 0
        %1609 = vmatprep.mubr.bf16.mxu0 0
        %1610 = vmatmul.mubr.bf16.gmra.mrb[0].mxu0 %v1569
        %v1611 = vpop.f32.mrb[0].mxu0
        %v1612 = vadd.f32 %v1567, %v1611
        %v1613 = vpop.f32.mrb[0].mxu0
        %v1614 = vpop.f32.mrb[0].mxu0
        %v1615 = vadd.f32 %v1567, %v1614
        %v1616 = vpop.f32.mrb[0].mxu0
        %1617 = vmatprep.mubr.bf16.mxu0 0
        %1618 = vmatmul.mubr.bf16.gmra.mrb[0].mxu0 %v1572
        %v1619 = vpop.f32.mrb[0].mxu0
        %v1620 = vadd.f32 %v1567, %v1619
        %v1621 = vpop.f32.mrb[0].mxu0
        %v1622 = vpop.f32.mrb[0].mxu0
        %v1623 = vadd.f32 %v1567, %v1622
        %v1624 = vpop.f32.mrb[0].mxu0
        %1625 = vdwg.mxu0
        %1630 = vrot.lane.b32.xlu0 %v1345, 104
        %v1631 = vpop.permute.xlu0 %1630
        %1632 = vrot.lane.b32.xlu0 %v1346, 104
        %v1633 = vpop.permute.xlu0 %1632
        %1634 = vrot.lane.b32.xlu0 %v1347, 104
        %v1635 = vpop.permute.xlu0 %1634
        %1636 = vrot.lane.b32.xlu0 %v1348, 104
        %v1637 = vpop.permute.xlu0 %1636
        %v1642 = vadd.f32 %v1612, %v1631
        %v1643 = vadd.f32 %v1615, %v1633
        %v1644 = vadd.f32 %v1620, %v1635
        %v1645 = vadd.f32 %v1623, %v1637
        %1646 = vst.msk [vmem:[#allocation2] sm:$0xff] %vm1359, %v1269
        %1647 = vst.msk [vmem:[#allocation2 + $0x8] sm:$0xff] %vm1359, %v1270
        %1648 = vst.msk [vmem:[#allocation2 + $0x10] sm:$0xff] %vm1359, %v1271
        %1649 = vst.msk [vmem:[#allocation2 + $0x18] sm:$0xff] %vm1359, %v1272
        %vm1650 = vcmask 130112
        %1651 = vst.msk [vmem:[#allocation2] sm:$0xff] %vm1650, %v1305
        %1652 = vst.msk [vmem:[#allocation2 + $0x8] sm:$0xff] %vm1650, %v1306
        %1653 = vst.msk [vmem:[#allocation2 + $0x10] sm:$0xff] %vm1650, %v1307
        %1654 = vst.msk [vmem:[#allocation2 + $0x18] sm:$0xff] %vm1650, %v1308
        %vm1655 = vcmask 195712
        %1656 = vst.msk [vmem:[#allocation2] sm:$0xff] %vm1655, %v1341
        %1657 = vst.msk [vmem:[#allocation2 + $0x8] sm:$0xff] %vm1655, %v1342
        %1658 = vst.msk [vmem:[#allocation2 + $0x10] sm:$0xff] %vm1655, %v1343
        %1659 = vst.msk [vmem:[#allocation2 + $0x18] sm:$0xff] %vm1655, %v1344
        %1664 = vrot.lane.b32.xlu0 %v1642, 24
        %v1665 = vpop.permute.xlu0 %1664
        %1666 = vrot.lane.b32.xlu0 %v1643, 24
        %v1667 = vpop.permute.xlu0 %1666
        %1668 = vrot.lane.b32.xlu0 %v1644, 24
        %v1669 = vpop.permute.xlu0 %1668
        %1670 = vrot.lane.b32.xlu0 %v1645, 24
        %v1671 = vpop.permute.xlu0 %1670
        %vm1676 = vcmask 261312
        %1677 = vst.msk [vmem:[#allocation2] sm:$0xff] %vm1676, %v1665
        %1678 = vst.msk [vmem:[#allocation2 + $0x8] sm:$0xff] %vm1676, %v1667
        %1679 = vst.msk [vmem:[#allocation2 + $0x10] sm:$0xff] %vm1676, %v1669
        %1680 = vst.msk [vmem:[#allocation2 + $0x18] sm:$0xff] %vm1676, %v1671
        %v1681 = vld [vmem:[#allocation2] sm:$0xff]
        %v1682 = vld [vmem:[#allocation2 + $0x8] sm:$0xff]
        %v1683 = vld [vmem:[#allocation2 + $0x10] sm:$0xff]
        %v1684 = vld [vmem:[#allocation2 + $0x18] sm:$0xff]
        %v1686 = vrot.slane %v1684, 7
        %v1691 = vrot.slane %v1681, 7
        %v1692 = vrot.slane %v1682, 7
        %v1693 = vsel %vm715, %v1691, %v1692
        %v1694 = vrot.slane %v1683, 7
        %v1695 = vsel %vm715, %v1692, %v1694
        %v1696 = vsel %vm715, %v1694, %v1686
        %v1701 = vsel %vm715, %v1686, %v1691
        %v1702 = vmul.f32 %v1701, %v453
        %v1703 = vmul.f32 %v1693, %v454
        %v1704 = vmul.f32 %v1695, %v455
        %v1705 = vmul.f32 %v1696, %v456
        %v1706 = vpack.c.bf16 %v1703, %v1702
        %v1707 = vpack.c.bf16 %v1705, %v1704
        %1708 = vst.msk [vmem:[#allocation3] sm:$0xff] %vm653, %v1706
        %1709 = vst.msk [vmem:[#allocation3 + $0x8] sm:$0xff] %vm653, %v1707
        %v1710 = vpack.c.bf16 %v1682, %v1681
        %v1711 = vpack.c.bf16 %v1684, %v1683
        %1714 = vrot.lane.b32.xlu0 %v1710, 32
        %v1715 = vpop.permute.xlu0 %1714
        %1716 = vrot.lane.b32.xlu0 %v1711, 32
        %v1717 = vpop.permute.xlu0 %1716
        %vm1720 = vcmask 523520
        %1721 = vst.msk [vmem:[#allocation3] sm:$0xff] %vm1720, %v1715
        %1722 = vst.msk [vmem:[#allocation3 + $0x8] sm:$0xff] %vm1720, %v1717
        %v1723 = vrot.slane %v1681, 1
        %v1724 = vrot.slane %v1682, 1
        %v1725 = vsel %vm737, %v1723, %v1724
        %v1726 = vrot.slane %v1683, 1
        %v1727 = vsel %vm737, %v1724, %v1726
        %v1728 = vrot.slane %v1684, 1
        %v1729 = vsel %vm737, %v1726, %v1728
        %v1735 = vsel %vm737, %v1728, %v1723
        %v1736 = vmul.f32 %v1725, %v489
        %v1737 = vmul.f32 %v1727, %v490
        %v1738 = vmul.f32 %v1729, %v491
        %v1739 = vmul.f32 %v1735, %v492
        %v1740 = vpack.c.bf16 %v1737, %v1736
        %v1741 = vpack.c.bf16 %v1739, %v1738
        %1744 = vrot.lane.b32.xlu0 %v1740, 64
        %v1745 = vpop.permute.xlu0 %1744
        %1746 = vrot.lane.b32.xlu0 %v1741, 64
        %v1747 = vpop.permute.xlu0 %1746
        %vm1750 = vcmask 785920
        %1751 = vst.msk [vmem:[#allocation3] sm:$0xff] %vm1750, %v1745
        %1752 = vst.msk [vmem:[#allocation3 + $0x8] sm:$0xff] %vm1750, %v1747
        %v1753 = vld [vmem:[#allocation3] sm:$0xff]
        %v1754 = vld [vmem:[#allocation3 + $0x8] sm:$0xff]
        %v1755 = vld [vmem:[%s5] sm:$0xf]
        %v1756 = vld [vmem:[%s5 + $0x4] sm:$0xf]
        %v1757 = vld [vmem:[%s5 + $0x8] sm:$0xf]
        %v1758 = vld [vmem:[%s5 + $0xc] sm:$0xf]
        %v1759 = vld [vmem:[%s5 + $0x10] sm:$0xf]
        %v1760 = vld [vmem:[%s5 + $0x14] sm:$0xf]
        %v1761 = vld [vmem:[%s5 + $0x18] sm:$0xf]
        %v1762 = vld [vmem:[%s5 + $0x1c] sm:$0xf]
        %v1763 = vld [vmem:[%s5 + $0x20] sm:$0xf]
        %v1764 = vld [vmem:[%s5 + $0x24] sm:$0xf]
        %v1765 = vld [vmem:[%s5 + $0x28] sm:$0xf]
        %v1766 = vld [vmem:[%s5 + $0x2c] sm:$0xf]
        %v1779 = vunpack.c.l.b16 %v1755
        %v1780 = vunpack.c.l.b16 %v1756
        %v1781 = vunpack.c.l.b16 %v1757
        %v1782 = vunpack.c.l.b16 %v1758
        %v1783 = vunpack.c.l.b16 %v1759
        %v1784 = vunpack.c.l.b16 %v1760
        %v1785 = vunpack.c.l.b16 %v1761
        %v1786 = vunpack.c.l.b16 %v1762
        %v1787 = vunpack.c.l.b16 %v1763
        %v1788 = vunpack.c.l.b16 %v1764
        %v1789 = vunpack.c.l.b16 %v1765
        %v1790 = vunpack.c.l.b16 %v1766
        %v1791 = vpack.c.b16 %v1780, %v1779
        %v1792 = vpack.c.b16 %v1782, %v1781
        %v1793 = vpack.c.b16 %v1784, %v1783
        %v1794 = vpack.c.b16 %v1786, %v1785
        %v1795 = vpack.c.b16 %v1788, %v1787
        %v1796 = vpack.c.b16 %v1790, %v1789
        %vm1803 = vcmask 785408
        %v1805 = vsel %vm1803, %v1753, 0
        %v1808 = vsel %vm1803, %v1754, 0
        %1810 = vmatprep.subr.bf16.mxu0 0
        %1811 = vmatpush1.bf16.msra.mxu0 %v1791
        %1812 = vmatprep.subr.bf16.mxu0 0
        %1813 = vmatpush1.bf16.msra.mxu0 %v1792
        %1814 = vmatprep.subr.bf16.mxu0 0
        %1815 = vmatpush1.bf16.msra.mxu0 %v1793
        %1816 = vmatprep.subr.bf16.mxu0 0
        %1817 = vmatpush1.bf16.msra.mxu0 %v1794
        %1818 = vmatprep.subr.bf16.mxu0 0
        %1819 = vmatpush1.bf16.msra.mxu0 %v1795
        %1820 = vmatprep.subr.bf16.mxu0 0
        %1821 = vmatpush1.bf16.msra.mxu0 %v1796
        %1822 = vmatprep.subr.bf16.mxu0 0
        %1823 = vmatpush1.bf16.msra.mxu0 0
        %1824 = vmatprep.subr.bf16.mxu0 0
        %1825 = vmatpush1.bf16.msra.mxu0 0
        %1826 = vmatprep.subr.bf16.mxu0 0
        %1827 = vmatpush1.bf16.msra.mxu0 0
        %1828 = vmatprep.subr.bf16.mxu0 0
        %1829 = vmatpush1.bf16.msra.mxu0 0
        %1830 = vmatprep.subr.bf16.mxu0 0
        %1831 = vmatpush1.bf16.msra.mxu0 0
        %1832 = vmatprep.subr.bf16.mxu0 0
        %1833 = vmatpush1.bf16.msra.mxu0 0
        %1834 = vmatprep.subr.bf16.mxu0 0
        %1835 = vmatpush1.bf16.msra.mxu0 0
        %1836 = vmatprep.subr.bf16.mxu0 0
        %1837 = vmatpush1.bf16.msra.mxu0 0
        %1838 = vmatprep.subr.bf16.mxu0 0
        %1839 = vmatpush1.bf16.msra.mxu0 0
        %1840 = vmatprep.subr.bf16.mxu0 0
        %1841 = vmatpush1.bf16.msra.mxu0 0
        %1842 = vmatprep.mubr.bf16.mxu0 0
        %1843 = vmatmul.mubr.bf16.gmra.mrb[0].mxu0 %v1805
        %v1844 = vpop.f32.mrb[0].mxu0
        %v1845 = vadd.f32 0.0, %v1844
        %v1846 = vpop.f32.mrb[0].mxu0
        %v1847 = vpop.f32.mrb[0].mxu0
        %v1848 = vadd.f32 0.0, %v1847
        %v1849 = vpop.f32.mrb[0].mxu0
        %1850 = vmatprep.mubr.bf16.mxu0 0
        %1851 = vmatmul.mubr.bf16.gmra.mrb[0].mxu0 %v1808
        %v1852 = vpop.f32.mrb[0].mxu0
        %v1853 = vadd.f32 0.0, %v1852
        %v1854 = vpop.f32.mrb[0].mxu0
        %v1855 = vpop.f32.mrb[0].mxu0
        %v1856 = vadd.f32 0.0, %v1855
        %v1857 = vpop.f32.mrb[0].mxu0
        %1858 = vdwg.mxu0
        %v1859 = vmax.f32 %v1845, 0.0
        %v1860 = vmax.f32 %v1848, 0.0
        %v1861 = vmax.f32 %v1853, 0.0
        %v1862 = vmax.f32 %v1856, 0.0
        %v1863 = vld [vmem:[#allocation7 + $0x5] ss:$0 sm:$0xff]
        %v1864 = vmul.f32 %v1859, %v1863
        %v1865 = vmul.f32 %v1860, %v1863
        %v1866 = vmul.f32 %v1861, %v1863
        %v1867 = vmul.f32 %v1862, %v1863
        %v1868 = vld [vmem:[#allocation7 + $0x6] ss:$0 sm:$0xff]
        %v1869 = vadd.f32 %v1864, %v1868
        %v1870 = vadd.f32 %v1865, %v1868
        %v1871 = vadd.f32 %v1866, %v1868
        %v1872 = vadd.f32 %v1867, %v1868
        %v1873 = vadd.f32 %v1869, %v406
        %v1874 = vadd.f32 %v1870, %v407
        %v1875 = vadd.f32 %v1871, %v408
        %v1876 = vadd.f32 %v1872, %v409
        %v1877 = vpack.c.bf16 %v1874, %v1873
        %v1878 = vpack.c.bf16 %v1876, %v1875
        %v1879 = vld [vmem:[#allocation4] sm:$0xff]
        %v1880 = vld [vmem:[#allocation4 + $0x8] sm:$0xff]
        %v1881 = vld [vmem:[#allocation4 + $0x10] sm:$0xff]
        %v1882 = vld [vmem:[#allocation4 + $0x18] sm:$0xff]
        %v1883 = vld [vmem:[#allocation4 + $0x20] sm:$0xff]
        %v1884 = vld [vmem:[#allocation4 + $0x28] sm:$0xff]
        %v1885 = vld [vmem:[#allocation4 + $0x30] sm:$0xff]
        %v1886 = vld [vmem:[#allocation4 + $0x38] sm:$0xff]
        %s1887 = scalar_lea.vmem [#allocation7], 7
        %v1888 = vld [vmem:[%s1887] ss:$8 sm:$0xf]
        %v1890 = vlaneseq
        %v1891 = vshrl.u32 %v1890, 7
        %v1892 = vsub.s32 0, %v1891
        %v1893 = vrot.slane %v1888, %v1892
        %v1894 = vlaneseq
        %v1895 = vshrl.u32 %v1894, 7
        %v1896 = vsub.s32 1, %v1895
        %v1897 = vrot.slane %v1888, %v1896
        %v1898 = vlaneseq
        %v1899 = vshrl.u32 %v1898, 7
        %v1900 = vsub.s32 2, %v1899
        %v1901 = vrot.slane %v1888, %v1900
        %v1902 = vlaneseq
        %v1903 = vshrl.u32 %v1902, 7
        %v1904 = vsub.s32 3, %v1903
        %v1905 = vrot.slane %v1888, %v1904
        %v1918 = vunpack.c.l.b16 %v1879
        %v1919 = vunpack.c.h.b16 %v1879
        %v1920 = vunpack.c.l.b16 %v1880
        %v1921 = vunpack.c.h.b16 %v1880
        %v1922 = vunpack.c.l.b16 %v1881
        %v1923 = vunpack.c.h.b16 %v1881
        %v1924 = vunpack.c.l.b16 %v1882
        %v1925 = vunpack.c.h.b16 %v1882
        %v1926 = vunpack.c.l.b16 %v1883
        %v1927 = vunpack.c.h.b16 %v1883
        %v1928 = vunpack.c.l.b16 %v1884
        %v1929 = vunpack.c.h.b16 %v1884
        %v1930 = vunpack.c.l.b16 %v1885
        %v1931 = vunpack.c.h.b16 %v1885
        %v1932 = vunpack.c.l.b16 %v1886
        %v1933 = vunpack.c.h.b16 %v1886
        %v1934 = vpack.c.b16 %v1922, %v1918
        %v1935 = vpack.c.b16 %v1923, %v1919
        %v1936 = vpack.c.b16 %v1924, %v1920
        %v1937 = vpack.c.b16 %v1925, %v1921
        %v1938 = vpack.c.b16 %v1930, %v1926
        %v1939 = vpack.c.b16 %v1931, %v1927
        %v1940 = vpack.c.b16 %v1932, %v1928
        %v1941 = vpack.c.b16 %v1933, %v1929
        %v1951 = vsel %vm653, %v1877, 0
        %v1954 = vsel %vm653, %v1878, 0
        %1956 = vmatprep.subr.bf16.mxu0 %v1935
        %1957 = vmatpush1.bf16.msra.mxu0 %v1934
        %1958 = vmatprep.subr.bf16.mxu0 %v1939
        %1959 = vmatpush1.bf16.msra.mxu0 %v1938
        %1960 = vmatprep.subr.bf16.mxu0 0
        %1961 = vmatpush1.bf16.msra.mxu0 0
        %1962 = vmatprep.subr.bf16.mxu0 0
        %1963 = vmatpush1.bf16.msra.mxu0 0
        %1964 = vmatprep.subr.bf16.mxu0 0
        %1965 = vmatpush1.bf16.msra.mxu0 0
        %1966 = vmatprep.subr.bf16.mxu0 0
        %1967 = vmatpush1.bf16.msra.mxu0 0
        %1968 = vmatprep.subr.bf16.mxu0 0
        %1969 = vmatpush1.bf16.msra.mxu0 0
        %1970 = vmatprep.subr.bf16.mxu0 0
        %1971 = vmatpush1.bf16.msra.mxu0 0
        %1972 = vmatprep.subr.bf16.mxu0 0
        %1973 = vmatpush1.bf16.msra.mxu0 0
        %1974 = vmatprep.subr.bf16.mxu0 0
        %1975 = vmatpush1.bf16.msra.mxu0 0
        %1976 = vmatprep.subr.bf16.mxu0 0
        %1977 = vmatpush1.bf16.msra.mxu0 0
        %1978 = vmatprep.subr.bf16.mxu0 0
        %1979 = vmatpush1.bf16.msra.mxu0 0
        %1980 = vmatprep.subr.bf16.mxu0 0
        %1981 = vmatpush1.bf16.msra.mxu0 0
        %1982 = vmatprep.subr.bf16.mxu0 0
        %1983 = vmatpush1.bf16.msra.mxu0 0
        %1984 = vmatprep.subr.bf16.mxu0 0
        %1985 = vmatpush1.bf16.msra.mxu0 0
        %1986 = vmatprep.subr.bf16.mxu0 0
        %1987 = vmatpush1.bf16.msra.mxu0 0
        %1988 = vmatprep.mubr.bf16.mxu0 0
        %1989 = vmatmul.mubr.bf16.gmra.mrb[0].mxu0 %v1951
        %v1990 = vpop.f32.mrb[0].mxu0
        %v1991 = vadd.f32 %v1893, %v1990
        %v1992 = vpop.f32.mrb[0].mxu0
        %v1993 = vadd.f32 %v1897, %v1992
        %v1994 = vpop.f32.mrb[0].mxu0
        %v1995 = vadd.f32 %v1893, %v1994
        %v1996 = vpop.f32.mrb[0].mxu0
        %v1997 = vadd.f32 %v1897, %v1996
        %1998 = vmatprep.mubr.bf16.mxu0 0
        %1999 = vmatmul.mubr.bf16.gmra.mrb[0].mxu0 %v1954
        %v2000 = vpop.f32.mrb[0].mxu0
        %v2001 = vadd.f32 %v1893, %v2000
        %v2002 = vpop.f32.mrb[0].mxu0
        %v2003 = vadd.f32 %v1897, %v2002
        %v2004 = vpop.f32.mrb[0].mxu0
        %v2005 = vadd.f32 %v1893, %v2004
        %v2006 = vpop.f32.mrb[0].mxu0
        %v2007 = vadd.f32 %v1897, %v2006
        %2008 = vdwg.mxu0
        %2009 = vmatprep.subr.bf16.mxu0 %v1937
        %2010 = vmatpush1.bf16.msra.mxu0 %v1936
        %2011 = vmatprep.subr.bf16.mxu0 %v1941
        %2012 = vmatpush1.bf16.msra.mxu0 %v1940
        %2013 = vmatprep.subr.bf16.mxu0 0
        %2014 = vmatpush1.bf16.msra.mxu0 0
        %2015 = vmatprep.subr.bf16.mxu0 0
        %2016 = vmatpush1.bf16.msra.mxu0 0
        %2017 = vmatprep.subr.bf16.mxu0 0
        %2018 = vmatpush1.bf16.msra.mxu0 0
        %2019 = vmatprep.subr.bf16.mxu0 0
        %2020 = vmatpush1.bf16.msra.mxu0 0
        %2021 = vmatprep.subr.bf16.mxu0 0
        %2022 = vmatpush1.bf16.msra.mxu0 0
        %2023 = vmatprep.subr.bf16.mxu0 0
        %2024 = vmatpush1.bf16.msra.mxu0 0
        %2025 = vmatprep.subr.bf16.mxu0 0
        %2026 = vmatpush1.bf16.msra.mxu0 0
        %2027 = vmatprep.subr.bf16.mxu0 0
        %2028 = vmatpush1.bf16.msra.mxu0 0
        %2029 = vmatprep.subr.bf16.mxu0 0
        %2030 = vmatpush1.bf16.msra.mxu0 0
        %2031 = vmatprep.subr.bf16.mxu0 0
        %2032 = vmatpush1.bf16.msra.mxu0 0
        %2033 = vmatprep.subr.bf16.mxu0 0
        %2034 = vmatpush1.bf16.msra.mxu0 0
        %2035 = vmatprep.subr.bf16.mxu0 0
        %2036 = vmatpush1.bf16.msra.mxu0 0
        %2037 = vmatprep.subr.bf16.mxu0 0
        %2038 = vmatpush1.bf16.msra.mxu0 0
        %2039 = vmatprep.subr.bf16.mxu0 0
        %2040 = vmatpush1.bf16.msra.mxu0 0
        %2041 = vmatprep.mubr.bf16.mxu0 0
        %2042 = vmatmul.mubr.bf16.gmra.mrb[0].mxu0 %v1951
        %v2043 = vpop.f32.mrb[0].mxu0
        %v2044 = vadd.f32 %v1901, %v2043
        %v2045 = vpop.f32.mrb[0].mxu0
        %v2046 = vadd.f32 %v1905, %v2045
        %v2047 = vpop.f32.mrb[0].mxu0
        %v2048 = vadd.f32 %v1901, %v2047
        %v2049 = vpop.f32.mrb[0].mxu0
        %v2050 = vadd.f32 %v1905, %v2049
        %2051 = vmatprep.mubr.bf16.mxu0 0
        %2052 = vmatmul.mubr.bf16.gmra.mrb[0].mxu0 %v1954
        %v2053 = vpop.f32.mrb[0].mxu0
        %v2054 = vadd.f32 %v1901, %v2053
        %v2055 = vpop.f32.mrb[0].mxu0
        %v2056 = vadd.f32 %v1905, %v2055
        %v2057 = vpop.f32.mrb[0].mxu0
        %v2058 = vadd.f32 %v1901, %v2057
        %v2059 = vpop.f32.mrb[0].mxu0
        %v2060 = vadd.f32 %v1905, %v2059
        %2061 = vdwg.mxu0
        %v2062 = vmax.f32 %v1991, 0.0
        %v2063 = vmax.f32 %v1993, 0.0
        %v2064 = vmax.f32 %v2044, 0.0
        %v2065 = vmax.f32 %v2046, 0.0
        %v2066 = vmax.f32 %v1995, 0.0
        %v2067 = vmax.f32 %v1997, 0.0
        %v2068 = vmax.f32 %v2048, 0.0
        %v2069 = vmax.f32 %v2050, 0.0
        %v2070 = vmax.f32 %v2001, 0.0
        %v2071 = vmax.f32 %v2003, 0.0
        %v2072 = vmax.f32 %v2054, 0.0
        %v2073 = vmax.f32 %v2056, 0.0
        %v2074 = vmax.f32 %v2005, 0.0
        %v2075 = vmax.f32 %v2007, 0.0
        %v2076 = vmax.f32 %v2058, 0.0
        %v2077 = vmax.f32 %v2060, 0.0
        %v2078 = vpack.c.bf16 %v2066, %v2062
        %v2079 = vpack.c.bf16 %v2067, %v2063
        %v2080 = vpack.c.bf16 %v2068, %v2064
        %v2081 = vpack.c.bf16 %v2069, %v2065
        %v2082 = vpack.c.bf16 %v2074, %v2070
        %v2083 = vpack.c.bf16 %v2075, %v2071
        %v2084 = vpack.c.bf16 %v2076, %v2072
        %v2085 = vpack.c.bf16 %v2077, %v2073
        %v2086 = vld [vmem:[%s7] sm:$0xf]
        %v2087 = vld [vmem:[%s7 + $0x4] sm:$0xf]
        %v2088 = vld [vmem:[%s7 + $0x8] sm:$0xf]
        %v2089 = vld [vmem:[%s7 + $0xc] sm:$0xf]
        %v2090 = vld [vmem:[%s7 + $0x10] sm:$0xf]
        %v2091 = vld [vmem:[%s7 + $0x14] sm:$0xf]
        %v2092 = vld [vmem:[%s7 + $0x18] sm:$0xf]
        %v2093 = vld [vmem:[%s7 + $0x1c] sm:$0xf]
        %v2094 = vld [vmem:[%s7 + $0x20] sm:$0xf]
        %v2095 = vld [vmem:[%s7 + $0x24] sm:$0xf]
        %v2096 = vld [vmem:[%s7 + $0x28] sm:$0xf]
        %v2097 = vld [vmem:[%s7 + $0x2c] sm:$0xf]
        %v2098 = vld [vmem:[%s7 + $0x30] sm:$0xf]
        %v2099 = vld [vmem:[%s7 + $0x34] sm:$0xf]
        %v2100 = vld [vmem:[%s7 + $0x38] sm:$0xf]
        %v2101 = vld [vmem:[%s7 + $0x3c] sm:$0xf]
        %v2102 = vld [vmem:[%s7 + $0x40] sm:$0xf]
        %v2103 = vld [vmem:[%s7 + $0x44] sm:$0xf]
        %v2104 = vld [vmem:[%s7 + $0x48] sm:$0xf]
        %v2105 = vld [vmem:[%s7 + $0x4c] sm:$0xf]
        %v2106 = vld [vmem:[%s7 + $0x50] sm:$0xf]
        %v2107 = vld [vmem:[%s7 + $0x54] sm:$0xf]
        %v2108 = vld [vmem:[%s7 + $0x58] sm:$0xf]
        %v2109 = vld [vmem:[%s7 + $0x5c] sm:$0xf]
        %v2110 = vld [vmem:[%s7 + $0x60] sm:$0xf]
        %v2111 = vld [vmem:[%s7 + $0x64] sm:$0xf]
        %v2112 = vld [vmem:[%s7 + $0x68] sm:$0xf]
        %v2113 = vld [vmem:[%s7 + $0x6c] sm:$0xf]
        %v2114 = vld [vmem:[%s7 + $0x70] sm:$0xf]
        %v2115 = vld [vmem:[%s7 + $0x74] sm:$0xf]
        %v2116 = vld [vmem:[%s7 + $0x78] sm:$0xf]
        %v2117 = vld [vmem:[%s7 + $0x7c] sm:$0xf]
        %v2118 = vld [vmem:[%s7 + $0x80] sm:$0xf]
        %v2119 = vld [vmem:[%s7 + $0x84] sm:$0xf]
        %v2120 = vld [vmem:[%s7 + $0x88] sm:$0xf]
        %v2121 = vld [vmem:[%s7 + $0x8c] sm:$0xf]
        %v2122 = vld [vmem:[%s7 + $0x90] sm:$0xf]
        %v2123 = vld [vmem:[%s7 + $0x94] sm:$0xf]
        %v2124 = vld [vmem:[%s7 + $0x98] sm:$0xf]
        %v2125 = vld [vmem:[%s7 + $0x9c] sm:$0xf]
        %v2126 = vld [vmem:[%s7 + $0xa0] sm:$0xf]
        %v2127 = vld [vmem:[%s7 + $0xa4] sm:$0xf]
        %v2128 = vld [vmem:[%s7 + $0xa8] sm:$0xf]
        %v2129 = vld [vmem:[%s7 + $0xac] sm:$0xf]
        %v2130 = vld [vmem:[%s7 + $0xb0] sm:$0xf]
        %v2131 = vld [vmem:[%s7 + $0xb4] sm:$0xf]
        %v2132 = vld [vmem:[%s7 + $0xb8] sm:$0xf]
        %v2133 = vld [vmem:[%s7 + $0xbc] sm:$0xf]
        %v2134 = vld [vmem:[%s7 + $0xc0] sm:$0xf]
        %v2135 = vld [vmem:[%s7 + $0xc4] sm:$0xf]
        %v2136 = vld [vmem:[%s7 + $0xc8] sm:$0xf]
        %v2137 = vld [vmem:[%s7 + $0xcc] sm:$0xf]
        %v2138 = vld [vmem:[%s7 + $0xd0] sm:$0xf]
        %v2139 = vld [vmem:[%s7 + $0xd4] sm:$0xf]
        %v2140 = vld [vmem:[%s7 + $0xd8] sm:$0xf]
        %v2141 = vld [vmem:[%s7 + $0xdc] sm:$0xf]
        %v2142 = vld [vmem:[%s7 + $0xe0] sm:$0xf]
        %v2143 = vld [vmem:[%s7 + $0xe4] sm:$0xf]
        %v2144 = vld [vmem:[%s7 + $0xe8] sm:$0xf]
        %v2145 = vld [vmem:[%s7 + $0xec] sm:$0xf]
        %v2146 = vld [vmem:[%s7 + $0xf0] sm:$0xf]
        %v2147 = vld [vmem:[%s7 + $0xf4] sm:$0xf]
        %v2148 = vld [vmem:[%s7 + $0xf8] sm:$0xf]
        %v2149 = vld [vmem:[%s7 + $0xfc] sm:$0xf]
        %v2150 = vld [vmem:[#allocation7 + $0x20] ss:$0 sm:$0xff]
        %v2215 = vunpack.c.l.b16 %v2086
        %v2216 = vunpack.c.l.b16 %v2087
        %v2217 = vunpack.c.l.b16 %v2088
        %v2218 = vunpack.c.l.b16 %v2089
        %v2219 = vunpack.c.l.b16 %v2090
        %v2220 = vunpack.c.l.b16 %v2091
        %v2221 = vunpack.c.l.b16 %v2092
        %v2222 = vunpack.c.l.b16 %v2093
        %v2223 = vunpack.c.l.b16 %v2094
        %v2224 = vunpack.c.l.b16 %v2095
        %v2225 = vunpack.c.l.b16 %v2096
        %v2226 = vunpack.c.l.b16 %v2097
        %v2227 = vunpack.c.l.b16 %v2098
        %v2228 = vunpack.c.l.b16 %v2099
        %v2229 = vunpack.c.l.b16 %v2100
        %v2230 = vunpack.c.l.b16 %v2101
        %v2231 = vunpack.c.l.b16 %v2102
        %v2232 = vunpack.c.l.b16 %v2103
        %v2233 = vunpack.c.l.b16 %v2104
        %v2234 = vunpack.c.l.b16 %v2105
        %v2235 = vunpack.c.l.b16 %v2106
        %v2236 = vunpack.c.l.b16 %v2107
        %v2237 = vunpack.c.l.b16 %v2108
        %v2238 = vunpack.c.l.b16 %v2109
        %v2239 = vunpack.c.l.b16 %v2110
        %v2240 = vunpack.c.l.b16 %v2111
        %v2241 = vunpack.c.l.b16 %v2112
        %v2242 = vunpack.c.l.b16 %v2113
        %v2243 = vunpack.c.l.b16 %v2114
        %v2244 = vunpack.c.l.b16 %v2115
        %v2245 = vunpack.c.l.b16 %v2116
        %v2246 = vunpack.c.l.b16 %v2117
        %v2247 = vunpack.c.l.b16 %v2118
        %v2248 = vunpack.c.l.b16 %v2119
        %v2249 = vunpack.c.l.b16 %v2120
        %v2250 = vunpack.c.l.b16 %v2121
        %v2251 = vunpack.c.l.b16 %v2122
        %v2252 = vunpack.c.l.b16 %v2123
        %v2253 = vunpack.c.l.b16 %v2124
        %v2254 = vunpack.c.l.b16 %v2125
        %v2255 = vunpack.c.l.b16 %v2126
        %v2256 = vunpack.c.l.b16 %v2127
        %v2257 = vunpack.c.l.b16 %v2128
        %v2258 = vunpack.c.l.b16 %v2129
        %v2259 = vunpack.c.l.b16 %v2130
        %v2260 = vunpack.c.l.b16 %v2131
        %v2261 = vunpack.c.l.b16 %v2132
        %v2262 = vunpack.c.l.b16 %v2133
        %v2263 = vunpack.c.l.b16 %v2134
        %v2264 = vunpack.c.l.b16 %v2135
        %v2265 = vunpack.c.l.b16 %v2136
        %v2266 = vunpack.c.l.b16 %v2137
        %v2267 = vunpack.c.l.b16 %v2138
        %v2268 = vunpack.c.l.b16 %v2139
        %v2269 = vunpack.c.l.b16 %v2140
        %v2270 = vunpack.c.l.b16 %v2141
        %v2271 = vunpack.c.l.b16 %v2142
        %v2272 = vunpack.c.l.b16 %v2143
        %v2273 = vunpack.c.l.b16 %v2144
        %v2274 = vunpack.c.l.b16 %v2145
        %v2275 = vunpack.c.l.b16 %v2146
        %v2276 = vunpack.c.l.b16 %v2147
        %v2277 = vunpack.c.l.b16 %v2148
        %v2278 = vunpack.c.l.b16 %v2149
        %v2279 = vpack.c.b16 %v2216, %v2215
        %v2280 = vpack.c.b16 %v2218, %v2217
        %v2281 = vpack.c.b16 %v2220, %v2219
        %v2282 = vpack.c.b16 %v2222, %v2221
        %v2283 = vpack.c.b16 %v2224, %v2223
        %v2284 = vpack.c.b16 %v2226, %v2225
        %v2285 = vpack.c.b16 %v2228, %v2227
        %v2286 = vpack.c.b16 %v2230, %v2229
        %v2287 = vpack.c.b16 %v2232, %v2231
        %v2288 = vpack.c.b16 %v2234, %v2233
        %v2289 = vpack.c.b16 %v2236, %v2235
        %v2290 = vpack.c.b16 %v2238, %v2237
        %v2291 = vpack.c.b16 %v2240, %v2239
        %v2292 = vpack.c.b16 %v2242, %v2241
        %v2293 = vpack.c.b16 %v2244, %v2243
        %v2294 = vpack.c.b16 %v2246, %v2245
        %v2295 = vpack.c.b16 %v2248, %v2247
        %v2296 = vpack.c.b16 %v2250, %v2249
        %v2297 = vpack.c.b16 %v2252, %v2251
        %v2298 = vpack.c.b16 %v2254, %v2253
        %v2299 = vpack.c.b16 %v2256, %v2255
        %v2300 = vpack.c.b16 %v2258, %v2257
        %v2301 = vpack.c.b16 %v2260, %v2259
        %v2302 = vpack.c.b16 %v2262, %v2261
        %v2303 = vpack.c.b16 %v2264, %v2263
        %v2304 = vpack.c.b16 %v2266, %v2265
        %v2305 = vpack.c.b16 %v2268, %v2267
        %v2306 = vpack.c.b16 %v2270, %v2269
        %v2307 = vpack.c.b16 %v2272, %v2271
        %v2308 = vpack.c.b16 %v2274, %v2273
        %v2309 = vpack.c.b16 %v2276, %v2275
        %v2310 = vpack.c.b16 %v2278, %v2277
        %2343 = vmatprep.subr.bf16.mxu0 0
        %2344 = vmatpush1.bf16.msra.mxu0 %v2279
        %2345 = vmatprep.subr.bf16.mxu0 0
        %2346 = vmatpush1.bf16.msra.mxu0 %v2280
        %2347 = vmatprep.subr.bf16.mxu0 0
        %2348 = vmatpush1.bf16.msra.mxu0 %v2281
        %2349 = vmatprep.subr.bf16.mxu0 0
        %2350 = vmatpush1.bf16.msra.mxu0 %v2282
        %2351 = vmatprep.subr.bf16.mxu0 0
        %2352 = vmatpush1.bf16.msra.mxu0 %v2283
        %2353 = vmatprep.subr.bf16.mxu0 0
        %2354 = vmatpush1.bf16.msra.mxu0 %v2284
        %2355 = vmatprep.subr.bf16.mxu0 0
        %2356 = vmatpush1.bf16.msra.mxu0 %v2285
        %2357 = vmatprep.subr.bf16.mxu0 0
        %2358 = vmatpush1.bf16.msra.mxu0 %v2286
        %2359 = vmatprep.subr.bf16.mxu0 0
        %2360 = vmatpush1.bf16.msra.mxu0 %v2287
        %2361 = vmatprep.subr.bf16.mxu0 0
        %2362 = vmatpush1.bf16.msra.mxu0 %v2288
        %2363 = vmatprep.subr.bf16.mxu0 0
        %2364 = vmatpush1.bf16.msra.mxu0 %v2289
        %2365 = vmatprep.subr.bf16.mxu0 0
        %2366 = vmatpush1.bf16.msra.mxu0 %v2290
        %2367 = vmatprep.subr.bf16.mxu0 0
        %2368 = vmatpush1.bf16.msra.mxu0 %v2291
        %2369 = vmatprep.subr.bf16.mxu0 0
        %2370 = vmatpush1.bf16.msra.mxu0 %v2292
        %2371 = vmatprep.subr.bf16.mxu0 0
        %2372 = vmatpush1.bf16.msra.mxu0 %v2293
        %2373 = vmatprep.subr.bf16.mxu0 0
        %2374 = vmatpush1.bf16.msra.mxu0 %v2294
        %2375 = vmatprep.mubr.bf16.mxu0 %v2079
        %2376 = vmatmul.mubr.bf16.gmra.mrb[0].mxu0 %v2078
        %v2377 = vpop.f32.mrb[0].mxu0
        %v2378 = vadd.f32 %v2150, %v2377
        %v2379 = vpop.f32.mrb[0].mxu0
        %v2380 = vpop.f32.mrb[0].mxu0
        %v2381 = vadd.f32 %v2150, %v2380
        %v2382 = vpop.f32.mrb[0].mxu0
        %2383 = vmatprep.mubr.bf16.mxu0 %v2083
        %2384 = vmatmul.mubr.bf16.gmra.mrb[0].mxu0 %v2082
        %v2385 = vpop.f32.mrb[0].mxu0
        %v2386 = vadd.f32 %v2150, %v2385
        %v2387 = vpop.f32.mrb[0].mxu0
        %v2388 = vpop.f32.mrb[0].mxu0
        %v2389 = vadd.f32 %v2150, %v2388
        %v2390 = vpop.f32.mrb[0].mxu0
        %2391 = vdwg.mxu0
        %2392 = vmatprep.subr.bf16.mxu0 0
        %2393 = vmatpush1.bf16.msra.mxu0 %v2295
        %2394 = vmatprep.subr.bf16.mxu0 0
        %2395 = vmatpush1.bf16.msra.mxu0 %v2296
        %2396 = vmatprep.subr.bf16.mxu0 0
        %2397 = vmatpush1.bf16.msra.mxu0 %v2297
        %2398 = vmatprep.subr.bf16.mxu0 0
        %2399 = vmatpush1.bf16.msra.mxu0 %v2298
        %2400 = vmatprep.subr.bf16.mxu0 0
        %2401 = vmatpush1.bf16.msra.mxu0 %v2299
        %2402 = vmatprep.subr.bf16.mxu0 0
        %2403 = vmatpush1.bf16.msra.mxu0 %v2300
        %2404 = vmatprep.subr.bf16.mxu0 0
        %2405 = vmatpush1.bf16.msra.mxu0 %v2301
        %2406 = vmatprep.subr.bf16.mxu0 0
        %2407 = vmatpush1.bf16.msra.mxu0 %v2302
        %2408 = vmatprep.subr.bf16.mxu0 0
        %2409 = vmatpush1.bf16.msra.mxu0 %v2303
        %2410 = vmatprep.subr.bf16.mxu0 0
        %2411 = vmatpush1.bf16.msra.mxu0 %v2304
        %2412 = vmatprep.subr.bf16.mxu0 0
        %2413 = vmatpush1.bf16.msra.mxu0 %v2305
        %2414 = vmatprep.subr.bf16.mxu0 0
        %2415 = vmatpush1.bf16.msra.mxu0 %v2306
        %2416 = vmatprep.subr.bf16.mxu0 0
        %2417 = vmatpush1.bf16.msra.mxu0 %v2307
        %2418 = vmatprep.subr.bf16.mxu0 0
        %2419 = vmatpush1.bf16.msra.mxu0 %v2308
        %2420 = vmatprep.subr.bf16.mxu0 0
        %2421 = vmatpush1.bf16.msra.mxu0 %v2309
        %2422 = vmatprep.subr.bf16.mxu0 0
        %2423 = vmatpush1.bf16.msra.mxu0 %v2310
        %2424 = vmatprep.mubr.bf16.mxu0 %v2081
        %2425 = vmatmul.mubr.bf16.gmra.mrb[0].mxu0 %v2080
        %v2426 = vpop.f32.mrb[0].mxu0
        %v2427 = vadd.f32 %v2378, %v2426
        %v2428 = vpop.f32.mrb[0].mxu0
        %v2429 = vpop.f32.mrb[0].mxu0
        %v2430 = vadd.f32 %v2381, %v2429
        %v2431 = vpop.f32.mrb[0].mxu0
        %2432 = vmatprep.mubr.bf16.mxu0 %v2085
        %2433 = vmatmul.mubr.bf16.gmra.mrb[0].mxu0 %v2084
        %v2434 = vpop.f32.mrb[0].mxu0
        %v2435 = vadd.f32 %v2386, %v2434
        %v2436 = vpop.f32.mrb[0].mxu0
        %v2437 = vpop.f32.mrb[0].mxu0
        %v2438 = vadd.f32 %v2389, %v2437
        %v2439 = vpop.f32.mrb[0].mxu0
        %2440 = vdwg.mxu0
        %v2441 = vmax.f32 %v2427, 0.0
        %v2442 = vmax.f32 %v2430, 0.0
        %v2443 = vmax.f32 %v2435, 0.0
        %v2444 = vmax.f32 %v2438, 0.0
        %v2445 = vld [vmem:[#allocation7 + $0x21] ss:$0 sm:$0xff]
        %v2446 = vmul.f32 %v2441, %v2445
        %v2447 = vmul.f32 %v2442, %v2445
        %v2448 = vmul.f32 %v2443, %v2445
        %v2449 = vmul.f32 %v2444, %v2445
        %2450 = vadd.xlane.f32.xlu0 %v2446
        %v2451 = vpop.xlane.xlu0 %2450
        %2452 = vadd.xlane.f32.xlu0 %v2447
        %v2453 = vpop.xlane.xlu0 %2452
        %2454 = vadd.xlane.f32.xlu0 %v2448
        %v2455 = vpop.xlane.xlu0 %2454
        %2456 = vadd.xlane.f32.xlu0 %v2449
        %v2457 = vpop.xlane.xlu0 %2456
        %v2458 = vld [vmem:[#allocation7 + $0x22] ss:$0 sm:$0xff]
        %v2459 = vadd.f32 %v2451, %v2458
        %v2460 = vadd.f32 %v2453, %v2458
        %v2461 = vadd.f32 %v2455, %v2458
        %v2462 = vadd.f32 %v2457, %v2458
        %v2463 = vxor.u32 %v2459, 2147483648
        %v2464 = vxor.u32 %v2460, 2147483648
        %v2465 = vxor.u32 %v2461, 2147483648
        %v2466 = vxor.u32 %v2462, 2147483648
        %v2467 = vmul.f32 %v2463, 1.442695
        %v2468 = vpow.pop %v2467
        %v2469 = vmul.f32 %v2464, 1.442695
        %v2470 = vpow.pop %v2469
        %v2471 = vmul.f32 %v2465, 1.442695
        %v2472 = vpow.pop %v2471
        %v2473 = vmul.f32 %v2466, 1.442695
        %v2474 = vpow.pop %v2473
        %v2475 = vadd.f32 %v2468, 1.0
        %v2476 = vadd.f32 %v2470, 1.0
        %v2477 = vadd.f32 %v2472, 1.0
        %v2478 = vadd.f32 %v2474, 1.0
        %v2479 = vrcp.pop %v2475
        %v2480 = vmul.f32 1.0, %v2479
        %v2481 = vrcp.pop %v2476
        %v2482 = vmul.f32 1.0, %v2481
        %v2483 = vrcp.pop %v2477
        %v2484 = vmul.f32 1.0, %v2483
        %v2485 = vrcp.pop %v2478
        %v2486 = vmul.f32 1.0, %v2485
        %v2487 = vmul.f32 %v1873, %v1873
        %v2488 = vmul.f32 %v1874, %v1874
        %v2489 = vmul.f32 %v1875, %v1875
        %v2490 = vmul.f32 %v1876, %v1876
        %v2491 = vsel %vm653, %v2487, 0.0
        %2492 = vadd.xlane.f32.xlu0 %v2491
        %v2493 = vpop.xlane.xlu0 %2492
        %v2494 = vsel %vm653, %v2488, 0.0
        %2495 = vadd.xlane.f32.xlu0 %v2494
        %v2496 = vpop.xlane.xlu0 %2495
        %v2497 = vsel %vm653, %v2489, 0.0
        %2498 = vadd.xlane.f32.xlu0 %v2497
        %v2499 = vpop.xlane.xlu0 %2498
        %v2500 = vsel %vm653, %v2490, 0.0
        %2501 = vadd.xlane.f32.xlu0 %v2500
        %v2502 = vpop.xlane.xlu0 %2501
        %v2503 = vrsqrt.pop %v2493
        %v2504 = vmul.f32 %v2493, %v2503
        %vm2505 = vcmp.eq.f32.partialorder %v2493, inf
        %v2506 = vsel %vm2505, %v2493, %v2504
        %vm2507 = vcmp.eq.f32.partialorder %v2493, 0.0
        %v2508 = vand.u32 %v2493, 2147483648
        %v2509 = vsel %vm2507, %v2508, %v2506
        %v2510 = vrsqrt.pop %v2496
        %v2511 = vmul.f32 %v2496, %v2510
        %vm2512 = vcmp.eq.f32.partialorder %v2496, inf
        %v2513 = vsel %vm2512, %v2496, %v2511
        %vm2514 = vcmp.eq.f32.partialorder %v2496, 0.0
        %v2515 = vand.u32 %v2496, 2147483648
        %v2516 = vsel %vm2514, %v2515, %v2513
        %v2517 = vrsqrt.pop %v2499
        %v2518 = vmul.f32 %v2499, %v2517
        %vm2519 = vcmp.eq.f32.partialorder %v2499, inf
        %v2520 = vsel %vm2519, %v2499, %v2518
        %vm2521 = vcmp.eq.f32.partialorder %v2499, 0.0
        %v2522 = vand.u32 %v2499, 2147483648
        %v2523 = vsel %vm2521, %v2522, %v2520
        %v2524 = vrsqrt.pop %v2502
        %v2525 = vmul.f32 %v2502, %v2524
        %vm2526 = vcmp.eq.f32.partialorder %v2502, inf
        %v2527 = vsel %vm2526, %v2502, %v2525
        %vm2528 = vcmp.eq.f32.partialorder %v2502, 0.0
        %v2529 = vand.u32 %v2502, 2147483648
        %v2530 = vsel %vm2528, %v2529, %v2527
        %2531 = vst.msk [vmem:[%s402] sm:$0xff] %vm653, %v1873
        %2532 = vst.msk [vmem:[%s402 + $0x8] sm:$0xff] %vm653, %v1874
        %2533 = vst.msk [vmem:[%s402 + $0x10] sm:$0xff] %vm653, %v1875
        %2534 = vst.msk [vmem:[%s402 + $0x18] sm:$0xff] %vm653, %v1876
        %vm2535 = vcmp.eq.s32.totalorder %v1419, 0
        %vm2536 = vcmp.eq.s32.totalorder %v1419, 1
        %v2537 = vsel %vm2536, %v2509, 0.0
        %v2538 = vsel %vm2536, %v2516, 0.0
        %v2539 = vsel %vm2536, %v2523, 0.0
        %v2540 = vsel %vm2536, %v2530, 0.0
        %2542 = vset.pattern.permute.xlu0 0
        %2543 = vperm.xlu0 %2542, %v2480
        %v2544 = vpop.permute.xlu0 %2543
        %2547 = vset.pattern.permute.xlu0 0
        %2548 = vperm.xlu0 %2547, %v2482
        %v2549 = vpop.permute.xlu0 %2548
        %2552 = vset.pattern.permute.xlu0 0
        %2553 = vperm.xlu0 %2552, %v2484
        %v2554 = vpop.permute.xlu0 %2553
        %2557 = vset.pattern.permute.xlu0 0
        %2558 = vperm.xlu0 %2557, %v2486
        %v2559 = vpop.permute.xlu0 %2558
        %v2561 = vsel %vm2535, %v2544, %v2537
        %v2562 = vsel %vm2535, %v2549, %v2538
        %v2563 = vsel %vm2535, %v2554, %v2539
        %v2564 = vsel %vm2535, %v2559, %v2540
        %2565 = vst [vmem:[%s391] sm:$0xff] %v2561
        %2566 = vst [vmem:[%s391 + $0x8] sm:$0xff] %v2562
        %2567 = vst [vmem:[%s391 + $0x10] sm:$0xff] %v2563
        %2568 = vst [vmem:[%s391 + $0x18] sm:$0xff] %v2564
        %s2569 = smul.u32 4, %s27
        %p2570 = scmp.lt.s32.totalorder %s2569, 7
        %s2571 = scalar_select %p2570, %s2569, 7
        %s2572 = smul.addr %s2571, 8
        %s2573 = scalar_lea.vmem %s9, %s2572
        %s2574 = sand.u32 %s255, 1
        %s2575 = scalar_lea.sflag [#allocation6], %s2574
        %s2576 = sand.u32 %s255, 1
        %s2577 = smul.addr %s2576, 32
        %s2578 = scalar_lea.vmem [#allocation9], %s2577
        // Predicated region
        $region65: #{tpu_custom_call.1} parent=55 // pred_check
          %p2579 = pneg %p239
        $region66: #{tpu_custom_call.1} parent=55 // pred_check_branch
          %2581 = sbr.rel (%p2579) target = $region68
        $region67: #{tpu_custom_call.1} parent=55 // pred_region
          %s2582 = smul.u32 4, %s27
        $region68: #{tpu_custom_call.1} parent=55 // pred_fallthru
          _
        // Predicated region
        $region69: #{tpu_custom_call.1} parent=55 // pred_check
          %p2583 = pneg %p265
        $region70: #{tpu_custom_call.1} parent=55 // pred_check_branch
          %2585 = sbr.rel (%p2583) target = $region72
        $region71: #{tpu_custom_call.1} parent=55 // pred_region
          %s2586 = smul.u32 4, %s27
          %s2588 = ssub.s32 512, 512
          %2589 = vsyncadd %s2575, %s2588
          %s2590 = smul.addr %s2586, 128
          %s2591 = scalar_lea.hbm %s10, %s2590
          %s2592 = sshll.u32 %s2578, 4
          %s2593 = int_to_ptr.vmem [resolvable:$true] %s2592
          %2598 = dma.vmem_to_hbm [thread:$0]  %s2593, 512, %s2591, %s2575, 128, 128, 8
        $region72: #{tpu_custom_call.1} parent=55 // pred_fallthru
          _
      $region56: #{tpu_custom_call.1} parent=5 // pred_fallthru
        _
      %p2599 = scmp.le.s32.totalorder 2, %s22
      // Predicated region
      $region73: #{tpu_custom_call.1} parent=5 // pred_check
        %p2600 = pneg %p2599
      $region74: #{tpu_custom_call.1} parent=5 // pred_check_branch
        %2602 = sbr.rel (%p2600) target = $region76
      $region75: #{tpu_custom_call.1} parent=5 // pred_region
        %s2603 = ssub.s32 %s22, 2
        // Predicated region
        $region77: #{tpu_custom_call.1} parent=75 // pred_check
          %p2604 = pneg %p245
        $region78: #{tpu_custom_call.1} parent=75 // pred_check_branch
          %2606 = sbr.rel (%p2604) target = $region80
        $region79: #{tpu_custom_call.1} parent=75 // pred_region
          %s2607 = smul.u32 4, %s28
          %p2608 = scmp.lt.s32.totalorder %s2607, 7
          %s2609 = scalar_select %p2608, %s2607, 7
          %s2610 = smul.addr %s2609, 8
          %s2611 = scalar_lea.vmem %s9, %s2610
        $region80: #{tpu_custom_call.1} parent=75 // pred_fallthru
          _
        // Predicated region
        $region81: #{tpu_custom_call.1} parent=75 // pred_check
          %p2612 = pneg %p271
        $region82: #{tpu_custom_call.1} parent=75 // pred_check_branch
          %2614 = sbr.rel (%p2612) target = $region84
        $region83: #{tpu_custom_call.1} parent=75 // pred_region
          %s2615 = sand.u32 %s256, 1
          %s2616 = scalar_lea.sflag [#allocation6], %s2615
          %s2617 = sand.u32 %s256, 1
          %s2618 = smul.addr %s2617, 32
          %s2619 = scalar_lea.vmem [#allocation9], %s2618
          %2620 = dma.done %s2616, 512
        $region84: #{tpu_custom_call.1} parent=75 // pred_fallthru
          _
      $region76: #{tpu_custom_call.1} parent=5 // pred_fallthru
        _
    $region6: #{tpu_custom_call.1} parent=1 // loop_footer
      %s26 = sadd.s32 1, %s22
    $region7: #{tpu_custom_call.1} parent=1 // loop_footer_branch
      %21 = sbr.rel target = $region3
    $region8: #{tpu_custom_call.1} parent=1 // loop_exit
      _
    %2621 = vsyncpa [#allocation5], 1
    %s2622 = scalar_lea.sflag [#allocation5], 1
    %2623 = vsyncpa %s2622, 1
    %2624 = vsyncpa [#allocation8], 1
    %2625 = vsyncpa [#allocation6], 1
    %s2626 = scalar_lea.sflag [#allocation6], 1
    %2627 = vsyncpa %s2626, 1

// kernel: tpu_custom_call.1
$region0: #{tpu_custom_call.1}
  #allocation0 [shape = 'u32[]', space=smem, size = 0x4, offset = 0x4, fixed_abs, tag = 'smem constant byte address 0x4 - core index']
  #allocation1 [shape = 'u32[144,128]{1,0:T(1,128)}', space=vmem, size = 0x12000, scoped, tag = 'internal scratch']
  #allocation2 [shape = 'f32[32,32]{1,0:T(8,128)}', space=vmem, size = 0x4000, scoped, tag = 'scratch operand']
  #allocation3 [shape = 'bf16[32,96]{1,0:T(16,128)(2,1)}', space=vmem, size = 0x2000, scoped, tag = 'scratch operand']
  %s0 = inlined_call_operand.vmem [shape: f32[64,32], index: 0, kind: input, shape index: {}]
  %s1 = inlined_call_operand.vmem [shape: bf16[32,32], index: 1, kind: input, shape index: {}]
  %s2 = inlined_call_operand.vmem [shape: bf16[6,32,8], index: 2, kind: input, shape index: {}]
  %s3 = inlined_call_operand.vmem [shape: bf16[8,12], index: 3, kind: input, shape index: {}]
  %s4 = inlined_call_operand.vmem [shape: bf16[4,8], index: 4, kind: input, shape index: {}]
  %s5 = inlined_call_operand.vmem [shape: bf16[96,32], index: 5, kind: input, shape index: {}]
  %s6 = inlined_call_operand.hbm [shape: bf16[32,512], index: 6, kind: input, shape index: {}]
  %s7 = inlined_call_operand.vmem [shape: bf16[512,128], index: 7, kind: input, shape index: {}]
  %s8 = inlined_call_operand.hbm [shape: f32[11,512], index: 8, kind: input, shape index: {}]
  %s9 = inlined_call_operand.vmem [shape: f32[64,32], index: 9, kind: output, shape index: {0}]
  %s10 = inlined_call_operand.hbm [shape: f32[64,128], index: 10, kind: output, shape index: {1}]
  %11 = xla_tuple %s9, %s10
  %s12 = sld [smem:[#allocation0]]
  $region85: #{tpu_custom_call.1} parent=0
    _
  %s14 = ssub.s32 1, %s12
  %s15 = scalar_select 0, %s14, %s12
  $region1: #{tpu_custom_call.1} parent=0
    #allocation4 [shape = 'u8[32768]{0}', space=vmem, size = 0x8000, scoped, tag = 'input window, operand 6, single buffered']
    #allocation5 [shape = 's32[2]{0}', space=sflag, size = 0x8, scoped, tag = 'scoped memory for tpu_custom_call.1']
    #allocation6 [shape = 's32[2]{0}', space=sflag, size = 0x8, scoped, tag = 'scoped memory for tpu_custom_call.1']
    #allocation7 [shape = 'u8[32768]{0}', space=vmem, size = 0x8000, scoped, tag = 'input window, operand 8, single buffered']
    #allocation8 [shape = 's32[1]{0}', space=sflag, size = 0x4, scoped, tag = 'scoped memory for tpu_custom_call.1']
    #allocation9 [shape = 'u8[32768]{0}', space=vmem, size = 0x8000, scoped, tag = 'output window, operand 1']
    %16 = vsyncpa [#allocation5], 0
    %17 = vsyncpa [#allocation8], 0
    %18 = vsyncpa [#allocation6], 0
    %s19 = scalar_lea.sflag [#allocation6], 1
    %20 = vsyncpa %s19, 0
    loop: start=0, step=1, limit=4
    $region2: #{tpu_custom_call.1} parent=1 // loop_pre_header
      _
    $region3: #{tpu_custom_call.1} parent=1 // loop_header
      %s22 = sphi 0, %s26
      %p23 = scmp.ge.s32.totalorder %s22, 4
      %s32 = sphi 0, %s34
      %s35 = sphi 0, %s32
      %s36 = sphi 0, %s35
      %s52 = sphi 0, %s36
      %s56 = sphi 0, %s56
      %s58 = sphi 0, %s56
      %s59 = sphi 0, %s58
      %s73 = sphi 0, %s59
      %s77 = sphi 0, %s77
      %s79 = sphi 0, %s77
      %s80 = sphi 0, %s79
      %s94 = sphi 0, %s80
      %s98 = sphi 0, %s98
      %s100 = sphi 0, %s98
      %s101 = sphi 0, %s100
      %s115 = sphi 0, %s101
      %s119 = sphi 0, %s119
      %s121 = sphi 0, %s119
      %s122 = sphi 0, %s121
      %s136 = sphi 0, %s122
      %s140 = sphi 0, %s140
      %s142 = sphi 0, %s140
      %s143 = sphi 0, %s142
      %s157 = sphi 0, %s143
      %s161 = sphi 0, %s161
      %s163 = sphi 0, %s161
      %s164 = sphi 0, %s163
      %s178 = sphi 0, %s164
      %s182 = sphi 0, %s182
      %s184 = sphi 0, %s182
      %s185 = sphi 0, %s184
      %s199 = sphi 0, %s185
      %s203 = sphi 0, %s203
      %s205 = sphi 0, %s203
      %s206 = sphi 0, %s205
      %s220 = sphi 0, %s206
      %s226 = sphi 0, %s228
      %s229 = sphi 0, %s226
      %s230 = sphi 0, %s229
      %s246 = sphi 0, %s230
      %s252 = sphi 0, %s254
      %s255 = sphi 0, %s252
      %s256 = sphi 0, %s255
      %s272 = sphi 0, %s256
    $region4: #{tpu_custom_call.1} parent=1 // loop_header_branch
      %25 = sbr.rel (%p23) target = $region8
    $region5: #{tpu_custom_call.1} parent=1 // loop_body
      %s27 = ssub.s32 %s22, 1
      %s28 = ssub.s32 %s22, 2
      %s29 = sadd.s32 %s22, 1
      %s30 = ssub.s32 %s22, %s29
      %p31 = scmp.eq.s32.totalorder %s30, 0
      %s33 = sadd.s32 %s32, 1
      %s34 = scalar_select %p31, %s32, %s33
      %p37 = pneg %p31
      %p38 = scmp.eq.s32.totalorder %s22, 1
      %p39 = por %p37, %p38
      %p40 = scmp.ne.s32.totalorder %s32, %s35
      %p41 = scmp.eq.s32.totalorder %s22, 0
      %p42 = por %p40, %p41
      %p43 = scmp.ne.s32.totalorder %s32, %s35
      %p44 = scmp.eq.s32.totalorder %s27, 1
      %p45 = por %p43, %p44
      %p46 = scmp.ne.s32.totalorder %s35, %s36
      %p47 = scmp.eq.s32.totalorder %s27, 0
      %p48 = por %p46, %p47
      %p49 = scmp.ne.s32.totalorder %s35, %s36
      %p50 = scmp.eq.s32.totalorder %s28, 1
      %p51 = por %p49, %p50
      %p53 = scmp.ne.s32.totalorder %s36, %s52
      %p54 = scmp.eq.s32.totalorder %s28, 0
      %p55 = por %p53, %p54
      %s57 = sadd.s32 %s56, 1
      %p60 = scmp.eq.s32.totalorder %s22, 1
      %p61 = scmp.ne.s32.totalorder %s56, %s58
      %p62 = scmp.eq.s32.totalorder %s22, 0
      %p63 = por %p61, %p62
      %p64 = scmp.ne.s32.totalorder %s56, %s58
      %p65 = scmp.eq.s32.totalorder %s27, 1
      %p66 = por %p64, %p65
      %p67 = scmp.ne.s32.totalorder %s58, %s59
      %p68 = scmp.eq.s32.totalorder %s27, 0
      %p69 = por %p67, %p68
      %p70 = scmp.ne.s32.totalorder %s58, %s59
      %p71 = scmp.eq.s32.totalorder %s28, 1
      %p72 = por %p70, %p71
      %p74 = scmp.ne.s32.totalorder %s59, %s73
      %p75 = scmp.eq.s32.totalorder %s28, 0
      %p76 = por %p74, %p75
      %s78 = sadd.s32 %s77, 1
      %p81 = scmp.eq.s32.totalorder %s22, 1
      %p82 = scmp.ne.s32.totalorder %s77, %s79
      %p83 = scmp.eq.s32.totalorder %s22, 0
      %p84 = por %p82, %p83
      %p85 = scmp.ne.s32.totalorder %s77, %s79
      %p86 = scmp.eq.s32.totalorder %s27, 1
      %p87 = por %p85, %p86
      %p88 = scmp.ne.s32.totalorder %s79, %s80
      %p89 = scmp.eq.s32.totalorder %s27, 0
      %p90 = por %p88, %p89
      %p91 = scmp.ne.s32.totalorder %s79, %s80
      %p92 = scmp.eq.s32.totalorder %s28, 1
      %p93 = por %p91, %p92
      %p95 = scmp.ne.s32.totalorder %s80, %s94
      %p96 = scmp.eq.s32.totalorder %s28, 0
      %p97 = por %p95, %p96
      %s99 = sadd.s32 %s98, 1
      %p102 = scmp.eq.s32.totalorder %s22, 1
      %p103 = scmp.ne.s32.totalorder %s98, %s100
      %p104 = scmp.eq.s32.totalorder %s22, 0
      %p105 = por %p103, %p104
      %p106 = scmp.ne.s32.totalorder %s98, %s100
      %p107 = scmp.eq.s32.totalorder %s27, 1
      %p108 = por %p106, %p107
      %p109 = scmp.ne.s32.totalorder %s100, %s101
      %p110 = scmp.eq.s32.totalorder %s27, 0
      %p111 = por %p109, %p110
      %p112 = scmp.ne.s32.totalorder %s100, %s101
      %p113 = scmp.eq.s32.totalorder %s28, 1
      %p114 = por %p112, %p113
      %p116 = scmp.ne.s32.totalorder %s101, %s115
      %p117 = scmp.eq.s32.totalorder %s28, 0
      %p118 = por %p116, %p117
      %s120 = sadd.s32 %s119, 1
      %p123 = scmp.eq.s32.totalorder %s22, 1
      %p124 = scmp.ne.s32.totalorder %s119, %s121
      %p125 = scmp.eq.s32.totalorder %s22, 0
      %p126 = por %p124, %p125
      %p127 = scmp.ne.s32.totalorder %s119, %s121
      %p128 = scmp.eq.s32.totalorder %s27, 1
      %p129 = por %p127, %p128
      %p130 = scmp.ne.s32.totalorder %s121, %s122
      %p131 = scmp.eq.s32.totalorder %s27, 0
      %p132 = por %p130, %p131
      %p133 = scmp.ne.s32.totalorder %s121, %s122
      %p134 = scmp.eq.s32.totalorder %s28, 1
      %p135 = por %p133, %p134
      %p137 = scmp.ne.s32.totalorder %s122, %s136
      %p138 = scmp.eq.s32.totalorder %s28, 0
      %p139 = por %p137, %p138
      %s141 = sadd.s32 %s140, 1
      %p144 = scmp.eq.s32.totalorder %s22, 1
      %p145 = scmp.ne.s32.totalorder %s140, %s142
      %p146 = scmp.eq.s32.totalorder %s22, 0
      %p147 = por %p145, %p146
      %p148 = scmp.ne.s32.totalorder %s140, %s142
      %p149 = scmp.eq.s32.totalorder %s27, 1
      %p150 = por %p148, %p149
      %p151 = scmp.ne.s32.totalorder %s142, %s143
      %p152 = scmp.eq.s32.totalorder %s27, 0
      %p153 = por %p151, %p152
      %p154 = scmp.ne.s32.totalorder %s142, %s143
      %p155 = scmp.eq.s32.totalorder %s28, 1
      %p156 = por %p154, %p155
      %p158 = scmp.ne.s32.totalorder %s143, %s157
      %p159 = scmp.eq.s32.totalorder %s28, 0
      %p160 = por %p158, %p159
      %s162 = sadd.s32 %s161, 1
      %p165 = scmp.eq.s32.totalorder %s22, 1
      %p166 = scmp.ne.s32.totalorder %s161, %s163
      %p167 = scmp.eq.s32.totalorder %s22, 0
      %p168 = por %p166, %p167
      %p169 = scmp.ne.s32.totalorder %s161, %s163
      %p170 = scmp.eq.s32.totalorder %s27, 1
      %p171 = por %p169, %p170
      %p172 = scmp.ne.s32.totalorder %s163, %s164
      %p173 = scmp.eq.s32.totalorder %s27, 0
      %p174 = por %p172, %p173
      %p175 = scmp.ne.s32.totalorder %s163, %s164
      %p176 = scmp.eq.s32.totalorder %s28, 1
      %p177 = por %p175, %p176
      %p179 = scmp.ne.s32.totalorder %s164, %s178
      %p180 = scmp.eq.s32.totalorder %s28, 0
      %p181 = por %p179, %p180
      %s183 = sadd.s32 %s182, 1
      %p186 = scmp.eq.s32.totalorder %s22, 1
      %p187 = scmp.ne.s32.totalorder %s182, %s184
      %p188 = scmp.eq.s32.totalorder %s22, 0
      %p189 = por %p187, %p188
      %p190 = scmp.ne.s32.totalorder %s182, %s184
      %p191 = scmp.eq.s32.totalorder %s27, 1
      %p192 = por %p190, %p191
      %p193 = scmp.ne.s32.totalorder %s184, %s185
      %p194 = scmp.eq.s32.totalorder %s27, 0
      %p195 = por %p193, %p194
      %p196 = scmp.ne.s32.totalorder %s184, %s185
      %p197 = scmp.eq.s32.totalorder %s28, 1
      %p198 = por %p196, %p197
      %p200 = scmp.ne.s32.totalorder %s185, %s199
      %p201 = scmp.eq.s32.totalorder %s28, 0
      %p202 = por %p200, %p201
      %s204 = sadd.s32 %s203, 1
      %p207 = scmp.eq.s32.totalorder %s22, 1
      %p208 = scmp.ne.s32.totalorder %s203, %s205
      %p209 = scmp.eq.s32.totalorder %s22, 0
      %p210 = por %p208, %p209
      %p211 = scmp.ne.s32.totalorder %s203, %s205
      %p212 = scmp.eq.s32.totalorder %s27, 1
      %p213 = por %p211, %p212
      %p214 = scmp.ne.s32.totalorder %s205, %s206
      %p215 = scmp.eq.s32.totalorder %s27, 0
      %p216 = por %p214, %p215
      %p217 = scmp.ne.s32.totalorder %s205, %s206
      %p218 = scmp.eq.s32.totalorder %s28, 1
      %p219 = por %p217, %p218
      %p221 = scmp.ne.s32.totalorder %s206, %s220
      %p222 = scmp.eq.s32.totalorder %s28, 0
      %p223 = por %p221, %p222
      %s224 = ssub.s32 %s22, %s29
      %p225 = scmp.eq.s32.totalorder %s224, 0
      %s227 = sadd.s32 %s226, 1
      %s228 = scalar_select %p225, %s226, %s227
      %p231 = pneg %p225
      %p232 = scmp.eq.s32.totalorder %s22, 1
      %p233 = por %p231, %p232
      %p234 = scmp.ne.s32.totalorder %s226, %s229
      %p235 = scmp.eq.s32.totalorder %s22, 0
      %p236 = por %p234, %p235
      %p237 = scmp.ne.s32.totalorder %s226, %s229
      %p238 = scmp.eq.s32.totalorder %s27, 1
      %p239 = por %p237, %p238
      %p240 = scmp.ne.s32.totalorder %s229, %s230
      %p241 = scmp.eq.s32.totalorder %s27, 0
      %p242 = por %p240, %p241
      %p243 = scmp.ne.s32.totalorder %s229, %s230
      %p244 = scmp.eq.s32.totalorder %s28, 1
      %p245 = por %p243, %p244
      %p247 = scmp.ne.s32.totalorder %s230, %s246
      %p248 = scmp.eq.s32.totalorder %s28, 0
      %p249 = por %p247, %p248
      %s250 = ssub.s32 %s22, %s29
      %p251 = scmp.eq.s32.totalorder %s250, 0
      %s253 = sadd.s32 %s252, 1
      %s254 = scalar_select %p251, %s252, %s253
      %p257 = pneg %p251
      %p258 = scmp.eq.s32.totalorder %s22, 1
      %p259 = por %p257, %p258
      %p260 = scmp.ne.s32.totalorder %s252, %s255
      %p261 = scmp.eq.s32.totalorder %s22, 0
      %p262 = por %p260, %p261
      %p263 = scmp.ne.s32.totalorder %s252, %s255
      %p264 = scmp.eq.s32.totalorder %s27, 1
      %p265 = por %p263, %p264
      %p266 = scmp.ne.s32.totalorder %s255, %s256
      %p267 = scmp.eq.s32.totalorder %s27, 0
      %p268 = por %p266, %p267
      %p269 = scmp.ne.s32.totalorder %s255, %s256
      %p270 = scmp.eq.s32.totalorder %s28, 1
      %p271 = por %p269, %p270
      %p273 = scmp.ne.s32.totalorder %s256, %s272
      %p274 = scmp.eq.s32.totalorder %s28, 0
      %p275 = por %p273, %p274
      %p276 = scmp.le.s32.totalorder 1, %s22
      %p277 = scmp.lt.s32.totalorder %s22, 3
      %p278 = pnand %p276, %p277
      %p279 = pneg %p278
      // Predicated region
      $region9: #{tpu_custom_call.1} parent=5 // pred_check
        _
      $region10: #{tpu_custom_call.1} parent=5 // pred_check_branch
        %281 = sbr.rel (%p278) target = $region12
      $region11: #{tpu_custom_call.1} parent=5 // pred_region
        %s282 = ssub.s32 %s22, 1
        // Predicated region
        $region13: #{tpu_custom_call.1} parent=11 // pred_check
          %p283 = pneg %p69
        $region14: #{tpu_custom_call.1} parent=11 // pred_check_branch
          %285 = sbr.rel (%p283) target = $region16
        $region15: #{tpu_custom_call.1} parent=11 // pred_region
          _
        $region16: #{tpu_custom_call.1} parent=11 // pred_fallthru
          _
        // Predicated region
        $region17: #{tpu_custom_call.1} parent=11 // pred_check
          %p286 = pneg %p90
        $region18: #{tpu_custom_call.1} parent=11 // pred_check_branch
          %288 = sbr.rel (%p286) target = $region20
        $region19: #{tpu_custom_call.1} parent=11 // pred_region
          _
        $region20: #{tpu_custom_call.1} parent=11 // pred_fallthru
          _
        // Predicated region
        $region21: #{tpu_custom_call.1} parent=11 // pred_check
          %p289 = pneg %p111
        $region22: #{tpu_custom_call.1} parent=11 // pred_check_branch
          %291 = sbr.rel (%p289) target = $region24
        $region23: #{tpu_custom_call.1} parent=11 // pred_region
          _
        $region24: #{tpu_custom_call.1} parent=11 // pred_fallthru
          _
        // Predicated region
        $region25: #{tpu_custom_call.1} parent=11 // pred_check
          %p292 = pneg %p132
        $region26: #{tpu_custom_call.1} parent=11 // pred_check_branch
          %294 = sbr.rel (%p292) target = $region28
        $region27: #{tpu_custom_call.1} parent=11 // pred_region
          _
        $region28: #{tpu_custom_call.1} parent=11 // pred_fallthru
          _
        // Predicated region
        $region29: #{tpu_custom_call.1} parent=11 // pred_check
          %p295 = pneg %p153
        $region30: #{tpu_custom_call.1} parent=11 // pred_check_branch
          %297 = sbr.rel (%p295) target = $region32
        $region31: #{tpu_custom_call.1} parent=11 // pred_region
          _
        $region32: #{tpu_custom_call.1} parent=11 // pred_fallthru
          _
        // Predicated region
        $region33: #{tpu_custom_call.1} parent=11 // pred_check
          %p298 = pneg %p174
        $region34: #{tpu_custom_call.1} parent=11 // pred_check_branch
          %300 = sbr.rel (%p298) target = $region36
        $region35: #{tpu_custom_call.1} parent=11 // pred_region
          %s302 = ssub.s32 1024, 1024
          %303 = vsyncadd [#allocation5], %s302
          %s304 = sshll.u32 [#allocation4], 4
          %s305 = int_to_ptr.vmem [resolvable:$true] %s304
          %310 = dma.hbm_to_vmem [thread:$0]  %s6, 1024, %s305, [#allocation5], 256, 256, 16
        $region36: #{tpu_custom_call.1} parent=11 // pred_fallthru
          _
        // Predicated region
        $region37: #{tpu_custom_call.1} parent=11 // pred_check
          %p311 = pneg %p195
        $region38: #{tpu_custom_call.1} parent=11 // pred_check_branch
          %313 = sbr.rel (%p311) target = $region40
        $region39: #{tpu_custom_call.1} parent=11 // pred_region
          _
        $region40: #{tpu_custom_call.1} parent=11 // pred_fallthru
          _
        // Predicated region
        $region41: #{tpu_custom_call.1} parent=11 // pred_check
          %p314 = pneg %p216
        $region42: #{tpu_custom_call.1} parent=11 // pred_check_branch
          %316 = sbr.rel (%p314) target = $region44
        $region43: #{tpu_custom_call.1} parent=11 // pred_region
          %s318 = ssub.s32 1024, 1024
          %319 = vsyncadd [#allocation8], %s318
          %s320 = sshll.u32 [#allocation7], 4
          %s321 = int_to_ptr.vmem [resolvable:$true] %s320
          %326 = dma.hbm_to_vmem [thread:$0]  %s8, 1024, %s321, [#allocation8], 512, 512, 32
        $region44: #{tpu_custom_call.1} parent=11 // pred_fallthru
          _
      $region12: #{tpu_custom_call.1} parent=5 // pred_fallthru
        _
      %p327 = scmp.lt.s32.totalorder %s22, 2
      // Predicated region
      $region45: #{tpu_custom_call.1} parent=5 // pred_check
        %p328 = pneg %p327
      $region46: #{tpu_custom_call.1} parent=5 // pred_check_branch
        %330 = sbr.rel (%p328) target = $region48
      $region47: #{tpu_custom_call.1} parent=5 // pred_region
        // Predicated region
        $region49: #{tpu_custom_call.1} parent=47 // pred_check
          %p331 = pneg %p42
        $region50: #{tpu_custom_call.1} parent=47 // pred_check_branch
          %333 = sbr.rel (%p331) target = $region52
        $region51: #{tpu_custom_call.1} parent=47 // pred_region
          %s334 = smul.u32 4, %s22
          %p335 = scmp.lt.s32.totalorder %s334, 7
          %s336 = scalar_select %p335, %s334, 7
          %s337 = smul.addr %s336, 8
          %s338 = scalar_lea.vmem %s0, %s337
          %s339 = smul.u32 4, %s22
        $region52: #{tpu_custom_call.1} parent=47 // pred_fallthru
          _
      $region48: #{tpu_custom_call.1} parent=5 // pred_fallthru
        _
      %p340 = scmp.le.s32.totalorder 1, %s22
      %p341 = scmp.lt.s32.totalorder %s22, 3
      %p342 = pnand %p340, %p341
      %p343 = pneg %p342
      // Predicated region
      $region53: #{tpu_custom_call.1} parent=5 // pred_check
        _
      $region54: #{tpu_custom_call.1} parent=5 // pred_check_branch
        %345 = sbr.rel (%p342) target = $region56
      $region55: #{tpu_custom_call.1} parent=5 // pred_region
        %s346 = ssub.s32 %s22, 1
        // Predicated region
        $region57: #{tpu_custom_call.1} parent=55 // pred_check
          %p347 = pneg %p174
        $region58: #{tpu_custom_call.1} parent=55 // pred_check_branch
          %349 = sbr.rel (%p347) target = $region60
        $region59: #{tpu_custom_call.1} parent=55 // pred_region
          %350 = dma.done [#allocation5], 1024
        $region60: #{tpu_custom_call.1} parent=55 // pred_fallthru
          _
        // Predicated region
        $region61: #{tpu_custom_call.1} parent=55 // pred_check
          %p351 = pneg %p216
        $region62: #{tpu_custom_call.1} parent=55 // pred_check_branch
          %353 = sbr.rel (%p351) target = $region64
        $region63: #{tpu_custom_call.1} parent=55 // pred_region
          %354 = dma.done [#allocation8], 1024
        $region64: #{tpu_custom_call.1} parent=55 // pred_fallthru
          _
        %s355 = smul.u32 4, %s27
        %p356 = scmp.lt.s32.totalorder %s355, 7
        %s357 = scalar_select %p356, %s355, 7
        %s358 = smul.addr %s357, 8
        %s359 = scalar_lea.vmem %s0, %s358
        %p360 = pneg %p48
        %p361 = pneg %p45
        %p362 = pneg %p69
        %p363 = pneg %p66
        %p364 = pneg %p90
        %p365 = pneg %p87
        %p366 = pneg %p111
        %p367 = pneg %p108
        %p368 = pneg %p132
        %p369 = pneg %p129
        %p370 = pneg %p153
        %p371 = pneg %p150
        %p372 = pneg %p174
        %p373 = pneg %p171
        %p374 = pneg %p195
        %p375 = pneg %p192
        %p376 = pneg %p216
        %p377 = pneg %p213
        %p378 = pneg %p242
        %p379 = pneg %p239
        %s380 = smul.u32 4, %s27
        %p381 = scmp.lt.s32.totalorder %s380, 7
        %s382 = scalar_select %p381, %s380, 7
        %s383 = smul.addr %s382, 8
        %s384 = scalar_lea.vmem %s9, %s383
        %p385 = pneg %p268
        %p386 = pneg %p265
        %s387 = sand.u32 %s255, 1
        %s388 = scalar_lea.sflag [#allocation6], %s387
        %s389 = sand.u32 %s255, 1
        %s390 = smul.addr %s389, 32
        %s391 = scalar_lea.vmem [#allocation9], %s390
        %s392 = smul.u32 4, %s27
        %p393 = scmp.lt.s32.totalorder %s392, 7
        %s394 = scalar_select %p393, %s392, 7
        %s395 = smul.addr %s394, 8
        %s396 = scalar_lea.vmem %s0, %s395
        %s397 = smul.u32 4, %s27
        %s398 = smul.u32 4, %s27
        %p399 = scmp.lt.s32.totalorder %s398, 7
        %s400 = scalar_select %p399, %s398, 7
        %s401 = smul.addr %s400, 8
        %s402 = scalar_lea.vmem %s9, %s401
        %s403 = smul.u32 4, %s27
        %s404 = smul.u32 4, %s27
        %v406 = vld [vmem:[%s396] sm:$0xff]
        %v407 = vld [vmem:[%s396 + $0x8] sm:$0xff]
        %v408 = vld [vmem:[%s396 + $0x10] sm:$0xff]
        %v409 = vld [vmem:[%s396 + $0x18] sm:$0xff]
        %v410 = vpack.c.bf16 %v407, %v406
        %v411 = vpack.c.bf16 %v409, %v408
        %v412 = vlaneseq
        %v413 = vshrl.u32 %v412, 7
        %v414 = vadd.s32 %v413, 8
        %v415 = vadd.s32 %v413, 16
        %v416 = vadd.s32 %v413, 24
        %v417 = vshra.s32 %v413, 4
        %v418 = vshra.s32 %v414, 4
        %v419 = vshra.s32 %v415, 4
        %v420 = vshra.s32 %v416, 4
        %v421 = vadd.s32 %v413, 4294967295
        %v422 = vadd.s32 %v414, 4294967295
        %v423 = vadd.s32 %v415, 4294967295
        %v424 = vadd.s32 %v416, 4294967295
        %v425 = vshra.s32 %v421, 4
        %v426 = vshra.s32 %v422, 4
        %v427 = vshra.s32 %v423, 4
        %v428 = vshra.s32 %v424, 4
        %vm429 = vcmp.eq.s32.totalorder %v425, %v417
        %vm430 = vcmp.eq.s32.totalorder %v426, %v418
        %vm431 = vcmp.eq.s32.totalorder %v427, %v419
        %vm432 = vcmp.eq.s32.totalorder %v428, %v420
        %vm433 = vcmp.ge.s32.totalorder %v421, 0
        %vm434 = vcmp.ge.s32.totalorder %v422, 0
        %vm435 = vcmp.ge.s32.totalorder %v423, 0
        %vm436 = vcmp.ge.s32.totalorder %v424, 0
        %vm437 = vcmp.lt.s32.totalorder %v421, 32
        %vm438 = vcmp.lt.s32.totalorder %v422, 32
        %vm439 = vcmp.lt.s32.totalorder %v423, 32
        %vm440 = vcmp.lt.s32.totalorder %v424, 32
        %vm441 = vmand %vm433, %vm437
        %vm442 = vmand %vm434, %vm438
        %vm443 = vmand %vm435, %vm439
        %vm444 = vmand %vm436, %vm440
        %vm445 = vmand %vm429, %vm441
        %vm446 = vmand %vm430, %vm442
        %vm447 = vmand %vm431, %vm443
        %vm448 = vmand %vm432, %vm444
        %v449 = vsel %vm445, 1, 0
        %v450 = vsel %vm446, 1, 0
        %v451 = vsel %vm447, 1, 0
        %v452 = vsel %vm448, 1, 0
        %v453 = vcvt.s32.f32 %v449
        %v454 = vcvt.s32.f32 %v450
        %v455 = vcvt.s32.f32 %v451
        %v456 = vcvt.s32.f32 %v452
        %v457 = vadd.s32 %v413, 1
        %v458 = vadd.s32 %v414, 1
        %v459 = vadd.s32 %v415, 1
        %v460 = vadd.s32 %v416, 1
        %v461 = vshra.s32 %v457, 4
        %v462 = vshra.s32 %v458, 4
        %v463 = vshra.s32 %v459, 4
        %v464 = vshra.s32 %v460, 4
        %vm465 = vcmp.eq.s32.totalorder %v461, %v417
        %vm466 = vcmp.eq.s32.totalorder %v462, %v418
        %vm467 = vcmp.eq.s32.totalorder %v463, %v419
        %vm468 = vcmp.eq.s32.totalorder %v464, %v420
        %vm469 = vcmp.ge.s32.totalorder %v457, 0
        %vm470 = vcmp.ge.s32.totalorder %v458, 0
        %vm471 = vcmp.ge.s32.totalorder %v459, 0
        %vm472 = vcmp.ge.s32.totalorder %v460, 0
        %vm473 = vcmp.lt.s32.totalorder %v457, 32
        %vm474 = vcmp.lt.s32.totalorder %v458, 32
        %vm475 = vcmp.lt.s32.totalorder %v459, 32
        %vm476 = vcmp.lt.s32.totalorder %v460, 32
        %vm477 = vmand %vm469, %vm473
        %vm478 = vmand %vm470, %vm474
        %vm479 = vmand %vm471, %vm475
        %vm480 = vmand %vm472, %vm476
        %vm481 = vmand %vm465, %vm477
        %vm482 = vmand %vm466, %vm478
        %vm483 = vmand %vm467, %vm479
        %vm484 = vmand %vm468, %vm480
        %v485 = vsel %vm481, 1, 0
        %v486 = vsel %vm482, 1, 0
        %v487 = vsel %vm483, 1, 0
        %v488 = vsel %vm484, 1, 0
        %v489 = vcvt.s32.f32 %v485
        %v490 = vcvt.s32.f32 %v486
        %v491 = vcvt.s32.f32 %v487
        %v492 = vcvt.s32.f32 %v488
        %v493 = vadd.s32 %v413, 4294967294
        %v494 = vadd.s32 %v414, 4294967294
        %v495 = vadd.s32 %v415, 4294967294
        %v496 = vadd.s32 %v416, 4294967294
        %v497 = vshra.s32 %v493, 4
        %v498 = vshra.s32 %v494, 4
        %v499 = vshra.s32 %v495, 4
        %v500 = vshra.s32 %v496, 4
        %vm501 = vcmp.eq.s32.totalorder %v497, %v417
        %vm502 = vcmp.eq.s32.totalorder %v498, %v418
        %vm503 = vcmp.eq.s32.totalorder %v499, %v419
        %vm504 = vcmp.eq.s32.totalorder %v500, %v420
        %vm505 = vcmp.ge.s32.totalorder %v493, 0
        %vm506 = vcmp.ge.s32.totalorder %v494, 0
        %vm507 = vcmp.ge.s32.totalorder %v495, 0
        %vm508 = vcmp.ge.s32.totalorder %v496, 0
        %vm509 = vcmp.lt.s32.totalorder %v493, 32
        %vm510 = vcmp.lt.s32.totalorder %v494, 32
        %vm511 = vcmp.lt.s32.totalorder %v495, 32
        %vm512 = vcmp.lt.s32.totalorder %v496, 32
        %vm513 = vmand %vm505, %vm509
        %vm514 = vmand %vm506, %vm510
        %vm515 = vmand %vm507, %vm511
        %vm516 = vmand %vm508, %vm512
        %vm517 = vmand %vm501, %vm513
        %vm518 = vmand %vm502, %vm514
        %vm519 = vmand %vm503, %vm515
        %vm520 = vmand %vm504, %vm516
        %v521 = vsel %vm517, 1, 0
        %v522 = vsel %vm518, 1, 0
        %v523 = vsel %vm519, 1, 0
        %v524 = vsel %vm520, 1, 0
        %v525 = vcvt.s32.f32 %v521
        %v526 = vcvt.s32.f32 %v522
        %v527 = vcvt.s32.f32 %v523
        %v528 = vcvt.s32.f32 %v524
        %v529 = vadd.s32 %v413, 2
        %v530 = vadd.s32 %v414, 2
        %v531 = vadd.s32 %v415, 2
        %v532 = vadd.s32 %v416, 2
        %v533 = vshra.s32 %v529, 4
        %v534 = vshra.s32 %v530, 4
        %v535 = vshra.s32 %v531, 4
        %v536 = vshra.s32 %v532, 4
        %vm537 = vcmp.eq.s32.totalorder %v533, %v417
        %vm538 = vcmp.eq.s32.totalorder %v534, %v418
        %vm539 = vcmp.eq.s32.totalorder %v535, %v419
        %vm540 = vcmp.eq.s32.totalorder %v536, %v420
        %vm541 = vcmp.ge.s32.totalorder %v529, 0
        %vm542 = vcmp.ge.s32.totalorder %v530, 0
        %vm543 = vcmp.ge.s32.totalorder %v531, 0
        %vm544 = vcmp.ge.s32.totalorder %v532, 0
        %vm545 = vcmp.lt.s32.totalorder %v529, 32
        %vm546 = vcmp.lt.s32.totalorder %v530, 32
        %vm547 = vcmp.lt.s32.totalorder %v531, 32
        %vm548 = vcmp.lt.s32.totalorder %v532, 32
        %vm549 = vmand %vm541, %vm545
        %vm550 = vmand %vm542, %vm546
        %vm551 = vmand %vm543, %vm547
        %vm552 = vmand %vm544, %vm548
        %vm553 = vmand %vm537, %vm549
        %vm554 = vmand %vm538, %vm550
        %vm555 = vmand %vm539, %vm551
        %vm556 = vmand %vm540, %vm552
        %v557 = vsel %vm553, 1, 0
        %v558 = vsel %vm554, 1, 0
        %v559 = vsel %vm555, 1, 0
        %v560 = vsel %vm556, 1, 0
        %v561 = vcvt.s32.f32 %v557
        %v562 = vcvt.s32.f32 %v558
        %v563 = vcvt.s32.f32 %v559
        %v564 = vcvt.s32.f32 %v560
        %v565 = vadd.s32 %v413, 4294967292
        %v566 = vadd.s32 %v414, 4294967292
        %v567 = vadd.s32 %v415, 4294967292
        %v568 = vadd.s32 %v416, 4294967292
        %v569 = vshra.s32 %v565, 4
        %v570 = vshra.s32 %v566, 4
        %v571 = vshra.s32 %v567, 4
        %v572 = vshra.s32 %v568, 4
        %vm573 = vcmp.eq.s32.totalorder %v569, %v417
        %vm574 = vcmp.eq.s32.totalorder %v570, %v418
        %vm575 = vcmp.eq.s32.totalorder %v571, %v419
        %vm576 = vcmp.eq.s32.totalorder %v572, %v420
        %vm577 = vcmp.ge.s32.totalorder %v565, 0
        %vm578 = vcmp.ge.s32.totalorder %v566, 0
        %vm579 = vcmp.ge.s32.totalorder %v567, 0
        %vm580 = vcmp.ge.s32.totalorder %v568, 0
        %vm581 = vcmp.lt.s32.totalorder %v565, 32
        %vm582 = vcmp.lt.s32.totalorder %v566, 32
        %vm583 = vcmp.lt.s32.totalorder %v567, 32
        %vm584 = vcmp.lt.s32.totalorder %v568, 32
        %vm585 = vmand %vm577, %vm581
        %vm586 = vmand %vm578, %vm582
        %vm587 = vmand %vm579, %vm583
        %vm588 = vmand %vm580, %vm584
        %vm589 = vmand %vm573, %vm585
        %vm590 = vmand %vm574, %vm586
        %vm591 = vmand %vm575, %vm587
        %vm592 = vmand %vm576, %vm588
        %v593 = vsel %vm589, 1, 0
        %v594 = vsel %vm590, 1, 0
        %v595 = vsel %vm591, 1, 0
        %v596 = vsel %vm592, 1, 0
        %v597 = vcvt.s32.f32 %v593
        %v598 = vcvt.s32.f32 %v594
        %v599 = vcvt.s32.f32 %v595
        %v600 = vcvt.s32.f32 %v596
        %v601 = vadd.s32 %v413, 4
        %v602 = vadd.s32 %v414, 4
        %v603 = vadd.s32 %v415, 4
        %v604 = vadd.s32 %v416, 4
        %v605 = vshra.s32 %v601, 4
        %v606 = vshra.s32 %v602, 4
        %v607 = vshra.s32 %v603, 4
        %v608 = vshra.s32 %v604, 4
        %vm609 = vcmp.eq.s32.totalorder %v605, %v417
        %vm610 = vcmp.eq.s32.totalorder %v606, %v418
        %vm611 = vcmp.eq.s32.totalorder %v607, %v419
        %vm612 = vcmp.eq.s32.totalorder %v608, %v420
        %vm613 = vcmp.ge.s32.totalorder %v601, 0
        %vm614 = vcmp.ge.s32.totalorder %v602, 0
        %vm615 = vcmp.ge.s32.totalorder %v603, 0
        %vm616 = vcmp.ge.s32.totalorder %v604, 0
        %vm617 = vcmp.lt.s32.totalorder %v601, 32
        %vm618 = vcmp.lt.s32.totalorder %v602, 32
        %vm619 = vcmp.lt.s32.totalorder %v603, 32
        %vm620 = vcmp.lt.s32.totalorder %v604, 32
        %vm621 = vmand %vm613, %vm617
        %vm622 = vmand %vm614, %vm618
        %vm623 = vmand %vm615, %vm619
        %vm624 = vmand %vm616, %vm620
        %vm625 = vmand %vm609, %vm621
        %vm626 = vmand %vm610, %vm622
        %vm627 = vmand %vm611, %vm623
        %vm628 = vmand %vm612, %vm624
        %v629 = vsel %vm625, 1, 0
        %v630 = vsel %vm626, 1, 0
        %v631 = vsel %vm627, 1, 0
        %v632 = vsel %vm628, 1, 0
        %v633 = vcvt.s32.f32 %v629
        %v634 = vcvt.s32.f32 %v630
        %v635 = vcvt.s32.f32 %v631
        %v636 = vcvt.s32.f32 %v632
        %v637 = vld [vmem:[%s1] sm:$0xf]
        %v638 = vld [vmem:[%s1 + $0x4] sm:$0xf]
        %v639 = vld [vmem:[%s1 + $0x8] sm:$0xf]
        %v640 = vld [vmem:[%s1 + $0xc] sm:$0xf]
        %v645 = vunpack.c.l.b16 %v637
        %v646 = vunpack.c.l.b16 %v638
        %v647 = vunpack.c.l.b16 %v639
        %v648 = vunpack.c.l.b16 %v640
        %v649 = vpack.c.b16 %v646, %v645
        %v650 = vpack.c.b16 %v648, %v647
        %vm653 = vcmask 261120
        %v655 = vsel %vm653, %v410, 0
        %v658 = vsel %vm653, %v411, 0
        %660 = vmatprep.subr.bf16.mxu0 0
        %661 = vmatpush1.bf16.msra.mxu0 %v649
        %662 = vmatprep.subr.bf16.mxu0 0
        %663 = vmatpush1.bf16.msra.mxu0 %v650
        %664 = vmatprep.subr.bf16.mxu0 0
        %665 = vmatpush1.bf16.msra.mxu0 0
        %666 = vmatprep.subr.bf16.mxu0 0
        %667 = vmatpush1.bf16.msra.mxu0 0
        %668 = vmatprep.subr.bf16.mxu0 0
        %669 = vmatpush1.bf16.msra.mxu0 0
        %670 = vmatprep.subr.bf16.mxu0 0
        %671 = vmatpush1.bf16.msra.mxu0 0
        %672 = vmatprep.subr.bf16.mxu0 0
        %673 = vmatpush1.bf16.msra.mxu0 0
        %674 = vmatprep.subr.bf16.mxu0 0
        %675 = vmatpush1.bf16.msra.mxu0 0
        %676 = vmatprep.subr.bf16.mxu0 0
        %677 = vmatpush1.bf16.msra.mxu0 0
        %678 = vmatprep.subr.bf16.mxu0 0
        %679 = vmatpush1.bf16.msra.mxu0 0
        %680 = vmatprep.subr.bf16.mxu0 0
        %681 = vmatpush1.bf16.msra.mxu0 0
        %682 = vmatprep.subr.bf16.mxu0 0
        %683 = vmatpush1.bf16.msra.mxu0 0
        %684 = vmatprep.subr.bf16.mxu0 0
        %685 = vmatpush1.bf16.msra.mxu0 0
        %686 = vmatprep.subr.bf16.mxu0 0
        %687 = vmatpush1.bf16.msra.mxu0 0
        %688 = vmatprep.subr.bf16.mxu0 0
        %689 = vmatpush1.bf16.msra.mxu0 0
        %690 = vmatprep.subr.bf16.mxu0 0
        %691 = vmatpush1.bf16.msra.mxu0 0
        %692 = vmatprep.mubr.bf16.mxu0 0
        %693 = vmatmul.mubr.bf16.gmra.mrb[0].mxu0 %v655
        %v694 = vpop.f32.mrb[0].mxu0
        %v695 = vadd.f32 0.0, %v694
        %v696 = vpop.f32.mrb[0].mxu0
        %v697 = vpop.f32.mrb[0].mxu0
        %v698 = vadd.f32 0.0, %v697
        %v699 = vpop.f32.mrb[0].mxu0
        %700 = vmatprep.mubr.bf16.mxu0 0
        %701 = vmatmul.mubr.bf16.gmra.mrb[0].mxu0 %v658
        %v702 = vpop.f32.mrb[0].mxu0
        %v703 = vadd.f32 0.0, %v702
        %v704 = vpop.f32.mrb[0].mxu0
        %v705 = vpop.f32.mrb[0].mxu0
        %v706 = vadd.f32 0.0, %v705
        %v707 = vpop.f32.mrb[0].mxu0
        %708 = vdwg.mxu0
        %v710 = vrot.slane %v409, 7
        %vm715 = vcmask 1040384
        %v716 = vrot.slane %v406, 7
        %v717 = vrot.slane %v407, 7
        %v718 = vsel %vm715, %v716, %v717
        %v719 = vrot.slane %v408, 7
        %v720 = vsel %vm715, %v717, %v719
        %v721 = vsel %vm715, %v719, %v710
        %v726 = vsel %vm715, %v710, %v716
        %v727 = vmul.f32 %v726, %v453
        %v728 = vmul.f32 %v718, %v454
        %v729 = vmul.f32 %v720, %v455
        %v730 = vmul.f32 %v721, %v456
        %v731 = vpack.c.bf16 %v728, %v727
        %v732 = vpack.c.bf16 %v730, %v729
        %v733 = vld [vmem:[%s2] sm:$0xf]
        %v734 = vld [vmem:[%s2 + $0x4] sm:$0xf]
        %v735 = vld [vmem:[%s2 + $0x8] sm:$0xf]
        %v736 = vld [vmem:[%s2 + $0xc] sm:$0xf]
        %vm737 = vcmask 1046528
        %v738 = vrot.slane %v406, 1
        %v739 = vrot.slane %v407, 1
        %v740 = vsel %vm737, %v738, %v739
        %v741 = vrot.slane %v408, 1
        %v742 = vsel %vm737, %v739, %v741
        %v743 = vrot.slane %v409, 1
        %v744 = vsel %vm737, %v741, %v743
        %v750 = vsel %vm737, %v743, %v738
        %v751 = vmul.f32 %v740, %v489
        %v752 = vmul.f32 %v742, %v490
        %v753 = vmul.f32 %v744, %v491
        %v754 = vmul.f32 %v750, %v492
        %v755 = vpack.c.bf16 %v752, %v751
        %v756 = vpack.c.bf16 %v754, %v753
        %s757 = scalar_lea.vmem %s2, 16
        %v758 = vld [vmem:[%s757] sm:$0xf]
        %v759 = vld [vmem:[%s757 + $0x4] sm:$0xf]
        %v760 = vld [vmem:[%s757 + $0x8] sm:$0xf]
        %v761 = vld [vmem:[%s757 + $0xc] sm:$0xf]
        %v766 = vunpack.c.l.b16 %v758
        %v767 = vunpack.c.l.b16 %v759
        %v768 = vunpack.c.l.b16 %v760
        %v769 = vunpack.c.l.b16 %v761
        %v770 = vpack.c.b16 %v767, %v766
        %v771 = vpack.c.b16 %v769, %v768
        %v775 = vsel %vm653, %v755, 0
        %v778 = vsel %vm653, %v756, 0
        %780 = vmatprep.subr.bf16.mxu0 0
        %781 = vmatpush1.bf16.msra.mxu0 %v770
        %782 = vmatprep.subr.bf16.mxu0 0
        %783 = vmatpush1.bf16.msra.mxu0 %v771
        %784 = vmatprep.subr.bf16.mxu0 0
        %785 = vmatpush1.bf16.msra.mxu0 0
        %786 = vmatprep.subr.bf16.mxu0 0
        %787 = vmatpush1.bf16.msra.mxu0 0
        %788 = vmatprep.subr.bf16.mxu0 0
        %789 = vmatpush1.bf16.msra.mxu0 0
        %790 = vmatprep.subr.bf16.mxu0 0
        %791 = vmatpush1.bf16.msra.mxu0 0
        %792 = vmatprep.subr.bf16.mxu0 0
        %793 = vmatpush1.bf16.msra.mxu0 0
        %794 = vmatprep.subr.bf16.mxu0 0
        %795 = vmatpush1.bf16.msra.mxu0 0
        %796 = vmatprep.subr.bf16.mxu0 0
        %797 = vmatpush1.bf16.msra.mxu0 0
        %798 = vmatprep.subr.bf16.mxu0 0
        %799 = vmatpush1.bf16.msra.mxu0 0
        %800 = vmatprep.subr.bf16.mxu0 0
        %801 = vmatpush1.bf16.msra.mxu0 0
        %802 = vmatprep.subr.bf16.mxu0 0
        %803 = vmatpush1.bf16.msra.mxu0 0
        %804 = vmatprep.subr.bf16.mxu0 0
        %805 = vmatpush1.bf16.msra.mxu0 0
        %806 = vmatprep.subr.bf16.mxu0 0
        %807 = vmatpush1.bf16.msra.mxu0 0
        %808 = vmatprep.subr.bf16.mxu0 0
        %809 = vmatpush1.bf16.msra.mxu0 0
        %810 = vmatprep.subr.bf16.mxu0 0
        %811 = vmatpush1.bf16.msra.mxu0 0
        %812 = vmatprep.mubr.bf16.mxu0 0
        %813 = vmatmul.mubr.bf16.gmra.mrb[0].mxu0 %v775
        %v814 = vpop.f32.mrb[0].mxu0
        %v815 = vadd.f32 0.0, %v814
        %v816 = vpop.f32.mrb[0].mxu0
        %v817 = vpop.f32.mrb[0].mxu0
        %v818 = vadd.f32 0.0, %v817
        %v819 = vpop.f32.mrb[0].mxu0
        %820 = vmatprep.mubr.bf16.mxu0 0
        %821 = vmatmul.mubr.bf16.gmra.mrb[0].mxu0 %v778
        %v822 = vpop.f32.mrb[0].mxu0
        %v823 = vadd.f32 0.0, %v822
        %v824 = vpop.f32.mrb[0].mxu0
        %v825 = vpop.f32.mrb[0].mxu0
        %v826 = vadd.f32 0.0, %v825
        %v827 = vpop.f32.mrb[0].mxu0
        %828 = vdwg.mxu0
        %v833 = vunpack.c.l.b16 %v733
        %v834 = vunpack.c.l.b16 %v734
        %v835 = vunpack.c.l.b16 %v735
        %v836 = vunpack.c.l.b16 %v736
        %v837 = vpack.c.b16 %v834, %v833
        %v838 = vpack.c.b16 %v836, %v835
        %v842 = vsel %vm653, %v731, 0
        %v845 = vsel %vm653, %v732, 0
        %847 = vmatprep.subr.bf16.mxu0 0
        %848 = vmatpush1.bf16.msra.mxu0 %v837
        %849 = vmatprep.subr.bf16.mxu0 0
        %850 = vmatpush1.bf16.msra.mxu0 %v838
        %851 = vmatprep.subr.bf16.mxu0 0
        %852 = vmatpush1.bf16.msra.mxu0 0
        %853 = vmatprep.subr.bf16.mxu0 0
        %854 = vmatpush1.bf16.msra.mxu0 0
        %855 = vmatprep.subr.bf16.mxu0 0
        %856 = vmatpush1.bf16.msra.mxu0 0
        %857 = vmatprep.subr.bf16.mxu0 0
        %858 = vmatpush1.bf16.msra.mxu0 0
        %859 = vmatprep.subr.bf16.mxu0 0
        %860 = vmatpush1.bf16.msra.mxu0 0
        %861 = vmatprep.subr.bf16.mxu0 0
        %862 = vmatpush1.bf16.msra.mxu0 0
        %863 = vmatprep.subr.bf16.mxu0 0
        %864 = vmatpush1.bf16.msra.mxu0 0
        %865 = vmatprep.subr.bf16.mxu0 0
        %866 = vmatpush1.bf16.msra.mxu0 0
        %867 = vmatprep.subr.bf16.mxu0 0
        %868 = vmatpush1.bf16.msra.mxu0 0
        %869 = vmatprep.subr.bf16.mxu0 0
        %870 = vmatpush1.bf16.msra.mxu0 0
        %871 = vmatprep.subr.bf16.mxu0 0
        %872 = vmatpush1.bf16.msra.mxu0 0
        %873 = vmatprep.subr.bf16.mxu0 0
        %874 = vmatpush1.bf16.msra.mxu0 0
        %875 = vmatprep.subr.bf16.mxu0 0
        %876 = vmatpush1.bf16.msra.mxu0 0
        %877 = vmatprep.subr.bf16.mxu0 0
        %878 = vmatpush1.bf16.msra.mxu0 0
        %879 = vmatprep.mubr.bf16.mxu0 0
        %880 = vmatmul.mubr.bf16.gmra.mrb[0].mxu0 %v842
        %v881 = vpop.f32.mrb[0].mxu0
        %v882 = vadd.f32 %v815, %v881
        %v883 = vpop.f32.mrb[0].mxu0
        %v884 = vpop.f32.mrb[0].mxu0
        %v885 = vadd.f32 %v818, %v884
        %v886 = vpop.f32.mrb[0].mxu0
        %887 = vmatprep.mubr.bf16.mxu0 0
        %888 = vmatmul.mubr.bf16.gmra.mrb[0].mxu0 %v845
        %v889 = vpop.f32.mrb[0].mxu0
        %v890 = vadd.f32 %v823, %v889
        %v891 = vpop.f32.mrb[0].mxu0
        %v892 = vpop.f32.mrb[0].mxu0
        %v893 = vadd.f32 %v826, %v892
        %v894 = vpop.f32.mrb[0].mxu0
        %895 = vdwg.mxu0
        %v896 = vrot.slane %v409, 6
        %vm898 = vcmask 1041408
        %v899 = vrot.slane %v406, 6
        %v900 = vrot.slane %v407, 6
        %v901 = vsel %vm898, %v899, %v900
        %v902 = vrot.slane %v408, 6
        %v903 = vsel %vm898, %v900, %v902
        %v904 = vsel %vm898, %v902, %v896
        %v909 = vsel %vm898, %v896, %v899
        %v910 = vmul.f32 %v909, %v525
        %v911 = vmul.f32 %v901, %v526
        %v912 = vmul.f32 %v903, %v527
        %v913 = vmul.f32 %v904, %v528
        %v914 = vpack.c.bf16 %v911, %v910
        %v915 = vpack.c.bf16 %v913, %v912
        %s916 = scalar_lea.vmem %s2, 32
        %v917 = vld [vmem:[%s916] sm:$0xf]
        %v918 = vld [vmem:[%s916 + $0x4] sm:$0xf]
        %v919 = vld [vmem:[%s916 + $0x8] sm:$0xf]
        %v920 = vld [vmem:[%s916 + $0xc] sm:$0xf]
        %vm921 = vcmask 1045504
        %v922 = vrot.slane %v406, 2
        %v923 = vrot.slane %v407, 2
        %v924 = vsel %vm921, %v922, %v923
        %v925 = vrot.slane %v408, 2
        %v926 = vsel %vm921, %v923, %v925
        %v927 = vrot.slane %v409, 2
        %v928 = vsel %vm921, %v925, %v927
        %v934 = vsel %vm921, %v927, %v922
        %v935 = vmul.f32 %v924, %v561
        %v936 = vmul.f32 %v926, %v562
        %v937 = vmul.f32 %v928, %v563
        %v938 = vmul.f32 %v934, %v564
        %v939 = vpack.c.bf16 %v936, %v935
        %v940 = vpack.c.bf16 %v938, %v937
        %s941 = scalar_lea.vmem %s2, 48
        %v942 = vld [vmem:[%s941] sm:$0xf]
        %v943 = vld [vmem:[%s941 + $0x4] sm:$0xf]
        %v944 = vld [vmem:[%s941 + $0x8] sm:$0xf]
        %v945 = vld [vmem:[%s941 + $0xc] sm:$0xf]
        %v950 = vunpack.c.l.b16 %v942
        %v951 = vunpack.c.l.b16 %v943
        %v952 = vunpack.c.l.b16 %v944
        %v953 = vunpack.c.l.b16 %v945
        %v954 = vpack.c.b16 %v951, %v950
        %v955 = vpack.c.b16 %v953, %v952
        %v959 = vsel %vm653, %v939, 0
        %v962 = vsel %vm653, %v940, 0
        %964 = vmatprep.subr.bf16.mxu0 0
        %965 = vmatpush1.bf16.msra.mxu0 %v954
        %966 = vmatprep.subr.bf16.mxu0 0
        %967 = vmatpush1.bf16.msra.mxu0 %v955
        %968 = vmatprep.subr.bf16.mxu0 0
        %969 = vmatpush1.bf16.msra.mxu0 0
        %970 = vmatprep.subr.bf16.mxu0 0
        %971 = vmatpush1.bf16.msra.mxu0 0
        %972 = vmatprep.subr.bf16.mxu0 0
        %973 = vmatpush1.bf16.msra.mxu0 0
        %974 = vmatprep.subr.bf16.mxu0 0
        %975 = vmatpush1.bf16.msra.mxu0 0
        %976 = vmatprep.subr.bf16.mxu0 0
        %977 = vmatpush1.bf16.msra.mxu0 0
        %978 = vmatprep.subr.bf16.mxu0 0
        %979 = vmatpush1.bf16.msra.mxu0 0
        %980 = vmatprep.subr.bf16.mxu0 0
        %981 = vmatpush1.bf16.msra.mxu0 0
        %982 = vmatprep.subr.bf16.mxu0 0
        %983 = vmatpush1.bf16.msra.mxu0 0
        %984 = vmatprep.subr.bf16.mxu0 0
        %985 = vmatpush1.bf16.msra.mxu0 0
        %986 = vmatprep.subr.bf16.mxu0 0
        %987 = vmatpush1.bf16.msra.mxu0 0
        %988 = vmatprep.subr.bf16.mxu0 0
        %989 = vmatpush1.bf16.msra.mxu0 0
        %990 = vmatprep.subr.bf16.mxu0 0
        %991 = vmatpush1.bf16.msra.mxu0 0
        %992 = vmatprep.subr.bf16.mxu0 0
        %993 = vmatpush1.bf16.msra.mxu0 0
        %994 = vmatprep.subr.bf16.mxu0 0
        %995 = vmatpush1.bf16.msra.mxu0 0
        %996 = vmatprep.mubr.bf16.mxu0 0
        %997 = vmatmul.mubr.bf16.gmra.mrb[0].mxu0 %v959
        %v998 = vpop.f32.mrb[0].mxu0
        %v999 = vadd.f32 0.0, %v998
        %v1000 = vpop.f32.mrb[0].mxu0
        %v1001 = vpop.f32.mrb[0].mxu0
        %v1002 = vadd.f32 0.0, %v1001
        %v1003 = vpop.f32.mrb[0].mxu0
        %1004 = vmatprep.mubr.bf16.mxu0 0
        %1005 = vmatmul.mubr.bf16.gmra.mrb[0].mxu0 %v962
        %v1006 = vpop.f32.mrb[0].mxu0
        %v1007 = vadd.f32 0.0, %v1006
        %v1008 = vpop.f32.mrb[0].mxu0
        %v1009 = vpop.f32.mrb[0].mxu0
        %v1010 = vadd.f32 0.0, %v1009
        %v1011 = vpop.f32.mrb[0].mxu0
        %1012 = vdwg.mxu0
        %v1017 = vunpack.c.l.b16 %v917
        %v1018 = vunpack.c.l.b16 %v918
        %v1019 = vunpack.c.l.b16 %v919
        %v1020 = vunpack.c.l.b16 %v920
        %v1021 = vpack.c.b16 %v1018, %v1017
        %v1022 = vpack.c.b16 %v1020, %v1019
        %v1026 = vsel %vm653, %v914, 0
        %v1029 = vsel %vm653, %v915, 0
        %1031 = vmatprep.subr.bf16.mxu0 0
        %1032 = vmatpush1.bf16.msra.mxu0 %v1021
        %1033 = vmatprep.subr.bf16.mxu0 0
        %1034 = vmatpush1.bf16.msra.mxu0 %v1022
        %1035 = vmatprep.subr.bf16.mxu0 0
        %1036 = vmatpush1.bf16.msra.mxu0 0
        %1037 = vmatprep.subr.bf16.mxu0 0
        %1038 = vmatpush1.bf16.msra.mxu0 0
        %1039 = vmatprep.subr.bf16.mxu0 0
        %1040 = vmatpush1.bf16.msra.mxu0 0
        %1041 = vmatprep.subr.bf16.mxu0 0
        %1042 = vmatpush1.bf16.msra.mxu0 0
        %1043 = vmatprep.subr.bf16.mxu0 0
        %1044 = vmatpush1.bf16.msra.mxu0 0
        %1045 = vmatprep.subr.bf16.mxu0 0
        %1046 = vmatpush1.bf16.msra.mxu0 0
        %1047 = vmatprep.subr.bf16.mxu0 0
        %1048 = vmatpush1.bf16.msra.mxu0 0
        %1049 = vmatprep.subr.bf16.mxu0 0
        %1050 = vmatpush1.bf16.msra.mxu0 0
        %1051 = vmatprep.subr.bf16.mxu0 0
        %1052 = vmatpush1.bf16.msra.mxu0 0
        %1053 = vmatprep.subr.bf16.mxu0 0
        %1054 = vmatpush1.bf16.msra.mxu0 0
        %1055 = vmatprep.subr.bf16.mxu0 0
        %1056 = vmatpush1.bf16.msra.mxu0 0
        %1057 = vmatprep.subr.bf16.mxu0 0
        %1058 = vmatpush1.bf16.msra.mxu0 0
        %1059 = vmatprep.subr.bf16.mxu0 0
        %1060 = vmatpush1.bf16.msra.mxu0 0
        %1061 = vmatprep.subr.bf16.mxu0 0
        %1062 = vmatpush1.bf16.msra.mxu0 0
        %1063 = vmatprep.mubr.bf16.mxu0 0
        %1064 = vmatmul.mubr.bf16.gmra.mrb[0].mxu0 %v1026
        %v1065 = vpop.f32.mrb[0].mxu0
        %v1066 = vadd.f32 %v999, %v1065
        %v1067 = vpop.f32.mrb[0].mxu0
        %v1068 = vpop.f32.mrb[0].mxu0
        %v1069 = vadd.f32 %v1002, %v1068
        %v1070 = vpop.f32.mrb[0].mxu0
        %1071 = vmatprep.mubr.bf16.mxu0 0
        %1072 = vmatmul.mubr.bf16.gmra.mrb[0].mxu0 %v1029
        %v1073 = vpop.f32.mrb[0].mxu0
        %v1074 = vadd.f32 %v1007, %v1073
        %v1075 = vpop.f32.mrb[0].mxu0
        %v1076 = vpop.f32.mrb[0].mxu0
        %v1077 = vadd.f32 %v1010, %v1076
        %v1078 = vpop.f32.mrb[0].mxu0
        %1079 = vdwg.mxu0
        %v1080 = vrot.slane %v409, 4
        %vm1082 = vcmask 1043456
        %v1083 = vrot.slane %v406, 4
        %v1084 = vrot.slane %v407, 4
        %v1085 = vsel %vm1082, %v1083, %v1084
        %v1086 = vrot.slane %v408, 4
        %v1087 = vsel %vm1082, %v1084, %v1086
        %v1088 = vsel %vm1082, %v1086, %v1080
        %v1093 = vsel %vm1082, %v1080, %v1083
        %v1094 = vmul.f32 %v1093, %v597
        %v1095 = vmul.f32 %v1085, %v598
        %v1096 = vmul.f32 %v1087, %v599
        %v1097 = vmul.f32 %v1088, %v600
        %v1098 = vpack.c.bf16 %v1095, %v1094
        %v1099 = vpack.c.bf16 %v1097, %v1096
        %s1100 = scalar_lea.vmem %s2, 64
        %v1101 = vld [vmem:[%s1100] sm:$0xf]
        %v1102 = vld [vmem:[%s1100 + $0x4] sm:$0xf]
        %v1103 = vld [vmem:[%s1100 + $0x8] sm:$0xf]
        %v1104 = vld [vmem:[%s1100 + $0xc] sm:$0xf]
        %v1105 = vmul.f32 %v1085, %v633
        %v1106 = vmul.f32 %v1087, %v634
        %v1107 = vmul.f32 %v1088, %v635
        %v1108 = vmul.f32 %v1093, %v636
        %v1109 = vpack.c.bf16 %v1106, %v1105
        %v1110 = vpack.c.bf16 %v1108, %v1107
        %s1111 = scalar_lea.vmem %s2, 80
        %v1112 = vld [vmem:[%s1111] sm:$0xf]
        %v1113 = vld [vmem:[%s1111 + $0x4] sm:$0xf]
        %v1114 = vld [vmem:[%s1111 + $0x8] sm:$0xf]
        %v1115 = vld [vmem:[%s1111 + $0xc] sm:$0xf]
        %v1120 = vunpack.c.l.b16 %v1112
        %v1121 = vunpack.c.l.b16 %v1113
        %v1122 = vunpack.c.l.b16 %v1114
        %v1123 = vunpack.c.l.b16 %v1115
        %v1124 = vpack.c.b16 %v1121, %v1120
        %v1125 = vpack.c.b16 %v1123, %v1122
        %v1129 = vsel %vm653, %v1109, 0
        %v1132 = vsel %vm653, %v1110, 0
        %1134 = vmatprep.subr.bf16.mxu0 0
        %1135 = vmatpush1.bf16.msra.mxu0 %v1124
        %1136 = vmatprep.subr.bf16.mxu0 0
        %1137 = vmatpush1.bf16.msra.mxu0 %v1125
        %1138 = vmatprep.subr.bf16.mxu0 0
        %1139 = vmatpush1.bf16.msra.mxu0 0
        %1140 = vmatprep.subr.bf16.mxu0 0
        %1141 = vmatpush1.bf16.msra.mxu0 0
        %1142 = vmatprep.subr.bf16.mxu0 0
        %1143 = vmatpush1.bf16.msra.mxu0 0
        %1144 = vmatprep.subr.bf16.mxu0 0
        %1145 = vmatpush1.bf16.msra.mxu0 0
        %1146 = vmatprep.subr.bf16.mxu0 0
        %1147 = vmatpush1.bf16.msra.mxu0 0
        %1148 = vmatprep.subr.bf16.mxu0 0
        %1149 = vmatpush1.bf16.msra.mxu0 0
        %1150 = vmatprep.subr.bf16.mxu0 0
        %1151 = vmatpush1.bf16.msra.mxu0 0
        %1152 = vmatprep.subr.bf16.mxu0 0
        %1153 = vmatpush1.bf16.msra.mxu0 0
        %1154 = vmatprep.subr.bf16.mxu0 0
        %1155 = vmatpush1.bf16.msra.mxu0 0
        %1156 = vmatprep.subr.bf16.mxu0 0
        %1157 = vmatpush1.bf16.msra.mxu0 0
        %1158 = vmatprep.subr.bf16.mxu0 0
        %1159 = vmatpush1.bf16.msra.mxu0 0
        %1160 = vmatprep.subr.bf16.mxu0 0
        %1161 = vmatpush1.bf16.msra.mxu0 0
        %1162 = vmatprep.subr.bf16.mxu0 0
        %1163 = vmatpush1.bf16.msra.mxu0 0
        %1164 = vmatprep.subr.bf16.mxu0 0
        %1165 = vmatpush1.bf16.msra.mxu0 0
        %1166 = vmatprep.mubr.bf16.mxu0 0
        %1167 = vmatmul.mubr.bf16.gmra.mrb[0].mxu0 %v1129
        %v1168 = vpop.f32.mrb[0].mxu0
        %v1169 = vadd.f32 0.0, %v1168
        %v1170 = vpop.f32.mrb[0].mxu0
        %v1171 = vpop.f32.mrb[0].mxu0
        %v1172 = vadd.f32 0.0, %v1171
        %v1173 = vpop.f32.mrb[0].mxu0
        %1174 = vmatprep.mubr.bf16.mxu0 0
        %1175 = vmatmul.mubr.bf16.gmra.mrb[0].mxu0 %v1132
        %v1176 = vpop.f32.mrb[0].mxu0
        %v1177 = vadd.f32 0.0, %v1176
        %v1178 = vpop.f32.mrb[0].mxu0
        %v1179 = vpop.f32.mrb[0].mxu0
        %v1180 = vadd.f32 0.0, %v1179
        %v1181 = vpop.f32.mrb[0].mxu0
        %1182 = vdwg.mxu0
        %v1187 = vunpack.c.l.b16 %v1101
        %v1188 = vunpack.c.l.b16 %v1102
        %v1189 = vunpack.c.l.b16 %v1103
        %v1190 = vunpack.c.l.b16 %v1104
        %v1191 = vpack.c.b16 %v1188, %v1187
        %v1192 = vpack.c.b16 %v1190, %v1189
        %v1196 = vsel %vm653, %v1098, 0
        %v1199 = vsel %vm653, %v1099, 0
        %1201 = vmatprep.subr.bf16.mxu0 0
        %1202 = vmatpush1.bf16.msra.mxu0 %v1191
        %1203 = vmatprep.subr.bf16.mxu0 0
        %1204 = vmatpush1.bf16.msra.mxu0 %v1192
        %1205 = vmatprep.subr.bf16.mxu0 0
        %1206 = vmatpush1.bf16.msra.mxu0 0
        %1207 = vmatprep.subr.bf16.mxu0 0
        %1208 = vmatpush1.bf16.msra.mxu0 0
        %1209 = vmatprep.subr.bf16.mxu0 0
        %1210 = vmatpush1.bf16.msra.mxu0 0
        %1211 = vmatprep.subr.bf16.mxu0 0
        %1212 = vmatpush1.bf16.msra.mxu0 0
        %1213 = vmatprep.subr.bf16.mxu0 0
        %1214 = vmatpush1.bf16.msra.mxu0 0
        %1215 = vmatprep.subr.bf16.mxu0 0
        %1216 = vmatpush1.bf16.msra.mxu0 0
        %1217 = vmatprep.subr.bf16.mxu0 0
        %1218 = vmatpush1.bf16.msra.mxu0 0
        %1219 = vmatprep.subr.bf16.mxu0 0
        %1220 = vmatpush1.bf16.msra.mxu0 0
        %1221 = vmatprep.subr.bf16.mxu0 0
        %1222 = vmatpush1.bf16.msra.mxu0 0
        %1223 = vmatprep.subr.bf16.mxu0 0
        %1224 = vmatpush1.bf16.msra.mxu0 0
        %1225 = vmatprep.subr.bf16.mxu0 0
        %1226 = vmatpush1.bf16.msra.mxu0 0
        %1227 = vmatprep.subr.bf16.mxu0 0
        %1228 = vmatpush1.bf16.msra.mxu0 0
        %1229 = vmatprep.subr.bf16.mxu0 0
        %1230 = vmatpush1.bf16.msra.mxu0 0
        %1231 = vmatprep.subr.bf16.mxu0 0
        %1232 = vmatpush1.bf16.msra.mxu0 0
        %1233 = vmatprep.mubr.bf16.mxu0 0
        %1234 = vmatmul.mubr.bf16.gmra.mrb[0].mxu0 %v1196
        %v1235 = vpop.f32.mrb[0].mxu0
        %v1236 = vadd.f32 %v1169, %v1235
        %v1237 = vpop.f32.mrb[0].mxu0
        %v1238 = vpop.f32.mrb[0].mxu0
        %v1239 = vadd.f32 %v1172, %v1238
        %v1240 = vpop.f32.mrb[0].mxu0
        %1241 = vmatprep.mubr.bf16.mxu0 0
        %1242 = vmatmul.mubr.bf16.gmra.mrb[0].mxu0 %v1199
        %v1243 = vpop.f32.mrb[0].mxu0
        %v1244 = vadd.f32 %v1177, %v1243
        %v1245 = vpop.f32.mrb[0].mxu0
        %v1246 = vpop.f32.mrb[0].mxu0
        %v1247 = vadd.f32 %v1180, %v1246
        %v1248 = vpop.f32.mrb[0].mxu0
        %1249 = vdwg.mxu0
        %v1250 = vadd.f32 %v695, %v882
        %v1251 = vadd.f32 %v698, %v885
        %v1252 = vadd.f32 %v703, %v890
        %v1253 = vadd.f32 %v706, %v893
        %v1254 = vld [vmem:[#allocation7] ss:$0 sm:$0xff]
        %v1255 = vadd.f32 %v1250, %v1254
        %v1256 = vadd.f32 %v1251, %v1254
        %v1257 = vadd.f32 %v1252, %v1254
        %v1258 = vadd.f32 %v1253, %v1254
        %v1259 = vmax.f32 %v1255, 0.0
        %v1260 = vmax.f32 %v1256, 0.0
        %v1261 = vmax.f32 %v1257, 0.0
        %v1262 = vmax.f32 %v1258, 0.0
        %v1263 = vld [vmem:[#allocation7 + $0x1] ss:$0 sm:$0xff]
        %v1264 = vmul.f32 %v1259, %v1263
        %v1265 = vmul.f32 %v1260, %v1263
        %v1266 = vmul.f32 %v1261, %v1263
        %v1267 = vmul.f32 %v1262, %v1263
        %v1268 = vld [vmem:[#allocation7 + $0x2] ss:$0 sm:$0xff]
        %v1269 = vadd.f32 %v1264, %v1268
        %v1270 = vadd.f32 %v1265, %v1268
        %v1271 = vadd.f32 %v1266, %v1268
        %v1272 = vadd.f32 %v1267, %v1268
        %1277 = vrot.lane.b32.xlu0 %v1066, 8
        %v1278 = vpop.permute.xlu0 %1277
        %1279 = vrot.lane.b32.xlu0 %v1069, 8
        %v1280 = vpop.permute.xlu0 %1279
        %1281 = vrot.lane.b32.xlu0 %v1074, 8
        %v1282 = vpop.permute.xlu0 %1281
        %1283 = vrot.lane.b32.xlu0 %v1077, 8
        %v1284 = vpop.permute.xlu0 %1283
        %v1289 = vadd.f32 %v695, %v1278
        %v1290 = vadd.f32 %v698, %v1280
        %v1291 = vadd.f32 %v703, %v1282
        %v1292 = vadd.f32 %v706, %v1284
        %v1293 = vadd.f32 %v1289, %v1254
        %v1294 = vadd.f32 %v1290, %v1254
        %v1295 = vadd.f32 %v1291, %v1254
        %v1296 = vadd.f32 %v1292, %v1254
        %v1297 = vmax.f32 %v1293, 0.0
        %v1298 = vmax.f32 %v1294, 0.0
        %v1299 = vmax.f32 %v1295, 0.0
        %v1300 = vmax.f32 %v1296, 0.0
        %v1301 = vmul.f32 %v1297, %v1263
        %v1302 = vmul.f32 %v1298, %v1263
        %v1303 = vmul.f32 %v1299, %v1263
        %v1304 = vmul.f32 %v1300, %v1263
        %v1305 = vadd.f32 %v1301, %v1268
        %v1306 = vadd.f32 %v1302, %v1268
        %v1307 = vadd.f32 %v1303, %v1268
        %v1308 = vadd.f32 %v1304, %v1268
        %1313 = vrot.lane.b32.xlu0 %v1236, 16
        %v1314 = vpop.permute.xlu0 %1313
        %1315 = vrot.lane.b32.xlu0 %v1239, 16
        %v1316 = vpop.permute.xlu0 %1315
        %1317 = vrot.lane.b32.xlu0 %v1244, 16
        %v1318 = vpop.permute.xlu0 %1317
        %1319 = vrot.lane.b32.xlu0 %v1247, 16
        %v1320 = vpop.permute.xlu0 %1319
        %v1325 = vadd.f32 %v695, %v1314
        %v1326 = vadd.f32 %v698, %v1316
        %v1327 = vadd.f32 %v703, %v1318
        %v1328 = vadd.f32 %v706, %v1320
        %v1329 = vadd.f32 %v1325, %v1254
        %v1330 = vadd.f32 %v1326, %v1254
        %v1331 = vadd.f32 %v1327, %v1254
        %v1332 = vadd.f32 %v1328, %v1254
        %v1333 = vmax.f32 %v1329, 0.0
        %v1334 = vmax.f32 %v1330, 0.0
        %v1335 = vmax.f32 %v1331, 0.0
        %v1336 = vmax.f32 %v1332, 0.0
        %v1337 = vmul.f32 %v1333, %v1263
        %v1338 = vmul.f32 %v1334, %v1263
        %v1339 = vmul.f32 %v1335, %v1263
        %v1340 = vmul.f32 %v1336, %v1263
        %v1341 = vadd.f32 %v1337, %v1268
        %v1342 = vadd.f32 %v1338, %v1268
        %v1343 = vadd.f32 %v1339, %v1268
        %v1344 = vadd.f32 %v1340, %v1268
        %v1345 = vmax.f32 %v695, 0.0
        %v1346 = vmax.f32 %v698, 0.0
        %v1347 = vmax.f32 %v703, 0.0
        %v1348 = vmax.f32 %v706, 0.0
        %v1349 = vpack.c.bf16 %v1346, %v1345
        %v1350 = vpack.c.bf16 %v1348, %v1347
        %v1351 = vld [vmem:[%s3] sm:$0xf]
        %v1352 = vld [vmem:[#allocation7 + $0x3] ss:$0 sm:$0xff]
        %1355 = vrot.lane.b32.xlu0 %v1349, 104
        %v1356 = vpop.permute.xlu0 %1355
        %1357 = vrot.lane.b32.xlu0 %v1350, 104
        %v1358 = vpop.permute.xlu0 %1357
        %vm1359 = vcmask 64512
        %v1361 = vsel %vm1359, %v1356, 0
        %v1364 = vsel %vm1359, %v1358, 0
        %v1367 = vsel %vm1082, %v1351, 0
        %1369 = vmatprep.subr.bf16.mxu0 0
        %1370 = vmatpush1.bf16.msra.mxu0 %v1367
        %1371 = vmatprep.subr.bf16.mxu0 0
        %1372 = vmatpush1.bf16.msra.mxu0 0
        %1373 = vmatprep.subr.bf16.mxu0 0
        %1374 = vmatpush1.bf16.msra.mxu0 0
        %1375 = vmatprep.subr.bf16.mxu0 0
        %1376 = vmatpush1.bf16.msra.mxu0 0
        %1377 = vmatprep.subr.bf16.mxu0 0
        %1378 = vmatpush1.bf16.msra.mxu0 0
        %1379 = vmatprep.subr.bf16.mxu0 0
        %1380 = vmatpush1.bf16.msra.mxu0 0
        %1381 = vmatprep.subr.bf16.mxu0 0
        %1382 = vmatpush1.bf16.msra.mxu0 0
        %1383 = vmatprep.subr.bf16.mxu0 0
        %1384 = vmatpush1.bf16.msra.mxu0 0
        %1385 = vmatprep.subr.bf16.mxu0 0
        %1386 = vmatpush1.bf16.msra.mxu0 0
        %1387 = vmatprep.subr.bf16.mxu0 0
        %1388 = vmatpush1.bf16.msra.mxu0 0
        %1389 = vmatprep.subr.bf16.mxu0 0
        %1390 = vmatpush1.bf16.msra.mxu0 0
        %1391 = vmatprep.subr.bf16.mxu0 0
        %1392 = vmatpush1.bf16.msra.mxu0 0
        %1393 = vmatprep.subr.bf16.mxu0 0
        %1394 = vmatpush1.bf16.msra.mxu0 0
        %1395 = vmatprep.subr.bf16.mxu0 0
        %1396 = vmatpush1.bf16.msra.mxu0 0
        %1397 = vmatprep.subr.bf16.mxu0 0
        %1398 = vmatpush1.bf16.msra.mxu0 0
        %1399 = vmatprep.subr.bf16.mxu0 0
        %1400 = vmatpush1.bf16.msra.mxu0 0
        %1401 = vmatprep.mubr.bf16.mxu0 0
        %1402 = vmatmul.mubr.bf16.gmra.mrb[0].mxu0 %v1361
        %v1403 = vpop.f32.mrb[0].mxu0
        %v1404 = vadd.f32 %v1352, %v1403
        %v1405 = vpop.f32.mrb[0].mxu0
        %v1406 = vpop.f32.mrb[0].mxu0
        %v1407 = vadd.f32 %v1352, %v1406
        %v1408 = vpop.f32.mrb[0].mxu0
        %1409 = vmatprep.mubr.bf16.mxu0 0
        %1410 = vmatmul.mubr.bf16.gmra.mrb[0].mxu0 %v1364
        %v1411 = vpop.f32.mrb[0].mxu0
        %v1412 = vadd.f32 %v1352, %v1411
        %v1413 = vpop.f32.mrb[0].mxu0
        %v1414 = vpop.f32.mrb[0].mxu0
        %v1415 = vadd.f32 %v1352, %v1414
        %v1416 = vpop.f32.mrb[0].mxu0
        %1417 = vdwg.mxu0
        %v1418 = vlaneseq
        %v1419 = vand.u32 %v1418, 127
        %v1420 = vshra.s32 %v1419, 4
        %vm1421 = vcmp.eq.s32.totalorder %v417, %v1420
        %vm1422 = vcmp.eq.s32.totalorder %v418, %v1420
        %vm1423 = vcmp.eq.s32.totalorder %v419, %v1420
        %vm1424 = vcmp.eq.s32.totalorder %v420, %v1420
        %v1425 = vpack.c.bf16 %v1407, %v1404
        %v1426 = vpack.c.bf16 %v1415, %v1412
        %1429 = vrot.lane.b32.xlu0 %v1425, 124
        %v1430 = vpop.permute.xlu0 %1429
        %1431 = vrot.lane.b32.xlu0 %v1426, 124
        %v1432 = vpop.permute.xlu0 %1431
        %1433 = vrot.lane.b32.xlu0 %v1425, 120
        %v1434 = vpop.permute.xlu0 %1433
        %1435 = vrot.lane.b32.xlu0 %v1426, 120
        %v1436 = vpop.permute.xlu0 %1435
        %vm1437 = vcmask 31744
        %v1439 = vsel %vm1437, %v1430, 0
        %v1442 = vsel %vm1437, %v1432, 0
        %v1445 = vsel %vm1437, %v1434, 0
        %v1448 = vsel %vm1437, %v1436, 0
        %1450 = vmatprep.subr.bf16.mxu0 0
        %1451 = vmatpush1.bf16.xpose.msra.mxu0 %v1445
        %1452 = vmatprep.subr.bf16.mxu0 0
        %1453 = vmatpush1.bf16.xpose.msra.mxu0 %v1448
        %1454 = vmatprep.subr.bf16.mxu0 0
        %1455 = vmatpush1.bf16.xpose.msra.mxu0 0
        %1456 = vmatprep.subr.bf16.mxu0 0
        %1457 = vmatpush1.bf16.xpose.msra.mxu0 0
        %1458 = vmatprep.subr.bf16.mxu0 0
        %1459 = vmatpush1.bf16.xpose.msra.mxu0 0
        %1460 = vmatprep.subr.bf16.mxu0 0
        %1461 = vmatpush1.bf16.xpose.msra.mxu0 0
        %1462 = vmatprep.subr.bf16.mxu0 0
        %1463 = vmatpush1.bf16.xpose.msra.mxu0 0
        %1464 = vmatprep.subr.bf16.mxu0 0
        %1465 = vmatpush1.bf16.xpose.msra.mxu0 0
        %1466 = vmatprep.subr.bf16.mxu0 0
        %1467 = vmatpush1.bf16.xpose.msra.mxu0 0
        %1468 = vmatprep.subr.bf16.mxu0 0
        %1469 = vmatpush1.bf16.xpose.msra.mxu0 0
        %1470 = vmatprep.subr.bf16.mxu0 0
        %1471 = vmatpush1.bf16.xpose.msra.mxu0 0
        %1472 = vmatprep.subr.bf16.mxu0 0
        %1473 = vmatpush1.bf16.xpose.msra.mxu0 0
        %1474 = vmatprep.subr.bf16.mxu0 0
        %1475 = vmatpush1.bf16.xpose.msra.mxu0 0
        %1476 = vmatprep.subr.bf16.mxu0 0
        %1477 = vmatpush1.bf16.xpose.msra.mxu0 0
        %1478 = vmatprep.subr.bf16.mxu0 0
        %1479 = vmatpush1.bf16.xpose.msra.mxu0 0
        %1480 = vmatprep.subr.bf16.mxu0 0
        %1481 = vmatpush1.bf16.xpose.msra.mxu0 0
        %1482 = vmatprep.mubr.bf16.mxu0 0
        %1483 = vmatmul.mubr.bf16.gmra.mrb[0].mxu0 %v1439
        %v1484 = vpop.f32.mrb[0].mxu0
        %v1485 = vadd.f32 0.0, %v1484
        %v1486 = vpop.f32.mrb[0].mxu0
        %v1487 = vpop.f32.mrb[0].mxu0
        %v1488 = vadd.f32 0.0, %v1487
        %v1489 = vpop.f32.mrb[0].mxu0
        %1490 = vmatprep.mubr.bf16.mxu0 0
        %1491 = vmatmul.mubr.bf16.gmra.mrb[0].mxu0 %v1442
        %v1492 = vpop.f32.mrb[0].mxu0
        %v1493 = vadd.f32 0.0, %v1492
        %v1494 = vpop.f32.mrb[0].mxu0
        %v1495 = vpop.f32.mrb[0].mxu0
        %v1496 = vadd.f32 0.0, %v1495
        %v1497 = vpop.f32.mrb[0].mxu0
        %1498 = vdwg.mxu0
        %v1499 = vmul.f32 %v1485, 0.0625
        %v1500 = vmul.f32 %v1488, 0.0625
        %v1501 = vmul.f32 %v1493, 0.0625
        %v1502 = vmul.f32 %v1496, 0.0625
        %v1503 = vsel %vm1421, %v1499, 0.0
        %v1504 = vsel %vm1422, %v1500, 0.0
        %v1505 = vsel %vm1423, %v1501, 0.0
        %v1506 = vsel %vm1424, %v1502, 0.0
        %v1507 = vpack.c.bf16 %v1504, %v1503
        %v1508 = vpack.c.bf16 %v1506, %v1505
        %v1510 = vsel %vm653, %v1507, 0
        %v1513 = vsel %vm653, %v1508, 0
        %1515 = vmatprep.subr.bf16.mxu0 0
        %1516 = vmatpush1.bf16.msra.mxu0 %v1425
        %1517 = vmatprep.subr.bf16.mxu0 0
        %1518 = vmatpush1.bf16.msra.mxu0 %v1426
        %1519 = vmatprep.subr.bf16.mxu0 0
        %1520 = vmatpush1.bf16.msra.mxu0 0
        %1521 = vmatprep.subr.bf16.mxu0 0
        %1522 = vmatpush1.bf16.msra.mxu0 0
        %1523 = vmatprep.subr.bf16.mxu0 0
        %1524 = vmatpush1.bf16.msra.mxu0 0
        %1525 = vmatprep.subr.bf16.mxu0 0
        %1526 = vmatpush1.bf16.msra.mxu0 0
        %1527 = vmatprep.subr.bf16.mxu0 0
        %1528 = vmatpush1.bf16.msra.mxu0 0
        %1529 = vmatprep.subr.bf16.mxu0 0
        %1530 = vmatpush1.bf16.msra.mxu0 0
        %1531 = vmatprep.subr.bf16.mxu0 0
        %1532 = vmatpush1.bf16.msra.mxu0 0
        %1533 = vmatprep.subr.bf16.mxu0 0
        %1534 = vmatpush1.bf16.msra.mxu0 0
        %1535 = vmatprep.subr.bf16.mxu0 0
        %1536 = vmatpush1.bf16.msra.mxu0 0
        %1537 = vmatprep.subr.bf16.mxu0 0
        %1538 = vmatpush1.bf16.msra.mxu0 0
        %1539 = vmatprep.subr.bf16.mxu0 0
        %1540 = vmatpush1.bf16.msra.mxu0 0
        %1541 = vmatprep.subr.bf16.mxu0 0
        %1542 = vmatpush1.bf16.msra.mxu0 0
        %1543 = vmatprep.subr.bf16.mxu0 0
        %1544 = vmatpush1.bf16.msra.mxu0 0
        %1545 = vmatprep.subr.bf16.mxu0 0
        %1546 = vmatpush1.bf16.msra.mxu0 0
        %1547 = vmatprep.mubr.bf16.mxu0 0
        %1548 = vmatmul.mubr.bf16.gmra.mrb[0].mxu0 %v1510
        %v1549 = vpop.f32.mrb[0].mxu0
        %v1550 = vadd.f32 0.0, %v1549
        %v1551 = vpop.f32.mrb[0].mxu0
        %v1552 = vpop.f32.mrb[0].mxu0
        %v1553 = vadd.f32 0.0, %v1552
        %v1554 = vpop.f32.mrb[0].mxu0
        %1555 = vmatprep.mubr.bf16.mxu0 0
        %1556 = vmatmul.mubr.bf16.gmra.mrb[0].mxu0 %v1513
        %v1557 = vpop.f32.mrb[0].mxu0
        %v1558 = vadd.f32 0.0, %v1557
        %v1559 = vpop.f32.mrb[0].mxu0
        %v1560 = vpop.f32.mrb[0].mxu0
        %v1561 = vadd.f32 0.0, %v1560
        %v1562 = vpop.f32.mrb[0].mxu0
        %1563 = vdwg.mxu0
        %v1564 = vpack.c.bf16 %v1553, %v1550
        %v1565 = vpack.c.bf16 %v1561, %v1558
        %v1566 = vld [vmem:[%s4] sm:$0x3]
        %v1567 = vld [vmem:[#allocation7 + $0x4] ss:$0 sm:$0xff]
        %v1569 = vsel %vm1437, %v1564, 0
        %v1572 = vsel %vm1437, %v1565, 0
        %v1575 = vsel %vm898, %v1566, 0
        %1577 = vmatprep.subr.bf16.mxu0 0
        %1578 = vmatpush1.bf16.msra.mxu0 %v1575
        %1579 = vmatprep.subr.bf16.mxu0 0
        %1580 = vmatpush1.bf16.msra.mxu0 0
        %1581 = vmatprep.subr.bf16.mxu0 0
        %1582 = vmatpush1.bf16.msra.mxu0 0
        %1583 = vmatprep.subr.bf16.mxu0 0
        %1584 = vmatpush1.bf16.msra.mxu0 0
        %1585 = vmatprep.subr.bf16.mxu0 0
        %1586 = vmatpush1.bf16.msra.mxu0 0
        %1587 = vmatprep.subr.bf16.mxu0 0
        %1588 = vmatpush1.bf16.msra.mxu0 0
        %1589 = vmatprep.subr.bf16.mxu0 0
        %1590 = vmatpush1.bf16.msra.mxu0 0
        %1591 = vmatprep.subr.bf16.mxu0 0
        %1592 = vmatpush1.bf16.msra.mxu0 0
        %1593 = vmatprep.subr.bf16.mxu0 0
        %1594 = vmatpush1.bf16.msra.mxu0 0
        %1595 = vmatprep.subr.bf16.mxu0 0
        %1596 = vmatpush1.bf16.msra.mxu0 0
        %1597 = vmatprep.subr.bf16.mxu0 0
        %1598 = vmatpush1.bf16.msra.mxu0 0
        %1599 = vmatprep.subr.bf16.mxu0 0
        %1600 = vmatpush1.bf16.msra.mxu0 0
        %1601 = vmatprep.subr.bf16.mxu0 0
        %1602 = vmatpush1.bf16.msra.mxu0 0
        %1603 = vmatprep.subr.bf16.mxu0 0
        %1604 = vmatpush1.bf16.msra.mxu0 0
        %1605 = vmatprep.subr.bf16.mxu0 0
        %1606 = vmatpush1.bf16.msra.mxu0 0
        %1607 = vmatprep.subr.bf16.mxu0 0
        %1608 = vmatpush1.bf16.msra.mxu0 0
        %1609 = vmatprep.mubr.bf16.mxu0 0
        %1610 = vmatmul.mubr.bf16.gmra.mrb[0].mxu0 %v1569
        %v1611 = vpop.f32.mrb[0].mxu0
        %v1612 = vadd.f32 %v1567, %v1611
        %v1613 = vpop.f32.mrb[0].mxu0
        %v1614 = vpop.f32.mrb[0].mxu0
        %v1615 = vadd.f32 %v1567, %v1614
        %v1616 = vpop.f32.mrb[0].mxu0
        %1617 = vmatprep.mubr.bf16.mxu0 0
        %1618 = vmatmul.mubr.bf16.gmra.mrb[0].mxu0 %v1572
        %v1619 = vpop.f32.mrb[0].mxu0
        %v1620 = vadd.f32 %v1567, %v1619
        %v1621 = vpop.f32.mrb[0].mxu0
        %v1622 = vpop.f32.mrb[0].mxu0
        %v1623 = vadd.f32 %v1567, %v1622
        %v1624 = vpop.f32.mrb[0].mxu0
        %1625 = vdwg.mxu0
        %1630 = vrot.lane.b32.xlu0 %v1345, 104
        %v1631 = vpop.permute.xlu0 %1630
        %1632 = vrot.lane.b32.xlu0 %v1346, 104
        %v1633 = vpop.permute.xlu0 %1632
        %1634 = vrot.lane.b32.xlu0 %v1347, 104
        %v1635 = vpop.permute.xlu0 %1634
        %1636 = vrot.lane.b32.xlu0 %v1348, 104
        %v1637 = vpop.permute.xlu0 %1636
        %v1642 = vadd.f32 %v1612, %v1631
        %v1643 = vadd.f32 %v1615, %v1633
        %v1644 = vadd.f32 %v1620, %v1635
        %v1645 = vadd.f32 %v1623, %v1637
        %1646 = vst.msk [vmem:[#allocation2] sm:$0xff] %vm1359, %v1269
        %1647 = vst.msk [vmem:[#allocation2 + $0x8] sm:$0xff] %vm1359, %v1270
        %1648 = vst.msk [vmem:[#allocation2 + $0x10] sm:$0xff] %vm1359, %v1271
        %1649 = vst.msk [vmem:[#allocation2 + $0x18] sm:$0xff] %vm1359, %v1272
        %vm1650 = vcmask 130112
        %1651 = vst.msk [vmem:[#allocation2] sm:$0xff] %vm1650, %v1305
        %1652 = vst.msk [vmem:[#allocation2 + $0x8] sm:$0xff] %vm1650, %v1306
        %1653 = vst.msk [vmem:[#allocation2 + $0x10] sm:$0xff] %vm1650, %v1307
        %1654 = vst.msk [vmem:[#allocation2 + $0x18] sm:$0xff] %vm1650, %v1308
        %vm1655 = vcmask 195712
        %1656 = vst.msk [vmem:[#allocation2] sm:$0xff] %vm1655, %v1341
        %1657 = vst.msk [vmem:[#allocation2 + $0x8] sm:$0xff] %vm1655, %v1342
        %1658 = vst.msk [vmem:[#allocation2 + $0x10] sm:$0xff] %vm1655, %v1343
        %1659 = vst.msk [vmem:[#allocation2 + $0x18] sm:$0xff] %vm1655, %v1344
        %1664 = vrot.lane.b32.xlu0 %v1642, 24
        %v1665 = vpop.permute.xlu0 %1664
        %1666 = vrot.lane.b32.xlu0 %v1643, 24
        %v1667 = vpop.permute.xlu0 %1666
        %1668 = vrot.lane.b32.xlu0 %v1644, 24
        %v1669 = vpop.permute.xlu0 %1668
        %1670 = vrot.lane.b32.xlu0 %v1645, 24
        %v1671 = vpop.permute.xlu0 %1670
        %vm1676 = vcmask 261312
        %1677 = vst.msk [vmem:[#allocation2] sm:$0xff] %vm1676, %v1665
        %1678 = vst.msk [vmem:[#allocation2 + $0x8] sm:$0xff] %vm1676, %v1667
        %1679 = vst.msk [vmem:[#allocation2 + $0x10] sm:$0xff] %vm1676, %v1669
        %1680 = vst.msk [vmem:[#allocation2 + $0x18] sm:$0xff] %vm1676, %v1671
        %v1681 = vld [vmem:[#allocation2] sm:$0xff]
        %v1682 = vld [vmem:[#allocation2 + $0x8] sm:$0xff]
        %v1683 = vld [vmem:[#allocation2 + $0x10] sm:$0xff]
        %v1684 = vld [vmem:[#allocation2 + $0x18] sm:$0xff]
        %v1686 = vrot.slane %v1684, 7
        %v1691 = vrot.slane %v1681, 7
        %v1692 = vrot.slane %v1682, 7
        %v1693 = vsel %vm715, %v1691, %v1692
        %v1694 = vrot.slane %v1683, 7
        %v1695 = vsel %vm715, %v1692, %v1694
        %v1696 = vsel %vm715, %v1694, %v1686
        %v1701 = vsel %vm715, %v1686, %v1691
        %v1702 = vmul.f32 %v1701, %v453
        %v1703 = vmul.f32 %v1693, %v454
        %v1704 = vmul.f32 %v1695, %v455
        %v1705 = vmul.f32 %v1696, %v456
        %v1706 = vpack.c.bf16 %v1703, %v1702
        %v1707 = vpack.c.bf16 %v1705, %v1704
        %1708 = vst.msk [vmem:[#allocation3] sm:$0xff] %vm653, %v1706
        %1709 = vst.msk [vmem:[#allocation3 + $0x8] sm:$0xff] %vm653, %v1707
        %v1710 = vpack.c.bf16 %v1682, %v1681
        %v1711 = vpack.c.bf16 %v1684, %v1683
        %1714 = vrot.lane.b32.xlu0 %v1710, 32
        %v1715 = vpop.permute.xlu0 %1714
        %1716 = vrot.lane.b32.xlu0 %v1711, 32
        %v1717 = vpop.permute.xlu0 %1716
        %vm1720 = vcmask 523520
        %1721 = vst.msk [vmem:[#allocation3] sm:$0xff] %vm1720, %v1715
        %1722 = vst.msk [vmem:[#allocation3 + $0x8] sm:$0xff] %vm1720, %v1717
        %v1723 = vrot.slane %v1681, 1
        %v1724 = vrot.slane %v1682, 1
        %v1725 = vsel %vm737, %v1723, %v1724
        %v1726 = vrot.slane %v1683, 1
        %v1727 = vsel %vm737, %v1724, %v1726
        %v1728 = vrot.slane %v1684, 1
        %v1729 = vsel %vm737, %v1726, %v1728
        %v1735 = vsel %vm737, %v1728, %v1723
        %v1736 = vmul.f32 %v1725, %v489
        %v1737 = vmul.f32 %v1727, %v490
        %v1738 = vmul.f32 %v1729, %v491
        %v1739 = vmul.f32 %v1735, %v492
        %v1740 = vpack.c.bf16 %v1737, %v1736
        %v1741 = vpack.c.bf16 %v1739, %v1738
        %1744 = vrot.lane.b32.xlu0 %v1740, 64
        %v1745 = vpop.permute.xlu0 %1744
        %1746 = vrot.lane.b32.xlu0 %v1741, 64
        %v1747 = vpop.permute.xlu0 %1746
        %vm1750 = vcmask 785920
        %1751 = vst.msk [vmem:[#allocation3] sm:$0xff] %vm1750, %v1745
        %1752 = vst.msk [vmem:[#allocation3 + $0x8] sm:$0xff] %vm1750, %v1747
        %v1753 = vld [vmem:[#allocation3] sm:$0xff]
        %v1754 = vld [vmem:[#allocation3 + $0x8] sm:$0xff]
        %v1755 = vld [vmem:[%s5] sm:$0xf]
        %v1756 = vld [vmem:[%s5 + $0x4] sm:$0xf]
        %v1757 = vld [vmem:[%s5 + $0x8] sm:$0xf]
        %v1758 = vld [vmem:[%s5 + $0xc] sm:$0xf]
        %v1759 = vld [vmem:[%s5 + $0x10] sm:$0xf]
        %v1760 = vld [vmem:[%s5 + $0x14] sm:$0xf]
        %v1761 = vld [vmem:[%s5 + $0x18] sm:$0xf]
        %v1762 = vld [vmem:[%s5 + $0x1c] sm:$0xf]
        %v1763 = vld [vmem:[%s5 + $0x20] sm:$0xf]
        %v1764 = vld [vmem:[%s5 + $0x24] sm:$0xf]
        %v1765 = vld [vmem:[%s5 + $0x28] sm:$0xf]
        %v1766 = vld [vmem:[%s5 + $0x2c] sm:$0xf]
        %v1779 = vunpack.c.l.b16 %v1755
        %v1780 = vunpack.c.l.b16 %v1756
        %v1781 = vunpack.c.l.b16 %v1757
        %v1782 = vunpack.c.l.b16 %v1758
        %v1783 = vunpack.c.l.b16 %v1759
        %v1784 = vunpack.c.l.b16 %v1760
        %v1785 = vunpack.c.l.b16 %v1761
        %v1786 = vunpack.c.l.b16 %v1762
        %v1787 = vunpack.c.l.b16 %v1763
        %v1788 = vunpack.c.l.b16 %v1764
        %v1789 = vunpack.c.l.b16 %v1765
        %v1790 = vunpack.c.l.b16 %v1766
        %v1791 = vpack.c.b16 %v1780, %v1779
        %v1792 = vpack.c.b16 %v1782, %v1781
        %v1793 = vpack.c.b16 %v1784, %v1783
        %v1794 = vpack.c.b16 %v1786, %v1785
        %v1795 = vpack.c.b16 %v1788, %v1787
        %v1796 = vpack.c.b16 %v1790, %v1789
        %vm1803 = vcmask 785408
        %v1805 = vsel %vm1803, %v1753, 0
        %v1808 = vsel %vm1803, %v1754, 0
        %1810 = vmatprep.subr.bf16.mxu0 0
        %1811 = vmatpush1.bf16.msra.mxu0 %v1791
        %1812 = vmatprep.subr.bf16.mxu0 0
        %1813 = vmatpush1.bf16.msra.mxu0 %v1792
        %1814 = vmatprep.subr.bf16.mxu0 0
        %1815 = vmatpush1.bf16.msra.mxu0 %v1793
        %1816 = vmatprep.subr.bf16.mxu0 0
        %1817 = vmatpush1.bf16.msra.mxu0 %v1794
        %1818 = vmatprep.subr.bf16.mxu0 0
        %1819 = vmatpush1.bf16.msra.mxu0 %v1795
        %1820 = vmatprep.subr.bf16.mxu0 0
        %1821 = vmatpush1.bf16.msra.mxu0 %v1796
        %1822 = vmatprep.subr.bf16.mxu0 0
        %1823 = vmatpush1.bf16.msra.mxu0 0
        %1824 = vmatprep.subr.bf16.mxu0 0
        %1825 = vmatpush1.bf16.msra.mxu0 0
        %1826 = vmatprep.subr.bf16.mxu0 0
        %1827 = vmatpush1.bf16.msra.mxu0 0
        %1828 = vmatprep.subr.bf16.mxu0 0
        %1829 = vmatpush1.bf16.msra.mxu0 0
        %1830 = vmatprep.subr.bf16.mxu0 0
        %1831 = vmatpush1.bf16.msra.mxu0 0
        %1832 = vmatprep.subr.bf16.mxu0 0
        %1833 = vmatpush1.bf16.msra.mxu0 0
        %1834 = vmatprep.subr.bf16.mxu0 0
        %1835 = vmatpush1.bf16.msra.mxu0 0
        %1836 = vmatprep.subr.bf16.mxu0 0
        %1837 = vmatpush1.bf16.msra.mxu0 0
        %1838 = vmatprep.subr.bf16.mxu0 0
        %1839 = vmatpush1.bf16.msra.mxu0 0
        %1840 = vmatprep.subr.bf16.mxu0 0
        %1841 = vmatpush1.bf16.msra.mxu0 0
        %1842 = vmatprep.mubr.bf16.mxu0 0
        %1843 = vmatmul.mubr.bf16.gmra.mrb[0].mxu0 %v1805
        %v1844 = vpop.f32.mrb[0].mxu0
        %v1845 = vadd.f32 0.0, %v1844
        %v1846 = vpop.f32.mrb[0].mxu0
        %v1847 = vpop.f32.mrb[0].mxu0
        %v1848 = vadd.f32 0.0, %v1847
        %v1849 = vpop.f32.mrb[0].mxu0
        %1850 = vmatprep.mubr.bf16.mxu0 0
        %1851 = vmatmul.mubr.bf16.gmra.mrb[0].mxu0 %v1808
        %v1852 = vpop.f32.mrb[0].mxu0
        %v1853 = vadd.f32 0.0, %v1852
        %v1854 = vpop.f32.mrb[0].mxu0
        %v1855 = vpop.f32.mrb[0].mxu0
        %v1856 = vadd.f32 0.0, %v1855
        %v1857 = vpop.f32.mrb[0].mxu0
        %1858 = vdwg.mxu0
        %v1859 = vmax.f32 %v1845, 0.0
        %v1860 = vmax.f32 %v1848, 0.0
        %v1861 = vmax.f32 %v1853, 0.0
        %v1862 = vmax.f32 %v1856, 0.0
        %v1863 = vld [vmem:[#allocation7 + $0x5] ss:$0 sm:$0xff]
        %v1864 = vmul.f32 %v1859, %v1863
        %v1865 = vmul.f32 %v1860, %v1863
        %v1866 = vmul.f32 %v1861, %v1863
        %v1867 = vmul.f32 %v1862, %v1863
        %v1868 = vld [vmem:[#allocation7 + $0x6] ss:$0 sm:$0xff]
        %v1869 = vadd.f32 %v1864, %v1868
        %v1870 = vadd.f32 %v1865, %v1868
        %v1871 = vadd.f32 %v1866, %v1868
        %v1872 = vadd.f32 %v1867, %v1868
        %v1873 = vadd.f32 %v1869, %v406
        %v1874 = vadd.f32 %v1870, %v407
        %v1875 = vadd.f32 %v1871, %v408
        %v1876 = vadd.f32 %v1872, %v409
        %v1877 = vpack.c.bf16 %v1874, %v1873
        %v1878 = vpack.c.bf16 %v1876, %v1875
        %v1879 = vld [vmem:[#allocation4] sm:$0xff]
        %v1880 = vld [vmem:[#allocation4 + $0x8] sm:$0xff]
        %v1881 = vld [vmem:[#allocation4 + $0x10] sm:$0xff]
        %v1882 = vld [vmem:[#allocation4 + $0x18] sm:$0xff]
        %v1883 = vld [vmem:[#allocation4 + $0x20] sm:$0xff]
        %v1884 = vld [vmem:[#allocation4 + $0x28] sm:$0xff]
        %v1885 = vld [vmem:[#allocation4 + $0x30] sm:$0xff]
        %v1886 = vld [vmem:[#allocation4 + $0x38] sm:$0xff]
        %s1887 = scalar_lea.vmem [#allocation7], 7
        %v1888 = vld [vmem:[%s1887] ss:$8 sm:$0xf]
        %v1890 = vlaneseq
        %v1891 = vshrl.u32 %v1890, 7
        %v1892 = vsub.s32 0, %v1891
        %v1893 = vrot.slane %v1888, %v1892
        %v1894 = vlaneseq
        %v1895 = vshrl.u32 %v1894, 7
        %v1896 = vsub.s32 1, %v1895
        %v1897 = vrot.slane %v1888, %v1896
        %v1898 = vlaneseq
        %v1899 = vshrl.u32 %v1898, 7
        %v1900 = vsub.s32 2, %v1899
        %v1901 = vrot.slane %v1888, %v1900
        %v1902 = vlaneseq
        %v1903 = vshrl.u32 %v1902, 7
        %v1904 = vsub.s32 3, %v1903
        %v1905 = vrot.slane %v1888, %v1904
        %v1918 = vunpack.c.l.b16 %v1879
        %v1919 = vunpack.c.h.b16 %v1879
        %v1920 = vunpack.c.l.b16 %v1880
        %v1921 = vunpack.c.h.b16 %v1880
        %v1922 = vunpack.c.l.b16 %v1881
        %v1923 = vunpack.c.h.b16 %v1881
        %v1924 = vunpack.c.l.b16 %v1882
        %v1925 = vunpack.c.h.b16 %v1882
        %v1926 = vunpack.c.l.b16 %v1883
        %v1927 = vunpack.c.h.b16 %v1883
        %v1928 = vunpack.c.l.b16 %v1884
        %v1929 = vunpack.c.h.b16 %v1884
        %v1930 = vunpack.c.l.b16 %v1885
        %v1931 = vunpack.c.h.b16 %v1885
        %v1932 = vunpack.c.l.b16 %v1886
        %v1933 = vunpack.c.h.b16 %v1886
        %v1934 = vpack.c.b16 %v1922, %v1918
        %v1935 = vpack.c.b16 %v1923, %v1919
        %v1936 = vpack.c.b16 %v1924, %v1920
        %v1937 = vpack.c.b16 %v1925, %v1921
        %v1938 = vpack.c.b16 %v1930, %v1926
        %v1939 = vpack.c.b16 %v1931, %v1927
        %v1940 = vpack.c.b16 %v1932, %v1928
        %v1941 = vpack.c.b16 %v1933, %v1929
        %v1951 = vsel %vm653, %v1877, 0
        %v1954 = vsel %vm653, %v1878, 0
        %1956 = vmatprep.subr.bf16.mxu0 %v1935
        %1957 = vmatpush1.bf16.msra.mxu0 %v1934
        %1958 = vmatprep.subr.bf16.mxu0 %v1939
        %1959 = vmatpush1.bf16.msra.mxu0 %v1938
        %1960 = vmatprep.subr.bf16.mxu0 0
        %1961 = vmatpush1.bf16.msra.mxu0 0
        %1962 = vmatprep.subr.bf16.mxu0 0
        %1963 = vmatpush1.bf16.msra.mxu0 0
        %1964 = vmatprep.subr.bf16.mxu0 0
        %1965 = vmatpush1.bf16.msra.mxu0 0
        %1966 = vmatprep.subr.bf16.mxu0 0
        %1967 = vmatpush1.bf16.msra.mxu0 0
        %1968 = vmatprep.subr.bf16.mxu0 0
        %1969 = vmatpush1.bf16.msra.mxu0 0
        %1970 = vmatprep.subr.bf16.mxu0 0
        %1971 = vmatpush1.bf16.msra.mxu0 0
        %1972 = vmatprep.subr.bf16.mxu0 0
        %1973 = vmatpush1.bf16.msra.mxu0 0
        %1974 = vmatprep.subr.bf16.mxu0 0
        %1975 = vmatpush1.bf16.msra.mxu0 0
        %1976 = vmatprep.subr.bf16.mxu0 0
        %1977 = vmatpush1.bf16.msra.mxu0 0
        %1978 = vmatprep.subr.bf16.mxu0 0
        %1979 = vmatpush1.bf16.msra.mxu0 0
        %1980 = vmatprep.subr.bf16.mxu0 0
        %1981 = vmatpush1.bf16.msra.mxu0 0
        %1982 = vmatprep.subr.bf16.mxu0 0
        %1983 = vmatpush1.bf16.msra.mxu0 0
        %1984 = vmatprep.subr.bf16.mxu0 0
        %1985 = vmatpush1.bf16.msra.mxu0 0
        %1986 = vmatprep.subr.bf16.mxu0 0
        %1987 = vmatpush1.bf16.msra.mxu0 0
        %1988 = vmatprep.mubr.bf16.mxu0 0
        %1989 = vmatmul.mubr.bf16.gmra.mrb[0].mxu0 %v1951
        %v1990 = vpop.f32.mrb[0].mxu0
        %v1991 = vadd.f32 %v1893, %v1990
        %v1992 = vpop.f32.mrb[0].mxu0
        %v1993 = vadd.f32 %v1897, %v1992
        %v1994 = vpop.f32.mrb[0].mxu0
        %v1995 = vadd.f32 %v1893, %v1994
        %v1996 = vpop.f32.mrb[0].mxu0
        %v1997 = vadd.f32 %v1897, %v1996
        %1998 = vmatprep.mubr.bf16.mxu0 0
        %1999 = vmatmul.mubr.bf16.gmra.mrb[0].mxu0 %v1954
        %v2000 = vpop.f32.mrb[0].mxu0
        %v2001 = vadd.f32 %v1893, %v2000
        %v2002 = vpop.f32.mrb[0].mxu0
        %v2003 = vadd.f32 %v1897, %v2002
        %v2004 = vpop.f32.mrb[0].mxu0
        %v2005 = vadd.f32 %v1893, %v2004
        %v2006 = vpop.f32.mrb[0].mxu0
        %v2007 = vadd.f32 %v1897, %v2006
        %2008 = vdwg.mxu0
        %2009 = vmatprep.subr.bf16.mxu0 %v1937
        %2010 = vmatpush1.bf16.msra.mxu0 %v1936
        %2011 = vmatprep.subr.bf16.mxu0 %v1941
        %2012 = vmatpush1.bf16.msra.mxu0 %v1940
        %2013 = vmatprep.subr.bf16.mxu0 0
        %2014 = vmatpush1.bf16.msra.mxu0 0
        %2015 = vmatprep.subr.bf16.mxu0 0
        %2016 = vmatpush1.bf16.msra.mxu0 0
        %2017 = vmatprep.subr.bf16.mxu0 0
        %2018 = vmatpush1.bf16.msra.mxu0 0
        %2019 = vmatprep.subr.bf16.mxu0 0
        %2020 = vmatpush1.bf16.msra.mxu0 0
        %2021 = vmatprep.subr.bf16.mxu0 0
        %2022 = vmatpush1.bf16.msra.mxu0 0
        %2023 = vmatprep.subr.bf16.mxu0 0
        %2024 = vmatpush1.bf16.msra.mxu0 0
        %2025 = vmatprep.subr.bf16.mxu0 0
        %2026 = vmatpush1.bf16.msra.mxu0 0
        %2027 = vmatprep.subr.bf16.mxu0 0
        %2028 = vmatpush1.bf16.msra.mxu0 0
        %2029 = vmatprep.subr.bf16.mxu0 0
        %2030 = vmatpush1.bf16.msra.mxu0 0
        %2031 = vmatprep.subr.bf16.mxu0 0
        %2032 = vmatpush1.bf16.msra.mxu0 0
        %2033 = vmatprep.subr.bf16.mxu0 0
        %2034 = vmatpush1.bf16.msra.mxu0 0
        %2035 = vmatprep.subr.bf16.mxu0 0
        %2036 = vmatpush1.bf16.msra.mxu0 0
        %2037 = vmatprep.subr.bf16.mxu0 0
        %2038 = vmatpush1.bf16.msra.mxu0 0
        %2039 = vmatprep.subr.bf16.mxu0 0
        %2040 = vmatpush1.bf16.msra.mxu0 0
        %2041 = vmatprep.mubr.bf16.mxu0 0
        %2042 = vmatmul.mubr.bf16.gmra.mrb[0].mxu0 %v1951
        %v2043 = vpop.f32.mrb[0].mxu0
        %v2044 = vadd.f32 %v1901, %v2043
        %v2045 = vpop.f32.mrb[0].mxu0
        %v2046 = vadd.f32 %v1905, %v2045
        %v2047 = vpop.f32.mrb[0].mxu0
        %v2048 = vadd.f32 %v1901, %v2047
        %v2049 = vpop.f32.mrb[0].mxu0
        %v2050 = vadd.f32 %v1905, %v2049
        %2051 = vmatprep.mubr.bf16.mxu0 0
        %2052 = vmatmul.mubr.bf16.gmra.mrb[0].mxu0 %v1954
        %v2053 = vpop.f32.mrb[0].mxu0
        %v2054 = vadd.f32 %v1901, %v2053
        %v2055 = vpop.f32.mrb[0].mxu0
        %v2056 = vadd.f32 %v1905, %v2055
        %v2057 = vpop.f32.mrb[0].mxu0
        %v2058 = vadd.f32 %v1901, %v2057
        %v2059 = vpop.f32.mrb[0].mxu0
        %v2060 = vadd.f32 %v1905, %v2059
        %2061 = vdwg.mxu0
        %v2062 = vmax.f32 %v1991, 0.0
        %v2063 = vmax.f32 %v1993, 0.0
        %v2064 = vmax.f32 %v2044, 0.0
        %v2065 = vmax.f32 %v2046, 0.0
        %v2066 = vmax.f32 %v1995, 0.0
        %v2067 = vmax.f32 %v1997, 0.0
        %v2068 = vmax.f32 %v2048, 0.0
        %v2069 = vmax.f32 %v2050, 0.0
        %v2070 = vmax.f32 %v2001, 0.0
        %v2071 = vmax.f32 %v2003, 0.0
        %v2072 = vmax.f32 %v2054, 0.0
        %v2073 = vmax.f32 %v2056, 0.0
        %v2074 = vmax.f32 %v2005, 0.0
        %v2075 = vmax.f32 %v2007, 0.0
        %v2076 = vmax.f32 %v2058, 0.0
        %v2077 = vmax.f32 %v2060, 0.0
        %v2078 = vpack.c.bf16 %v2066, %v2062
        %v2079 = vpack.c.bf16 %v2067, %v2063
        %v2080 = vpack.c.bf16 %v2068, %v2064
        %v2081 = vpack.c.bf16 %v2069, %v2065
        %v2082 = vpack.c.bf16 %v2074, %v2070
        %v2083 = vpack.c.bf16 %v2075, %v2071
        %v2084 = vpack.c.bf16 %v2076, %v2072
        %v2085 = vpack.c.bf16 %v2077, %v2073
        %v2086 = vld [vmem:[%s7] sm:$0xf]
        %v2087 = vld [vmem:[%s7 + $0x4] sm:$0xf]
        %v2088 = vld [vmem:[%s7 + $0x8] sm:$0xf]
        %v2089 = vld [vmem:[%s7 + $0xc] sm:$0xf]
        %v2090 = vld [vmem:[%s7 + $0x10] sm:$0xf]
        %v2091 = vld [vmem:[%s7 + $0x14] sm:$0xf]
        %v2092 = vld [vmem:[%s7 + $0x18] sm:$0xf]
        %v2093 = vld [vmem:[%s7 + $0x1c] sm:$0xf]
        %v2094 = vld [vmem:[%s7 + $0x20] sm:$0xf]
        %v2095 = vld [vmem:[%s7 + $0x24] sm:$0xf]
        %v2096 = vld [vmem:[%s7 + $0x28] sm:$0xf]
        %v2097 = vld [vmem:[%s7 + $0x2c] sm:$0xf]
        %v2098 = vld [vmem:[%s7 + $0x30] sm:$0xf]
        %v2099 = vld [vmem:[%s7 + $0x34] sm:$0xf]
        %v2100 = vld [vmem:[%s7 + $0x38] sm:$0xf]
        %v2101 = vld [vmem:[%s7 + $0x3c] sm:$0xf]
        %v2102 = vld [vmem:[%s7 + $0x40] sm:$0xf]
        %v2103 = vld [vmem:[%s7 + $0x44] sm:$0xf]
        %v2104 = vld [vmem:[%s7 + $0x48] sm:$0xf]
        %v2105 = vld [vmem:[%s7 + $0x4c] sm:$0xf]
        %v2106 = vld [vmem:[%s7 + $0x50] sm:$0xf]
        %v2107 = vld [vmem:[%s7 + $0x54] sm:$0xf]
        %v2108 = vld [vmem:[%s7 + $0x58] sm:$0xf]
        %v2109 = vld [vmem:[%s7 + $0x5c] sm:$0xf]
        %v2110 = vld [vmem:[%s7 + $0x60] sm:$0xf]
        %v2111 = vld [vmem:[%s7 + $0x64] sm:$0xf]
        %v2112 = vld [vmem:[%s7 + $0x68] sm:$0xf]
        %v2113 = vld [vmem:[%s7 + $0x6c] sm:$0xf]
        %v2114 = vld [vmem:[%s7 + $0x70] sm:$0xf]
        %v2115 = vld [vmem:[%s7 + $0x74] sm:$0xf]
        %v2116 = vld [vmem:[%s7 + $0x78] sm:$0xf]
        %v2117 = vld [vmem:[%s7 + $0x7c] sm:$0xf]
        %v2118 = vld [vmem:[%s7 + $0x80] sm:$0xf]
        %v2119 = vld [vmem:[%s7 + $0x84] sm:$0xf]
        %v2120 = vld [vmem:[%s7 + $0x88] sm:$0xf]
        %v2121 = vld [vmem:[%s7 + $0x8c] sm:$0xf]
        %v2122 = vld [vmem:[%s7 + $0x90] sm:$0xf]
        %v2123 = vld [vmem:[%s7 + $0x94] sm:$0xf]
        %v2124 = vld [vmem:[%s7 + $0x98] sm:$0xf]
        %v2125 = vld [vmem:[%s7 + $0x9c] sm:$0xf]
        %v2126 = vld [vmem:[%s7 + $0xa0] sm:$0xf]
        %v2127 = vld [vmem:[%s7 + $0xa4] sm:$0xf]
        %v2128 = vld [vmem:[%s7 + $0xa8] sm:$0xf]
        %v2129 = vld [vmem:[%s7 + $0xac] sm:$0xf]
        %v2130 = vld [vmem:[%s7 + $0xb0] sm:$0xf]
        %v2131 = vld [vmem:[%s7 + $0xb4] sm:$0xf]
        %v2132 = vld [vmem:[%s7 + $0xb8] sm:$0xf]
        %v2133 = vld [vmem:[%s7 + $0xbc] sm:$0xf]
        %v2134 = vld [vmem:[%s7 + $0xc0] sm:$0xf]
        %v2135 = vld [vmem:[%s7 + $0xc4] sm:$0xf]
        %v2136 = vld [vmem:[%s7 + $0xc8] sm:$0xf]
        %v2137 = vld [vmem:[%s7 + $0xcc] sm:$0xf]
        %v2138 = vld [vmem:[%s7 + $0xd0] sm:$0xf]
        %v2139 = vld [vmem:[%s7 + $0xd4] sm:$0xf]
        %v2140 = vld [vmem:[%s7 + $0xd8] sm:$0xf]
        %v2141 = vld [vmem:[%s7 + $0xdc] sm:$0xf]
        %v2142 = vld [vmem:[%s7 + $0xe0] sm:$0xf]
        %v2143 = vld [vmem:[%s7 + $0xe4] sm:$0xf]
        %v2144 = vld [vmem:[%s7 + $0xe8] sm:$0xf]
        %v2145 = vld [vmem:[%s7 + $0xec] sm:$0xf]
        %v2146 = vld [vmem:[%s7 + $0xf0] sm:$0xf]
        %v2147 = vld [vmem:[%s7 + $0xf4] sm:$0xf]
        %v2148 = vld [vmem:[%s7 + $0xf8] sm:$0xf]
        %v2149 = vld [vmem:[%s7 + $0xfc] sm:$0xf]
        %v2150 = vld [vmem:[#allocation7 + $0x20] ss:$0 sm:$0xff]
        %v2215 = vunpack.c.l.b16 %v2086
        %v2216 = vunpack.c.l.b16 %v2087
        %v2217 = vunpack.c.l.b16 %v2088
        %v2218 = vunpack.c.l.b16 %v2089
        %v2219 = vunpack.c.l.b16 %v2090
        %v2220 = vunpack.c.l.b16 %v2091
        %v2221 = vunpack.c.l.b16 %v2092
        %v2222 = vunpack.c.l.b16 %v2093
        %v2223 = vunpack.c.l.b16 %v2094
        %v2224 = vunpack.c.l.b16 %v2095
        %v2225 = vunpack.c.l.b16 %v2096
        %v2226 = vunpack.c.l.b16 %v2097
        %v2227 = vunpack.c.l.b16 %v2098
        %v2228 = vunpack.c.l.b16 %v2099
        %v2229 = vunpack.c.l.b16 %v2100
        %v2230 = vunpack.c.l.b16 %v2101
        %v2231 = vunpack.c.l.b16 %v2102
        %v2232 = vunpack.c.l.b16 %v2103
        %v2233 = vunpack.c.l.b16 %v2104
        %v2234 = vunpack.c.l.b16 %v2105
        %v2235 = vunpack.c.l.b16 %v2106
        %v2236 = vunpack.c.l.b16 %v2107
        %v2237 = vunpack.c.l.b16 %v2108
        %v2238 = vunpack.c.l.b16 %v2109
        %v2239 = vunpack.c.l.b16 %v2110
        %v2240 = vunpack.c.l.b16 %v2111
        %v2241 = vunpack.c.l.b16 %v2112
        %v2242 = vunpack.c.l.b16 %v2113
        %v2243 = vunpack.c.l.b16 %v2114
        %v2244 = vunpack.c.l.b16 %v2115
        %v2245 = vunpack.c.l.b16 %v2116
        %v2246 = vunpack.c.l.b16 %v2117
        %v2247 = vunpack.c.l.b16 %v2118
        %v2248 = vunpack.c.l.b16 %v2119
        %v2249 = vunpack.c.l.b16 %v2120
        %v2250 = vunpack.c.l.b16 %v2121
        %v2251 = vunpack.c.l.b16 %v2122
        %v2252 = vunpack.c.l.b16 %v2123
        %v2253 = vunpack.c.l.b16 %v2124
        %v2254 = vunpack.c.l.b16 %v2125
        %v2255 = vunpack.c.l.b16 %v2126
        %v2256 = vunpack.c.l.b16 %v2127
        %v2257 = vunpack.c.l.b16 %v2128
        %v2258 = vunpack.c.l.b16 %v2129
        %v2259 = vunpack.c.l.b16 %v2130
        %v2260 = vunpack.c.l.b16 %v2131
        %v2261 = vunpack.c.l.b16 %v2132
        %v2262 = vunpack.c.l.b16 %v2133
        %v2263 = vunpack.c.l.b16 %v2134
        %v2264 = vunpack.c.l.b16 %v2135
        %v2265 = vunpack.c.l.b16 %v2136
        %v2266 = vunpack.c.l.b16 %v2137
        %v2267 = vunpack.c.l.b16 %v2138
        %v2268 = vunpack.c.l.b16 %v2139
        %v2269 = vunpack.c.l.b16 %v2140
        %v2270 = vunpack.c.l.b16 %v2141
        %v2271 = vunpack.c.l.b16 %v2142
        %v2272 = vunpack.c.l.b16 %v2143
        %v2273 = vunpack.c.l.b16 %v2144
        %v2274 = vunpack.c.l.b16 %v2145
        %v2275 = vunpack.c.l.b16 %v2146
        %v2276 = vunpack.c.l.b16 %v2147
        %v2277 = vunpack.c.l.b16 %v2148
        %v2278 = vunpack.c.l.b16 %v2149
        %v2279 = vpack.c.b16 %v2216, %v2215
        %v2280 = vpack.c.b16 %v2218, %v2217
        %v2281 = vpack.c.b16 %v2220, %v2219
        %v2282 = vpack.c.b16 %v2222, %v2221
        %v2283 = vpack.c.b16 %v2224, %v2223
        %v2284 = vpack.c.b16 %v2226, %v2225
        %v2285 = vpack.c.b16 %v2228, %v2227
        %v2286 = vpack.c.b16 %v2230, %v2229
        %v2287 = vpack.c.b16 %v2232, %v2231
        %v2288 = vpack.c.b16 %v2234, %v2233
        %v2289 = vpack.c.b16 %v2236, %v2235
        %v2290 = vpack.c.b16 %v2238, %v2237
        %v2291 = vpack.c.b16 %v2240, %v2239
        %v2292 = vpack.c.b16 %v2242, %v2241
        %v2293 = vpack.c.b16 %v2244, %v2243
        %v2294 = vpack.c.b16 %v2246, %v2245
        %v2295 = vpack.c.b16 %v2248, %v2247
        %v2296 = vpack.c.b16 %v2250, %v2249
        %v2297 = vpack.c.b16 %v2252, %v2251
        %v2298 = vpack.c.b16 %v2254, %v2253
        %v2299 = vpack.c.b16 %v2256, %v2255
        %v2300 = vpack.c.b16 %v2258, %v2257
        %v2301 = vpack.c.b16 %v2260, %v2259
        %v2302 = vpack.c.b16 %v2262, %v2261
        %v2303 = vpack.c.b16 %v2264, %v2263
        %v2304 = vpack.c.b16 %v2266, %v2265
        %v2305 = vpack.c.b16 %v2268, %v2267
        %v2306 = vpack.c.b16 %v2270, %v2269
        %v2307 = vpack.c.b16 %v2272, %v2271
        %v2308 = vpack.c.b16 %v2274, %v2273
        %v2309 = vpack.c.b16 %v2276, %v2275
        %v2310 = vpack.c.b16 %v2278, %v2277
        %2343 = vmatprep.subr.bf16.mxu0 0
        %2344 = vmatpush1.bf16.msra.mxu0 %v2279
        %2345 = vmatprep.subr.bf16.mxu0 0
        %2346 = vmatpush1.bf16.msra.mxu0 %v2280
        %2347 = vmatprep.subr.bf16.mxu0 0
        %2348 = vmatpush1.bf16.msra.mxu0 %v2281
        %2349 = vmatprep.subr.bf16.mxu0 0
        %2350 = vmatpush1.bf16.msra.mxu0 %v2282
        %2351 = vmatprep.subr.bf16.mxu0 0
        %2352 = vmatpush1.bf16.msra.mxu0 %v2283
        %2353 = vmatprep.subr.bf16.mxu0 0
        %2354 = vmatpush1.bf16.msra.mxu0 %v2284
        %2355 = vmatprep.subr.bf16.mxu0 0
        %2356 = vmatpush1.bf16.msra.mxu0 %v2285
        %2357 = vmatprep.subr.bf16.mxu0 0
        %2358 = vmatpush1.bf16.msra.mxu0 %v2286
        %2359 = vmatprep.subr.bf16.mxu0 0
        %2360 = vmatpush1.bf16.msra.mxu0 %v2287
        %2361 = vmatprep.subr.bf16.mxu0 0
        %2362 = vmatpush1.bf16.msra.mxu0 %v2288
        %2363 = vmatprep.subr.bf16.mxu0 0
        %2364 = vmatpush1.bf16.msra.mxu0 %v2289
        %2365 = vmatprep.subr.bf16.mxu0 0
        %2366 = vmatpush1.bf16.msra.mxu0 %v2290
        %2367 = vmatprep.subr.bf16.mxu0 0
        %2368 = vmatpush1.bf16.msra.mxu0 %v2291
        %2369 = vmatprep.subr.bf16.mxu0 0
        %2370 = vmatpush1.bf16.msra.mxu0 %v2292
        %2371 = vmatprep.subr.bf16.mxu0 0
        %2372 = vmatpush1.bf16.msra.mxu0 %v2293
        %2373 = vmatprep.subr.bf16.mxu0 0
        %2374 = vmatpush1.bf16.msra.mxu0 %v2294
        %2375 = vmatprep.mubr.bf16.mxu0 %v2079
        %2376 = vmatmul.mubr.bf16.gmra.mrb[0].mxu0 %v2078
        %v2377 = vpop.f32.mrb[0].mxu0
        %v2378 = vadd.f32 %v2150, %v2377
        %v2379 = vpop.f32.mrb[0].mxu0
        %v2380 = vpop.f32.mrb[0].mxu0
        %v2381 = vadd.f32 %v2150, %v2380
        %v2382 = vpop.f32.mrb[0].mxu0
        %2383 = vmatprep.mubr.bf16.mxu0 %v2083
        %2384 = vmatmul.mubr.bf16.gmra.mrb[0].mxu0 %v2082
        %v2385 = vpop.f32.mrb[0].mxu0
        %v2386 = vadd.f32 %v2150, %v2385
        %v2387 = vpop.f32.mrb[0].mxu0
        %v2388 = vpop.f32.mrb[0].mxu0
        %v2389 = vadd.f32 %v2150, %v2388
        %v2390 = vpop.f32.mrb[0].mxu0
        %2391 = vdwg.mxu0
        %2392 = vmatprep.subr.bf16.mxu0 0
        %2393 = vmatpush1.bf16.msra.mxu0 %v2295
        %2394 = vmatprep.subr.bf16.mxu0 0
        %2395 = vmatpush1.bf16.msra.mxu0 %v2296
        %2396 = vmatprep.subr.bf16.mxu0 0
        %2397 = vmatpush1.bf16.msra.mxu0 %v2297
        %2398 = vmatprep.subr.bf16.mxu0 0
        %2399 = vmatpush1.bf16.msra.mxu0 %v2298
        %2400 = vmatprep.subr.bf16.mxu0 0
        %2401 = vmatpush1.bf16.msra.mxu0 %v2299
        %2402 = vmatprep.subr.bf16.mxu0 0
        %2403 = vmatpush1.bf16.msra.mxu0 %v2300
        %2404 = vmatprep.subr.bf16.mxu0 0
        %2405 = vmatpush1.bf16.msra.mxu0 %v2301
        %2406 = vmatprep.subr.bf16.mxu0 0
        %2407 = vmatpush1.bf16.msra.mxu0 %v2302
        %2408 = vmatprep.subr.bf16.mxu0 0
        %2409 = vmatpush1.bf16.msra.mxu0 %v2303
        %2410 = vmatprep.subr.bf16.mxu0 0
        %2411 = vmatpush1.bf16.msra.mxu0 %v2304
        %2412 = vmatprep.subr.bf16.mxu0 0
        %2413 = vmatpush1.bf16.msra.mxu0 %v2305
        %2414 = vmatprep.subr.bf16.mxu0 0
        %2415 = vmatpush1.bf16.msra.mxu0 %v2306
        %2416 = vmatprep.subr.bf16.mxu0 0
        %2417 = vmatpush1.bf16.msra.mxu0 %v2307
        %2418 = vmatprep.subr.bf16.mxu0 0
        %2419 = vmatpush1.bf16.msra.mxu0 %v2308
        %2420 = vmatprep.subr.bf16.mxu0 0
        %2421 = vmatpush1.bf16.msra.mxu0 %v2309
        %2422 = vmatprep.subr.bf16.mxu0 0
        %2423 = vmatpush1.bf16.msra.mxu0 %v2310
        %2424 = vmatprep.mubr.bf16.mxu0 %v2081
        %2425 = vmatmul.mubr.bf16.gmra.mrb[0].mxu0 %v2080
        %v2426 = vpop.f32.mrb[0].mxu0
        %v2427 = vadd.f32 %v2378, %v2426
        %v2428 = vpop.f32.mrb[0].mxu0
        %v2429 = vpop.f32.mrb[0].mxu0
        %v2430 = vadd.f32 %v2381, %v2429
        %v2431 = vpop.f32.mrb[0].mxu0
        %2432 = vmatprep.mubr.bf16.mxu0 %v2085
        %2433 = vmatmul.mubr.bf16.gmra.mrb[0].mxu0 %v2084
        %v2434 = vpop.f32.mrb[0].mxu0
        %v2435 = vadd.f32 %v2386, %v2434
        %v2436 = vpop.f32.mrb[0].mxu0
        %v2437 = vpop.f32.mrb[0].mxu0
        %v2438 = vadd.f32 %v2389, %v2437
        %v2439 = vpop.f32.mrb[0].mxu0
        %2440 = vdwg.mxu0
        %v2441 = vmax.f32 %v2427, 0.0
        %v2442 = vmax.f32 %v2430, 0.0
        %v2443 = vmax.f32 %v2435, 0.0
        %v2444 = vmax.f32 %v2438, 0.0
        %v2445 = vld [vmem:[#allocation7 + $0x21] ss:$0 sm:$0xff]
        %v2446 = vmul.f32 %v2441, %v2445
        %v2447 = vmul.f32 %v2442, %v2445
        %v2448 = vmul.f32 %v2443, %v2445
        %v2449 = vmul.f32 %v2444, %v2445
        %2450 = vadd.xlane.f32.xlu0 %v2446
        %v2451 = vpop.xlane.xlu0 %2450
        %2452 = vadd.xlane.f32.xlu0 %v2447
        %v2453 = vpop.xlane.xlu0 %2452
        %2454 = vadd.xlane.f32.xlu0 %v2448
        %v2455 = vpop.xlane.xlu0 %2454
        %2456 = vadd.xlane.f32.xlu0 %v2449
        %v2457 = vpop.xlane.xlu0 %2456
        %v2458 = vld [vmem:[#allocation7 + $0x22] ss:$0 sm:$0xff]
        %v2459 = vadd.f32 %v2451, %v2458
        %v2460 = vadd.f32 %v2453, %v2458
        %v2461 = vadd.f32 %v2455, %v2458
        %v2462 = vadd.f32 %v2457, %v2458
        %v2463 = vxor.u32 %v2459, 2147483648
        %v2464 = vxor.u32 %v2460, 2147483648
        %v2465 = vxor.u32 %v2461, 2147483648
        %v2466 = vxor.u32 %v2462, 2147483648
        %v2467 = vmul.f32 %v2463, 1.442695
        %v2468 = vpow.pop %v2467
        %v2469 = vmul.f32 %v2464, 1.442695
        %v2470 = vpow.pop %v2469
        %v2471 = vmul.f32 %v2465, 1.442695
        %v2472 = vpow.pop %v2471
        %v2473 = vmul.f32 %v2466, 1.442695
        %v2474 = vpow.pop %v2473
        %v2475 = vadd.f32 %v2468, 1.0
        %v2476 = vadd.f32 %v2470, 1.0
        %v2477 = vadd.f32 %v2472, 1.0
        %v2478 = vadd.f32 %v2474, 1.0
        %v2479 = vrcp.pop %v2475
        %v2480 = vmul.f32 1.0, %v2479
        %v2481 = vrcp.pop %v2476
        %v2482 = vmul.f32 1.0, %v2481
        %v2483 = vrcp.pop %v2477
        %v2484 = vmul.f32 1.0, %v2483
        %v2485 = vrcp.pop %v2478
        %v2486 = vmul.f32 1.0, %v2485
        %v2487 = vmul.f32 %v1873, %v1873
        %v2488 = vmul.f32 %v1874, %v1874
        %v2489 = vmul.f32 %v1875, %v1875
        %v2490 = vmul.f32 %v1876, %v1876
        %v2491 = vsel %vm653, %v2487, 0.0
        %2492 = vadd.xlane.f32.xlu0 %v2491
        %v2493 = vpop.xlane.xlu0 %2492
        %v2494 = vsel %vm653, %v2488, 0.0
        %2495 = vadd.xlane.f32.xlu0 %v2494
        %v2496 = vpop.xlane.xlu0 %2495
        %v2497 = vsel %vm653, %v2489, 0.0
        %2498 = vadd.xlane.f32.xlu0 %v2497
        %v2499 = vpop.xlane.xlu0 %2498
        %v2500 = vsel %vm653, %v2490, 0.0
        %2501 = vadd.xlane.f32.xlu0 %v2500
        %v2502 = vpop.xlane.xlu0 %2501
        %v2503 = vrsqrt.pop %v2493
        %v2504 = vmul.f32 %v2493, %v2503
        %vm2505 = vcmp.eq.f32.partialorder %v2493, inf
        %v2506 = vsel %vm2505, %v2493, %v2504
        %vm2507 = vcmp.eq.f32.partialorder %v2493, 0.0
        %v2508 = vand.u32 %v2493, 2147483648
        %v2509 = vsel %vm2507, %v2508, %v2506
        %v2510 = vrsqrt.pop %v2496
        %v2511 = vmul.f32 %v2496, %v2510
        %vm2512 = vcmp.eq.f32.partialorder %v2496, inf
        %v2513 = vsel %vm2512, %v2496, %v2511
        %vm2514 = vcmp.eq.f32.partialorder %v2496, 0.0
        %v2515 = vand.u32 %v2496, 2147483648
        %v2516 = vsel %vm2514, %v2515, %v2513
        %v2517 = vrsqrt.pop %v2499
        %v2518 = vmul.f32 %v2499, %v2517
        %vm2519 = vcmp.eq.f32.partialorder %v2499, inf
        %v2520 = vsel %vm2519, %v2499, %v2518
        %vm2521 = vcmp.eq.f32.partialorder %v2499, 0.0
        %v2522 = vand.u32 %v2499, 2147483648
        %v2523 = vsel %vm2521, %v2522, %v2520
        %v2524 = vrsqrt.pop %v2502
        %v2525 = vmul.f32 %v2502, %v2524
        %vm2526 = vcmp.eq.f32.partialorder %v2502, inf
        %v2527 = vsel %vm2526, %v2502, %v2525
        %vm2528 = vcmp.eq.f32.partialorder %v2502, 0.0
        %v2529 = vand.u32 %v2502, 2147483648
        %v2530 = vsel %vm2528, %v2529, %v2527
        %2531 = vst.msk [vmem:[%s402] sm:$0xff] %vm653, %v1873
        %2532 = vst.msk [vmem:[%s402 + $0x8] sm:$0xff] %vm653, %v1874
        %2533 = vst.msk [vmem:[%s402 + $0x10] sm:$0xff] %vm653, %v1875
        %2534 = vst.msk [vmem:[%s402 + $0x18] sm:$0xff] %vm653, %v1876
        %vm2535 = vcmp.eq.s32.totalorder %v1419, 0
        %vm2536 = vcmp.eq.s32.totalorder %v1419, 1
        %v2537 = vsel %vm2536, %v2509, 0.0
        %v2538 = vsel %vm2536, %v2516, 0.0
        %v2539 = vsel %vm2536, %v2523, 0.0
        %v2540 = vsel %vm2536, %v2530, 0.0
        %2542 = vset.pattern.permute.xlu0 0
        %2543 = vperm.xlu0 %2542, %v2480
        %v2544 = vpop.permute.xlu0 %2543
        %2547 = vset.pattern.permute.xlu0 0
        %2548 = vperm.xlu0 %2547, %v2482
        %v2549 = vpop.permute.xlu0 %2548
        %2552 = vset.pattern.permute.xlu0 0
        %2553 = vperm.xlu0 %2552, %v2484
        %v2554 = vpop.permute.xlu0 %2553
        %2557 = vset.pattern.permute.xlu0 0
        %2558 = vperm.xlu0 %2557, %v2486
        %v2559 = vpop.permute.xlu0 %2558
        %v2561 = vsel %vm2535, %v2544, %v2537
        %v2562 = vsel %vm2535, %v2549, %v2538
        %v2563 = vsel %vm2535, %v2554, %v2539
        %v2564 = vsel %vm2535, %v2559, %v2540
        %2565 = vst [vmem:[%s391] sm:$0xff] %v2561
        %2566 = vst [vmem:[%s391 + $0x8] sm:$0xff] %v2562
        %2567 = vst [vmem:[%s391 + $0x10] sm:$0xff] %v2563
        %2568 = vst [vmem:[%s391 + $0x18] sm:$0xff] %v2564
        %s2569 = smul.u32 4, %s27
        %p2570 = scmp.lt.s32.totalorder %s2569, 7
        %s2571 = scalar_select %p2570, %s2569, 7
        %s2572 = smul.addr %s2571, 8
        %s2573 = scalar_lea.vmem %s9, %s2572
        %s2574 = sand.u32 %s255, 1
        %s2575 = scalar_lea.sflag [#allocation6], %s2574
        %s2576 = sand.u32 %s255, 1
        %s2577 = smul.addr %s2576, 32
        %s2578 = scalar_lea.vmem [#allocation9], %s2577
        // Predicated region
        $region65: #{tpu_custom_call.1} parent=55 // pred_check
          %p2579 = pneg %p239
        $region66: #{tpu_custom_call.1} parent=55 // pred_check_branch
          %2581 = sbr.rel (%p2579) target = $region68
        $region67: #{tpu_custom_call.1} parent=55 // pred_region
          %s2582 = smul.u32 4, %s27
        $region68: #{tpu_custom_call.1} parent=55 // pred_fallthru
          _
        // Predicated region
        $region69: #{tpu_custom_call.1} parent=55 // pred_check
          %p2583 = pneg %p265
        $region70: #{tpu_custom_call.1} parent=55 // pred_check_branch
          %2585 = sbr.rel (%p2583) target = $region72
        $region71: #{tpu_custom_call.1} parent=55 // pred_region
          %s2586 = smul.u32 4, %s27
          %s2588 = ssub.s32 512, 512
          %2589 = vsyncadd %s2575, %s2588
          %s2590 = smul.addr %s2586, 128
          %s2591 = scalar_lea.hbm %s10, %s2590
          %s2592 = sshll.u32 %s2578, 4
          %s2593 = int_to_ptr.vmem [resolvable:$true] %s2592
          %2598 = dma.vmem_to_hbm [thread:$0]  %s2593, 512, %s2591, %s2575, 128, 128, 8
        $region72: #{tpu_custom_call.1} parent=55 // pred_fallthru
          _
      $region56: #{tpu_custom_call.1} parent=5 // pred_fallthru
        _
      %p2599 = scmp.le.s32.totalorder 2, %s22
      // Predicated region
      $region73: #{tpu_custom_call.1} parent=5 // pred_check
        %p2600 = pneg %p2599
      $region74: #{tpu_custom_call.1} parent=5 // pred_check_branch
        %2602 = sbr.rel (%p2600) target = $region76
      $region75: #{tpu_custom_call.1} parent=5 // pred_region
        %s2603 = ssub.s32 %s22, 2
        // Predicated region
        $region77: #{tpu_custom_call.1} parent=75 // pred_check
          %p2604 = pneg %p245
        $region78: #{tpu_custom_call.1} parent=75 // pred_check_branch
          %2606 = sbr.rel (%p2604) target = $region80
        $region79: #{tpu_custom_call.1} parent=75 // pred_region
          %s2607 = smul.u32 4, %s28
          %p2608 = scmp.lt.s32.totalorder %s2607, 7
          %s2609 = scalar_select %p2608, %s2607, 7
          %s2610 = smul.addr %s2609, 8
          %s2611 = scalar_lea.vmem %s9, %s2610
        $region80: #{tpu_custom_call.1} parent=75 // pred_fallthru
          _
        // Predicated region
        $region81: #{tpu_custom_call.1} parent=75 // pred_check
          %p2612 = pneg %p271
        $region82: #{tpu_custom_call.1} parent=75 // pred_check_branch
          %2614 = sbr.rel (%p2612) target = $region84
        $region83: #{tpu_custom_call.1} parent=75 // pred_region
          %s2615 = sand.u32 %s256, 1
          %s2616 = scalar_lea.sflag [#allocation6], %s2615
          %s2617 = sand.u32 %s256, 1
          %s2618 = smul.addr %s2617, 32
          %s2619 = scalar_lea.vmem [#allocation9], %s2618
          %2620 = dma.done %s2616, 512
        $region84: #{tpu_custom_call.1} parent=75 // pred_fallthru
          _
      $region76: #{tpu_custom_call.1} parent=5 // pred_fallthru
        _
    $region6: #{tpu_custom_call.1} parent=1 // loop_footer
      %s26 = sadd.s32 1, %s22
    $region7: #{tpu_custom_call.1} parent=1 // loop_footer_branch
      %21 = sbr.rel target = $region3
    $region8: #{tpu_custom_call.1} parent=1 // loop_exit
      _
    %2621 = vsyncpa [#allocation5], 1
    %s2622 = scalar_lea.sflag [#allocation5], 1
    %2623 = vsyncpa %s2622, 1
    %2624 = vsyncpa [#allocation8], 1
    %2625 = vsyncpa [#allocation6], 1
    %s2626 = scalar_lea.sflag [#allocation6], 1
    %2627 = vsyncpa %s2626, 1

</llo_original>
